<compile_context>
chip_gen: v7x
topology: tpu7x:2x2x1
jax: 0.10.0
libtpu: 0.0.40
codegen_flags: <defaults>
</compile_context>

<pallas_src>
import functools

import jax
import jax.numpy as jnp
from jax.experimental import pallas as pl
from jax.experimental.pallas import tpu as pltpu


def resblock_kernel(xc_ref, xt_ref, xb_ref, w1_ref, b1_ref, w2_ref, b2_ref,
                    o_ref, xin, hid, *, res_scale):
    """One (batch, row-tile) grid step of the fused ResBlock.

    xc_ref : (1, TH, W, C)  f32   current input rows
    xt_ref : (1, 2, W, C)   f32   2-row halo above (zeroed on the first tile)
    xb_ref : (1, 2, W, C)   f32   2-row halo below (zeroed on the last tile)
    w1_ref : (9, C, Cp)     bf16  conv1 weights, one (Cin, Cout) slice per tap
    b1_ref : (1, Cp)        f32
    w2_ref : (9, Cp, C)     bf16  conv2 weights, per tap
    b2_ref : (1, C)         f32
    o_ref  : (1, TH, W, C)        output rows
    xin    : VMEM (TH+4, W+2, C)  bf16  width-padded input slab (tile + halos)
    hid    : VMEM (TH+2, W+2, Cp) bf16  width-padded ReLU(conv1) rows
    """
    _, TH, W, C = xc_ref.shape
    Cp = w1_ref.shape[2]
    R1 = TH + 2            # conv1 output rows: tile rows + one halo row each side
    M1 = R1 * W
    M2 = TH * W
    f32, bf16 = jnp.float32, jnp.bfloat16

    r = pl.program_id(1)
    last = pl.num_programs(1) - 1

    # ---- 1. stage the tile + halos into a width-padded bf16 slab.
    #         Horizontal SAME padding = the zeroed border columns; vertical
    #         SAME padding = the zeroed halo rows on the first/last tile.
    zcol = jnp.zeros((TH + 4, 1, C), bf16)
    xin[:, 0:1, :] = zcol
    xin[:, W + 1:W + 2, :] = zcol
    xin[2:TH + 2, 1:W + 1, :] = xc_ref[0].astype(bf16)

    @pl.when(r > 0)
    def _():
        xin[0:2, 1:W + 1, :] = xt_ref[0].astype(bf16)

    @pl.when(r == 0)
    def _():
        xin[0:2, 1:W + 1, :] = jnp.zeros((2, W, C), bf16)

    @pl.when(r < last)
    def _():
        xin[TH + 2:TH + 4, 1:W + 1, :] = xb_ref[0].astype(bf16)

    @pl.when(r == last)
    def _():
        xin[TH + 2:TH + 4, 1:W + 1, :] = jnp.zeros((2, W, C), bf16)

    # ---- 2. conv1 = 9 accumulating tap matmuls (bf16 in, f32 accumulate).
    #         The kw-shift is hoisted: 3 shifted slabs reused across kh.
    x_kw = [xin[:, kw:kw + W, :] for kw in range(3)]        # each (TH+4, W, C)
    h = None
    for kh in range(3):
        for kw in range(3):
            lhs = x_kw[kw][kh:kh + R1].reshape(M1, C)
            part = jnp.dot(lhs, w1_ref[kh * 3 + kw],
                           preferred_element_type=f32)      # (M1, Cp)
            h = part if h is None else h + part
    h = jnp.maximum(h + b1_ref[...], 0.0)                   # bias + ReLU (f32)

    # ---- 3. stage ReLU(conv1) rows (width-padded, bf16) for conv2.
    zcolh = jnp.zeros((R1, 1, Cp), bf16)
    hid[:, 0:1, :] = zcolh
    hid[:, W + 1:W + 2, :] = zcolh
    hid[:, 1:W + 1, :] = h.reshape(R1, W, Cp).astype(bf16)

    # conv2's vertical SAME padding at the image border: hid rows that fall
    # outside the image must be zeros, not conv1 evaluated over padding.
    @pl.when(r == 0)
    def _():
        hid[0:1, :, :] = jnp.zeros((1, W + 2, Cp), bf16)

    @pl.when(r == last)
    def _():
        hid[TH + 1:TH + 2, :, :] = jnp.zeros((1, W + 2, Cp), bf16)

    # ---- 4. conv2 = 9 accumulating tap matmuls.
    h_kw = [hid[:, kw:kw + W, :] for kw in range(3)]        # each (R1, W, Cp)
    res = None
    for kh in range(3):
        for kw in range(3):
            lhs = h_kw[kw][kh:kh + TH].reshape(M2, Cp)
            part = jnp.dot(lhs, w2_ref[kh * 3 + kw],
                           preferred_element_type=f32)      # (M2, C)
            res = part if res is None else res + part

    # ---- 5. bias, res_scale, residual add, store (all f32).
    res = res + b2_ref[...]
    if res_scale != 1.0:
        res = res * res_scale
    out = res + xc_ref[0].reshape(M2, C)
    o_ref[0] = out.reshape(TH, W, C).astype(o_ref.dtype)


# --------------------------------------------------------------------------
# Tiling / VMEM budgeting helpers
# --------------------------------------------------------------------------

def _round_up(x, m):
    return ((x + m - 1) // m) * m


def _padded_bytes(shape, dtype):
    """Bytes a buffer occupies in VMEM under the (8,128) tiled layout.
    Sub-32-bit dtypes pack along sublanes (bf16 sublane tile = 16)."""
    itemsize = jnp.dtype(dtype).itemsize
    packing = max(1, 4 // itemsize)
    dims = [int(d) for d in shape]
    if len(dims) == 0:
        return 4
    if len(dims) == 1:
        return _round_up(dims[0] * itemsize, 512)
    lead = 1
    for d in dims[:-2]:
        lead *= d
    sub = _round_up(dims[-2], 8 * packing)
    lane = _round_up(dims[-1], 128)
    return lead * sub * lane * itemsize


def _vmem_capacity_bytes():
    """Per-core VMEM capacity; generation-aware, falls back to the v7x floor."""
    try:
        cap = getattr(pltpu.get_tpu_info(), "vmem_capacity_bytes", None)
        if cap:
            return int(cap)
    except Exception:
        pass
    return 64 * 1024 * 1024


def _step_bytes(th, W, C, Cp):
    """Padding-correct estimate of the per-step VMEM working set."""
    f32, bf16 = jnp.float32, jnp.bfloat16
    r1, m1, m2 = th + 2, (th + 2) * W, th * W
    b = 0
    b += _padded_bytes((th + 4, W + 2, C), bf16)              # xin scratch
    b += _padded_bytes((r1, W + 2, Cp), bf16)                 # hid scratch
    b += _padded_bytes((9, C, Cp), bf16) + _padded_bytes((9, Cp, C), bf16)
    b += _padded_bytes((1, Cp), f32) + _padded_bytes((1, C), f32)
    io = (2 * _padded_bytes((th, W, C), f32)                  # x tile + out tile
          + 2 * _padded_bytes((2, W, C), f32))                # 2-row halos
    b += 2 * io                                               # double-buffered pipeline
    b += 3 * _padded_bytes((th + 4, W, C), bf16)              # kw-shifted input slabs
    b += 3 * _padded_bytes((r1, W, Cp), bf16)                 # kw-shifted hidden slabs
    b += _padded_bytes((m1, Cp), f32) + _padded_bytes((m2, C), f32)    # matmul accs
    b += _padded_bytes((m1, C), bf16) + _padded_bytes((m2, Cp), bf16)  # tap LHS temps
    return b


def _pick_row_tile(N, H, W, C, Cp, budget_bytes):
    """Largest even row tile dividing H whose padded working set fits the
    budget; prefers a total step count that splits evenly over 2 TCs (v7x)."""
    cands = [t for t in range(H, 0, -1) if H % t == 0 and t % 2 == 0]
    if not cands:
        raise ValueError("image height must be even")
    fitting = [t for t in cands if _step_bytes(t, W, C, Cp) <= budget_bytes]
    if not fitting:
        return cands[-1]          # smallest even divisor (only for huge W*C rows)
    for t in fitting:             # descending tile size
        steps = N * (H // t)
        if steps >= 2 and steps % 2 == 0:
            return t
    for t in fitting:
        if N * (H // t) >= 2:
            return t
    return fitting[0]


# --------------------------------------------------------------------------
# Wrappers
# --------------------------------------------------------------------------

def resblock_nhwc(x, w1, b1, w2, b2, *, res_scale=1.0, row_tile=None):
    """x: (N, H, W, C) f32; w1: (3,3,C,Cp), w2: (3,3,Cp,C) HWIO. -> (N,H,W,C)."""
    N, H, W, C = x.shape
    Cp = w1.shape[3]
    if H % 2 != 0:
        raise ValueError("image height must be even")

    cap = _vmem_capacity_bytes()
    if row_tile is None:
        row_tile = _pick_row_tile(N, H, W, C, Cp, budget_bytes=cap // 2)
    TH = int(row_tile)
    if H % TH != 0 or TH % 2 != 0:
        raise ValueError("row_tile must be an even divisor of H")
    RT = H // TH
    HB = H // 2                                 # number of 2-row halo blocks

    # per-tap weight layout (9, Cin, Cout), bf16 cast once outside the kernel
    w1t = w1.reshape(9, C, Cp).astype(jnp.bfloat16)
    w2t = w2.reshape(9, Cp, C).astype(jnp.bfloat16)
    b1f = b1.reshape(1, Cp).astype(jnp.float32)
    b2f = b2.reshape(1, C).astype(jnp.float32)

    kernel = functools.partial(resblock_kernel, res_scale=float(res_scale))

    flops = 2 * N * H * W * 9 * (C * Cp + Cp * C)
    bytes_accessed = (2 * N * H * W * C * 4                  # x in + out
                      + 2 * N * RT * 2 * W * C * 4           # halo re-reads
                      + (w1t.size + w2t.size) * 2
                      + (b1f.size + b2f.size) * 4)
    cost = pl.CostEstimate(flops=int(flops), transcendentals=0,
                           bytes_accessed=int(bytes_accessed))

    return pl.pallas_call(
        kernel,
        out_shape=jax.ShapeDtypeStruct((N, H, W, C), x.dtype),
        grid_spec=pltpu.PrefetchScalarGridSpec(
            num_scalar_prefetch=0,
            grid=(N, RT),
            in_specs=[
                # current rows of the tile
                pl.BlockSpec((1, TH, W, C), lambda n, r: (n, r, 0, 0)),
                # 2-row halo above: rows [r*TH-2, r*TH-1], clamped at the top
                pl.BlockSpec(
                    (1, 2, W, C),
                    lambda n, r: (n, jnp.maximum(r * (TH // 2) - 1, 0), 0, 0)),
                # 2-row halo below: rows [r*TH+TH, r*TH+TH+1], clamped at the bottom
                pl.BlockSpec(
                    (1, 2, W, C),
                    lambda n, r: (n, jnp.minimum((r + 1) * (TH // 2), HB - 1), 0, 0)),
                # conv weights / biases: constant index_map -> resident in VMEM
                pl.BlockSpec((9, C, Cp), lambda n, r: (0, 0, 0)),
                pl.BlockSpec((1, Cp), lambda n, r: (0, 0)),
                pl.BlockSpec((9, Cp, C), lambda n, r: (0, 0, 0)),
                pl.BlockSpec((1, C), lambda n, r: (0, 0)),
            ],
            out_specs=pl.BlockSpec((1, TH, W, C), lambda n, r: (n, r, 0, 0)),
            scratch_shapes=[
                pltpu.VMEM((TH + 4, W + 2, C), jnp.bfloat16),    # xin
                pltpu.VMEM((TH + 2, W + 2, Cp), jnp.bfloat16),   # hid
            ],
        ),
        compiler_params=pltpu.CompilerParams(
            dimension_semantics=("parallel", "parallel"),
            vmem_limit_bytes=int(min(cap * 4 // 5, 112 * 1024 * 1024)),
        ),
        cost_estimate=cost,
    )(x, x, x, w1t, b1f, w2t, b2f)


def resblock(x_nchw, w1, b1, w2, b2, *, res_scale=1.0):
    """NCHW (PyTorch convention) -> NHWC kernel -> NCHW.

    NOTE: in a full network these transposes should be hoisted to the model
    input/output (keep every ResBlock in NHWC); each one costs an extra HBM
    read+write pass over the activations, comparable to the block itself.
    """
    x_nhwc = jnp.transpose(x_nchw, (0, 2, 3, 1))
    y_nhwc = resblock_nhwc(x_nhwc, w1, b1, w2, b2, res_scale=res_scale)
    return jnp.transpose(y_nhwc, (0, 3, 1, 2))


def _reference_nhwc(x, w1, b1, w2, b2, res_scale):
    """Pure-JAX f32 reference (lax conv) for correctness checking."""
    dn = ("NHWC", "HWIO", "NHWC")
    h = jax.lax.conv_general_dilated(x, w1, (1, 1), "SAME",
                                     dimension_numbers=dn)
    h = jnp.maximum(h + b1.reshape(1, 1, 1, -1), 0.0)
    r = jax.lax.conv_general_dilated(h, w2, (1, 1), "SAME",
                                     dimension_numbers=dn)
    r = r + b2.reshape(1, 1, 1, -1)
    return r * res_scale + x


if __name__ == "__main__":
    # ResBlock(conv, n_feats=4, kernel_size=3, bias=True, bn=False,
    #          act=ReLU, res_scale=1)
    N, C, H, W = 2, 4, 16, 16     # NCHW, matching PyTorch input convention
    Cp = C                        # pruned_feats defaults to n_feats
    res_scale = 1.0

    key = jax.random.PRNGKey(0)
    kx, kw1, kb1, kw2, kb2 = jax.random.split(key, 5)

    x = jax.random.normal(kx, (N, C, H, W), dtype=jnp.float32)
    # deterministic synthetic weights (HWIO), kaiming-ish scale
    w1 = jax.random.normal(kw1, (3, 3, C, Cp), dtype=jnp.float32) * 0.1
    b1 = jax.random.normal(kb1, (1, Cp), dtype=jnp.float32) * 0.1
    w2 = jax.random.normal(kw2, (3, 3, Cp, C), dtype=jnp.float32) * 0.1
    b2 = jax.random.normal(kb2, (1, C), dtype=jnp.float32) * 0.1

    out = resblock(x, w1, b1, w2, b2, res_scale=res_scale)
    out = jax.block_until_ready(out)

    # sanity check against the plain-JAX f32 reference; the tolerance reflects
    # the bf16 rounding of the matmul operands (accumulation is f32).
    x_nhwc = jnp.transpose(x, (0, 2, 3, 1))
    ref = _reference_nhwc(x_nhwc, w1, b1, w2, b2, res_scale)
    ref = jnp.transpose(ref, (0, 3, 1, 2))
    assert out.shape == (N, C, H, W)
    max_err = float(jnp.max(jnp.abs(out - ref)))
    assert jnp.allclose(out, ref, atol=3e-2, rtol=3e-2), f"max abs err {max_err}"

    print("KERNEL_OK")
</pallas_src>

<mosaic_0001>
module attributes {stable_mosaic.version = 11 : i64} {
  func.func @resblock_kernel(%arg0: i32, %arg1: i32, %arg2: memref<1x16x16x4xf32, #tpu.memory_space<vmem>>, %arg3: memref<1x2x16x4xf32, #tpu.memory_space<vmem>>, %arg4: memref<1x2x16x4xf32, #tpu.memory_space<vmem>>, %arg5: memref<9x4x4xbf16, #tpu.memory_space<vmem>>, %arg6: memref<1x4xf32, #tpu.memory_space<vmem>>, %arg7: memref<9x4x4xbf16, #tpu.memory_space<vmem>>, %arg8: memref<1x4xf32, #tpu.memory_space<vmem>>, %arg9: memref<1x16x16x4xf32, #tpu.memory_space<vmem>>, %arg10: memref<20x18x4xbf16, #tpu.memory_space<vmem>>, %arg11: memref<18x18x4xbf16, #tpu.memory_space<vmem>>) attributes {dimension_semantics = [#tpu.dimension_semantics<parallel>, #tpu.dimension_semantics<parallel>], iteration_bounds = array<i64: 2, 1>, scalar_prefetch = 0 : i64, scratch_operands = 2 : i64, tpu.core_type = #tpu.core_type<tc>, window_params = [{transform_indices = @transform_0, window_bounds = array<i64: 1, 16, 16, 4>}, {transform_indices = @transform_1, window_bounds = array<i64: 1, 2, 16, 4>}, {transform_indices = @transform_2, window_bounds = array<i64: 1, 2, 16, 4>}, {pipeline_mode = #tpu.pipeline_mode<synchronous>, transform_indices = @transform_3, window_bounds = array<i64: 9, 4, 4>}, {pipeline_mode = #tpu.pipeline_mode<synchronous>, transform_indices = @transform_4, window_bounds = array<i64: 1, 4>}, {pipeline_mode = #tpu.pipeline_mode<synchronous>, transform_indices = @transform_5, window_bounds = array<i64: 9, 4, 4>}, {pipeline_mode = #tpu.pipeline_mode<synchronous>, transform_indices = @transform_6, window_bounds = array<i64: 1, 4>}, {transform_indices = @transform_7, window_bounds = array<i64: 1, 16, 16, 4>}]} {
    %cst = arith.constant 0.000000e+00 : bf16
    %0 = vector.broadcast %cst : bf16 to vector<20x1x4xbf16>
    %c0 = arith.constant 0 : index
    %c0_0 = arith.constant 0 : index
    %c0_1 = arith.constant 0 : index
    %1 = vector.load %arg10[%c0, %c0_0, %c0_1] : memref<20x18x4xbf16, #tpu.memory_space<vmem>>, vector<20x1x4xbf16>
    tpu.vector_store %arg10[%c0, %c0_0, %c0_1], %0 {strides = array<i32>} : memref<20x18x4xbf16, #tpu.memory_space<vmem>>, vector<20x1x4xbf16>,
    %c0_2 = arith.constant 0 : index
    %c17 = arith.constant 17 : index
    %c0_3 = arith.constant 0 : index
    %2 = vector.load %arg10[%c0_2, %c17, %c0_3] : memref<20x18x4xbf16, #tpu.memory_space<vmem>>, vector<20x1x4xbf16>
    tpu.vector_store %arg10[%c0_2, %c17, %c0_3], %0 {strides = array<i32>} : memref<20x18x4xbf16, #tpu.memory_space<vmem>>, vector<20x1x4xbf16>,
    %c0_4 = arith.constant 0 : index
    %c0_5 = arith.constant 0 : index
    %c0_6 = arith.constant 0 : index
    %c0_7 = arith.constant 0 : index
    %3 = vector.load %arg2[%c0_4, %c0_5, %c0_6, %c0_7] : memref<1x16x16x4xf32, #tpu.memory_space<vmem>>, vector<1x16x16x4xf32>
    %4 = vector.shape_cast %3 : vector<1x16x16x4xf32> to vector<16x16x4xf32>
    %5 = arith.truncf %4 : vector<16x16x4xf32> to vector<16x16x4xbf16>
    %c2 = arith.constant 2 : index
    %c1 = arith.constant 1 : index
    %c0_8 = arith.constant 0 : index
    %6 = vector.load %arg10[%c2, %c1, %c0_8] : memref<20x18x4xbf16, #tpu.memory_space<vmem>>, vector<16x16x4xbf16>
    tpu.vector_store %arg10[%c2, %c1, %c0_8], %5 {strides = array<i32>} : memref<20x18x4xbf16, #tpu.memory_space<vmem>>, vector<16x16x4xbf16>,
    %c0_i32 = arith.constant 0 : i32
    %7 = arith.cmpi sgt, %arg1, %c0_i32 : i32
    %8 = arith.extui %7 : i1 to i32
    %c0_i32_9 = arith.constant 0 : i32
    %9 = arith.cmpi ne, %8, %c0_i32_9 : i32
    scf.if %9 {
      %c0_127 = arith.constant 0 : index
      %c0_128 = arith.constant 0 : index
      %c0_129 = arith.constant 0 : index
      %c0_130 = arith.constant 0 : index
      %159 = vector.load %arg3[%c0_127, %c0_128, %c0_129, %c0_130] : memref<1x2x16x4xf32, #tpu.memory_space<vmem>>, vector<1x2x16x4xf32>
      %160 = vector.shape_cast %159 : vector<1x2x16x4xf32> to vector<2x16x4xf32>
      %161 = arith.truncf %160 : vector<2x16x4xf32> to vector<2x16x4xbf16>
      %c0_131 = arith.constant 0 : index
      %c1_132 = arith.constant 1 : index
      %c0_133 = arith.constant 0 : index
      %162 = vector.load %arg10[%c0_131, %c1_132, %c0_133] : memref<20x18x4xbf16, #tpu.memory_space<vmem>>, vector<2x16x4xbf16>
      tpu.vector_store %arg10[%c0_131, %c1_132, %c0_133], %161 {strides = array<i32>} : memref<20x18x4xbf16, #tpu.memory_space<vmem>>, vector<2x16x4xbf16>,
    } else {
    }
    %c0_i32_10 = arith.constant 0 : i32
    %10 = arith.cmpi eq, %arg1, %c0_i32_10 : i32
    %11 = arith.extui %10 : i1 to i32
    %c0_i32_11 = arith.constant 0 : i32
    %12 = arith.cmpi ne, %11, %c0_i32_11 : i32
    scf.if %12 {
      %cst_127 = arith.constant 0.000000e+00 : bf16
      %159 = vector.broadcast %cst_127 : bf16 to vector<2x16x4xbf16>
      %c0_128 = arith.constant 0 : index
      %c1_129 = arith.constant 1 : index
      %c0_130 = arith.constant 0 : index
      %160 = vector.load %arg10[%c0_128, %c1_129, %c0_130] : memref<20x18x4xbf16, #tpu.memory_space<vmem>>, vector<2x16x4xbf16>
      tpu.vector_store %arg10[%c0_128, %c1_129, %c0_130], %159 {strides = array<i32>} : memref<20x18x4xbf16, #tpu.memory_space<vmem>>, vector<2x16x4xbf16>,
    } else {
    }
    %c0_i32_12 = arith.constant 0 : i32
    %13 = arith.cmpi slt, %arg1, %c0_i32_12 : i32
    %14 = arith.extui %13 : i1 to i32
    %c0_i32_13 = arith.constant 0 : i32
    %15 = arith.cmpi ne, %14, %c0_i32_13 : i32
    scf.if %15 {
      %c0_127 = arith.constant 0 : index
      %c0_128 = arith.constant 0 : index
      %c0_129 = arith.constant 0 : index
      %c0_130 = arith.constant 0 : index
      %159 = vector.load %arg4[%c0_127, %c0_128, %c0_129, %c0_130] : memref<1x2x16x4xf32, #tpu.memory_space<vmem>>, vector<1x2x16x4xf32>
      %160 = vector.shape_cast %159 : vector<1x2x16x4xf32> to vector<2x16x4xf32>
      %161 = arith.truncf %160 : vector<2x16x4xf32> to vector<2x16x4xbf16>
      %c18 = arith.constant 18 : index
      %c1_131 = arith.constant 1 : index
      %c0_132 = arith.constant 0 : index
      %162 = vector.load %arg10[%c18, %c1_131, %c0_132] : memref<20x18x4xbf16, #tpu.memory_space<vmem>>, vector<2x16x4xbf16>
      tpu.vector_store %arg10[%c18, %c1_131, %c0_132], %161 {strides = array<i32>} : memref<20x18x4xbf16, #tpu.memory_space<vmem>>, vector<2x16x4xbf16>,
    } else {
    }
    %c0_i32_14 = arith.constant 0 : i32
    %16 = arith.cmpi eq, %arg1, %c0_i32_14 : i32
    %17 = arith.extui %16 : i1 to i32
    %c0_i32_15 = arith.constant 0 : i32
    %18 = arith.cmpi ne, %17, %c0_i32_15 : i32
    scf.if %18 {
      %cst_127 = arith.constant 0.000000e+00 : bf16
      %159 = vector.broadcast %cst_127 : bf16 to vector<2x16x4xbf16>
      %c18 = arith.constant 18 : index
      %c1_128 = arith.constant 1 : index
      %c0_129 = arith.constant 0 : index
      %160 = vector.load %arg10[%c18, %c1_128, %c0_129] : memref<20x18x4xbf16, #tpu.memory_space<vmem>>, vector<2x16x4xbf16>
      tpu.vector_store %arg10[%c18, %c1_128, %c0_129], %159 {strides = array<i32>} : memref<20x18x4xbf16, #tpu.memory_space<vmem>>, vector<2x16x4xbf16>,
    } else {
    }
    %c0_16 = arith.constant 0 : index
    %c0_17 = arith.constant 0 : index
    %c0_18 = arith.constant 0 : index
    %19 = vector.load %arg10[%c0_16, %c0_17, %c0_18] : memref<20x18x4xbf16, #tpu.memory_space<vmem>>, vector<20x16x4xbf16>
    %c0_19 = arith.constant 0 : index
    %c1_20 = arith.constant 1 : index
    %c0_21 = arith.constant 0 : index
    %20 = vector.load %arg10[%c0_19, %c1_20, %c0_21] : memref<20x18x4xbf16, #tpu.memory_space<vmem>>, vector<20x16x4xbf16>
    %c0_22 = arith.constant 0 : index
    %c2_23 = arith.constant 2 : index
    %c0_24 = arith.constant 0 : index
    %21 = vector.load %arg10[%c0_22, %c2_23, %c0_24] : memref<20x18x4xbf16, #tpu.memory_space<vmem>>, vector<20x16x4xbf16>
    %22 = vector.extract_strided_slice %19 {offsets = [0, 0, 0], sizes = [18, 16, 4], strides = [1, 1, 1]} : vector<20x16x4xbf16> to vector<18x16x4xbf16>
    %23 = vector.shape_cast %22 : vector<18x16x4xbf16> to vector<288x4xbf16>
    %c0_25 = arith.constant 0 : index
    %c0_26 = arith.constant 0 : index
    %c0_27 = arith.constant 0 : index
    %24 = vector.load %arg5[%c0_25, %c0_26, %c0_27] : memref<9x4x4xbf16, #tpu.memory_space<vmem>>, vector<1x4x4xbf16>
    %25 = vector.shape_cast %24 : vector<1x4x4xbf16> to vector<4x4xbf16>
    %cst_28 = arith.constant dense<0.000000e+00> : vector<288x4xf32>
    %26 = tpu.matmul %23, %25, %cst_28 {dimension_numbers = #tpu.dot_dimension_numbers<[1], [0], [0], [1], [0, 0, 1, 1], [], []>} : vector<288x4xbf16>, vector<4x4xbf16>, vector<288x4xf32> -> vector<288x4xf32>
    %27 = vector.extract_strided_slice %20 {offsets = [0, 0, 0], sizes = [18, 16, 4], strides = [1, 1, 1]} : vector<20x16x4xbf16> to vector<18x16x4xbf16>
    %28 = vector.shape_cast %27 : vector<18x16x4xbf16> to vector<288x4xbf16>
    %c1_29 = arith.constant 1 : index
    %c0_30 = arith.constant 0 : index
    %c0_31 = arith.constant 0 : index
    %29 = vector.load %arg5[%c1_29, %c0_30, %c0_31] : memref<9x4x4xbf16, #tpu.memory_space<vmem>>, vector<1x4x4xbf16>
    %30 = vector.shape_cast %29 : vector<1x4x4xbf16> to vector<4x4xbf16>
    %cst_32 = arith.constant dense<0.000000e+00> : vector<288x4xf32>
    %31 = tpu.matmul %28, %30, %cst_32 {dimension_numbers = #tpu.dot_dimension_numbers<[1], [0], [0], [1], [0, 0, 1, 1], [], []>} : vector<288x4xbf16>, vector<4x4xbf16>, vector<288x4xf32> -> vector<288x4xf32>
    %32 = arith.addf %26, %31 : vector<288x4xf32>
    %33 = vector.extract_strided_slice %21 {offsets = [0, 0, 0], sizes = [18, 16, 4], strides = [1, 1, 1]} : vector<20x16x4xbf16> to vector<18x16x4xbf16>
    %34 = vector.shape_cast %33 : vector<18x16x4xbf16> to vector<288x4xbf16>
    %c2_33 = arith.constant 2 : index
    %c0_34 = arith.constant 0 : index
    %c0_35 = arith.constant 0 : index
    %35 = vector.load %arg5[%c2_33, %c0_34, %c0_35] : memref<9x4x4xbf16, #tpu.memory_space<vmem>>, vector<1x4x4xbf16>
    %36 = vector.shape_cast %35 : vector<1x4x4xbf16> to vector<4x4xbf16>
    %cst_36 = arith.constant dense<0.000000e+00> : vector<288x4xf32>
    %37 = tpu.matmul %34, %36, %cst_36 {dimension_numbers = #tpu.dot_dimension_numbers<[1], [0], [0], [1], [0, 0, 1, 1], [], []>} : vector<288x4xbf16>, vector<4x4xbf16>, vector<288x4xf32> -> vector<288x4xf32>
    %38 = arith.addf %32, %37 : vector<288x4xf32>
    %39 = vector.extract_strided_slice %19 {offsets = [1, 0, 0], sizes = [18, 16, 4], strides = [1, 1, 1]} : vector<20x16x4xbf16> to vector<18x16x4xbf16>
    %40 = vector.shape_cast %39 : vector<18x16x4xbf16> to vector<288x4xbf16>
    %c3 = arith.constant 3 : index
    %c0_37 = arith.constant 0 : index
    %c0_38 = arith.constant 0 : index
    %41 = vector.load %arg5[%c3, %c0_37, %c0_38] : memref<9x4x4xbf16, #tpu.memory_space<vmem>>, vector<1x4x4xbf16>
    %42 = vector.shape_cast %41 : vector<1x4x4xbf16> to vector<4x4xbf16>
    %cst_39 = arith.constant dense<0.000000e+00> : vector<288x4xf32>
    %43 = tpu.matmul %40, %42, %cst_39 {dimension_numbers = #tpu.dot_dimension_numbers<[1], [0], [0], [1], [0, 0, 1, 1], [], []>} : vector<288x4xbf16>, vector<4x4xbf16>, vector<288x4xf32> -> vector<288x4xf32>
    %44 = arith.addf %38, %43 : vector<288x4xf32>
    %45 = vector.extract_strided_slice %20 {offsets = [1, 0, 0], sizes = [18, 16, 4], strides = [1, 1, 1]} : vector<20x16x4xbf16> to vector<18x16x4xbf16>
    %46 = vector.shape_cast %45 : vector<18x16x4xbf16> to vector<288x4xbf16>
    %c4 = arith.constant 4 : index
    %c0_40 = arith.constant 0 : index
    %c0_41 = arith.constant 0 : index
    %47 = vector.load %arg5[%c4, %c0_40, %c0_41] : memref<9x4x4xbf16, #tpu.memory_space<vmem>>, vector<1x4x4xbf16>
    %48 = vector.shape_cast %47 : vector<1x4x4xbf16> to vector<4x4xbf16>
    %cst_42 = arith.constant dense<0.000000e+00> : vector<288x4xf32>
    %49 = tpu.matmul %46, %48, %cst_42 {dimension_numbers = #tpu.dot_dimension_numbers<[1], [0], [0], [1], [0, 0, 1, 1], [], []>} : vector<288x4xbf16>, vector<4x4xbf16>, vector<288x4xf32> -> vector<288x4xf32>
    %50 = arith.addf %44, %49 : vector<288x4xf32>
    %51 = vector.extract_strided_slice %21 {offsets = [1, 0, 0], sizes = [18, 16, 4], strides = [1, 1, 1]} : vector<20x16x4xbf16> to vector<18x16x4xbf16>
    %52 = vector.shape_cast %51 : vector<18x16x4xbf16> to vector<288x4xbf16>
    %c5 = arith.constant 5 : index
    %c0_43 = arith.constant 0 : index
    %c0_44 = arith.constant 0 : index
    %53 = vector.load %arg5[%c5, %c0_43, %c0_44] : memref<9x4x4xbf16, #tpu.memory_space<vmem>>, vector<1x4x4xbf16>
    %54 = vector.shape_cast %53 : vector<1x4x4xbf16> to vector<4x4xbf16>
    %cst_45 = arith.constant dense<0.000000e+00> : vector<288x4xf32>
    %55 = tpu.matmul %52, %54, %cst_45 {dimension_numbers = #tpu.dot_dimension_numbers<[1], [0], [0], [1], [0, 0, 1, 1], [], []>} : vector<288x4xbf16>, vector<4x4xbf16>, vector<288x4xf32> -> vector<288x4xf32>
    %56 = arith.addf %50, %55 : vector<288x4xf32>
    %57 = vector.extract_strided_slice %19 {offsets = [2, 0, 0], sizes = [18, 16, 4], strides = [1, 1, 1]} : vector<20x16x4xbf16> to vector<18x16x4xbf16>
    %58 = vector.shape_cast %57 : vector<18x16x4xbf16> to vector<288x4xbf16>
    %c6 = arith.constant 6 : index
    %c0_46 = arith.constant 0 : index
    %c0_47 = arith.constant 0 : index
    %59 = vector.load %arg5[%c6, %c0_46, %c0_47] : memref<9x4x4xbf16, #tpu.memory_space<vmem>>, vector<1x4x4xbf16>
    %60 = vector.shape_cast %59 : vector<1x4x4xbf16> to vector<4x4xbf16>
    %cst_48 = arith.constant dense<0.000000e+00> : vector<288x4xf32>
    %61 = tpu.matmul %58, %60, %cst_48 {dimension_numbers = #tpu.dot_dimension_numbers<[1], [0], [0], [1], [0, 0, 1, 1], [], []>} : vector<288x4xbf16>, vector<4x4xbf16>, vector<288x4xf32> -> vector<288x4xf32>
    %62 = arith.addf %56, %61 : vector<288x4xf32>
    %63 = vector.extract_strided_slice %20 {offsets = [2, 0, 0], sizes = [18, 16, 4], strides = [1, 1, 1]} : vector<20x16x4xbf16> to vector<18x16x4xbf16>
    %64 = vector.shape_cast %63 : vector<18x16x4xbf16> to vector<288x4xbf16>
    %c7 = arith.constant 7 : index
    %c0_49 = arith.constant 0 : index
    %c0_50 = arith.constant 0 : index
    %65 = vector.load %arg5[%c7, %c0_49, %c0_50] : memref<9x4x4xbf16, #tpu.memory_space<vmem>>, vector<1x4x4xbf16>
    %66 = vector.shape_cast %65 : vector<1x4x4xbf16> to vector<4x4xbf16>
    %cst_51 = arith.constant dense<0.000000e+00> : vector<288x4xf32>
    %67 = tpu.matmul %64, %66, %cst_51 {dimension_numbers = #tpu.dot_dimension_numbers<[1], [0], [0], [1], [0, 0, 1, 1], [], []>} : vector<288x4xbf16>, vector<4x4xbf16>, vector<288x4xf32> -> vector<288x4xf32>
    %68 = arith.addf %62, %67 : vector<288x4xf32>
    %69 = vector.extract_strided_slice %21 {offsets = [2, 0, 0], sizes = [18, 16, 4], strides = [1, 1, 1]} : vector<20x16x4xbf16> to vector<18x16x4xbf16>
    %70 = vector.shape_cast %69 : vector<18x16x4xbf16> to vector<288x4xbf16>
    %c8 = arith.constant 8 : index
    %c0_52 = arith.constant 0 : index
    %c0_53 = arith.constant 0 : index
    %71 = vector.load %arg5[%c8, %c0_52, %c0_53] : memref<9x4x4xbf16, #tpu.memory_space<vmem>>, vector<1x4x4xbf16>
    %72 = vector.shape_cast %71 : vector<1x4x4xbf16> to vector<4x4xbf16>
    %cst_54 = arith.constant dense<0.000000e+00> : vector<288x4xf32>
    %73 = tpu.matmul %70, %72, %cst_54 {dimension_numbers = #tpu.dot_dimension_numbers<[1], [0], [0], [1], [0, 0, 1, 1], [], []>} : vector<288x4xbf16>, vector<4x4xbf16>, vector<288x4xf32> -> vector<288x4xf32>
    %74 = arith.addf %68, %73 : vector<288x4xf32>
    %c0_55 = arith.constant 0 : index
    %c0_56 = arith.constant 0 : index
    %75 = vector.load %arg6[%c0_55, %c0_56] : memref<1x4xf32, #tpu.memory_space<vmem>>, vector<1x4xf32>
    %76 = vector.broadcast %75 : vector<1x4xf32> to vector<288x4xf32>
    %77 = arith.addf %74, %76 : vector<288x4xf32>
    %cst_57 = arith.constant 0.000000e+00 : f32
    %78 = vector.broadcast %cst_57 : f32 to vector<288x4xf32>
    %79 = arith.maximumf %77, %78 : vector<288x4xf32>
    %cst_58 = arith.constant 0.000000e+00 : bf16
    %80 = vector.broadcast %cst_58 : bf16 to vector<18x1x4xbf16>
    %c0_59 = arith.constant 0 : index
    %c0_60 = arith.constant 0 : index
    %c0_61 = arith.constant 0 : index
    %81 = vector.load %arg11[%c0_59, %c0_60, %c0_61] : memref<18x18x4xbf16, #tpu.memory_space<vmem>>, vector<18x1x4xbf16>
    tpu.vector_store %arg11[%c0_59, %c0_60, %c0_61], %80 {strides = array<i32>} : memref<18x18x4xbf16, #tpu.memory_space<vmem>>, vector<18x1x4xbf16>,
    %c0_62 = arith.constant 0 : index
    %c17_63 = arith.constant 17 : index
    %c0_64 = arith.constant 0 : index
    %82 = vector.load %arg11[%c0_62, %c17_63, %c0_64] : memref<18x18x4xbf16, #tpu.memory_space<vmem>>, vector<18x1x4xbf16>
    tpu.vector_store %arg11[%c0_62, %c17_63, %c0_64], %80 {strides = array<i32>} : memref<18x18x4xbf16, #tpu.memory_space<vmem>>, vector<18x1x4xbf16>,
    %83 = vector.shape_cast %79 : vector<288x4xf32> to vector<18x16x4xf32>
    %84 = arith.truncf %83 : vector<18x16x4xf32> to vector<18x16x4xbf16>
    %c0_65 = arith.constant 0 : index
    %c1_66 = arith.constant 1 : index
    %c0_67 = arith.constant 0 : index
    %85 = vector.load %arg11[%c0_65, %c1_66, %c0_67] : memref<18x18x4xbf16, #tpu.memory_space<vmem>>, vector<18x16x4xbf16>
    tpu.vector_store %arg11[%c0_65, %c1_66, %c0_67], %84 {strides = array<i32>} : memref<18x18x4xbf16, #tpu.memory_space<vmem>>, vector<18x16x4xbf16>,
    %c0_i32_68 = arith.constant 0 : i32
    %86 = arith.cmpi eq, %arg1, %c0_i32_68 : i32
    %87 = arith.extui %86 : i1 to i32
    %c0_i32_69 = arith.constant 0 : i32
    %88 = arith.cmpi ne, %87, %c0_i32_69 : i32
    scf.if %88 {
      %cst_127 = arith.constant 0.000000e+00 : bf16
      %159 = vector.broadcast %cst_127 : bf16 to vector<1x18x4xbf16>
      %c0_128 = arith.constant 0 : index
      %c0_129 = arith.constant 0 : index
      %c0_130 = arith.constant 0 : index
      %160 = vector.load %arg11[%c0_128, %c0_129, %c0_130] : memref<18x18x4xbf16, #tpu.memory_space<vmem>>, vector<1x18x4xbf16>
      tpu.vector_store %arg11[%c0_128, %c0_129, %c0_130], %159 {strides = array<i32>} : memref<18x18x4xbf16, #tpu.memory_space<vmem>>, vector<1x18x4xbf16>,
    } else {
    }
    %c0_i32_70 = arith.constant 0 : i32
    %89 = arith.cmpi eq, %arg1, %c0_i32_70 : i32
    %90 = arith.extui %89 : i1 to i32
    %c0_i32_71 = arith.constant 0 : i32
    %91 = arith.cmpi ne, %90, %c0_i32_71 : i32
    scf.if %91 {
      %cst_127 = arith.constant 0.000000e+00 : bf16
      %159 = vector.broadcast %cst_127 : bf16 to vector<1x18x4xbf16>
      %c17_128 = arith.constant 17 : index
      %c0_129 = arith.constant 0 : index
      %c0_130 = arith.constant 0 : index
      %160 = vector.load %arg11[%c17_128, %c0_129, %c0_130] : memref<18x18x4xbf16, #tpu.memory_space<vmem>>, vector<1x18x4xbf16>
      tpu.vector_store %arg11[%c17_128, %c0_129, %c0_130], %159 {strides = array<i32>} : memref<18x18x4xbf16, #tpu.memory_space<vmem>>, vector<1x18x4xbf16>,
    } else {
    }
    %c0_72 = arith.constant 0 : index
    %c0_73 = arith.constant 0 : index
    %c0_74 = arith.constant 0 : index
    %92 = vector.load %arg11[%c0_72, %c0_73, %c0_74] : memref<18x18x4xbf16, #tpu.memory_space<vmem>>, vector<18x16x4xbf16>
    %c0_75 = arith.constant 0 : index
    %c1_76 = arith.constant 1 : index
    %c0_77 = arith.constant 0 : index
    %93 = vector.load %arg11[%c0_75, %c1_76, %c0_77] : memref<18x18x4xbf16, #tpu.memory_space<vmem>>, vector<18x16x4xbf16>
    %c0_78 = arith.constant 0 : index
    %c2_79 = arith.constant 2 : index
    %c0_80 = arith.constant 0 : index
    %94 = vector.load %arg11[%c0_78, %c2_79, %c0_80] : memref<18x18x4xbf16, #tpu.memory_space<vmem>>, vector<18x16x4xbf16>
    %95 = vector.extract_strided_slice %92 {offsets = [0, 0, 0], sizes = [16, 16, 4], strides = [1, 1, 1]} : vector<18x16x4xbf16> to vector<16x16x4xbf16>
    %96 = vector.shape_cast %95 : vector<16x16x4xbf16> to vector<256x4xbf16>
    %c0_81 = arith.constant 0 : index
    %c0_82 = arith.constant 0 : index
    %c0_83 = arith.constant 0 : index
    %97 = vector.load %arg7[%c0_81, %c0_82, %c0_83] : memref<9x4x4xbf16, #tpu.memory_space<vmem>>, vector<1x4x4xbf16>
    %98 = vector.shape_cast %97 : vector<1x4x4xbf16> to vector<4x4xbf16>
    %cst_84 = arith.constant dense<0.000000e+00> : vector<256x4xf32>
    %99 = tpu.matmul %96, %98, %cst_84 {dimension_numbers = #tpu.dot_dimension_numbers<[1], [0], [0], [1], [0, 0, 1, 1], [], []>} : vector<256x4xbf16>, vector<4x4xbf16>, vector<256x4xf32> -> vector<256x4xf32>
    %100 = vector.extract_strided_slice %93 {offsets = [0, 0, 0], sizes = [16, 16, 4], strides = [1, 1, 1]} : vector<18x16x4xbf16> to vector<16x16x4xbf16>
    %101 = vector.shape_cast %100 : vector<16x16x4xbf16> to vector<256x4xbf16>
    %c1_85 = arith.constant 1 : index
    %c0_86 = arith.constant 0 : index
    %c0_87 = arith.constant 0 : index
    %102 = vector.load %arg7[%c1_85, %c0_86, %c0_87] : memref<9x4x4xbf16, #tpu.memory_space<vmem>>, vector<1x4x4xbf16>
    %103 = vector.shape_cast %102 : vector<1x4x4xbf16> to vector<4x4xbf16>
    %cst_88 = arith.constant dense<0.000000e+00> : vector<256x4xf32>
    %104 = tpu.matmul %101, %103, %cst_88 {dimension_numbers = #tpu.dot_dimension_numbers<[1], [0], [0], [1], [0, 0, 1, 1], [], []>} : vector<256x4xbf16>, vector<4x4xbf16>, vector<256x4xf32> -> vector<256x4xf32>
    %105 = arith.addf %99, %104 : vector<256x4xf32>
    %106 = vector.extract_strided_slice %94 {offsets = [0, 0, 0], sizes = [16, 16, 4], strides = [1, 1, 1]} : vector<18x16x4xbf16> to vector<16x16x4xbf16>
    %107 = vector.shape_cast %106 : vector<16x16x4xbf16> to vector<256x4xbf16>
    %c2_89 = arith.constant 2 : index
    %c0_90 = arith.constant 0 : index
    %c0_91 = arith.constant 0 : index
    %108 = vector.load %arg7[%c2_89, %c0_90, %c0_91] : memref<9x4x4xbf16, #tpu.memory_space<vmem>>, vector<1x4x4xbf16>
    %109 = vector.shape_cast %108 : vector<1x4x4xbf16> to vector<4x4xbf16>
    %cst_92 = arith.constant dense<0.000000e+00> : vector<256x4xf32>
    %110 = tpu.matmul %107, %109, %cst_92 {dimension_numbers = #tpu.dot_dimension_numbers<[1], [0], [0], [1], [0, 0, 1, 1], [], []>} : vector<256x4xbf16>, vector<4x4xbf16>, vector<256x4xf32> -> vector<256x4xf32>
    %111 = arith.addf %105, %110 : vector<256x4xf32>
    %112 = vector.extract_strided_slice %92 {offsets = [1, 0, 0], sizes = [16, 16, 4], strides = [1, 1, 1]} : vector<18x16x4xbf16> to vector<16x16x4xbf16>
    %113 = vector.shape_cast %112 : vector<16x16x4xbf16> to vector<256x4xbf16>
    %c3_93 = arith.constant 3 : index
    %c0_94 = arith.constant 0 : index
    %c0_95 = arith.constant 0 : index
    %114 = vector.load %arg7[%c3_93, %c0_94, %c0_95] : memref<9x4x4xbf16, #tpu.memory_space<vmem>>, vector<1x4x4xbf16>
    %115 = vector.shape_cast %114 : vector<1x4x4xbf16> to vector<4x4xbf16>
    %cst_96 = arith.constant dense<0.000000e+00> : vector<256x4xf32>
    %116 = tpu.matmul %113, %115, %cst_96 {dimension_numbers = #tpu.dot_dimension_numbers<[1], [0], [0], [1], [0, 0, 1, 1], [], []>} : vector<256x4xbf16>, vector<4x4xbf16>, vector<256x4xf32> -> vector<256x4xf32>
    %117 = arith.addf %111, %116 : vector<256x4xf32>
    %118 = vector.extract_strided_slice %93 {offsets = [1, 0, 0], sizes = [16, 16, 4], strides = [1, 1, 1]} : vector<18x16x4xbf16> to vector<16x16x4xbf16>
    %119 = vector.shape_cast %118 : vector<16x16x4xbf16> to vector<256x4xbf16>
    %c4_97 = arith.constant 4 : index
    %c0_98 = arith.constant 0 : index
    %c0_99 = arith.constant 0 : index
    %120 = vector.load %arg7[%c4_97, %c0_98, %c0_99] : memref<9x4x4xbf16, #tpu.memory_space<vmem>>, vector<1x4x4xbf16>
    %121 = vector.shape_cast %120 : vector<1x4x4xbf16> to vector<4x4xbf16>
    %cst_100 = arith.constant dense<0.000000e+00> : vector<256x4xf32>
    %122 = tpu.matmul %119, %121, %cst_100 {dimension_numbers = #tpu.dot_dimension_numbers<[1], [0], [0], [1], [0, 0, 1, 1], [], []>} : vector<256x4xbf16>, vector<4x4xbf16>, vector<256x4xf32> -> vector<256x4xf32>
    %123 = arith.addf %117, %122 : vector<256x4xf32>
    %124 = vector.extract_strided_slice %94 {offsets = [1, 0, 0], sizes = [16, 16, 4], strides = [1, 1, 1]} : vector<18x16x4xbf16> to vector<16x16x4xbf16>
    %125 = vector.shape_cast %124 : vector<16x16x4xbf16> to vector<256x4xbf16>
    %c5_101 = arith.constant 5 : index
    %c0_102 = arith.constant 0 : index
    %c0_103 = arith.constant 0 : index
    %126 = vector.load %arg7[%c5_101, %c0_102, %c0_103] : memref<9x4x4xbf16, #tpu.memory_space<vmem>>, vector<1x4x4xbf16>
    %127 = vector.shape_cast %126 : vector<1x4x4xbf16> to vector<4x4xbf16>
    %cst_104 = arith.constant dense<0.000000e+00> : vector<256x4xf32>
    %128 = tpu.matmul %125, %127, %cst_104 {dimension_numbers = #tpu.dot_dimension_numbers<[1], [0], [0], [1], [0, 0, 1, 1], [], []>} : vector<256x4xbf16>, vector<4x4xbf16>, vector<256x4xf32> -> vector<256x4xf32>
    %129 = arith.addf %123, %128 : vector<256x4xf32>
    %130 = vector.extract_strided_slice %92 {offsets = [2, 0, 0], sizes = [16, 16, 4], strides = [1, 1, 1]} : vector<18x16x4xbf16> to vector<16x16x4xbf16>
    %131 = vector.shape_cast %130 : vector<16x16x4xbf16> to vector<256x4xbf16>
    %c6_105 = arith.constant 6 : index
    %c0_106 = arith.constant 0 : index
    %c0_107 = arith.constant 0 : index
    %132 = vector.load %arg7[%c6_105, %c0_106, %c0_107] : memref<9x4x4xbf16, #tpu.memory_space<vmem>>, vector<1x4x4xbf16>
    %133 = vector.shape_cast %132 : vector<1x4x4xbf16> to vector<4x4xbf16>
    %cst_108 = arith.constant dense<0.000000e+00> : vector<256x4xf32>
    %134 = tpu.matmul %131, %133, %cst_108 {dimension_numbers = #tpu.dot_dimension_numbers<[1], [0], [0], [1], [0, 0, 1, 1], [], []>} : vector<256x4xbf16>, vector<4x4xbf16>, vector<256x4xf32> -> vector<256x4xf32>
    %135 = arith.addf %129, %134 : vector<256x4xf32>
    %136 = vector.extract_strided_slice %93 {offsets = [2, 0, 0], sizes = [16, 16, 4], strides = [1, 1, 1]} : vector<18x16x4xbf16> to vector<16x16x4xbf16>
    %137 = vector.shape_cast %136 : vector<16x16x4xbf16> to vector<256x4xbf16>
    %c7_109 = arith.constant 7 : index
    %c0_110 = arith.constant 0 : index
    %c0_111 = arith.constant 0 : index
    %138 = vector.load %arg7[%c7_109, %c0_110, %c0_111] : memref<9x4x4xbf16, #tpu.memory_space<vmem>>, vector<1x4x4xbf16>
    %139 = vector.shape_cast %138 : vector<1x4x4xbf16> to vector<4x4xbf16>
    %cst_112 = arith.constant dense<0.000000e+00> : vector<256x4xf32>
    %140 = tpu.matmul %137, %139, %cst_112 {dimension_numbers = #tpu.dot_dimension_numbers<[1], [0], [0], [1], [0, 0, 1, 1], [], []>} : vector<256x4xbf16>, vector<4x4xbf16>, vector<256x4xf32> -> vector<256x4xf32>
    %141 = arith.addf %135, %140 : vector<256x4xf32>
    %142 = vector.extract_strided_slice %94 {offsets = [2, 0, 0], sizes = [16, 16, 4], strides = [1, 1, 1]} : vector<18x16x4xbf16> to vector<16x16x4xbf16>
    %143 = vector.shape_cast %142 : vector<16x16x4xbf16> to vector<256x4xbf16>
    %c8_113 = arith.constant 8 : index
    %c0_114 = arith.constant 0 : index
    %c0_115 = arith.constant 0 : index
    %144 = vector.load %arg7[%c8_113, %c0_114, %c0_115] : memref<9x4x4xbf16, #tpu.memory_space<vmem>>, vector<1x4x4xbf16>
    %145 = vector.shape_cast %144 : vector<1x4x4xbf16> to vector<4x4xbf16>
    %cst_116 = arith.constant dense<0.000000e+00> : vector<256x4xf32>
    %146 = tpu.matmul %143, %145, %cst_116 {dimension_numbers = #tpu.dot_dimension_numbers<[1], [0], [0], [1], [0, 0, 1, 1], [], []>} : vector<256x4xbf16>, vector<4x4xbf16>, vector<256x4xf32> -> vector<256x4xf32>
    %147 = arith.addf %141, %146 : vector<256x4xf32>
    %c0_117 = arith.constant 0 : index
    %c0_118 = arith.constant 0 : index
    %148 = vector.load %arg8[%c0_117, %c0_118] : memref<1x4xf32, #tpu.memory_space<vmem>>, vector<1x4xf32>
    %149 = vector.broadcast %148 : vector<1x4xf32> to vector<256x4xf32>
    %150 = arith.addf %147, %149 : vector<256x4xf32>
    %c0_119 = arith.constant 0 : index
    %c0_120 = arith.constant 0 : index
    %c0_121 = arith.constant 0 : index
    %c0_122 = arith.constant 0 : index
    %151 = vector.load %arg2[%c0_119, %c0_120, %c0_121, %c0_122] : memref<1x16x16x4xf32, #tpu.memory_space<vmem>>, vector<1x16x16x4xf32>
    %152 = vector.shape_cast %151 : vector<1x16x16x4xf32> to vector<16x16x4xf32>
    %153 = vector.shape_cast %152 : vector<16x16x4xf32> to vector<256x4xf32>
    %154 = arith.addf %150, %153 : vector<256x4xf32>
    %155 = vector.shape_cast %154 : vector<256x4xf32> to vector<16x16x4xf32>
    %c0_123 = arith.constant 0 : index
    %c0_124 = arith.constant 0 : index
    %c0_125 = arith.constant 0 : index
    %c0_126 = arith.constant 0 : index
    %156 = vector.load %arg9[%c0_123, %c0_124, %c0_125, %c0_126] : memref<1x16x16x4xf32, #tpu.memory_space<vmem>>, vector<1x16x16x4xf32>
    %157 = vector.shape_cast %156 : vector<1x16x16x4xf32> to vector<16x16x4xf32>
    %158 = vector.shape_cast %155 : vector<16x16x4xf32> to vector<1x16x16x4xf32>
    tpu.vector_store %arg9[%c0_123, %c0_124, %c0_125, %c0_126], %158 {strides = array<i32>} : memref<1x16x16x4xf32, #tpu.memory_space<vmem>>, vector<1x16x16x4xf32>,
    return
  }
  func.func @transform_0(%arg0: i32, %arg1: i32) -> (i32, i32, i32, i32) {
    %c0_i32 = arith.constant 0 : i32
    %c0_i32_0 = arith.constant 0 : i32
    %c0_i32_1 = arith.constant 0 : i32
    return %arg0, %arg1, %c0_i32, %c0_i32_0 : i32, i32, i32, i32
  }
  func.func @transform_1(%arg0: i32, %arg1: i32) -> (i32, i32, i32, i32) {
    %c8_i32 = arith.constant 8 : i32
    %0 = arith.muli %arg1, %c8_i32 : i32
    %c1_i32 = arith.constant 1 : i32
    %1 = arith.subi %0, %c1_i32 : i32
    %c0_i32 = arith.constant 0 : i32
    %2 = arith.maxsi %1, %c0_i32 : i32
    %c0_i32_0 = arith.constant 0 : i32
    %c0_i32_1 = arith.constant 0 : i32
    %c0_i32_2 = arith.constant 0 : i32
    return %arg0, %2, %c0_i32_0, %c0_i32_1 : i32, i32, i32, i32
  }
  func.func @transform_2(%arg0: i32, %arg1: i32) -> (i32, i32, i32, i32) {
    %c1_i32 = arith.constant 1 : i32
    %0 = arith.addi %arg1, %c1_i32 : i32
    %c8_i32 = arith.constant 8 : i32
    %1 = arith.muli %0, %c8_i32 : i32
    %c7_i32 = arith.constant 7 : i32
    %2 = arith.minsi %1, %c7_i32 : i32
    %c0_i32 = arith.constant 0 : i32
    %c0_i32_0 = arith.constant 0 : i32
    %c0_i32_1 = arith.constant 0 : i32
    return %arg0, %2, %c0_i32, %c0_i32_0 : i32, i32, i32, i32
  }
  func.func @transform_3(%arg0: i32, %arg1: i32) -> (i32, i32, i32) {
    %c0_i32 = arith.constant 0 : i32
    %c0_i32_0 = arith.constant 0 : i32
    %c0_i32_1 = arith.constant 0 : i32
    %c0_i32_2 = arith.constant 0 : i32
    return %c0_i32, %c0_i32_0, %c0_i32_1 : i32, i32, i32
  }
  func.func @transform_4(%arg0: i32, %arg1: i32) -> (i32, i32) {
    %c0_i32 = arith.constant 0 : i32
    %c0_i32_0 = arith.constant 0 : i32
    %c0_i32_1 = arith.constant 0 : i32
    return %c0_i32, %c0_i32_0 : i32, i32
  }
  func.func @transform_5(%arg0: i32, %arg1: i32) -> (i32, i32, i32) {
    %c0_i32 = arith.constant 0 : i32
    %c0_i32_0 = arith.constant 0 : i32
    %c0_i32_1 = arith.constant 0 : i32
    %c0_i32_2 = arith.constant 0 : i32
    return %c0_i32, %c0_i32_0, %c0_i32_1 : i32, i32, i32
  }
  func.func @transform_6(%arg0: i32, %arg1: i32) -> (i32, i32) {
    %c0_i32 = arith.constant 0 : i32
    %c0_i32_0 = arith.constant 0 : i32
    %c0_i32_1 = arith.constant 0 : i32
    return %c0_i32, %c0_i32_0 : i32, i32
  }
  func.func @transform_7(%arg0: i32, %arg1: i32) -> (i32, i32, i32, i32) {
    %c0_i32 = arith.constant 0 : i32
    %c0_i32_0 = arith.constant 0 : i32
    %c0_i32_1 = arith.constant 0 : i32
    return %arg0, %arg1, %c0_i32, %c0_i32_0 : i32, i32, i32, i32
  }
}

</mosaic_0001>

<llo_original>
// kernel: tpu_custom_call.1
$region0: #{tpu_custom_call.1}
  #allocation0 [shape = 'u32[]', space=smem, size = 0x4, offset = 0x4, fixed_abs, tag = 'smem constant byte address 0x4 - core index']
  #allocation1 [shape = 'u32[144,128]{1,0:T(1,128)}', space=vmem, size = 0x12000, scoped, tag = 'internal scratch']
  #allocation2 [shape = 'bf16[20,18,4]{2,1,0:T(8,128)(2,1)}', space=vmem, size = 0x1e000, scoped, tag = 'scratch operand']
  #allocation3 [shape = 'bf16[18,18,4]{2,1,0:T(8,128)(2,1)}', space=vmem, size = 0x1b000, scoped, tag = 'scratch operand']
  %s0 = inlined_call_operand.vmem [shape: f32[2,16,16,4], index: 0, kind: input, shape index: {}]
  %s1 = inlined_call_operand.vmem [shape: f32[2,16,16,4], index: 1, kind: input, shape index: {}]
  %s2 = inlined_call_operand.vmem [shape: f32[2,16,16,4], index: 2, kind: input, shape index: {}]
  %s3 = inlined_call_operand.vmem [shape: bf16[9,4,4], index: 3, kind: input, shape index: {}]
  %s4 = inlined_call_operand.vmem [shape: f32[1,4], index: 4, kind: input, shape index: {}]
  %s5 = inlined_call_operand.vmem [shape: bf16[9,4,4], index: 5, kind: input, shape index: {}]
  %s6 = inlined_call_operand.vmem [shape: f32[1,4], index: 6, kind: input, shape index: {}]
  %s7 = inlined_call_operand.vmem [shape: f32[2,16,16,4], index: 7, kind: output, shape index: {}]
  %s8 = sld [smem:[#allocation0]]
  $region81: #{tpu_custom_call.1} parent=0
    _
  %s10 = ssub.s32 1, %s8
  %s11 = scalar_select 0, %s10, %s8
  loop: start=0, step=1, limit=4
  $region2: #{tpu_custom_call.1} parent=0 // loop_pre_header
    _
  $region3: #{tpu_custom_call.1} parent=0 // loop_header
    %s13 = sphi 0, %s17
    %p14 = scmp.ge.s32.totalorder %s13, 4
    %s20 = sphi 0, %s32
    %s21 = sphi 0, %s28
    %s22 = sphi 0, %s20
    %s23 = sphi 0, %s21
    %s24 = sphi 0, %s22
    %s25 = sphi 0, %s23
    %s37 = sphi 0, %s39
    %s40 = sphi 0, %s37
    %s41 = sphi 0, %s40
    %s57 = sphi 0, %s41
    %s73 = sphi 0, %s75
    %s76 = sphi 0, %s73
    %s77 = sphi 0, %s76
    %s93 = sphi 0, %s77
    %s109 = sphi 0, %s111
    %s112 = sphi 0, %s109
    %s113 = sphi 0, %s112
    %s129 = sphi 0, %s113
    %s133 = sphi 0, %s133
    %s135 = sphi 0, %s133
    %s136 = sphi 0, %s135
    %s150 = sphi 0, %s136
    %s154 = sphi 0, %s154
    %s156 = sphi 0, %s154
    %s157 = sphi 0, %s156
    %s171 = sphi 0, %s157
    %s175 = sphi 0, %s175
    %s177 = sphi 0, %s175
    %s178 = sphi 0, %s177
    %s192 = sphi 0, %s178
    %s196 = sphi 0, %s196
    %s198 = sphi 0, %s196
    %s199 = sphi 0, %s198
    %s213 = sphi 0, %s199
    %s221 = sphi 0, %s223
    %s224 = sphi 0, %s221
    %s225 = sphi 0, %s224
    %s241 = sphi 0, %s225
  $region4: #{tpu_custom_call.1} parent=0 // loop_header_branch
    %16 = sbr.rel (%p14) target = $region8
  $region5: #{tpu_custom_call.1} parent=0 // loop_body
    %s18 = ssub.s32 %s13, 1
    %s19 = ssub.s32 %s13, 2
    %s26 = sadd.s32 1, %s21
    %p27 = scmp.ge.s32.totalorder %s26, 1
    %s28 = scalar_select %p27, 0, %s26
    %s29 = sadd.s32 1, %s20
    %s30 = scalar_select %p27, %s29, %s20
    %p31 = scmp.ge.s32.totalorder %s30, 2
    %s32 = scalar_select %p31, 0, %s30
    %s33 = ssub.s32 %s20, %s32
    %s34 = ssub.s32 %s21, %s28
    %s35 = sor.u32 %s33, %s34
    %p36 = scmp.eq.s32.totalorder %s35, 0
    %s38 = sadd.s32 %s37, 1
    %s39 = scalar_select %p36, %s37, %s38
    %p42 = pneg %p36
    %p43 = scmp.eq.s32.totalorder %s13, 1
    %p44 = por %p42, %p43
    %p45 = scmp.ne.s32.totalorder %s37, %s40
    %p46 = scmp.eq.s32.totalorder %s13, 0
    %p47 = por %p45, %p46
    %p48 = scmp.ne.s32.totalorder %s37, %s40
    %p49 = scmp.eq.s32.totalorder %s18, 1
    %p50 = por %p48, %p49
    %p51 = scmp.ne.s32.totalorder %s40, %s41
    %p52 = scmp.eq.s32.totalorder %s18, 0
    %p53 = por %p51, %p52
    %p54 = scmp.ne.s32.totalorder %s40, %s41
    %p55 = scmp.eq.s32.totalorder %s19, 1
    %p56 = por %p54, %p55
    %p58 = scmp.ne.s32.totalorder %s41, %s57
    %p59 = scmp.eq.s32.totalorder %s19, 0
    %p60 = por %p58, %p59
    %s61 = smul.u32 %s21, 8
    %s62 = ssub.s32 %s61, 1
    %p63 = scmp.gt.s32.totalorder %s62, 0
    %s64 = scalar_select %p63, %s62, 0
    %s65 = smul.u32 %s28, 8
    %s66 = ssub.s32 %s65, 1
    %p67 = scmp.gt.s32.totalorder %s66, 0
    %s68 = scalar_select %p67, %s66, 0
    %s69 = ssub.s32 %s20, %s32
    %s70 = ssub.s32 %s64, %s68
    %s71 = sor.u32 %s69, %s70
    %p72 = scmp.eq.s32.totalorder %s71, 0
    %s74 = sadd.s32 %s73, 1
    %s75 = scalar_select %p72, %s73, %s74
    %p78 = pneg %p72
    %p79 = scmp.eq.s32.totalorder %s13, 1
    %p80 = por %p78, %p79
    %p81 = scmp.ne.s32.totalorder %s73, %s76
    %p82 = scmp.eq.s32.totalorder %s13, 0
    %p83 = por %p81, %p82
    %p84 = scmp.ne.s32.totalorder %s73, %s76
    %p85 = scmp.eq.s32.totalorder %s18, 1
    %p86 = por %p84, %p85
    %p87 = scmp.ne.s32.totalorder %s76, %s77
    %p88 = scmp.eq.s32.totalorder %s18, 0
    %p89 = por %p87, %p88
    %p90 = scmp.ne.s32.totalorder %s76, %s77
    %p91 = scmp.eq.s32.totalorder %s19, 1
    %p92 = por %p90, %p91
    %p94 = scmp.ne.s32.totalorder %s77, %s93
    %p95 = scmp.eq.s32.totalorder %s19, 0
    %p96 = por %p94, %p95
    %s97 = sadd.s32 %s21, 1
    %s98 = smul.u32 %s97, 8
    %p99 = scmp.lt.s32.totalorder %s98, 7
    %s100 = scalar_select %p99, %s98, 7
    %s101 = sadd.s32 %s28, 1
    %s102 = smul.u32 %s101, 8
    %p103 = scmp.lt.s32.totalorder %s102, 7
    %s104 = scalar_select %p103, %s102, 7
    %s105 = ssub.s32 %s20, %s32
    %s106 = ssub.s32 %s100, %s104
    %s107 = sor.u32 %s105, %s106
    %p108 = scmp.eq.s32.totalorder %s107, 0
    %s110 = sadd.s32 %s109, 1
    %s111 = scalar_select %p108, %s109, %s110
    %p114 = pneg %p108
    %p115 = scmp.eq.s32.totalorder %s13, 1
    %p116 = por %p114, %p115
    %p117 = scmp.ne.s32.totalorder %s109, %s112
    %p118 = scmp.eq.s32.totalorder %s13, 0
    %p119 = por %p117, %p118
    %p120 = scmp.ne.s32.totalorder %s109, %s112
    %p121 = scmp.eq.s32.totalorder %s18, 1
    %p122 = por %p120, %p121
    %p123 = scmp.ne.s32.totalorder %s112, %s113
    %p124 = scmp.eq.s32.totalorder %s18, 0
    %p125 = por %p123, %p124
    %p126 = scmp.ne.s32.totalorder %s112, %s113
    %p127 = scmp.eq.s32.totalorder %s19, 1
    %p128 = por %p126, %p127
    %p130 = scmp.ne.s32.totalorder %s113, %s129
    %p131 = scmp.eq.s32.totalorder %s19, 0
    %p132 = por %p130, %p131
    %s134 = sadd.s32 %s133, 1
    %p137 = scmp.eq.s32.totalorder %s13, 1
    %p138 = scmp.ne.s32.totalorder %s133, %s135
    %p139 = scmp.eq.s32.totalorder %s13, 0
    %p140 = por %p138, %p139
    %p141 = scmp.ne.s32.totalorder %s133, %s135
    %p142 = scmp.eq.s32.totalorder %s18, 1
    %p143 = por %p141, %p142
    %p144 = scmp.ne.s32.totalorder %s135, %s136
    %p145 = scmp.eq.s32.totalorder %s18, 0
    %p146 = por %p144, %p145
    %p147 = scmp.ne.s32.totalorder %s135, %s136
    %p148 = scmp.eq.s32.totalorder %s19, 1
    %p149 = por %p147, %p148
    %p151 = scmp.ne.s32.totalorder %s136, %s150
    %p152 = scmp.eq.s32.totalorder %s19, 0
    %p153 = por %p151, %p152
    %s155 = sadd.s32 %s154, 1
    %p158 = scmp.eq.s32.totalorder %s13, 1
    %p159 = scmp.ne.s32.totalorder %s154, %s156
    %p160 = scmp.eq.s32.totalorder %s13, 0
    %p161 = por %p159, %p160
    %p162 = scmp.ne.s32.totalorder %s154, %s156
    %p163 = scmp.eq.s32.totalorder %s18, 1
    %p164 = por %p162, %p163
    %p165 = scmp.ne.s32.totalorder %s156, %s157
    %p166 = scmp.eq.s32.totalorder %s18, 0
    %p167 = por %p165, %p166
    %p168 = scmp.ne.s32.totalorder %s156, %s157
    %p169 = scmp.eq.s32.totalorder %s19, 1
    %p170 = por %p168, %p169
    %p172 = scmp.ne.s32.totalorder %s157, %s171
    %p173 = scmp.eq.s32.totalorder %s19, 0
    %p174 = por %p172, %p173
    %s176 = sadd.s32 %s175, 1
    %p179 = scmp.eq.s32.totalorder %s13, 1
    %p180 = scmp.ne.s32.totalorder %s175, %s177
    %p181 = scmp.eq.s32.totalorder %s13, 0
    %p182 = por %p180, %p181
    %p183 = scmp.ne.s32.totalorder %s175, %s177
    %p184 = scmp.eq.s32.totalorder %s18, 1
    %p185 = por %p183, %p184
    %p186 = scmp.ne.s32.totalorder %s177, %s178
    %p187 = scmp.eq.s32.totalorder %s18, 0
    %p188 = por %p186, %p187
    %p189 = scmp.ne.s32.totalorder %s177, %s178
    %p190 = scmp.eq.s32.totalorder %s19, 1
    %p191 = por %p189, %p190
    %p193 = scmp.ne.s32.totalorder %s178, %s192
    %p194 = scmp.eq.s32.totalorder %s19, 0
    %p195 = por %p193, %p194
    %s197 = sadd.s32 %s196, 1
    %p200 = scmp.eq.s32.totalorder %s13, 1
    %p201 = scmp.ne.s32.totalorder %s196, %s198
    %p202 = scmp.eq.s32.totalorder %s13, 0
    %p203 = por %p201, %p202
    %p204 = scmp.ne.s32.totalorder %s196, %s198
    %p205 = scmp.eq.s32.totalorder %s18, 1
    %p206 = por %p204, %p205
    %p207 = scmp.ne.s32.totalorder %s198, %s199
    %p208 = scmp.eq.s32.totalorder %s18, 0
    %p209 = por %p207, %p208
    %p210 = scmp.ne.s32.totalorder %s198, %s199
    %p211 = scmp.eq.s32.totalorder %s19, 1
    %p212 = por %p210, %p211
    %p214 = scmp.ne.s32.totalorder %s199, %s213
    %p215 = scmp.eq.s32.totalorder %s19, 0
    %p216 = por %p214, %p215
    %s217 = ssub.s32 %s20, %s32
    %s218 = ssub.s32 %s21, %s28
    %s219 = sor.u32 %s217, %s218
    %p220 = scmp.eq.s32.totalorder %s219, 0
    %s222 = sadd.s32 %s221, 1
    %s223 = scalar_select %p220, %s221, %s222
    %p226 = pneg %p220
    %p227 = scmp.eq.s32.totalorder %s13, 1
    %p228 = por %p226, %p227
    %p229 = scmp.ne.s32.totalorder %s221, %s224
    %p230 = scmp.eq.s32.totalorder %s13, 0
    %p231 = por %p229, %p230
    %p232 = scmp.ne.s32.totalorder %s221, %s224
    %p233 = scmp.eq.s32.totalorder %s18, 1
    %p234 = por %p232, %p233
    %p235 = scmp.ne.s32.totalorder %s224, %s225
    %p236 = scmp.eq.s32.totalorder %s18, 0
    %p237 = por %p235, %p236
    %p238 = scmp.ne.s32.totalorder %s224, %s225
    %p239 = scmp.eq.s32.totalorder %s19, 1
    %p240 = por %p238, %p239
    %p242 = scmp.ne.s32.totalorder %s225, %s241
    %p243 = scmp.eq.s32.totalorder %s19, 0
    %p244 = por %p242, %p243
    %p245 = scmp.le.s32.totalorder 1, %s13
    %p246 = scmp.lt.s32.totalorder %s13, 3
    %p247 = pnand %p245, %p246
    %p248 = pneg %p247
    // Predicated region
    $region9: #{tpu_custom_call.1} parent=5 // pred_check
      _
    $region10: #{tpu_custom_call.1} parent=5 // pred_check_branch
      %250 = sbr.rel (%p247) target = $region12
    $region11: #{tpu_custom_call.1} parent=5 // pred_region
      %s251 = ssub.s32 %s13, 1
      // Predicated region
      $region13: #{tpu_custom_call.1} parent=11 // pred_check
        %p252 = pneg %p146
      $region14: #{tpu_custom_call.1} parent=11 // pred_check_branch
        %254 = sbr.rel (%p252) target = $region16
      $region15: #{tpu_custom_call.1} parent=11 // pred_region
        _
      $region16: #{tpu_custom_call.1} parent=11 // pred_fallthru
        _
      // Predicated region
      $region17: #{tpu_custom_call.1} parent=11 // pred_check
        %p255 = pneg %p167
      $region18: #{tpu_custom_call.1} parent=11 // pred_check_branch
        %257 = sbr.rel (%p255) target = $region20
      $region19: #{tpu_custom_call.1} parent=11 // pred_region
        _
      $region20: #{tpu_custom_call.1} parent=11 // pred_fallthru
        _
      // Predicated region
      $region21: #{tpu_custom_call.1} parent=11 // pred_check
        %p258 = pneg %p188
      $region22: #{tpu_custom_call.1} parent=11 // pred_check_branch
        %260 = sbr.rel (%p258) target = $region24
      $region23: #{tpu_custom_call.1} parent=11 // pred_region
        _
      $region24: #{tpu_custom_call.1} parent=11 // pred_fallthru
        _
      // Predicated region
      $region25: #{tpu_custom_call.1} parent=11 // pred_check
        %p261 = pneg %p209
      $region26: #{tpu_custom_call.1} parent=11 // pred_check_branch
        %263 = sbr.rel (%p261) target = $region28
      $region27: #{tpu_custom_call.1} parent=11 // pred_region
        _
      $region28: #{tpu_custom_call.1} parent=11 // pred_fallthru
        _
    $region12: #{tpu_custom_call.1} parent=5 // pred_fallthru
      _
    %p264 = scmp.lt.s32.totalorder %s13, 2
    // Predicated region
    $region29: #{tpu_custom_call.1} parent=5 // pred_check
      %p265 = pneg %p264
    $region30: #{tpu_custom_call.1} parent=5 // pred_check_branch
      %267 = sbr.rel (%p265) target = $region32
    $region31: #{tpu_custom_call.1} parent=5 // pred_region
      // Predicated region
      $region33: #{tpu_custom_call.1} parent=31 // pred_check
        %p268 = pneg %p47
      $region34: #{tpu_custom_call.1} parent=31 // pred_check_branch
        %270 = sbr.rel (%p268) target = $region36
      $region35: #{tpu_custom_call.1} parent=31 // pred_region
        %s271 = smul.u32 16, %s21
        %p272 = scmp.lt.s32.totalorder %s20, 1
        %s273 = scalar_select %p272, %s20, 1
        %p274 = scmp.lt.s32.totalorder %s271, 15
        %s275 = scalar_select %p274, %s271, 15
        %s276 = smul.addr %s275, 2
        %s277 = smul.addr %s273, 32
        %s278 = sadd.s32 %s276, %s277
        %s279 = smul.addr %s278, 8
        %s280 = scalar_lea.vmem %s0, %s279
        %s281 = smul.u32 16, %s21
      $region36: #{tpu_custom_call.1} parent=31 // pred_fallthru
        _
      // Predicated region
      $region37: #{tpu_custom_call.1} parent=31 // pred_check
        %p282 = pneg %p83
      $region38: #{tpu_custom_call.1} parent=31 // pred_check_branch
        %284 = sbr.rel (%p282) target = $region40
      $region39: #{tpu_custom_call.1} parent=31 // pred_region
        %s285 = smul.u32 %s21, 8
        %s286 = ssub.s32 %s285, 1
        %p287 = scmp.gt.s32.totalorder %s286, 0
        %s288 = scalar_select %p287, %s286, 0
        %s289 = smul.u32 2, %s288
        %p290 = scmp.lt.s32.totalorder %s20, 1
        %s291 = scalar_select %p290, %s20, 1
        %p292 = scmp.lt.s32.totalorder %s289, 15
        %s293 = scalar_select %p292, %s289, 15
        %s294 = smul.addr %s293, 2
        %s295 = smul.addr %s291, 32
        %s296 = sadd.s32 %s294, %s295
        %s297 = smul.addr %s296, 8
        %s298 = scalar_lea.vmem %s1, %s297
        %s299 = smul.u32 %s21, 8
        %s300 = ssub.s32 %s299, 1
        %p301 = scmp.gt.s32.totalorder %s300, 0
        %s302 = scalar_select %p301, %s300, 0
        %s303 = smul.u32 2, %s302
      $region40: #{tpu_custom_call.1} parent=31 // pred_fallthru
        _
      // Predicated region
      $region41: #{tpu_custom_call.1} parent=31 // pred_check
        %p304 = pneg %p119
      $region42: #{tpu_custom_call.1} parent=31 // pred_check_branch
        %306 = sbr.rel (%p304) target = $region44
      $region43: #{tpu_custom_call.1} parent=31 // pred_region
        %s307 = sadd.s32 %s21, 1
        %s308 = smul.u32 %s307, 8
        %p309 = scmp.lt.s32.totalorder %s308, 7
        %s310 = scalar_select %p309, %s308, 7
        %s311 = smul.u32 2, %s310
        %p312 = scmp.lt.s32.totalorder %s20, 1
        %s313 = scalar_select %p312, %s20, 1
        %p314 = scmp.lt.s32.totalorder %s311, 15
        %s315 = scalar_select %p314, %s311, 15
        %s316 = smul.addr %s315, 2
        %s317 = smul.addr %s313, 32
        %s318 = sadd.s32 %s316, %s317
        %s319 = smul.addr %s318, 8
        %s320 = scalar_lea.vmem %s2, %s319
        %s321 = sadd.s32 %s21, 1
        %s322 = smul.u32 %s321, 8
        %p323 = scmp.lt.s32.totalorder %s322, 7
        %s324 = scalar_select %p323, %s322, 7
        %s325 = smul.u32 2, %s324
      $region44: #{tpu_custom_call.1} parent=31 // pred_fallthru
        _
    $region32: #{tpu_custom_call.1} parent=5 // pred_fallthru
      _
    %p326 = scmp.le.s32.totalorder 1, %s13
    %p327 = scmp.lt.s32.totalorder %s13, 3
    %p328 = pnand %p326, %p327
    %p329 = pneg %p328
    // Predicated region
    $region45: #{tpu_custom_call.1} parent=5 // pred_check
      _
    $region46: #{tpu_custom_call.1} parent=5 // pred_check_branch
      %331 = sbr.rel (%p328) target = $region48
    $region47: #{tpu_custom_call.1} parent=5 // pred_region
      %s332 = ssub.s32 %s13, 1
      %s333 = smul.u32 16, %s23
      %p334 = scmp.lt.s32.totalorder %s22, 1
      %s335 = scalar_select %p334, %s22, 1
      %p336 = scmp.lt.s32.totalorder %s333, 15
      %s337 = scalar_select %p336, %s333, 15
      %s338 = smul.addr %s337, 2
      %s339 = smul.addr %s335, 32
      %s340 = sadd.s32 %s338, %s339
      %s341 = smul.addr %s340, 8
      %s342 = scalar_lea.vmem %s0, %s341
      %p343 = pneg %p53
      %p344 = pneg %p50
      %s345 = smul.u32 %s23, 8
      %s346 = ssub.s32 %s345, 1
      %p347 = scmp.gt.s32.totalorder %s346, 0
      %s348 = scalar_select %p347, %s346, 0
      %s349 = smul.u32 2, %s348
      %p350 = scmp.lt.s32.totalorder %s22, 1
      %s351 = scalar_select %p350, %s22, 1
      %p352 = scmp.lt.s32.totalorder %s349, 15
      %s353 = scalar_select %p352, %s349, 15
      %s354 = smul.addr %s353, 2
      %s355 = smul.addr %s351, 32
      %s356 = sadd.s32 %s354, %s355
      %s357 = smul.addr %s356, 8
      %s358 = scalar_lea.vmem %s1, %s357
      %p359 = pneg %p89
      %p360 = pneg %p86
      %s361 = sadd.s32 %s23, 1
      %s362 = smul.u32 %s361, 8
      %p363 = scmp.lt.s32.totalorder %s362, 7
      %s364 = scalar_select %p363, %s362, 7
      %s365 = smul.u32 2, %s364
      %p366 = scmp.lt.s32.totalorder %s22, 1
      %s367 = scalar_select %p366, %s22, 1
      %p368 = scmp.lt.s32.totalorder %s365, 15
      %s369 = scalar_select %p368, %s365, 15
      %s370 = smul.addr %s369, 2
      %s371 = smul.addr %s367, 32
      %s372 = sadd.s32 %s370, %s371
      %s373 = smul.addr %s372, 8
      %s374 = scalar_lea.vmem %s2, %s373
      %p375 = pneg %p125
      %p376 = pneg %p122
      %p377 = pneg %p146
      %p378 = pneg %p143
      %p379 = pneg %p167
      %p380 = pneg %p164
      %p381 = pneg %p188
      %p382 = pneg %p185
      %p383 = pneg %p209
      %p384 = pneg %p206
      %p385 = pneg %p237
      %p386 = pneg %p234
      %s387 = smul.u32 16, %s23
      %p388 = scmp.lt.s32.totalorder %s22, 1
      %s389 = scalar_select %p388, %s22, 1
      %p390 = scmp.lt.s32.totalorder %s387, 15
      %s391 = scalar_select %p390, %s387, 15
      %s392 = smul.addr %s391, 2
      %s393 = smul.addr %s389, 32
      %s394 = sadd.s32 %s392, %s393
      %s395 = smul.addr %s394, 8
      %s396 = scalar_lea.vmem %s7, %s395
      %s397 = smul.u32 16, %s23
      %p398 = scmp.lt.s32.totalorder %s22, 1
      %s399 = scalar_select %p398, %s22, 1
      %p400 = scmp.lt.s32.totalorder %s397, 15
      %s401 = scalar_select %p400, %s397, 15
      %s402 = smul.addr %s401, 2
      %s403 = smul.addr %s399, 32
      %s404 = sadd.s32 %s402, %s403
      %s405 = smul.addr %s404, 8
      %s406 = scalar_lea.vmem %s0, %s405
      %s407 = smul.u32 16, %s23
      %s408 = smul.u32 %s23, 8
      %s409 = ssub.s32 %s408, 1
      %p410 = scmp.gt.s32.totalorder %s409, 0
      %s411 = scalar_select %p410, %s409, 0
      %s412 = smul.u32 2, %s411
      %p413 = scmp.lt.s32.totalorder %s22, 1
      %s414 = scalar_select %p413, %s22, 1
      %p415 = scmp.lt.s32.totalorder %s412, 15
      %s416 = scalar_select %p415, %s412, 15
      %s417 = smul.addr %s416, 2
      %s418 = smul.addr %s414, 32
      %s419 = sadd.s32 %s417, %s418
      %s420 = smul.addr %s419, 8
      %s421 = scalar_lea.vmem %s1, %s420
      %s422 = smul.u32 %s23, 8
      %s423 = ssub.s32 %s422, 1
      %p424 = scmp.gt.s32.totalorder %s423, 0
      %s425 = scalar_select %p424, %s423, 0
      %s426 = smul.u32 2, %s425
      %s427 = sadd.s32 %s23, 1
      %s428 = smul.u32 %s427, 8
      %p429 = scmp.lt.s32.totalorder %s428, 7
      %s430 = scalar_select %p429, %s428, 7
      %s431 = smul.u32 2, %s430
      %p432 = scmp.lt.s32.totalorder %s22, 1
      %s433 = scalar_select %p432, %s22, 1
      %p434 = scmp.lt.s32.totalorder %s431, 15
      %s435 = scalar_select %p434, %s431, 15
      %s436 = smul.addr %s435, 2
      %s437 = smul.addr %s433, 32
      %s438 = sadd.s32 %s436, %s437
      %s439 = smul.addr %s438, 8
      %s440 = scalar_lea.vmem %s2, %s439
      %s441 = sadd.s32 %s23, 1
      %s442 = smul.u32 %s441, 8
      %p443 = scmp.lt.s32.totalorder %s442, 7
      %s444 = scalar_select %p443, %s442, 7
      %s445 = smul.u32 2, %s444
      %s446 = smul.u32 16, %s23
      %p447 = scmp.lt.s32.totalorder %s22, 1
      %s448 = scalar_select %p447, %s22, 1
      %p449 = scmp.lt.s32.totalorder %s446, 15
      %s450 = scalar_select %p449, %s446, 15
      %s451 = smul.addr %s450, 2
      %s452 = smul.addr %s448, 32
      %s453 = sadd.s32 %s451, %s452
      %s454 = smul.addr %s453, 8
      %s455 = scalar_lea.vmem %s7, %s454
      %s456 = smul.u32 16, %s23
      %vm458 = vcmask 24576
      %vm459 = vsmask.f32 256
      %vm460 = vmand %vm458, %vm459
      %v461 = vld [vmem:[#allocation2] sm:$0x1]
      %v462 = vsel %vm460, 0, %v461
      %463 = vst [vmem:[#allocation2] sm:$0x1] %v462
      %v464 = vld [vmem:[#allocation2 + $0xc] sm:$0x1]
      %v465 = vsel %vm460, 0, %v464
      %466 = vst [vmem:[#allocation2 + $0xc] sm:$0x1] %v465
      %v467 = vld [vmem:[#allocation2 + $0x18] sm:$0x1]
      %v468 = vsel %vm460, 0, %v467
      %469 = vst [vmem:[#allocation2 + $0x18] sm:$0x1] %v468
      %v470 = vld [vmem:[#allocation2 + $0x24] sm:$0x1]
      %v471 = vsel %vm460, 0, %v470
      %472 = vst [vmem:[#allocation2 + $0x24] sm:$0x1] %v471
      %v473 = vld [vmem:[#allocation2 + $0x30] sm:$0x1]
      %v474 = vsel %vm460, 0, %v473
      %475 = vst [vmem:[#allocation2 + $0x30] sm:$0x1] %v474
      %v476 = vld [vmem:[#allocation2 + $0x3c] sm:$0x1]
      %v477 = vsel %vm460, 0, %v476
      %478 = vst [vmem:[#allocation2 + $0x3c] sm:$0x1] %v477
      %v479 = vld [vmem:[#allocation2 + $0x48] sm:$0x1]
      %v480 = vsel %vm460, 0, %v479
      %481 = vst [vmem:[#allocation2 + $0x48] sm:$0x1] %v480
      %v482 = vld [vmem:[#allocation2 + $0x54] sm:$0x1]
      %v483 = vsel %vm460, 0, %v482
      %484 = vst [vmem:[#allocation2 + $0x54] sm:$0x1] %v483
      %v485 = vld [vmem:[#allocation2 + $0x60] sm:$0x1]
      %v486 = vsel %vm460, 0, %v485
      %487 = vst [vmem:[#allocation2 + $0x60] sm:$0x1] %v486
      %v488 = vld [vmem:[#allocation2 + $0x6c] sm:$0x1]
      %v489 = vsel %vm460, 0, %v488
      %490 = vst [vmem:[#allocation2 + $0x6c] sm:$0x1] %v489
      %v491 = vld [vmem:[#allocation2 + $0x78] sm:$0x1]
      %v492 = vsel %vm460, 0, %v491
      %493 = vst [vmem:[#allocation2 + $0x78] sm:$0x1] %v492
      %v494 = vld [vmem:[#allocation2 + $0x84] sm:$0x1]
      %v495 = vsel %vm460, 0, %v494
      %496 = vst [vmem:[#allocation2 + $0x84] sm:$0x1] %v495
      %v497 = vld [vmem:[#allocation2 + $0x90] sm:$0x1]
      %v498 = vsel %vm460, 0, %v497
      %499 = vst [vmem:[#allocation2 + $0x90] sm:$0x1] %v498
      %v500 = vld [vmem:[#allocation2 + $0x9c] sm:$0x1]
      %v501 = vsel %vm460, 0, %v500
      %502 = vst [vmem:[#allocation2 + $0x9c] sm:$0x1] %v501
      %v503 = vld [vmem:[#allocation2 + $0xa8] sm:$0x1]
      %v504 = vsel %vm460, 0, %v503
      %505 = vst [vmem:[#allocation2 + $0xa8] sm:$0x1] %v504
      %v506 = vld [vmem:[#allocation2 + $0xb4] sm:$0x1]
      %v507 = vsel %vm460, 0, %v506
      %508 = vst [vmem:[#allocation2 + $0xb4] sm:$0x1] %v507
      %v509 = vld [vmem:[#allocation2 + $0xc0] sm:$0x1]
      %v510 = vsel %vm460, 0, %v509
      %511 = vst [vmem:[#allocation2 + $0xc0] sm:$0x1] %v510
      %v512 = vld [vmem:[#allocation2 + $0xcc] sm:$0x1]
      %v513 = vsel %vm460, 0, %v512
      %514 = vst [vmem:[#allocation2 + $0xcc] sm:$0x1] %v513
      %v515 = vld [vmem:[#allocation2 + $0xd8] sm:$0x1]
      %v516 = vsel %vm460, 0, %v515
      %517 = vst [vmem:[#allocation2 + $0xd8] sm:$0x1] %v516
      %v518 = vld [vmem:[#allocation2 + $0xe4] sm:$0x1]
      %v519 = vsel %vm460, 0, %v518
      %520 = vst [vmem:[#allocation2 + $0xe4] sm:$0x1] %v519
      %vm521 = vsmask.f32 7938
      %vm522 = vmand %vm458, %vm521
      %v523 = vld [vmem:[#allocation2 + $0x8] sm:$0x1]
      %v524 = vsel %vm522, 0, %v523
      %525 = vst [vmem:[#allocation2 + $0x8] sm:$0x1] %v524
      %v526 = vld [vmem:[#allocation2 + $0x14] sm:$0x1]
      %v527 = vsel %vm522, 0, %v526
      %528 = vst [vmem:[#allocation2 + $0x14] sm:$0x1] %v527
      %v529 = vld [vmem:[#allocation2 + $0x20] sm:$0x1]
      %v530 = vsel %vm522, 0, %v529
      %531 = vst [vmem:[#allocation2 + $0x20] sm:$0x1] %v530
      %v532 = vld [vmem:[#allocation2 + $0x2c] sm:$0x1]
      %v533 = vsel %vm522, 0, %v532
      %534 = vst [vmem:[#allocation2 + $0x2c] sm:$0x1] %v533
      %v535 = vld [vmem:[#allocation2 + $0x38] sm:$0x1]
      %v536 = vsel %vm522, 0, %v535
      %537 = vst [vmem:[#allocation2 + $0x38] sm:$0x1] %v536
      %v538 = vld [vmem:[#allocation2 + $0x44] sm:$0x1]
      %v539 = vsel %vm522, 0, %v538
      %540 = vst [vmem:[#allocation2 + $0x44] sm:$0x1] %v539
      %v541 = vld [vmem:[#allocation2 + $0x50] sm:$0x1]
      %v542 = vsel %vm522, 0, %v541
      %543 = vst [vmem:[#allocation2 + $0x50] sm:$0x1] %v542
      %v544 = vld [vmem:[#allocation2 + $0x5c] sm:$0x1]
      %v545 = vsel %vm522, 0, %v544
      %546 = vst [vmem:[#allocation2 + $0x5c] sm:$0x1] %v545
      %v547 = vld [vmem:[#allocation2 + $0x68] sm:$0x1]
      %v548 = vsel %vm522, 0, %v547
      %549 = vst [vmem:[#allocation2 + $0x68] sm:$0x1] %v548
      %v550 = vld [vmem:[#allocation2 + $0x74] sm:$0x1]
      %v551 = vsel %vm522, 0, %v550
      %552 = vst [vmem:[#allocation2 + $0x74] sm:$0x1] %v551
      %v553 = vld [vmem:[#allocation2 + $0x80] sm:$0x1]
      %v554 = vsel %vm522, 0, %v553
      %555 = vst [vmem:[#allocation2 + $0x80] sm:$0x1] %v554
      %v556 = vld [vmem:[#allocation2 + $0x8c] sm:$0x1]
      %v557 = vsel %vm522, 0, %v556
      %558 = vst [vmem:[#allocation2 + $0x8c] sm:$0x1] %v557
      %v559 = vld [vmem:[#allocation2 + $0x98] sm:$0x1]
      %v560 = vsel %vm522, 0, %v559
      %561 = vst [vmem:[#allocation2 + $0x98] sm:$0x1] %v560
      %v562 = vld [vmem:[#allocation2 + $0xa4] sm:$0x1]
      %v563 = vsel %vm522, 0, %v562
      %564 = vst [vmem:[#allocation2 + $0xa4] sm:$0x1] %v563
      %v565 = vld [vmem:[#allocation2 + $0xb0] sm:$0x1]
      %v566 = vsel %vm522, 0, %v565
      %567 = vst [vmem:[#allocation2 + $0xb0] sm:$0x1] %v566
      %v568 = vld [vmem:[#allocation2 + $0xbc] sm:$0x1]
      %v569 = vsel %vm522, 0, %v568
      %570 = vst [vmem:[#allocation2 + $0xbc] sm:$0x1] %v569
      %v571 = vld [vmem:[#allocation2 + $0xc8] sm:$0x1]
      %v572 = vsel %vm522, 0, %v571
      %573 = vst [vmem:[#allocation2 + $0xc8] sm:$0x1] %v572
      %v574 = vld [vmem:[#allocation2 + $0xd4] sm:$0x1]
      %v575 = vsel %vm522, 0, %v574
      %576 = vst [vmem:[#allocation2 + $0xd4] sm:$0x1] %v575
      %v577 = vld [vmem:[#allocation2 + $0xe0] sm:$0x1]
      %v578 = vsel %vm522, 0, %v577
      %579 = vst [vmem:[#allocation2 + $0xe0] sm:$0x1] %v578
      %v580 = vld [vmem:[#allocation2 + $0xec] sm:$0x1]
      %v581 = vsel %vm522, 0, %v580
      %582 = vst [vmem:[#allocation2 + $0xec] sm:$0x1] %v581
      %v583 = vld [vmem:[%s406] sm:$0xff]
      %v584 = vld [vmem:[%s406 + $0x8] sm:$0xff]
      %v585 = vld [vmem:[%s406 + $0x10] sm:$0xff]
      %v586 = vld [vmem:[%s406 + $0x18] sm:$0xff]
      %v587 = vld [vmem:[%s406 + $0x20] sm:$0xff]
      %v588 = vld [vmem:[%s406 + $0x28] sm:$0xff]
      %v589 = vld [vmem:[%s406 + $0x30] sm:$0xff]
      %v590 = vld [vmem:[%s406 + $0x38] sm:$0xff]
      %v591 = vld [vmem:[%s406 + $0x40] sm:$0xff]
      %v592 = vld [vmem:[%s406 + $0x48] sm:$0xff]
      %v593 = vld [vmem:[%s406 + $0x50] sm:$0xff]
      %v594 = vld [vmem:[%s406 + $0x58] sm:$0xff]
      %v595 = vld [vmem:[%s406 + $0x60] sm:$0xff]
      %v596 = vld [vmem:[%s406 + $0x68] sm:$0xff]
      %v597 = vld [vmem:[%s406 + $0x70] sm:$0xff]
      %v598 = vld [vmem:[%s406 + $0x78] sm:$0xff]
      %v599 = vld [vmem:[%s406 + $0x80] sm:$0xff]
      %v600 = vld [vmem:[%s406 + $0x88] sm:$0xff]
      %v601 = vld [vmem:[%s406 + $0x90] sm:$0xff]
      %v602 = vld [vmem:[%s406 + $0x98] sm:$0xff]
      %v603 = vld [vmem:[%s406 + $0xa0] sm:$0xff]
      %v604 = vld [vmem:[%s406 + $0xa8] sm:$0xff]
      %v605 = vld [vmem:[%s406 + $0xb0] sm:$0xff]
      %v606 = vld [vmem:[%s406 + $0xb8] sm:$0xff]
      %v607 = vld [vmem:[%s406 + $0xc0] sm:$0xff]
      %v608 = vld [vmem:[%s406 + $0xc8] sm:$0xff]
      %v609 = vld [vmem:[%s406 + $0xd0] sm:$0xff]
      %v610 = vld [vmem:[%s406 + $0xd8] sm:$0xff]
      %v611 = vld [vmem:[%s406 + $0xe0] sm:$0xff]
      %v612 = vld [vmem:[%s406 + $0xe8] sm:$0xff]
      %v613 = vld [vmem:[%s406 + $0xf0] sm:$0xff]
      %v614 = vld [vmem:[%s406 + $0xf8] sm:$0xff]
      %v615 = vpack.c.bf16 %v584, %v583
      %v616 = vpack.c.bf16 %v586, %v585
      %v617 = vpack.c.bf16 %v588, %v587
      %v618 = vpack.c.bf16 %v590, %v589
      %v619 = vpack.c.bf16 %v592, %v591
      %v620 = vpack.c.bf16 %v594, %v593
      %v621 = vpack.c.bf16 %v596, %v595
      %v622 = vpack.c.bf16 %v598, %v597
      %v623 = vpack.c.bf16 %v600, %v599
      %v624 = vpack.c.bf16 %v602, %v601
      %v625 = vpack.c.bf16 %v604, %v603
      %v626 = vpack.c.bf16 %v606, %v605
      %v627 = vpack.c.bf16 %v608, %v607
      %v628 = vpack.c.bf16 %v610, %v609
      %v629 = vpack.c.bf16 %v612, %v611
      %v630 = vpack.c.bf16 %v614, %v613
      %v647 = vunpack.c.l.b16 %v615
      %v648 = vunpack.c.h.b16 %v615
      %v649 = vunpack.c.l.b16 %v616
      %v650 = vunpack.c.h.b16 %v616
      %v651 = vunpack.c.l.b16 %v617
      %v652 = vunpack.c.h.b16 %v617
      %v653 = vunpack.c.l.b16 %v618
      %v654 = vunpack.c.h.b16 %v618
      %v655 = vunpack.c.l.b16 %v619
      %v656 = vunpack.c.h.b16 %v619
      %v657 = vunpack.c.l.b16 %v620
      %v658 = vunpack.c.h.b16 %v620
      %v659 = vunpack.c.l.b16 %v621
      %v660 = vunpack.c.h.b16 %v621
      %v661 = vunpack.c.l.b16 %v622
      %v662 = vunpack.c.h.b16 %v622
      %v663 = vunpack.c.l.b16 %v623
      %v664 = vunpack.c.h.b16 %v623
      %v665 = vunpack.c.l.b16 %v624
      %v666 = vunpack.c.h.b16 %v624
      %v667 = vunpack.c.l.b16 %v625
      %v668 = vunpack.c.h.b16 %v625
      %v669 = vunpack.c.l.b16 %v626
      %v670 = vunpack.c.h.b16 %v626
      %v671 = vunpack.c.l.b16 %v627
      %v672 = vunpack.c.h.b16 %v627
      %v673 = vunpack.c.l.b16 %v628
      %v674 = vunpack.c.h.b16 %v628
      %v675 = vunpack.c.l.b16 %v629
      %v676 = vunpack.c.h.b16 %v629
      %v677 = vunpack.c.l.b16 %v630
      %v678 = vunpack.c.h.b16 %v630
      %v679 = vpack.c.b16 %v647, %v647
      %v680 = vpack.c.b16 %v648, %v648
      %v681 = vpack.c.b16 %v649, %v649
      %v682 = vpack.c.b16 %v650, %v650
      %v683 = vpack.c.b16 %v651, %v651
      %v684 = vpack.c.b16 %v652, %v652
      %v685 = vpack.c.b16 %v653, %v653
      %v686 = vpack.c.b16 %v654, %v654
      %v687 = vpack.c.b16 %v655, %v655
      %v688 = vpack.c.b16 %v656, %v656
      %v689 = vpack.c.b16 %v657, %v657
      %v690 = vpack.c.b16 %v658, %v658
      %v691 = vpack.c.b16 %v659, %v659
      %v692 = vpack.c.b16 %v660, %v660
      %v693 = vpack.c.b16 %v661, %v661
      %v694 = vpack.c.b16 %v662, %v662
      %v695 = vpack.c.b16 %v663, %v663
      %v696 = vpack.c.b16 %v664, %v664
      %v697 = vpack.c.b16 %v665, %v665
      %v698 = vpack.c.b16 %v666, %v666
      %v699 = vpack.c.b16 %v667, %v667
      %v700 = vpack.c.b16 %v668, %v668
      %v701 = vpack.c.b16 %v669, %v669
      %v702 = vpack.c.b16 %v670, %v670
      %v703 = vpack.c.b16 %v671, %v671
      %v704 = vpack.c.b16 %v672, %v672
      %v705 = vpack.c.b16 %v673, %v673
      %v706 = vpack.c.b16 %v674, %v674
      %v707 = vpack.c.b16 %v675, %v675
      %v708 = vpack.c.b16 %v676, %v676
      %v709 = vpack.c.b16 %v677, %v677
      %v710 = vpack.c.b16 %v678, %v678
      %vm711 = vsmask.f32 4368
      %vm712 = vmor %vm459, %vm711
      %v714 = vshrl.u32 %v679, 16
      %v716 = vrot.slane %v714, 7
      %v717 = vshll.u32 %v679, 16
      %v719 = vor.u32 %v716, %v717
      %v720 = vrot.slane %v716, 4
      %v722 = vshrl.u32 %v680, 16
      %v724 = vrot.slane %v722, 7
      %v725 = vshll.u32 %v680, 16
      %v727 = vor.u32 %v724, %v725
      %v728 = vsel %vm712, %v720, %v727
      %v729 = vrot.slane %v724, 4
      %v731 = vshrl.u32 %v681, 16
      %v733 = vrot.slane %v731, 7
      %v734 = vshll.u32 %v681, 16
      %v736 = vor.u32 %v733, %v734
      %v737 = vrot.slane %v733, 4
      %v739 = vshrl.u32 %v682, 16
      %v741 = vrot.slane %v739, 7
      %v742 = vshll.u32 %v682, 16
      %v744 = vor.u32 %v741, %v742
      %v745 = vsel %vm712, %v737, %v744
      %v746 = vrot.slane %v741, 4
      %v748 = vshrl.u32 %v683, 16
      %v750 = vrot.slane %v748, 7
      %v751 = vshll.u32 %v683, 16
      %v753 = vor.u32 %v750, %v751
      %v754 = vrot.slane %v750, 4
      %v756 = vshrl.u32 %v684, 16
      %v758 = vrot.slane %v756, 7
      %v759 = vshll.u32 %v684, 16
      %v761 = vor.u32 %v758, %v759
      %v762 = vsel %vm712, %v754, %v761
      %v763 = vrot.slane %v758, 4
      %v765 = vshrl.u32 %v685, 16
      %v767 = vrot.slane %v765, 7
      %v768 = vshll.u32 %v685, 16
      %v770 = vor.u32 %v767, %v768
      %v771 = vrot.slane %v767, 4
      %v773 = vshrl.u32 %v686, 16
      %v775 = vrot.slane %v773, 7
      %v776 = vshll.u32 %v686, 16
      %v778 = vor.u32 %v775, %v776
      %v779 = vsel %vm712, %v771, %v778
      %v780 = vrot.slane %v775, 4
      %v782 = vshrl.u32 %v687, 16
      %v784 = vrot.slane %v782, 7
      %v785 = vshll.u32 %v687, 16
      %v787 = vor.u32 %v784, %v785
      %v788 = vrot.slane %v784, 4
      %v790 = vshrl.u32 %v688, 16
      %v792 = vrot.slane %v790, 7
      %v793 = vshll.u32 %v688, 16
      %v795 = vor.u32 %v792, %v793
      %v796 = vsel %vm712, %v788, %v795
      %v797 = vrot.slane %v792, 4
      %v799 = vshrl.u32 %v689, 16
      %v801 = vrot.slane %v799, 7
      %v802 = vshll.u32 %v689, 16
      %v804 = vor.u32 %v801, %v802
      %v805 = vrot.slane %v801, 4
      %v807 = vshrl.u32 %v690, 16
      %v809 = vrot.slane %v807, 7
      %v810 = vshll.u32 %v690, 16
      %v812 = vor.u32 %v809, %v810
      %v813 = vsel %vm712, %v805, %v812
      %v814 = vrot.slane %v809, 4
      %v816 = vshrl.u32 %v691, 16
      %v818 = vrot.slane %v816, 7
      %v819 = vshll.u32 %v691, 16
      %v821 = vor.u32 %v818, %v819
      %v822 = vrot.slane %v818, 4
      %v824 = vshrl.u32 %v692, 16
      %v826 = vrot.slane %v824, 7
      %v827 = vshll.u32 %v692, 16
      %v829 = vor.u32 %v826, %v827
      %v830 = vsel %vm712, %v822, %v829
      %v831 = vrot.slane %v826, 4
      %v833 = vshrl.u32 %v693, 16
      %v835 = vrot.slane %v833, 7
      %v836 = vshll.u32 %v693, 16
      %v838 = vor.u32 %v835, %v836
      %v839 = vrot.slane %v835, 4
      %v841 = vshrl.u32 %v694, 16
      %v843 = vrot.slane %v841, 7
      %v844 = vshll.u32 %v694, 16
      %v846 = vor.u32 %v843, %v844
      %v847 = vsel %vm712, %v839, %v846
      %v848 = vrot.slane %v843, 4
      %v850 = vshrl.u32 %v695, 16
      %v852 = vrot.slane %v850, 7
      %v853 = vshll.u32 %v695, 16
      %v855 = vor.u32 %v852, %v853
      %v856 = vrot.slane %v852, 4
      %v858 = vshrl.u32 %v696, 16
      %v860 = vrot.slane %v858, 7
      %v861 = vshll.u32 %v696, 16
      %v863 = vor.u32 %v860, %v861
      %v864 = vsel %vm712, %v856, %v863
      %v865 = vrot.slane %v860, 4
      %v867 = vshrl.u32 %v697, 16
      %v869 = vrot.slane %v867, 7
      %v870 = vshll.u32 %v697, 16
      %v872 = vor.u32 %v869, %v870
      %v873 = vrot.slane %v869, 4
      %v875 = vshrl.u32 %v698, 16
      %v877 = vrot.slane %v875, 7
      %v878 = vshll.u32 %v698, 16
      %v880 = vor.u32 %v877, %v878
      %v881 = vsel %vm712, %v873, %v880
      %v882 = vrot.slane %v877, 4
      %v884 = vshrl.u32 %v699, 16
      %v886 = vrot.slane %v884, 7
      %v887 = vshll.u32 %v699, 16
      %v889 = vor.u32 %v886, %v887
      %v890 = vrot.slane %v886, 4
      %v892 = vshrl.u32 %v700, 16
      %v894 = vrot.slane %v892, 7
      %v895 = vshll.u32 %v700, 16
      %v897 = vor.u32 %v894, %v895
      %v898 = vsel %vm712, %v890, %v897
      %v899 = vrot.slane %v894, 4
      %v901 = vshrl.u32 %v701, 16
      %v903 = vrot.slane %v901, 7
      %v904 = vshll.u32 %v701, 16
      %v906 = vor.u32 %v903, %v904
      %v907 = vrot.slane %v903, 4
      %v909 = vshrl.u32 %v702, 16
      %v911 = vrot.slane %v909, 7
      %v912 = vshll.u32 %v702, 16
      %v914 = vor.u32 %v911, %v912
      %v915 = vsel %vm712, %v907, %v914
      %v916 = vrot.slane %v911, 4
      %v918 = vshrl.u32 %v703, 16
      %v920 = vrot.slane %v918, 7
      %v921 = vshll.u32 %v703, 16
      %v923 = vor.u32 %v920, %v921
      %v924 = vrot.slane %v920, 4
      %v926 = vshrl.u32 %v704, 16
      %v928 = vrot.slane %v926, 7
      %v929 = vshll.u32 %v704, 16
      %v931 = vor.u32 %v928, %v929
      %v932 = vsel %vm712, %v924, %v931
      %v933 = vrot.slane %v928, 4
      %v935 = vshrl.u32 %v705, 16
      %v937 = vrot.slane %v935, 7
      %v938 = vshll.u32 %v705, 16
      %v940 = vor.u32 %v937, %v938
      %v941 = vrot.slane %v937, 4
      %v943 = vshrl.u32 %v706, 16
      %v945 = vrot.slane %v943, 7
      %v946 = vshll.u32 %v706, 16
      %v948 = vor.u32 %v945, %v946
      %v949 = vsel %vm712, %v941, %v948
      %v950 = vrot.slane %v945, 4
      %v952 = vshrl.u32 %v707, 16
      %v954 = vrot.slane %v952, 7
      %v955 = vshll.u32 %v707, 16
      %v957 = vor.u32 %v954, %v955
      %v958 = vrot.slane %v954, 4
      %v960 = vshrl.u32 %v708, 16
      %v962 = vrot.slane %v960, 7
      %v963 = vshll.u32 %v708, 16
      %v965 = vor.u32 %v962, %v963
      %v966 = vsel %vm712, %v958, %v965
      %v967 = vrot.slane %v962, 4
      %v969 = vshrl.u32 %v709, 16
      %v971 = vrot.slane %v969, 7
      %v972 = vshll.u32 %v709, 16
      %v974 = vor.u32 %v971, %v972
      %v975 = vrot.slane %v971, 4
      %v977 = vshrl.u32 %v710, 16
      %v979 = vrot.slane %v977, 7
      %v980 = vshll.u32 %v710, 16
      %v982 = vor.u32 %v979, %v980
      %v983 = vsel %vm712, %v975, %v982
      %v984 = vrot.slane %v979, 4
      %s1033 = scalar_lea.vmem [#allocation2], 24
      %vm1034 = vcmask 27648
      %vm1035 = vmand %vm1034, %vm521
      %v1036 = vld [vmem:[%s1033] sm:$0xf]
      %v1037 = vsel %vm1035, %v719, %v1036
      %1038 = vst [vmem:[%s1033] sm:$0xf] %v1037
      %vm1039 = vcmask 27648
      %1040 = vst.msk [vmem:[%s1033 + $0x4] sm:$0xf] %vm1039, %v728
      %v1041 = vld [vmem:[%s1033 + $0x8] sm:$0x1]
      %v1042 = vsel %vm460, %v729, %v1041
      %1043 = vst [vmem:[%s1033 + $0x8] sm:$0x1] %v1042
      %v1044 = vld [vmem:[%s1033 + $0xc] sm:$0xf]
      %v1045 = vsel %vm1035, %v736, %v1044
      %1046 = vst [vmem:[%s1033 + $0xc] sm:$0xf] %v1045
      %1047 = vst.msk [vmem:[%s1033 + $0x10] sm:$0xf] %vm1039, %v745
      %v1048 = vld [vmem:[%s1033 + $0x14] sm:$0x1]
      %v1049 = vsel %vm460, %v746, %v1048
      %1050 = vst [vmem:[%s1033 + $0x14] sm:$0x1] %v1049
      %v1051 = vld [vmem:[%s1033 + $0x18] sm:$0xf]
      %v1052 = vsel %vm1035, %v753, %v1051
      %1053 = vst [vmem:[%s1033 + $0x18] sm:$0xf] %v1052
      %1054 = vst.msk [vmem:[%s1033 + $0x1c] sm:$0xf] %vm1039, %v762
      %v1055 = vld [vmem:[%s1033 + $0x20] sm:$0x1]
      %v1056 = vsel %vm460, %v763, %v1055
      %1057 = vst [vmem:[%s1033 + $0x20] sm:$0x1] %v1056
      %v1058 = vld [vmem:[%s1033 + $0x24] sm:$0xf]
      %v1059 = vsel %vm1035, %v770, %v1058
      %1060 = vst [vmem:[%s1033 + $0x24] sm:$0xf] %v1059
      %1061 = vst.msk [vmem:[%s1033 + $0x28] sm:$0xf] %vm1039, %v779
      %v1062 = vld [vmem:[%s1033 + $0x2c] sm:$0x1]
      %v1063 = vsel %vm460, %v780, %v1062
      %1064 = vst [vmem:[%s1033 + $0x2c] sm:$0x1] %v1063
      %v1065 = vld [vmem:[%s1033 + $0x30] sm:$0xf]
      %v1066 = vsel %vm1035, %v787, %v1065
      %1067 = vst [vmem:[%s1033 + $0x30] sm:$0xf] %v1066
      %1068 = vst.msk [vmem:[%s1033 + $0x34] sm:$0xf] %vm1039, %v796
      %v1069 = vld [vmem:[%s1033 + $0x38] sm:$0x1]
      %v1070 = vsel %vm460, %v797, %v1069
      %1071 = vst [vmem:[%s1033 + $0x38] sm:$0x1] %v1070
      %v1072 = vld [vmem:[%s1033 + $0x3c] sm:$0xf]
      %v1073 = vsel %vm1035, %v804, %v1072
      %1074 = vst [vmem:[%s1033 + $0x3c] sm:$0xf] %v1073
      %1075 = vst.msk [vmem:[%s1033 + $0x40] sm:$0xf] %vm1039, %v813
      %v1076 = vld [vmem:[%s1033 + $0x44] sm:$0x1]
      %v1077 = vsel %vm460, %v814, %v1076
      %1078 = vst [vmem:[%s1033 + $0x44] sm:$0x1] %v1077
      %v1079 = vld [vmem:[%s1033 + $0x48] sm:$0xf]
      %v1080 = vsel %vm1035, %v821, %v1079
      %1081 = vst [vmem:[%s1033 + $0x48] sm:$0xf] %v1080
      %1082 = vst.msk [vmem:[%s1033 + $0x4c] sm:$0xf] %vm1039, %v830
      %v1083 = vld [vmem:[%s1033 + $0x50] sm:$0x1]
      %v1084 = vsel %vm460, %v831, %v1083
      %1085 = vst [vmem:[%s1033 + $0x50] sm:$0x1] %v1084
      %v1086 = vld [vmem:[%s1033 + $0x54] sm:$0xf]
      %v1087 = vsel %vm1035, %v838, %v1086
      %1088 = vst [vmem:[%s1033 + $0x54] sm:$0xf] %v1087
      %1089 = vst.msk [vmem:[%s1033 + $0x58] sm:$0xf] %vm1039, %v847
      %v1090 = vld [vmem:[%s1033 + $0x5c] sm:$0x1]
      %v1091 = vsel %vm460, %v848, %v1090
      %1092 = vst [vmem:[%s1033 + $0x5c] sm:$0x1] %v1091
      %v1093 = vld [vmem:[%s1033 + $0x60] sm:$0xf]
      %v1094 = vsel %vm1035, %v855, %v1093
      %1095 = vst [vmem:[%s1033 + $0x60] sm:$0xf] %v1094
      %1096 = vst.msk [vmem:[%s1033 + $0x64] sm:$0xf] %vm1039, %v864
      %v1097 = vld [vmem:[%s1033 + $0x68] sm:$0x1]
      %v1098 = vsel %vm460, %v865, %v1097
      %1099 = vst [vmem:[%s1033 + $0x68] sm:$0x1] %v1098
      %v1100 = vld [vmem:[%s1033 + $0x6c] sm:$0xf]
      %v1101 = vsel %vm1035, %v872, %v1100
      %1102 = vst [vmem:[%s1033 + $0x6c] sm:$0xf] %v1101
      %1103 = vst.msk [vmem:[%s1033 + $0x70] sm:$0xf] %vm1039, %v881
      %v1104 = vld [vmem:[%s1033 + $0x74] sm:$0x1]
      %v1105 = vsel %vm460, %v882, %v1104
      %1106 = vst [vmem:[%s1033 + $0x74] sm:$0x1] %v1105
      %v1107 = vld [vmem:[%s1033 + $0x78] sm:$0xf]
      %v1108 = vsel %vm1035, %v889, %v1107
      %1109 = vst [vmem:[%s1033 + $0x78] sm:$0xf] %v1108
      %1110 = vst.msk [vmem:[%s1033 + $0x7c] sm:$0xf] %vm1039, %v898
      %v1111 = vld [vmem:[%s1033 + $0x80] sm:$0x1]
      %v1112 = vsel %vm460, %v899, %v1111
      %1113 = vst [vmem:[%s1033 + $0x80] sm:$0x1] %v1112
      %v1114 = vld [vmem:[%s1033 + $0x84] sm:$0xf]
      %v1115 = vsel %vm1035, %v906, %v1114
      %1116 = vst [vmem:[%s1033 + $0x84] sm:$0xf] %v1115
      %1117 = vst.msk [vmem:[%s1033 + $0x88] sm:$0xf] %vm1039, %v915
      %v1118 = vld [vmem:[%s1033 + $0x8c] sm:$0x1]
      %v1119 = vsel %vm460, %v916, %v1118
      %1120 = vst [vmem:[%s1033 + $0x8c] sm:$0x1] %v1119
      %v1121 = vld [vmem:[%s1033 + $0x90] sm:$0xf]
      %v1122 = vsel %vm1035, %v923, %v1121
      %1123 = vst [vmem:[%s1033 + $0x90] sm:$0xf] %v1122
      %1124 = vst.msk [vmem:[%s1033 + $0x94] sm:$0xf] %vm1039, %v932
      %v1125 = vld [vmem:[%s1033 + $0x98] sm:$0x1]
      %v1126 = vsel %vm460, %v933, %v1125
      %1127 = vst [vmem:[%s1033 + $0x98] sm:$0x1] %v1126
      %v1128 = vld [vmem:[%s1033 + $0x9c] sm:$0xf]
      %v1129 = vsel %vm1035, %v940, %v1128
      %1130 = vst [vmem:[%s1033 + $0x9c] sm:$0xf] %v1129
      %1131 = vst.msk [vmem:[%s1033 + $0xa0] sm:$0xf] %vm1039, %v949
      %v1132 = vld [vmem:[%s1033 + $0xa4] sm:$0x1]
      %v1133 = vsel %vm460, %v950, %v1132
      %1134 = vst [vmem:[%s1033 + $0xa4] sm:$0x1] %v1133
      %v1135 = vld [vmem:[%s1033 + $0xa8] sm:$0xf]
      %v1136 = vsel %vm1035, %v957, %v1135
      %1137 = vst [vmem:[%s1033 + $0xa8] sm:$0xf] %v1136
      %1138 = vst.msk [vmem:[%s1033 + $0xac] sm:$0xf] %vm1039, %v966
      %v1139 = vld [vmem:[%s1033 + $0xb0] sm:$0x1]
      %v1140 = vsel %vm460, %v967, %v1139
      %1141 = vst [vmem:[%s1033 + $0xb0] sm:$0x1] %v1140
      %v1142 = vld [vmem:[%s1033 + $0xb4] sm:$0xf]
      %v1143 = vsel %vm1035, %v974, %v1142
      %1144 = vst [vmem:[%s1033 + $0xb4] sm:$0xf] %v1143
      %1145 = vst.msk [vmem:[%s1033 + $0xb8] sm:$0xf] %vm1039, %v983
      %v1146 = vld [vmem:[%s1033 + $0xbc] sm:$0x1]
      %v1147 = vsel %vm460, %v984, %v1146
      %1148 = vst [vmem:[%s1033 + $0xbc] sm:$0x1] %v1147
      %p1149 = scmp.gt.s32.totalorder %s23, 0
      // Predicated region
      $region49: #{tpu_custom_call.1} parent=47 // pred_check
        %p1150 = pneg %p1149
      $region50: #{tpu_custom_call.1} parent=47 // pred_check_branch
        %1152 = sbr.rel (%p1150) target = $region52
      $region51: #{tpu_custom_call.1} parent=47 // pred_region
        %v1153 = vld [vmem:[%s421] sm:$0xff]
        %v1154 = vld [vmem:[%s421 + $0x8] sm:$0xff]
        %v1155 = vld [vmem:[%s421 + $0x10] sm:$0xff]
        %v1156 = vld [vmem:[%s421 + $0x18] sm:$0xff]
        %v1157 = vpack.c.bf16 %v1154, %v1153
        %v1158 = vpack.c.bf16 %v1156, %v1155
        %v1161 = vunpack.c.l.b16 %v1157
        %v1162 = vunpack.c.h.b16 %v1157
        %v1163 = vunpack.c.l.b16 %v1158
        %v1164 = vunpack.c.h.b16 %v1158
        %v1165 = vpack.c.b16 %v1161, %v1161
        %v1166 = vpack.c.b16 %v1162, %v1162
        %v1167 = vpack.c.b16 %v1163, %v1163
        %v1168 = vpack.c.b16 %v1164, %v1164
        %v1170 = vshrl.u32 %v1165, 16
        %v1172 = vrot.slane %v1170, 7
        %v1173 = vshll.u32 %v1165, 16
        %v1175 = vor.u32 %v1172, %v1173
        %v1176 = vrot.slane %v1172, 4
        %v1178 = vshrl.u32 %v1166, 16
        %v1180 = vrot.slane %v1178, 7
        %v1181 = vshll.u32 %v1166, 16
        %v1183 = vor.u32 %v1180, %v1181
        %v1184 = vsel %vm712, %v1176, %v1183
        %v1185 = vrot.slane %v1180, 4
        %v1187 = vshrl.u32 %v1167, 16
        %v1189 = vrot.slane %v1187, 7
        %v1190 = vshll.u32 %v1167, 16
        %v1192 = vor.u32 %v1189, %v1190
        %v1193 = vrot.slane %v1189, 4
        %v1195 = vshrl.u32 %v1168, 16
        %v1197 = vrot.slane %v1195, 7
        %v1198 = vshll.u32 %v1168, 16
        %v1200 = vor.u32 %v1197, %v1198
        %v1201 = vsel %vm712, %v1193, %v1200
        %v1202 = vrot.slane %v1197, 4
        %v1209 = vld [vmem:[#allocation2] sm:$0xf]
        %v1210 = vsel %vm1035, %v1175, %v1209
        %1211 = vst [vmem:[#allocation2] sm:$0xf] %v1210
        %1212 = vst.msk [vmem:[#allocation2 + $0x4] sm:$0xf] %vm1039, %v1184
        %v1213 = vld [vmem:[#allocation2 + $0x8] sm:$0x1]
        %v1214 = vsel %vm460, %v1185, %v1213
        %1215 = vst [vmem:[#allocation2 + $0x8] sm:$0x1] %v1214
        %v1216 = vld [vmem:[#allocation2 + $0xc] sm:$0xf]
        %v1217 = vsel %vm1035, %v1192, %v1216
        %1218 = vst [vmem:[#allocation2 + $0xc] sm:$0xf] %v1217
        %1219 = vst.msk [vmem:[#allocation2 + $0x10] sm:$0xf] %vm1039, %v1201
        %v1220 = vld [vmem:[#allocation2 + $0x14] sm:$0x1]
        %v1221 = vsel %vm460, %v1202, %v1220
        %1222 = vst [vmem:[#allocation2 + $0x14] sm:$0x1] %v1221
      $region52: #{tpu_custom_call.1} parent=47 // pred_fallthru
        _
      %p1223 = scmp.eq.s32.totalorder %s23, 0
      // Predicated region
      $region53: #{tpu_custom_call.1} parent=47 // pred_check
        %p1224 = pneg %p1223
      $region54: #{tpu_custom_call.1} parent=47 // pred_check_branch
        %1226 = sbr.rel (%p1224) target = $region56
      $region55: #{tpu_custom_call.1} parent=47 // pred_region
        %v1227 = vld [vmem:[#allocation2] sm:$0xf]
        %v1228 = vsel %vm1035, 0, %v1227
        %1229 = vst [vmem:[#allocation2] sm:$0xf] %v1228
        %1230 = vst.msk [vmem:[#allocation2 + $0x4] sm:$0xf] %vm1039, 0
        %v1231 = vld [vmem:[#allocation2 + $0x8] sm:$0x1]
        %v1232 = vsel %vm460, 0, %v1231
        %1233 = vst [vmem:[#allocation2 + $0x8] sm:$0x1] %v1232
        %v1234 = vld [vmem:[#allocation2 + $0xc] sm:$0xf]
        %v1235 = vsel %vm1035, 0, %v1234
        %1236 = vst [vmem:[#allocation2 + $0xc] sm:$0xf] %v1235
        %1237 = vst.msk [vmem:[#allocation2 + $0x10] sm:$0xf] %vm1039, 0
        %v1238 = vld [vmem:[#allocation2 + $0x14] sm:$0x1]
        %v1239 = vsel %vm460, 0, %v1238
        %1240 = vst [vmem:[#allocation2 + $0x14] sm:$0x1] %v1239
      $region56: #{tpu_custom_call.1} parent=47 // pred_fallthru
        _
      %p1241 = scmp.lt.s32.totalorder %s23, 0
      // Predicated region
      $region57: #{tpu_custom_call.1} parent=47 // pred_check
        %p1242 = pneg %p1241
      $region58: #{tpu_custom_call.1} parent=47 // pred_check_branch
        %1244 = sbr.rel (%p1242) target = $region60
      $region59: #{tpu_custom_call.1} parent=47 // pred_region
        %v1245 = vld [vmem:[%s440] sm:$0xff]
        %v1246 = vld [vmem:[%s440 + $0x8] sm:$0xff]
        %v1247 = vld [vmem:[%s440 + $0x10] sm:$0xff]
        %v1248 = vld [vmem:[%s440 + $0x18] sm:$0xff]
        %v1249 = vpack.c.bf16 %v1246, %v1245
        %v1250 = vpack.c.bf16 %v1248, %v1247
        %v1253 = vunpack.c.l.b16 %v1249
        %v1254 = vunpack.c.h.b16 %v1249
        %v1255 = vunpack.c.l.b16 %v1250
        %v1256 = vunpack.c.h.b16 %v1250
        %v1257 = vpack.c.b16 %v1253, %v1253
        %v1258 = vpack.c.b16 %v1254, %v1254
        %v1259 = vpack.c.b16 %v1255, %v1255
        %v1260 = vpack.c.b16 %v1256, %v1256
        %v1262 = vshrl.u32 %v1257, 16
        %v1264 = vrot.slane %v1262, 7
        %v1265 = vshll.u32 %v1257, 16
        %v1267 = vor.u32 %v1264, %v1265
        %v1268 = vrot.slane %v1264, 4
        %v1270 = vshrl.u32 %v1258, 16
        %v1272 = vrot.slane %v1270, 7
        %v1273 = vshll.u32 %v1258, 16
        %v1275 = vor.u32 %v1272, %v1273
        %v1276 = vsel %vm712, %v1268, %v1275
        %v1277 = vrot.slane %v1272, 4
        %v1279 = vshrl.u32 %v1259, 16
        %v1281 = vrot.slane %v1279, 7
        %v1282 = vshll.u32 %v1259, 16
        %v1284 = vor.u32 %v1281, %v1282
        %v1285 = vrot.slane %v1281, 4
        %v1287 = vshrl.u32 %v1260, 16
        %v1289 = vrot.slane %v1287, 7
        %v1290 = vshll.u32 %v1260, 16
        %v1292 = vor.u32 %v1289, %v1290
        %v1293 = vsel %vm712, %v1285, %v1292
        %v1294 = vrot.slane %v1289, 4
        %s1301 = scalar_lea.vmem [#allocation2], 216
        %v1302 = vld [vmem:[%s1301] sm:$0xf]
        %v1303 = vsel %vm1035, %v1267, %v1302
        %1304 = vst [vmem:[%s1301] sm:$0xf] %v1303
        %1305 = vst.msk [vmem:[%s1301 + $0x4] sm:$0xf] %vm1039, %v1276
        %v1306 = vld [vmem:[%s1301 + $0x8] sm:$0x1]
        %v1307 = vsel %vm460, %v1277, %v1306
        %1308 = vst [vmem:[%s1301 + $0x8] sm:$0x1] %v1307
        %v1309 = vld [vmem:[%s1301 + $0xc] sm:$0xf]
        %v1310 = vsel %vm1035, %v1284, %v1309
        %1311 = vst [vmem:[%s1301 + $0xc] sm:$0xf] %v1310
        %1312 = vst.msk [vmem:[%s1301 + $0x10] sm:$0xf] %vm1039, %v1293
        %v1313 = vld [vmem:[%s1301 + $0x14] sm:$0x1]
        %v1314 = vsel %vm460, %v1294, %v1313
        %1315 = vst [vmem:[%s1301 + $0x14] sm:$0x1] %v1314
      $region60: #{tpu_custom_call.1} parent=47 // pred_fallthru
        _
      // Predicated region
      $region61: #{tpu_custom_call.1} parent=47 // pred_check
        %p1316 = pneg %p1223
      $region62: #{tpu_custom_call.1} parent=47 // pred_check_branch
        %1318 = sbr.rel (%p1316) target = $region64
      $region63: #{tpu_custom_call.1} parent=47 // pred_region
        %s1319 = scalar_lea.vmem [#allocation2], 216
        %v1320 = vld [vmem:[%s1319] sm:$0xf]
        %v1321 = vsel %vm1035, 0, %v1320
        %1322 = vst [vmem:[%s1319] sm:$0xf] %v1321
        %1323 = vst.msk [vmem:[%s1319 + $0x4] sm:$0xf] %vm1039, 0
        %v1324 = vld [vmem:[%s1319 + $0x8] sm:$0x1]
        %v1325 = vsel %vm460, 0, %v1324
        %1326 = vst [vmem:[%s1319 + $0x8] sm:$0x1] %v1325
        %v1327 = vld [vmem:[%s1319 + $0xc] sm:$0xf]
        %v1328 = vsel %vm1035, 0, %v1327
        %1329 = vst [vmem:[%s1319 + $0xc] sm:$0xf] %v1328
        %1330 = vst.msk [vmem:[%s1319 + $0x10] sm:$0xf] %vm1039, 0
        %v1331 = vld [vmem:[%s1319 + $0x14] sm:$0x1]
        %v1332 = vsel %vm460, 0, %v1331
        %1333 = vst [vmem:[%s1319 + $0x14] sm:$0x1] %v1332
      $region64: #{tpu_custom_call.1} parent=47 // pred_fallthru
        _
      %v1334 = vld [vmem:[#allocation2] sm:$0xf]
      %v1335 = vld [vmem:[#allocation2 + $0x4] sm:$0xf]
      %v1336 = vld [vmem:[#allocation2 + $0xc] sm:$0xf]
      %v1337 = vld [vmem:[#allocation2 + $0x10] sm:$0xf]
      %v1338 = vld [vmem:[#allocation2 + $0x18] sm:$0xf]
      %v1339 = vld [vmem:[#allocation2 + $0x1c] sm:$0xf]
      %v1340 = vld [vmem:[#allocation2 + $0x24] sm:$0xf]
      %v1341 = vld [vmem:[#allocation2 + $0x28] sm:$0xf]
      %v1342 = vld [vmem:[#allocation2 + $0x30] sm:$0xf]
      %v1343 = vld [vmem:[#allocation2 + $0x34] sm:$0xf]
      %v1344 = vld [vmem:[#allocation2 + $0x3c] sm:$0xf]
      %v1345 = vld [vmem:[#allocation2 + $0x40] sm:$0xf]
      %v1346 = vld [vmem:[#allocation2 + $0x48] sm:$0xf]
      %v1347 = vld [vmem:[#allocation2 + $0x4c] sm:$0xf]
      %v1348 = vld [vmem:[#allocation2 + $0x54] sm:$0xf]
      %v1349 = vld [vmem:[#allocation2 + $0x58] sm:$0xf]
      %v1350 = vld [vmem:[#allocation2 + $0x60] sm:$0xf]
      %v1351 = vld [vmem:[#allocation2 + $0x64] sm:$0xf]
      %v1352 = vld [vmem:[#allocation2 + $0x6c] sm:$0xf]
      %v1353 = vld [vmem:[#allocation2 + $0x70] sm:$0xf]
      %v1354 = vld [vmem:[#allocation2 + $0x78] sm:$0xf]
      %v1355 = vld [vmem:[#allocation2 + $0x7c] sm:$0xf]
      %v1356 = vld [vmem:[#allocation2 + $0x84] sm:$0xf]
      %v1357 = vld [vmem:[#allocation2 + $0x88] sm:$0xf]
      %v1358 = vld [vmem:[#allocation2 + $0x90] sm:$0xf]
      %v1359 = vld [vmem:[#allocation2 + $0x94] sm:$0xf]
      %v1360 = vld [vmem:[#allocation2 + $0x9c] sm:$0xf]
      %v1361 = vld [vmem:[#allocation2 + $0xa0] sm:$0xf]
      %v1362 = vld [vmem:[#allocation2 + $0xa8] sm:$0xf]
      %v1363 = vld [vmem:[#allocation2 + $0xac] sm:$0xf]
      %v1364 = vld [vmem:[#allocation2 + $0xb4] sm:$0xf]
      %v1365 = vld [vmem:[#allocation2 + $0xb8] sm:$0xf]
      %v1366 = vld [vmem:[#allocation2 + $0xc0] sm:$0xf]
      %v1367 = vld [vmem:[#allocation2 + $0xc4] sm:$0xf]
      %v1368 = vld [vmem:[#allocation2 + $0xcc] sm:$0xf]
      %v1369 = vld [vmem:[#allocation2 + $0xd0] sm:$0xf]
      %v1370 = vld [vmem:[#allocation2 + $0xd8] sm:$0xf]
      %v1371 = vld [vmem:[#allocation2 + $0xdc] sm:$0xf]
      %v1372 = vld [vmem:[#allocation2 + $0xe4] sm:$0xf]
      %v1373 = vld [vmem:[#allocation2 + $0xe8] sm:$0xf]
      %v1374 = vld [vmem:[#allocation2 + $0x8] sm:$0x1]
      %v1375 = vld [vmem:[#allocation2 + $0x14] sm:$0x1]
      %v1376 = vld [vmem:[#allocation2 + $0x20] sm:$0x1]
      %v1377 = vld [vmem:[#allocation2 + $0x2c] sm:$0x1]
      %v1378 = vld [vmem:[#allocation2 + $0x38] sm:$0x1]
      %v1379 = vld [vmem:[#allocation2 + $0x44] sm:$0x1]
      %v1380 = vld [vmem:[#allocation2 + $0x50] sm:$0x1]
      %v1381 = vld [vmem:[#allocation2 + $0x5c] sm:$0x1]
      %v1382 = vld [vmem:[#allocation2 + $0x68] sm:$0x1]
      %v1383 = vld [vmem:[#allocation2 + $0x74] sm:$0x1]
      %v1384 = vld [vmem:[#allocation2 + $0x80] sm:$0x1]
      %v1385 = vld [vmem:[#allocation2 + $0x8c] sm:$0x1]
      %v1386 = vld [vmem:[#allocation2 + $0x98] sm:$0x1]
      %v1387 = vld [vmem:[#allocation2 + $0xa4] sm:$0x1]
      %v1388 = vld [vmem:[#allocation2 + $0xb0] sm:$0x1]
      %v1389 = vld [vmem:[#allocation2 + $0xbc] sm:$0x1]
      %v1390 = vld [vmem:[#allocation2 + $0xc8] sm:$0x1]
      %v1391 = vld [vmem:[#allocation2 + $0xd4] sm:$0x1]
      %v1392 = vld [vmem:[#allocation2 + $0xe0] sm:$0x1]
      %v1393 = vld [vmem:[#allocation2 + $0xec] sm:$0x1]
      %v1394 = vld [vmem:[#allocation2] sm:$0xe]
      %v1395 = vld [vmem:[#allocation2 + $0xc] sm:$0xe]
      %v1396 = vld [vmem:[#allocation2 + $0x18] sm:$0xe]
      %v1397 = vld [vmem:[#allocation2 + $0x24] sm:$0xe]
      %v1398 = vld [vmem:[#allocation2 + $0x30] sm:$0xe]
      %v1399 = vld [vmem:[#allocation2 + $0x3c] sm:$0xe]
      %v1400 = vld [vmem:[#allocation2 + $0x48] sm:$0xe]
      %v1401 = vld [vmem:[#allocation2 + $0x54] sm:$0xe]
      %v1402 = vld [vmem:[#allocation2 + $0x60] sm:$0xe]
      %v1403 = vld [vmem:[#allocation2 + $0x6c] sm:$0xe]
      %v1404 = vld [vmem:[#allocation2 + $0x78] sm:$0xe]
      %v1405 = vld [vmem:[#allocation2 + $0x84] sm:$0xe]
      %v1406 = vld [vmem:[#allocation2 + $0x90] sm:$0xe]
      %v1407 = vld [vmem:[#allocation2 + $0x9c] sm:$0xe]
      %v1408 = vld [vmem:[#allocation2 + $0xa8] sm:$0xe]
      %v1409 = vld [vmem:[#allocation2 + $0xb4] sm:$0xe]
      %v1410 = vld [vmem:[#allocation2 + $0xc0] sm:$0xe]
      %v1411 = vld [vmem:[#allocation2 + $0xcc] sm:$0xe]
      %v1412 = vld [vmem:[#allocation2 + $0xd8] sm:$0xe]
      %v1413 = vld [vmem:[#allocation2 + $0xe4] sm:$0xe]
      %v1414 = vld [vmem:[%s3] sm:$0x3]
      %vm1415 = vsmask.f32 3328
      %vm1416 = vsmask.f32 7440
      %vm1417 = vmor %vm1415, %vm1416
      %v1419 = vshrl.u32 %v1334, 16
      %v1421 = vrot.slane %v1419, 4
      %v1422 = vshll.u32 %v1334, 16
      %v1424 = vrot.slane %v1422, 5
      %v1425 = vor.u32 %v1421, %v1424
      %v1426 = vrot.slane %v1425, 4
      %v1428 = vshll.u32 %v1335, 16
      %v1430 = vrot.slane %v1428, 5
      %v1431 = vsel %vm1417, %v1426, %v1430
      %v1432 = vshrl.u32 %v1335, 16
      %v1434 = vrot.slane %v1432, 4
      %v1435 = vor.u32 %v1434, %v1430
      %v1436 = vrot.slane %v1435, 4
      %v1438 = vshll.u32 %v1374, 16
      %v1440 = vrot.slane %v1438, 5
      %v1441 = vsel %vm1417, %v1436, %v1440
      %v1443 = vshrl.u32 %v1336, 16
      %v1445 = vrot.slane %v1443, 4
      %v1446 = vshll.u32 %v1336, 16
      %v1448 = vrot.slane %v1446, 5
      %v1449 = vor.u32 %v1445, %v1448
      %v1450 = vrot.slane %v1449, 4
      %v1452 = vshll.u32 %v1337, 16
      %v1454 = vrot.slane %v1452, 5
      %v1455 = vsel %vm1417, %v1450, %v1454
      %v1456 = vshrl.u32 %v1337, 16
      %v1458 = vrot.slane %v1456, 4
      %v1459 = vor.u32 %v1458, %v1454
      %v1460 = vrot.slane %v1459, 4
      %v1462 = vshll.u32 %v1375, 16
      %v1464 = vrot.slane %v1462, 5
      %v1465 = vsel %vm1417, %v1460, %v1464
      %v1467 = vshrl.u32 %v1338, 16
      %v1469 = vrot.slane %v1467, 4
      %v1470 = vshll.u32 %v1338, 16
      %v1472 = vrot.slane %v1470, 5
      %v1473 = vor.u32 %v1469, %v1472
      %v1474 = vrot.slane %v1473, 4
      %v1476 = vshll.u32 %v1339, 16
      %v1478 = vrot.slane %v1476, 5
      %v1479 = vsel %vm1417, %v1474, %v1478
      %v1480 = vshrl.u32 %v1339, 16
      %v1482 = vrot.slane %v1480, 4
      %v1483 = vor.u32 %v1482, %v1478
      %v1484 = vrot.slane %v1483, 4
      %v1486 = vshll.u32 %v1376, 16
      %v1488 = vrot.slane %v1486, 5
      %v1489 = vsel %vm1417, %v1484, %v1488
      %v1491 = vshrl.u32 %v1340, 16
      %v1493 = vrot.slane %v1491, 4
      %v1494 = vshll.u32 %v1340, 16
      %v1496 = vrot.slane %v1494, 5
      %v1497 = vor.u32 %v1493, %v1496
      %v1498 = vrot.slane %v1497, 4
      %v1500 = vshll.u32 %v1341, 16
      %v1502 = vrot.slane %v1500, 5
      %v1503 = vsel %vm1417, %v1498, %v1502
      %v1504 = vshrl.u32 %v1341, 16
      %v1506 = vrot.slane %v1504, 4
      %v1507 = vor.u32 %v1506, %v1502
      %v1508 = vrot.slane %v1507, 4
      %v1510 = vshll.u32 %v1377, 16
      %v1512 = vrot.slane %v1510, 5
      %v1513 = vsel %vm1417, %v1508, %v1512
      %v1515 = vshrl.u32 %v1342, 16
      %v1517 = vrot.slane %v1515, 4
      %v1518 = vshll.u32 %v1342, 16
      %v1520 = vrot.slane %v1518, 5
      %v1521 = vor.u32 %v1517, %v1520
      %v1522 = vrot.slane %v1521, 4
      %v1524 = vshll.u32 %v1343, 16
      %v1526 = vrot.slane %v1524, 5
      %v1527 = vsel %vm1417, %v1522, %v1526
      %v1528 = vshrl.u32 %v1343, 16
      %v1530 = vrot.slane %v1528, 4
      %v1531 = vor.u32 %v1530, %v1526
      %v1532 = vrot.slane %v1531, 4
      %v1534 = vshll.u32 %v1378, 16
      %v1536 = vrot.slane %v1534, 5
      %v1537 = vsel %vm1417, %v1532, %v1536
      %v1539 = vshrl.u32 %v1344, 16
      %v1541 = vrot.slane %v1539, 4
      %v1542 = vshll.u32 %v1344, 16
      %v1544 = vrot.slane %v1542, 5
      %v1545 = vor.u32 %v1541, %v1544
      %v1546 = vrot.slane %v1545, 4
      %v1548 = vshll.u32 %v1345, 16
      %v1550 = vrot.slane %v1548, 5
      %v1551 = vsel %vm1417, %v1546, %v1550
      %v1552 = vshrl.u32 %v1345, 16
      %v1554 = vrot.slane %v1552, 4
      %v1555 = vor.u32 %v1554, %v1550
      %v1556 = vrot.slane %v1555, 4
      %v1558 = vshll.u32 %v1379, 16
      %v1560 = vrot.slane %v1558, 5
      %v1561 = vsel %vm1417, %v1556, %v1560
      %v1563 = vshrl.u32 %v1346, 16
      %v1565 = vrot.slane %v1563, 4
      %v1566 = vshll.u32 %v1346, 16
      %v1568 = vrot.slane %v1566, 5
      %v1569 = vor.u32 %v1565, %v1568
      %v1570 = vrot.slane %v1569, 4
      %v1572 = vshll.u32 %v1347, 16
      %v1574 = vrot.slane %v1572, 5
      %v1575 = vsel %vm1417, %v1570, %v1574
      %v1576 = vshrl.u32 %v1347, 16
      %v1578 = vrot.slane %v1576, 4
      %v1579 = vor.u32 %v1578, %v1574
      %v1580 = vrot.slane %v1579, 4
      %v1582 = vshll.u32 %v1380, 16
      %v1584 = vrot.slane %v1582, 5
      %v1585 = vsel %vm1417, %v1580, %v1584
      %v1587 = vshrl.u32 %v1348, 16
      %v1589 = vrot.slane %v1587, 4
      %v1590 = vshll.u32 %v1348, 16
      %v1592 = vrot.slane %v1590, 5
      %v1593 = vor.u32 %v1589, %v1592
      %v1594 = vrot.slane %v1593, 4
      %v1596 = vshll.u32 %v1349, 16
      %v1598 = vrot.slane %v1596, 5
      %v1599 = vsel %vm1417, %v1594, %v1598
      %v1600 = vshrl.u32 %v1349, 16
      %v1602 = vrot.slane %v1600, 4
      %v1603 = vor.u32 %v1602, %v1598
      %v1604 = vrot.slane %v1603, 4
      %v1606 = vshll.u32 %v1381, 16
      %v1608 = vrot.slane %v1606, 5
      %v1609 = vsel %vm1417, %v1604, %v1608
      %v1611 = vshrl.u32 %v1350, 16
      %v1613 = vrot.slane %v1611, 4
      %v1614 = vshll.u32 %v1350, 16
      %v1616 = vrot.slane %v1614, 5
      %v1617 = vor.u32 %v1613, %v1616
      %v1618 = vrot.slane %v1617, 4
      %v1620 = vshll.u32 %v1351, 16
      %v1622 = vrot.slane %v1620, 5
      %v1623 = vsel %vm1417, %v1618, %v1622
      %v1624 = vshrl.u32 %v1351, 16
      %v1626 = vrot.slane %v1624, 4
      %v1627 = vor.u32 %v1626, %v1622
      %v1628 = vrot.slane %v1627, 4
      %v1630 = vshll.u32 %v1382, 16
      %v1632 = vrot.slane %v1630, 5
      %v1633 = vsel %vm1417, %v1628, %v1632
      %v1635 = vshrl.u32 %v1352, 16
      %v1637 = vrot.slane %v1635, 4
      %v1638 = vshll.u32 %v1352, 16
      %v1640 = vrot.slane %v1638, 5
      %v1641 = vor.u32 %v1637, %v1640
      %v1642 = vrot.slane %v1641, 4
      %v1644 = vshll.u32 %v1353, 16
      %v1646 = vrot.slane %v1644, 5
      %v1647 = vsel %vm1417, %v1642, %v1646
      %v1648 = vshrl.u32 %v1353, 16
      %v1650 = vrot.slane %v1648, 4
      %v1651 = vor.u32 %v1650, %v1646
      %v1652 = vrot.slane %v1651, 4
      %v1654 = vshll.u32 %v1383, 16
      %v1656 = vrot.slane %v1654, 5
      %v1657 = vsel %vm1417, %v1652, %v1656
      %v1659 = vshrl.u32 %v1354, 16
      %v1661 = vrot.slane %v1659, 4
      %v1662 = vshll.u32 %v1354, 16
      %v1664 = vrot.slane %v1662, 5
      %v1665 = vor.u32 %v1661, %v1664
      %v1666 = vrot.slane %v1665, 4
      %v1668 = vshll.u32 %v1355, 16
      %v1670 = vrot.slane %v1668, 5
      %v1671 = vsel %vm1417, %v1666, %v1670
      %v1672 = vshrl.u32 %v1355, 16
      %v1674 = vrot.slane %v1672, 4
      %v1675 = vor.u32 %v1674, %v1670
      %v1676 = vrot.slane %v1675, 4
      %v1678 = vshll.u32 %v1384, 16
      %v1680 = vrot.slane %v1678, 5
      %v1681 = vsel %vm1417, %v1676, %v1680
      %v1683 = vshrl.u32 %v1356, 16
      %v1685 = vrot.slane %v1683, 4
      %v1686 = vshll.u32 %v1356, 16
      %v1688 = vrot.slane %v1686, 5
      %v1689 = vor.u32 %v1685, %v1688
      %v1690 = vrot.slane %v1689, 4
      %v1692 = vshll.u32 %v1357, 16
      %v1694 = vrot.slane %v1692, 5
      %v1695 = vsel %vm1417, %v1690, %v1694
      %v1696 = vshrl.u32 %v1357, 16
      %v1698 = vrot.slane %v1696, 4
      %v1699 = vor.u32 %v1698, %v1694
      %v1700 = vrot.slane %v1699, 4
      %v1702 = vshll.u32 %v1385, 16
      %v1704 = vrot.slane %v1702, 5
      %v1705 = vsel %vm1417, %v1700, %v1704
      %v1707 = vshrl.u32 %v1358, 16
      %v1709 = vrot.slane %v1707, 4
      %v1710 = vshll.u32 %v1358, 16
      %v1712 = vrot.slane %v1710, 5
      %v1713 = vor.u32 %v1709, %v1712
      %v1714 = vrot.slane %v1713, 4
      %v1716 = vshll.u32 %v1359, 16
      %v1718 = vrot.slane %v1716, 5
      %v1719 = vsel %vm1417, %v1714, %v1718
      %v1720 = vshrl.u32 %v1359, 16
      %v1722 = vrot.slane %v1720, 4
      %v1723 = vor.u32 %v1722, %v1718
      %v1724 = vrot.slane %v1723, 4
      %v1726 = vshll.u32 %v1386, 16
      %v1728 = vrot.slane %v1726, 5
      %v1729 = vsel %vm1417, %v1724, %v1728
      %v1731 = vshrl.u32 %v1360, 16
      %v1733 = vrot.slane %v1731, 4
      %v1734 = vshll.u32 %v1360, 16
      %v1736 = vrot.slane %v1734, 5
      %v1737 = vor.u32 %v1733, %v1736
      %v1738 = vrot.slane %v1737, 4
      %v1740 = vshll.u32 %v1361, 16
      %v1742 = vrot.slane %v1740, 5
      %v1743 = vsel %vm1417, %v1738, %v1742
      %v1744 = vshrl.u32 %v1361, 16
      %v1746 = vrot.slane %v1744, 4
      %v1747 = vor.u32 %v1746, %v1742
      %v1748 = vrot.slane %v1747, 4
      %v1750 = vshll.u32 %v1387, 16
      %v1752 = vrot.slane %v1750, 5
      %v1753 = vsel %vm1417, %v1748, %v1752
      %v1755 = vshrl.u32 %v1362, 16
      %v1757 = vrot.slane %v1755, 4
      %v1758 = vshll.u32 %v1362, 16
      %v1760 = vrot.slane %v1758, 5
      %v1761 = vor.u32 %v1757, %v1760
      %v1762 = vrot.slane %v1761, 4
      %v1764 = vshll.u32 %v1363, 16
      %v1766 = vrot.slane %v1764, 5
      %v1767 = vsel %vm1417, %v1762, %v1766
      %v1768 = vshrl.u32 %v1363, 16
      %v1770 = vrot.slane %v1768, 4
      %v1771 = vor.u32 %v1770, %v1766
      %v1772 = vrot.slane %v1771, 4
      %v1774 = vshll.u32 %v1388, 16
      %v1776 = vrot.slane %v1774, 5
      %v1777 = vsel %vm1417, %v1772, %v1776
      %v1779 = vshrl.u32 %v1364, 16
      %v1781 = vrot.slane %v1779, 4
      %v1782 = vshll.u32 %v1364, 16
      %v1784 = vrot.slane %v1782, 5
      %v1785 = vor.u32 %v1781, %v1784
      %v1786 = vrot.slane %v1785, 4
      %v1788 = vshll.u32 %v1365, 16
      %v1790 = vrot.slane %v1788, 5
      %v1791 = vsel %vm1417, %v1786, %v1790
      %v1792 = vshrl.u32 %v1365, 16
      %v1794 = vrot.slane %v1792, 4
      %v1795 = vor.u32 %v1794, %v1790
      %v1796 = vrot.slane %v1795, 4
      %v1798 = vshll.u32 %v1389, 16
      %v1800 = vrot.slane %v1798, 5
      %v1801 = vsel %vm1417, %v1796, %v1800
      %v1803 = vshrl.u32 %v1366, 16
      %v1805 = vrot.slane %v1803, 4
      %v1806 = vshll.u32 %v1366, 16
      %v1808 = vrot.slane %v1806, 5
      %v1809 = vor.u32 %v1805, %v1808
      %v1810 = vrot.slane %v1809, 4
      %v1812 = vshll.u32 %v1367, 16
      %v1814 = vrot.slane %v1812, 5
      %v1815 = vsel %vm1417, %v1810, %v1814
      %v1816 = vshrl.u32 %v1367, 16
      %v1818 = vrot.slane %v1816, 4
      %v1819 = vor.u32 %v1818, %v1814
      %v1820 = vrot.slane %v1819, 4
      %v1822 = vshll.u32 %v1390, 16
      %v1824 = vrot.slane %v1822, 5
      %v1825 = vsel %vm1417, %v1820, %v1824
      %v1827 = vshrl.u32 %v1368, 16
      %v1829 = vrot.slane %v1827, 4
      %v1830 = vshll.u32 %v1368, 16
      %v1832 = vrot.slane %v1830, 5
      %v1833 = vor.u32 %v1829, %v1832
      %v1834 = vrot.slane %v1833, 4
      %v1836 = vshll.u32 %v1369, 16
      %v1838 = vrot.slane %v1836, 5
      %v1839 = vsel %vm1417, %v1834, %v1838
      %v1840 = vshrl.u32 %v1369, 16
      %v1842 = vrot.slane %v1840, 4
      %v1843 = vor.u32 %v1842, %v1838
      %v1844 = vrot.slane %v1843, 4
      %v1846 = vshll.u32 %v1391, 16
      %v1848 = vrot.slane %v1846, 5
      %v1849 = vsel %vm1417, %v1844, %v1848
      %s1850 = scalar_lea.vmem %s3, 2
      %v1851 = vld [vmem:[%s1850] sm:$0x3]
      %v1852 = vunpack.c.l.b16 %v1431
      %v1853 = vunpack.c.l.b16 %v1441
      %v1854 = vunpack.c.l.b16 %v1455
      %v1855 = vunpack.c.l.b16 %v1465
      %v1856 = vunpack.c.l.b16 %v1479
      %v1857 = vunpack.c.l.b16 %v1489
      %v1858 = vunpack.c.l.b16 %v1503
      %v1859 = vunpack.c.l.b16 %v1513
      %v1860 = vunpack.c.l.b16 %v1527
      %v1861 = vunpack.c.l.b16 %v1537
      %v1862 = vunpack.c.l.b16 %v1551
      %v1863 = vunpack.c.l.b16 %v1561
      %v1864 = vunpack.c.l.b16 %v1575
      %v1865 = vunpack.c.l.b16 %v1585
      %v1866 = vunpack.c.l.b16 %v1599
      %v1867 = vunpack.c.l.b16 %v1609
      %v1868 = vunpack.c.l.b16 %v1623
      %v1869 = vunpack.c.l.b16 %v1633
      %v1870 = vunpack.c.l.b16 %v1647
      %v1871 = vunpack.c.l.b16 %v1657
      %v1872 = vunpack.c.l.b16 %v1671
      %v1873 = vunpack.c.l.b16 %v1681
      %v1874 = vunpack.c.l.b16 %v1695
      %v1875 = vunpack.c.l.b16 %v1705
      %v1876 = vunpack.c.l.b16 %v1719
      %v1877 = vunpack.c.l.b16 %v1729
      %v1878 = vunpack.c.l.b16 %v1743
      %v1879 = vunpack.c.l.b16 %v1753
      %v1880 = vunpack.c.l.b16 %v1767
      %v1881 = vunpack.c.l.b16 %v1777
      %v1882 = vunpack.c.l.b16 %v1791
      %v1883 = vunpack.c.l.b16 %v1801
      %v1884 = vunpack.c.l.b16 %v1815
      %v1885 = vunpack.c.l.b16 %v1825
      %v1886 = vunpack.c.l.b16 %v1839
      %v1887 = vunpack.c.l.b16 %v1849
      %v1888 = vpack.c.b16 %v1853, %v1852
      %v1889 = vpack.c.b16 %v1855, %v1854
      %v1890 = vpack.c.b16 %v1857, %v1856
      %v1891 = vpack.c.b16 %v1859, %v1858
      %v1892 = vpack.c.b16 %v1861, %v1860
      %v1893 = vpack.c.b16 %v1863, %v1862
      %v1894 = vpack.c.b16 %v1865, %v1864
      %v1895 = vpack.c.b16 %v1867, %v1866
      %v1896 = vpack.c.b16 %v1869, %v1868
      %v1897 = vpack.c.b16 %v1871, %v1870
      %v1898 = vpack.c.b16 %v1873, %v1872
      %v1899 = vpack.c.b16 %v1875, %v1874
      %v1900 = vpack.c.b16 %v1877, %v1876
      %v1901 = vpack.c.b16 %v1879, %v1878
      %v1902 = vpack.c.b16 %v1881, %v1880
      %v1903 = vpack.c.b16 %v1883, %v1882
      %v1904 = vpack.c.b16 %v1885, %v1884
      %v1905 = vpack.c.b16 %v1887, %v1886
      %vm1906 = vcmask 31744
      %v1908 = vsel %vm1906, %v1888, 0
      %v1911 = vsel %vm1906, %v1889, 0
      %v1914 = vsel %vm1906, %v1890, 0
      %v1917 = vsel %vm1906, %v1891, 0
      %v1920 = vsel %vm1906, %v1892, 0
      %v1923 = vsel %vm1906, %v1893, 0
      %v1926 = vsel %vm1906, %v1894, 0
      %v1929 = vsel %vm1906, %v1895, 0
      %v1932 = vsel %vm1906, %v1896, 0
      %v1935 = vsel %vm1906, %v1897, 0
      %v1938 = vsel %vm1906, %v1898, 0
      %v1941 = vsel %vm1906, %v1899, 0
      %v1944 = vsel %vm1906, %v1900, 0
      %v1947 = vsel %vm1906, %v1901, 0
      %v1950 = vsel %vm1906, %v1902, 0
      %v1953 = vsel %vm1906, %v1903, 0
      %v1956 = vsel %vm1906, %v1904, 0
      %v1959 = vsel %vm1906, %v1905, 0
      %vm1961 = vcmask 1041408
      %v1963 = vsel %vm1961, %v1851, 0
      %1965 = vmatprep.subr.bf16.mxu0 0
      %1966 = vmatpush1.bf16.msra.mxu0 %v1963
      %1967 = vmatprep.subr.bf16.mxu0 0
      %1968 = vmatpush1.bf16.msra.mxu0 0
      %1969 = vmatprep.subr.bf16.mxu0 0
      %1970 = vmatpush1.bf16.msra.mxu0 0
      %1971 = vmatprep.subr.bf16.mxu0 0
      %1972 = vmatpush1.bf16.msra.mxu0 0
      %1973 = vmatprep.subr.bf16.mxu0 0
      %1974 = vmatpush1.bf16.msra.mxu0 0
      %1975 = vmatprep.subr.bf16.mxu0 0
      %1976 = vmatpush1.bf16.msra.mxu0 0
      %1977 = vmatprep.subr.bf16.mxu0 0
      %1978 = vmatpush1.bf16.msra.mxu0 0
      %1979 = vmatprep.subr.bf16.mxu0 0
      %1980 = vmatpush1.bf16.msra.mxu0 0
      %1981 = vmatprep.subr.bf16.mxu0 0
      %1982 = vmatpush1.bf16.msra.mxu0 0
      %1983 = vmatprep.subr.bf16.mxu0 0
      %1984 = vmatpush1.bf16.msra.mxu0 0
      %1985 = vmatprep.subr.bf16.mxu0 0
      %1986 = vmatpush1.bf16.msra.mxu0 0
      %1987 = vmatprep.subr.bf16.mxu0 0
      %1988 = vmatpush1.bf16.msra.mxu0 0
      %1989 = vmatprep.subr.bf16.mxu0 0
      %1990 = vmatpush1.bf16.msra.mxu0 0
      %1991 = vmatprep.subr.bf16.mxu0 0
      %1992 = vmatpush1.bf16.msra.mxu0 0
      %1993 = vmatprep.subr.bf16.mxu0 0
      %1994 = vmatpush1.bf16.msra.mxu0 0
      %1995 = vmatprep.subr.bf16.mxu0 0
      %1996 = vmatpush1.bf16.msra.mxu0 0
      %1997 = vmatprep.mubr.bf16.mxu0 0
      %1998 = vmatmul.mubr.bf16.gmra.mrb[0].mxu0 %v1908
      %v1999 = vpop.f32.mrb[0].mxu0
      %v2000 = vadd.f32 0.0, %v1999
      %v2001 = vpop.f32.mrb[0].mxu0
      %v2002 = vpop.f32.mrb[0].mxu0
      %v2003 = vadd.f32 0.0, %v2002
      %v2004 = vpop.f32.mrb[0].mxu0
      %2005 = vmatprep.mubr.bf16.mxu0 0
      %2006 = vmatmul.mubr.bf16.gmra.mrb[0].mxu0 %v1911
      %v2007 = vpop.f32.mrb[0].mxu0
      %v2008 = vadd.f32 0.0, %v2007
      %v2009 = vpop.f32.mrb[0].mxu0
      %v2010 = vpop.f32.mrb[0].mxu0
      %v2011 = vadd.f32 0.0, %v2010
      %v2012 = vpop.f32.mrb[0].mxu0
      %2013 = vmatprep.mubr.bf16.mxu0 0
      %2014 = vmatmul.mubr.bf16.gmra.mrb[0].mxu0 %v1914
      %v2015 = vpop.f32.mrb[0].mxu0
      %v2016 = vadd.f32 0.0, %v2015
      %v2017 = vpop.f32.mrb[0].mxu0
      %v2018 = vpop.f32.mrb[0].mxu0
      %v2019 = vadd.f32 0.0, %v2018
      %v2020 = vpop.f32.mrb[0].mxu0
      %2021 = vmatprep.mubr.bf16.mxu0 0
      %2022 = vmatmul.mubr.bf16.gmra.mrb[0].mxu0 %v1917
      %v2023 = vpop.f32.mrb[0].mxu0
      %v2024 = vadd.f32 0.0, %v2023
      %v2025 = vpop.f32.mrb[0].mxu0
      %v2026 = vpop.f32.mrb[0].mxu0
      %v2027 = vadd.f32 0.0, %v2026
      %v2028 = vpop.f32.mrb[0].mxu0
      %2029 = vmatprep.mubr.bf16.mxu0 0
      %2030 = vmatmul.mubr.bf16.gmra.mrb[0].mxu0 %v1920
      %v2031 = vpop.f32.mrb[0].mxu0
      %v2032 = vadd.f32 0.0, %v2031
      %v2033 = vpop.f32.mrb[0].mxu0
      %v2034 = vpop.f32.mrb[0].mxu0
      %v2035 = vadd.f32 0.0, %v2034
      %v2036 = vpop.f32.mrb[0].mxu0
      %2037 = vmatprep.mubr.bf16.mxu0 0
      %2038 = vmatmul.mubr.bf16.gmra.mrb[0].mxu0 %v1923
      %v2039 = vpop.f32.mrb[0].mxu0
      %v2040 = vadd.f32 0.0, %v2039
      %v2041 = vpop.f32.mrb[0].mxu0
      %v2042 = vpop.f32.mrb[0].mxu0
      %v2043 = vadd.f32 0.0, %v2042
      %v2044 = vpop.f32.mrb[0].mxu0
      %2045 = vmatprep.mubr.bf16.mxu0 0
      %2046 = vmatmul.mubr.bf16.gmra.mrb[0].mxu0 %v1926
      %v2047 = vpop.f32.mrb[0].mxu0
      %v2048 = vadd.f32 0.0, %v2047
      %v2049 = vpop.f32.mrb[0].mxu0
      %v2050 = vpop.f32.mrb[0].mxu0
      %v2051 = vadd.f32 0.0, %v2050
      %v2052 = vpop.f32.mrb[0].mxu0
      %2053 = vmatprep.mubr.bf16.mxu0 0
      %2054 = vmatmul.mubr.bf16.gmra.mrb[0].mxu0 %v1929
      %v2055 = vpop.f32.mrb[0].mxu0
      %v2056 = vadd.f32 0.0, %v2055
      %v2057 = vpop.f32.mrb[0].mxu0
      %v2058 = vpop.f32.mrb[0].mxu0
      %v2059 = vadd.f32 0.0, %v2058
      %v2060 = vpop.f32.mrb[0].mxu0
      %2061 = vmatprep.mubr.bf16.mxu0 0
      %2062 = vmatmul.mubr.bf16.gmra.mrb[0].mxu0 %v1932
      %v2063 = vpop.f32.mrb[0].mxu0
      %v2064 = vadd.f32 0.0, %v2063
      %v2065 = vpop.f32.mrb[0].mxu0
      %v2066 = vpop.f32.mrb[0].mxu0
      %v2067 = vadd.f32 0.0, %v2066
      %v2068 = vpop.f32.mrb[0].mxu0
      %2069 = vmatprep.mubr.bf16.mxu0 0
      %2070 = vmatmul.mubr.bf16.gmra.mrb[0].mxu0 %v1935
      %v2071 = vpop.f32.mrb[0].mxu0
      %v2072 = vadd.f32 0.0, %v2071
      %v2073 = vpop.f32.mrb[0].mxu0
      %v2074 = vpop.f32.mrb[0].mxu0
      %v2075 = vadd.f32 0.0, %v2074
      %v2076 = vpop.f32.mrb[0].mxu0
      %2077 = vmatprep.mubr.bf16.mxu0 0
      %2078 = vmatmul.mubr.bf16.gmra.mrb[0].mxu0 %v1938
      %v2079 = vpop.f32.mrb[0].mxu0
      %v2080 = vadd.f32 0.0, %v2079
      %v2081 = vpop.f32.mrb[0].mxu0
      %v2082 = vpop.f32.mrb[0].mxu0
      %v2083 = vadd.f32 0.0, %v2082
      %v2084 = vpop.f32.mrb[0].mxu0
      %2085 = vmatprep.mubr.bf16.mxu0 0
      %2086 = vmatmul.mubr.bf16.gmra.mrb[0].mxu0 %v1941
      %v2087 = vpop.f32.mrb[0].mxu0
      %v2088 = vadd.f32 0.0, %v2087
      %v2089 = vpop.f32.mrb[0].mxu0
      %v2090 = vpop.f32.mrb[0].mxu0
      %v2091 = vadd.f32 0.0, %v2090
      %v2092 = vpop.f32.mrb[0].mxu0
      %2093 = vmatprep.mubr.bf16.mxu0 0
      %2094 = vmatmul.mubr.bf16.gmra.mrb[0].mxu0 %v1944
      %v2095 = vpop.f32.mrb[0].mxu0
      %v2096 = vadd.f32 0.0, %v2095
      %v2097 = vpop.f32.mrb[0].mxu0
      %v2098 = vpop.f32.mrb[0].mxu0
      %v2099 = vadd.f32 0.0, %v2098
      %v2100 = vpop.f32.mrb[0].mxu0
      %2101 = vmatprep.mubr.bf16.mxu0 0
      %2102 = vmatmul.mubr.bf16.gmra.mrb[0].mxu0 %v1947
      %v2103 = vpop.f32.mrb[0].mxu0
      %v2104 = vadd.f32 0.0, %v2103
      %v2105 = vpop.f32.mrb[0].mxu0
      %v2106 = vpop.f32.mrb[0].mxu0
      %v2107 = vadd.f32 0.0, %v2106
      %v2108 = vpop.f32.mrb[0].mxu0
      %2109 = vmatprep.mubr.bf16.mxu0 0
      %2110 = vmatmul.mubr.bf16.gmra.mrb[0].mxu0 %v1950
      %v2111 = vpop.f32.mrb[0].mxu0
      %v2112 = vadd.f32 0.0, %v2111
      %v2113 = vpop.f32.mrb[0].mxu0
      %v2114 = vpop.f32.mrb[0].mxu0
      %v2115 = vadd.f32 0.0, %v2114
      %v2116 = vpop.f32.mrb[0].mxu0
      %2117 = vmatprep.mubr.bf16.mxu0 0
      %2118 = vmatmul.mubr.bf16.gmra.mrb[0].mxu0 %v1953
      %v2119 = vpop.f32.mrb[0].mxu0
      %v2120 = vadd.f32 0.0, %v2119
      %v2121 = vpop.f32.mrb[0].mxu0
      %v2122 = vpop.f32.mrb[0].mxu0
      %v2123 = vadd.f32 0.0, %v2122
      %v2124 = vpop.f32.mrb[0].mxu0
      %2125 = vmatprep.mubr.bf16.mxu0 0
      %2126 = vmatmul.mubr.bf16.gmra.mrb[0].mxu0 %v1956
      %v2127 = vpop.f32.mrb[0].mxu0
      %v2128 = vadd.f32 0.0, %v2127
      %v2129 = vpop.f32.mrb[0].mxu0
      %v2130 = vpop.f32.mrb[0].mxu0
      %v2131 = vadd.f32 0.0, %v2130
      %v2132 = vpop.f32.mrb[0].mxu0
      %2133 = vmatprep.mubr.bf16.mxu0 0
      %2134 = vmatmul.mubr.bf16.gmra.mrb[0].mxu0 %v1959
      %v2135 = vpop.f32.mrb[0].mxu0
      %v2136 = vadd.f32 0.0, %v2135
      %v2137 = vpop.f32.mrb[0].mxu0
      %v2138 = vpop.f32.mrb[0].mxu0
      %v2139 = vadd.f32 0.0, %v2138
      %v2140 = vpop.f32.mrb[0].mxu0
      %2141 = vdwg.mxu0
      %v2178 = vunpack.c.l.b16 %v1334
      %v2179 = vunpack.c.l.b16 %v1335
      %v2180 = vunpack.c.l.b16 %v1336
      %v2181 = vunpack.c.l.b16 %v1337
      %v2182 = vunpack.c.l.b16 %v1338
      %v2183 = vunpack.c.l.b16 %v1339
      %v2184 = vunpack.c.l.b16 %v1340
      %v2185 = vunpack.c.l.b16 %v1341
      %v2186 = vunpack.c.l.b16 %v1342
      %v2187 = vunpack.c.l.b16 %v1343
      %v2188 = vunpack.c.l.b16 %v1344
      %v2189 = vunpack.c.l.b16 %v1345
      %v2190 = vunpack.c.l.b16 %v1346
      %v2191 = vunpack.c.l.b16 %v1347
      %v2192 = vunpack.c.l.b16 %v1348
      %v2193 = vunpack.c.l.b16 %v1349
      %v2194 = vunpack.c.l.b16 %v1350
      %v2195 = vunpack.c.l.b16 %v1351
      %v2196 = vunpack.c.l.b16 %v1352
      %v2197 = vunpack.c.l.b16 %v1353
      %v2198 = vunpack.c.l.b16 %v1354
      %v2199 = vunpack.c.l.b16 %v1355
      %v2200 = vunpack.c.l.b16 %v1356
      %v2201 = vunpack.c.l.b16 %v1357
      %v2202 = vunpack.c.l.b16 %v1358
      %v2203 = vunpack.c.l.b16 %v1359
      %v2204 = vunpack.c.l.b16 %v1360
      %v2205 = vunpack.c.l.b16 %v1361
      %v2206 = vunpack.c.l.b16 %v1362
      %v2207 = vunpack.c.l.b16 %v1363
      %v2208 = vunpack.c.l.b16 %v1364
      %v2209 = vunpack.c.l.b16 %v1365
      %v2210 = vunpack.c.l.b16 %v1366
      %v2211 = vunpack.c.l.b16 %v1367
      %v2212 = vunpack.c.l.b16 %v1368
      %v2213 = vunpack.c.l.b16 %v1369
      %v2214 = vpack.c.b16 %v2179, %v2178
      %v2215 = vpack.c.b16 %v2181, %v2180
      %v2216 = vpack.c.b16 %v2183, %v2182
      %v2217 = vpack.c.b16 %v2185, %v2184
      %v2218 = vpack.c.b16 %v2187, %v2186
      %v2219 = vpack.c.b16 %v2189, %v2188
      %v2220 = vpack.c.b16 %v2191, %v2190
      %v2221 = vpack.c.b16 %v2193, %v2192
      %v2222 = vpack.c.b16 %v2195, %v2194
      %v2223 = vpack.c.b16 %v2197, %v2196
      %v2224 = vpack.c.b16 %v2199, %v2198
      %v2225 = vpack.c.b16 %v2201, %v2200
      %v2226 = vpack.c.b16 %v2203, %v2202
      %v2227 = vpack.c.b16 %v2205, %v2204
      %v2228 = vpack.c.b16 %v2207, %v2206
      %v2229 = vpack.c.b16 %v2209, %v2208
      %v2230 = vpack.c.b16 %v2211, %v2210
      %v2231 = vpack.c.b16 %v2213, %v2212
      %v2233 = vsel %vm1906, %v2214, 0
      %v2236 = vsel %vm1906, %v2215, 0
      %v2239 = vsel %vm1906, %v2216, 0
      %v2242 = vsel %vm1906, %v2217, 0
      %v2245 = vsel %vm1906, %v2218, 0
      %v2248 = vsel %vm1906, %v2219, 0
      %v2251 = vsel %vm1906, %v2220, 0
      %v2254 = vsel %vm1906, %v2221, 0
      %v2257 = vsel %vm1906, %v2222, 0
      %v2260 = vsel %vm1906, %v2223, 0
      %v2263 = vsel %vm1906, %v2224, 0
      %v2266 = vsel %vm1906, %v2225, 0
      %v2269 = vsel %vm1906, %v2226, 0
      %v2272 = vsel %vm1906, %v2227, 0
      %v2275 = vsel %vm1906, %v2228, 0
      %v2278 = vsel %vm1906, %v2229, 0
      %v2281 = vsel %vm1906, %v2230, 0
      %v2284 = vsel %vm1906, %v2231, 0
      %v2287 = vsel %vm1961, %v1414, 0
      %2289 = vmatprep.subr.bf16.mxu0 0
      %2290 = vmatpush1.bf16.msra.mxu0 %v2287
      %2291 = vmatprep.subr.bf16.mxu0 0
      %2292 = vmatpush1.bf16.msra.mxu0 0
      %2293 = vmatprep.subr.bf16.mxu0 0
      %2294 = vmatpush1.bf16.msra.mxu0 0
      %2295 = vmatprep.subr.bf16.mxu0 0
      %2296 = vmatpush1.bf16.msra.mxu0 0
      %2297 = vmatprep.subr.bf16.mxu0 0
      %2298 = vmatpush1.bf16.msra.mxu0 0
      %2299 = vmatprep.subr.bf16.mxu0 0
      %2300 = vmatpush1.bf16.msra.mxu0 0
      %2301 = vmatprep.subr.bf16.mxu0 0
      %2302 = vmatpush1.bf16.msra.mxu0 0
      %2303 = vmatprep.subr.bf16.mxu0 0
      %2304 = vmatpush1.bf16.msra.mxu0 0
      %2305 = vmatprep.subr.bf16.mxu0 0
      %2306 = vmatpush1.bf16.msra.mxu0 0
      %2307 = vmatprep.subr.bf16.mxu0 0
      %2308 = vmatpush1.bf16.msra.mxu0 0
      %2309 = vmatprep.subr.bf16.mxu0 0
      %2310 = vmatpush1.bf16.msra.mxu0 0
      %2311 = vmatprep.subr.bf16.mxu0 0
      %2312 = vmatpush1.bf16.msra.mxu0 0
      %2313 = vmatprep.subr.bf16.mxu0 0
      %2314 = vmatpush1.bf16.msra.mxu0 0
      %2315 = vmatprep.subr.bf16.mxu0 0
      %2316 = vmatpush1.bf16.msra.mxu0 0
      %2317 = vmatprep.subr.bf16.mxu0 0
      %2318 = vmatpush1.bf16.msra.mxu0 0
      %2319 = vmatprep.subr.bf16.mxu0 0
      %2320 = vmatpush1.bf16.msra.mxu0 0
      %2321 = vmatprep.mubr.bf16.mxu0 0
      %2322 = vmatmul.mubr.bf16.gmra.mrb[0].mxu0 %v2233
      %v2323 = vpop.f32.mrb[0].mxu0
      %v2324 = vadd.f32 %v2000, %v2323
      %v2325 = vpop.f32.mrb[0].mxu0
      %v2326 = vpop.f32.mrb[0].mxu0
      %v2327 = vadd.f32 %v2003, %v2326
      %v2328 = vpop.f32.mrb[0].mxu0
      %2329 = vmatprep.mubr.bf16.mxu0 0
      %2330 = vmatmul.mubr.bf16.gmra.mrb[0].mxu0 %v2236
      %v2331 = vpop.f32.mrb[0].mxu0
      %v2332 = vadd.f32 %v2008, %v2331
      %v2333 = vpop.f32.mrb[0].mxu0
      %v2334 = vpop.f32.mrb[0].mxu0
      %v2335 = vadd.f32 %v2011, %v2334
      %v2336 = vpop.f32.mrb[0].mxu0
      %2337 = vmatprep.mubr.bf16.mxu0 0
      %2338 = vmatmul.mubr.bf16.gmra.mrb[0].mxu0 %v2239
      %v2339 = vpop.f32.mrb[0].mxu0
      %v2340 = vadd.f32 %v2016, %v2339
      %v2341 = vpop.f32.mrb[0].mxu0
      %v2342 = vpop.f32.mrb[0].mxu0
      %v2343 = vadd.f32 %v2019, %v2342
      %v2344 = vpop.f32.mrb[0].mxu0
      %2345 = vmatprep.mubr.bf16.mxu0 0
      %2346 = vmatmul.mubr.bf16.gmra.mrb[0].mxu0 %v2242
      %v2347 = vpop.f32.mrb[0].mxu0
      %v2348 = vadd.f32 %v2024, %v2347
      %v2349 = vpop.f32.mrb[0].mxu0
      %v2350 = vpop.f32.mrb[0].mxu0
      %v2351 = vadd.f32 %v2027, %v2350
      %v2352 = vpop.f32.mrb[0].mxu0
      %2353 = vmatprep.mubr.bf16.mxu0 0
      %2354 = vmatmul.mubr.bf16.gmra.mrb[0].mxu0 %v2245
      %v2355 = vpop.f32.mrb[0].mxu0
      %v2356 = vadd.f32 %v2032, %v2355
      %v2357 = vpop.f32.mrb[0].mxu0
      %v2358 = vpop.f32.mrb[0].mxu0
      %v2359 = vadd.f32 %v2035, %v2358
      %v2360 = vpop.f32.mrb[0].mxu0
      %2361 = vmatprep.mubr.bf16.mxu0 0
      %2362 = vmatmul.mubr.bf16.gmra.mrb[0].mxu0 %v2248
      %v2363 = vpop.f32.mrb[0].mxu0
      %v2364 = vadd.f32 %v2040, %v2363
      %v2365 = vpop.f32.mrb[0].mxu0
      %v2366 = vpop.f32.mrb[0].mxu0
      %v2367 = vadd.f32 %v2043, %v2366
      %v2368 = vpop.f32.mrb[0].mxu0
      %2369 = vmatprep.mubr.bf16.mxu0 0
      %2370 = vmatmul.mubr.bf16.gmra.mrb[0].mxu0 %v2251
      %v2371 = vpop.f32.mrb[0].mxu0
      %v2372 = vadd.f32 %v2048, %v2371
      %v2373 = vpop.f32.mrb[0].mxu0
      %v2374 = vpop.f32.mrb[0].mxu0
      %v2375 = vadd.f32 %v2051, %v2374
      %v2376 = vpop.f32.mrb[0].mxu0
      %2377 = vmatprep.mubr.bf16.mxu0 0
      %2378 = vmatmul.mubr.bf16.gmra.mrb[0].mxu0 %v2254
      %v2379 = vpop.f32.mrb[0].mxu0
      %v2380 = vadd.f32 %v2056, %v2379
      %v2381 = vpop.f32.mrb[0].mxu0
      %v2382 = vpop.f32.mrb[0].mxu0
      %v2383 = vadd.f32 %v2059, %v2382
      %v2384 = vpop.f32.mrb[0].mxu0
      %2385 = vmatprep.mubr.bf16.mxu0 0
      %2386 = vmatmul.mubr.bf16.gmra.mrb[0].mxu0 %v2257
      %v2387 = vpop.f32.mrb[0].mxu0
      %v2388 = vadd.f32 %v2064, %v2387
      %v2389 = vpop.f32.mrb[0].mxu0
      %v2390 = vpop.f32.mrb[0].mxu0
      %v2391 = vadd.f32 %v2067, %v2390
      %v2392 = vpop.f32.mrb[0].mxu0
      %2393 = vmatprep.mubr.bf16.mxu0 0
      %2394 = vmatmul.mubr.bf16.gmra.mrb[0].mxu0 %v2260
      %v2395 = vpop.f32.mrb[0].mxu0
      %v2396 = vadd.f32 %v2072, %v2395
      %v2397 = vpop.f32.mrb[0].mxu0
      %v2398 = vpop.f32.mrb[0].mxu0
      %v2399 = vadd.f32 %v2075, %v2398
      %v2400 = vpop.f32.mrb[0].mxu0
      %2401 = vmatprep.mubr.bf16.mxu0 0
      %2402 = vmatmul.mubr.bf16.gmra.mrb[0].mxu0 %v2263
      %v2403 = vpop.f32.mrb[0].mxu0
      %v2404 = vadd.f32 %v2080, %v2403
      %v2405 = vpop.f32.mrb[0].mxu0
      %v2406 = vpop.f32.mrb[0].mxu0
      %v2407 = vadd.f32 %v2083, %v2406
      %v2408 = vpop.f32.mrb[0].mxu0
      %2409 = vmatprep.mubr.bf16.mxu0 0
      %2410 = vmatmul.mubr.bf16.gmra.mrb[0].mxu0 %v2266
      %v2411 = vpop.f32.mrb[0].mxu0
      %v2412 = vadd.f32 %v2088, %v2411
      %v2413 = vpop.f32.mrb[0].mxu0
      %v2414 = vpop.f32.mrb[0].mxu0
      %v2415 = vadd.f32 %v2091, %v2414
      %v2416 = vpop.f32.mrb[0].mxu0
      %2417 = vmatprep.mubr.bf16.mxu0 0
      %2418 = vmatmul.mubr.bf16.gmra.mrb[0].mxu0 %v2269
      %v2419 = vpop.f32.mrb[0].mxu0
      %v2420 = vadd.f32 %v2096, %v2419
      %v2421 = vpop.f32.mrb[0].mxu0
      %v2422 = vpop.f32.mrb[0].mxu0
      %v2423 = vadd.f32 %v2099, %v2422
      %v2424 = vpop.f32.mrb[0].mxu0
      %2425 = vmatprep.mubr.bf16.mxu0 0
      %2426 = vmatmul.mubr.bf16.gmra.mrb[0].mxu0 %v2272
      %v2427 = vpop.f32.mrb[0].mxu0
      %v2428 = vadd.f32 %v2104, %v2427
      %v2429 = vpop.f32.mrb[0].mxu0
      %v2430 = vpop.f32.mrb[0].mxu0
      %v2431 = vadd.f32 %v2107, %v2430
      %v2432 = vpop.f32.mrb[0].mxu0
      %2433 = vmatprep.mubr.bf16.mxu0 0
      %2434 = vmatmul.mubr.bf16.gmra.mrb[0].mxu0 %v2275
      %v2435 = vpop.f32.mrb[0].mxu0
      %v2436 = vadd.f32 %v2112, %v2435
      %v2437 = vpop.f32.mrb[0].mxu0
      %v2438 = vpop.f32.mrb[0].mxu0
      %v2439 = vadd.f32 %v2115, %v2438
      %v2440 = vpop.f32.mrb[0].mxu0
      %2441 = vmatprep.mubr.bf16.mxu0 0
      %2442 = vmatmul.mubr.bf16.gmra.mrb[0].mxu0 %v2278
      %v2443 = vpop.f32.mrb[0].mxu0
      %v2444 = vadd.f32 %v2120, %v2443
      %v2445 = vpop.f32.mrb[0].mxu0
      %v2446 = vpop.f32.mrb[0].mxu0
      %v2447 = vadd.f32 %v2123, %v2446
      %v2448 = vpop.f32.mrb[0].mxu0
      %2449 = vmatprep.mubr.bf16.mxu0 0
      %2450 = vmatmul.mubr.bf16.gmra.mrb[0].mxu0 %v2281
      %v2451 = vpop.f32.mrb[0].mxu0
      %v2452 = vadd.f32 %v2128, %v2451
      %v2453 = vpop.f32.mrb[0].mxu0
      %v2454 = vpop.f32.mrb[0].mxu0
      %v2455 = vadd.f32 %v2131, %v2454
      %v2456 = vpop.f32.mrb[0].mxu0
      %2457 = vmatprep.mubr.bf16.mxu0 0
      %2458 = vmatmul.mubr.bf16.gmra.mrb[0].mxu0 %v2284
      %v2459 = vpop.f32.mrb[0].mxu0
      %v2460 = vadd.f32 %v2136, %v2459
      %v2461 = vpop.f32.mrb[0].mxu0
      %v2462 = vpop.f32.mrb[0].mxu0
      %v2463 = vadd.f32 %v2139, %v2462
      %v2464 = vpop.f32.mrb[0].mxu0
      %2465 = vdwg.mxu0
      %vm2502 = vcmask 1042432
      %vm2503 = vcmask 1046532
      %vm2504 = vmor %vm2502, %vm2503
      %v2505 = vrot.slane %v1394, 5
      %v2506 = vrot.slane %v2505, 4
      %v2507 = vrot.slane %v1335, 5
      %v2508 = vsel %vm2504, %v2506, %v2507
      %v2509 = vrot.slane %v2507, 4
      %v2510 = vrot.slane %v1374, 5
      %v2511 = vsel %vm2504, %v2509, %v2510
      %v2512 = vrot.slane %v1395, 5
      %v2513 = vrot.slane %v2512, 4
      %v2514 = vrot.slane %v1337, 5
      %v2515 = vsel %vm2504, %v2513, %v2514
      %v2516 = vrot.slane %v2514, 4
      %v2517 = vrot.slane %v1375, 5
      %v2518 = vsel %vm2504, %v2516, %v2517
      %v2519 = vrot.slane %v1396, 5
      %v2520 = vrot.slane %v2519, 4
      %v2521 = vrot.slane %v1339, 5
      %v2522 = vsel %vm2504, %v2520, %v2521
      %v2523 = vrot.slane %v2521, 4
      %v2524 = vrot.slane %v1376, 5
      %v2525 = vsel %vm2504, %v2523, %v2524
      %v2526 = vrot.slane %v1397, 5
      %v2527 = vrot.slane %v2526, 4
      %v2528 = vrot.slane %v1341, 5
      %v2529 = vsel %vm2504, %v2527, %v2528
      %v2530 = vrot.slane %v2528, 4
      %v2531 = vrot.slane %v1377, 5
      %v2532 = vsel %vm2504, %v2530, %v2531
      %v2533 = vrot.slane %v1398, 5
      %v2534 = vrot.slane %v2533, 4
      %v2535 = vrot.slane %v1343, 5
      %v2536 = vsel %vm2504, %v2534, %v2535
      %v2537 = vrot.slane %v2535, 4
      %v2538 = vrot.slane %v1378, 5
      %v2539 = vsel %vm2504, %v2537, %v2538
      %v2540 = vrot.slane %v1399, 5
      %v2541 = vrot.slane %v2540, 4
      %v2542 = vrot.slane %v1345, 5
      %v2543 = vsel %vm2504, %v2541, %v2542
      %v2544 = vrot.slane %v2542, 4
      %v2545 = vrot.slane %v1379, 5
      %v2546 = vsel %vm2504, %v2544, %v2545
      %v2547 = vrot.slane %v1400, 5
      %v2548 = vrot.slane %v2547, 4
      %v2549 = vrot.slane %v1347, 5
      %v2550 = vsel %vm2504, %v2548, %v2549
      %v2551 = vrot.slane %v2549, 4
      %v2552 = vrot.slane %v1380, 5
      %v2553 = vsel %vm2504, %v2551, %v2552
      %v2554 = vrot.slane %v1401, 5
      %v2555 = vrot.slane %v2554, 4
      %v2556 = vrot.slane %v1349, 5
      %v2557 = vsel %vm2504, %v2555, %v2556
      %v2558 = vrot.slane %v2556, 4
      %v2559 = vrot.slane %v1381, 5
      %v2560 = vsel %vm2504, %v2558, %v2559
      %v2561 = vrot.slane %v1402, 5
      %v2562 = vrot.slane %v2561, 4
      %v2563 = vrot.slane %v1351, 5
      %v2564 = vsel %vm2504, %v2562, %v2563
      %v2565 = vrot.slane %v2563, 4
      %v2566 = vrot.slane %v1382, 5
      %v2567 = vsel %vm2504, %v2565, %v2566
      %v2568 = vrot.slane %v1403, 5
      %v2569 = vrot.slane %v2568, 4
      %v2570 = vrot.slane %v1353, 5
      %v2571 = vsel %vm2504, %v2569, %v2570
      %v2572 = vrot.slane %v2570, 4
      %v2573 = vrot.slane %v1383, 5
      %v2574 = vsel %vm2504, %v2572, %v2573
      %v2575 = vrot.slane %v1404, 5
      %v2576 = vrot.slane %v2575, 4
      %v2577 = vrot.slane %v1355, 5
      %v2578 = vsel %vm2504, %v2576, %v2577
      %v2579 = vrot.slane %v2577, 4
      %v2580 = vrot.slane %v1384, 5
      %v2581 = vsel %vm2504, %v2579, %v2580
      %v2582 = vrot.slane %v1405, 5
      %v2583 = vrot.slane %v2582, 4
      %v2584 = vrot.slane %v1357, 5
      %v2585 = vsel %vm2504, %v2583, %v2584
      %v2586 = vrot.slane %v2584, 4
      %v2587 = vrot.slane %v1385, 5
      %v2588 = vsel %vm2504, %v2586, %v2587
      %v2589 = vrot.slane %v1406, 5
      %v2590 = vrot.slane %v2589, 4
      %v2591 = vrot.slane %v1359, 5
      %v2592 = vsel %vm2504, %v2590, %v2591
      %v2593 = vrot.slane %v2591, 4
      %v2594 = vrot.slane %v1386, 5
      %v2595 = vsel %vm2504, %v2593, %v2594
      %v2596 = vrot.slane %v1407, 5
      %v2597 = vrot.slane %v2596, 4
      %v2598 = vrot.slane %v1361, 5
      %v2599 = vsel %vm2504, %v2597, %v2598
      %v2600 = vrot.slane %v2598, 4
      %v2601 = vrot.slane %v1387, 5
      %v2602 = vsel %vm2504, %v2600, %v2601
      %v2603 = vrot.slane %v1408, 5
      %v2604 = vrot.slane %v2603, 4
      %v2605 = vrot.slane %v1363, 5
      %v2606 = vsel %vm2504, %v2604, %v2605
      %v2607 = vrot.slane %v2605, 4
      %v2608 = vrot.slane %v1388, 5
      %v2609 = vsel %vm2504, %v2607, %v2608
      %v2610 = vrot.slane %v1409, 5
      %v2611 = vrot.slane %v2610, 4
      %v2612 = vrot.slane %v1365, 5
      %v2613 = vsel %vm2504, %v2611, %v2612
      %v2614 = vrot.slane %v2612, 4
      %v2615 = vrot.slane %v1389, 5
      %v2616 = vsel %vm2504, %v2614, %v2615
      %v2617 = vrot.slane %v1410, 5
      %v2618 = vrot.slane %v2617, 4
      %v2619 = vrot.slane %v1367, 5
      %v2620 = vsel %vm2504, %v2618, %v2619
      %v2621 = vrot.slane %v2619, 4
      %v2622 = vrot.slane %v1390, 5
      %v2623 = vsel %vm2504, %v2621, %v2622
      %v2624 = vrot.slane %v1411, 5
      %v2625 = vrot.slane %v2624, 4
      %v2626 = vrot.slane %v1369, 5
      %v2627 = vsel %vm2504, %v2625, %v2626
      %v2628 = vrot.slane %v2626, 4
      %v2629 = vrot.slane %v1391, 5
      %v2630 = vsel %vm2504, %v2628, %v2629
      %s2631 = scalar_lea.vmem %s3, 4
      %v2632 = vld [vmem:[%s2631] sm:$0x3]
      %v2633 = vunpack.c.l.b16 %v2508
      %v2634 = vunpack.c.l.b16 %v2511
      %v2635 = vunpack.c.l.b16 %v2515
      %v2636 = vunpack.c.l.b16 %v2518
      %v2637 = vunpack.c.l.b16 %v2522
      %v2638 = vunpack.c.l.b16 %v2525
      %v2639 = vunpack.c.l.b16 %v2529
      %v2640 = vunpack.c.l.b16 %v2532
      %v2641 = vunpack.c.l.b16 %v2536
      %v2642 = vunpack.c.l.b16 %v2539
      %v2643 = vunpack.c.l.b16 %v2543
      %v2644 = vunpack.c.l.b16 %v2546
      %v2645 = vunpack.c.l.b16 %v2550
      %v2646 = vunpack.c.l.b16 %v2553
      %v2647 = vunpack.c.l.b16 %v2557
      %v2648 = vunpack.c.l.b16 %v2560
      %v2649 = vunpack.c.l.b16 %v2564
      %v2650 = vunpack.c.l.b16 %v2567
      %v2651 = vunpack.c.l.b16 %v2571
      %v2652 = vunpack.c.l.b16 %v2574
      %v2653 = vunpack.c.l.b16 %v2578
      %v2654 = vunpack.c.l.b16 %v2581
      %v2655 = vunpack.c.l.b16 %v2585
      %v2656 = vunpack.c.l.b16 %v2588
      %v2657 = vunpack.c.l.b16 %v2592
      %v2658 = vunpack.c.l.b16 %v2595
      %v2659 = vunpack.c.l.b16 %v2599
      %v2660 = vunpack.c.l.b16 %v2602
      %v2661 = vunpack.c.l.b16 %v2606
      %v2662 = vunpack.c.l.b16 %v2609
      %v2663 = vunpack.c.l.b16 %v2613
      %v2664 = vunpack.c.l.b16 %v2616
      %v2665 = vunpack.c.l.b16 %v2620
      %v2666 = vunpack.c.l.b16 %v2623
      %v2667 = vunpack.c.l.b16 %v2627
      %v2668 = vunpack.c.l.b16 %v2630
      %v2669 = vpack.c.b16 %v2634, %v2633
      %v2670 = vpack.c.b16 %v2636, %v2635
      %v2671 = vpack.c.b16 %v2638, %v2637
      %v2672 = vpack.c.b16 %v2640, %v2639
      %v2673 = vpack.c.b16 %v2642, %v2641
      %v2674 = vpack.c.b16 %v2644, %v2643
      %v2675 = vpack.c.b16 %v2646, %v2645
      %v2676 = vpack.c.b16 %v2648, %v2647
      %v2677 = vpack.c.b16 %v2650, %v2649
      %v2678 = vpack.c.b16 %v2652, %v2651
      %v2679 = vpack.c.b16 %v2654, %v2653
      %v2680 = vpack.c.b16 %v2656, %v2655
      %v2681 = vpack.c.b16 %v2658, %v2657
      %v2682 = vpack.c.b16 %v2660, %v2659
      %v2683 = vpack.c.b16 %v2662, %v2661
      %v2684 = vpack.c.b16 %v2664, %v2663
      %v2685 = vpack.c.b16 %v2666, %v2665
      %v2686 = vpack.c.b16 %v2668, %v2667
      %v2688 = vsel %vm1906, %v2669, 0
      %v2691 = vsel %vm1906, %v2670, 0
      %v2694 = vsel %vm1906, %v2671, 0
      %v2697 = vsel %vm1906, %v2672, 0
      %v2700 = vsel %vm1906, %v2673, 0
      %v2703 = vsel %vm1906, %v2674, 0
      %v2706 = vsel %vm1906, %v2675, 0
      %v2709 = vsel %vm1906, %v2676, 0
      %v2712 = vsel %vm1906, %v2677, 0
      %v2715 = vsel %vm1906, %v2678, 0
      %v2718 = vsel %vm1906, %v2679, 0
      %v2721 = vsel %vm1906, %v2680, 0
      %v2724 = vsel %vm1906, %v2681, 0
      %v2727 = vsel %vm1906, %v2682, 0
      %v2730 = vsel %vm1906, %v2683, 0
      %v2733 = vsel %vm1906, %v2684, 0
      %v2736 = vsel %vm1906, %v2685, 0
      %v2739 = vsel %vm1906, %v2686, 0
      %v2742 = vsel %vm1961, %v2632, 0
      %2744 = vmatprep.subr.bf16.mxu0 0
      %2745 = vmatpush1.bf16.msra.mxu0 %v2742
      %2746 = vmatprep.subr.bf16.mxu0 0
      %2747 = vmatpush1.bf16.msra.mxu0 0
      %2748 = vmatprep.subr.bf16.mxu0 0
      %2749 = vmatpush1.bf16.msra.mxu0 0
      %2750 = vmatprep.subr.bf16.mxu0 0
      %2751 = vmatpush1.bf16.msra.mxu0 0
      %2752 = vmatprep.subr.bf16.mxu0 0
      %2753 = vmatpush1.bf16.msra.mxu0 0
      %2754 = vmatprep.subr.bf16.mxu0 0
      %2755 = vmatpush1.bf16.msra.mxu0 0
      %2756 = vmatprep.subr.bf16.mxu0 0
      %2757 = vmatpush1.bf16.msra.mxu0 0
      %2758 = vmatprep.subr.bf16.mxu0 0
      %2759 = vmatpush1.bf16.msra.mxu0 0
      %2760 = vmatprep.subr.bf16.mxu0 0
      %2761 = vmatpush1.bf16.msra.mxu0 0
      %2762 = vmatprep.subr.bf16.mxu0 0
      %2763 = vmatpush1.bf16.msra.mxu0 0
      %2764 = vmatprep.subr.bf16.mxu0 0
      %2765 = vmatpush1.bf16.msra.mxu0 0
      %2766 = vmatprep.subr.bf16.mxu0 0
      %2767 = vmatpush1.bf16.msra.mxu0 0
      %2768 = vmatprep.subr.bf16.mxu0 0
      %2769 = vmatpush1.bf16.msra.mxu0 0
      %2770 = vmatprep.subr.bf16.mxu0 0
      %2771 = vmatpush1.bf16.msra.mxu0 0
      %2772 = vmatprep.subr.bf16.mxu0 0
      %2773 = vmatpush1.bf16.msra.mxu0 0
      %2774 = vmatprep.subr.bf16.mxu0 0
      %2775 = vmatpush1.bf16.msra.mxu0 0
      %2776 = vmatprep.mubr.bf16.mxu0 0
      %2777 = vmatmul.mubr.bf16.gmra.mrb[0].mxu0 %v2688
      %v2778 = vpop.f32.mrb[0].mxu0
      %v2779 = vadd.f32 0.0, %v2778
      %v2780 = vpop.f32.mrb[0].mxu0
      %v2781 = vpop.f32.mrb[0].mxu0
      %v2782 = vadd.f32 0.0, %v2781
      %v2783 = vpop.f32.mrb[0].mxu0
      %2784 = vmatprep.mubr.bf16.mxu0 0
      %2785 = vmatmul.mubr.bf16.gmra.mrb[0].mxu0 %v2691
      %v2786 = vpop.f32.mrb[0].mxu0
      %v2787 = vadd.f32 0.0, %v2786
      %v2788 = vpop.f32.mrb[0].mxu0
      %v2789 = vpop.f32.mrb[0].mxu0
      %v2790 = vadd.f32 0.0, %v2789
      %v2791 = vpop.f32.mrb[0].mxu0
      %2792 = vmatprep.mubr.bf16.mxu0 0
      %2793 = vmatmul.mubr.bf16.gmra.mrb[0].mxu0 %v2694
      %v2794 = vpop.f32.mrb[0].mxu0
      %v2795 = vadd.f32 0.0, %v2794
      %v2796 = vpop.f32.mrb[0].mxu0
      %v2797 = vpop.f32.mrb[0].mxu0
      %v2798 = vadd.f32 0.0, %v2797
      %v2799 = vpop.f32.mrb[0].mxu0
      %2800 = vmatprep.mubr.bf16.mxu0 0
      %2801 = vmatmul.mubr.bf16.gmra.mrb[0].mxu0 %v2697
      %v2802 = vpop.f32.mrb[0].mxu0
      %v2803 = vadd.f32 0.0, %v2802
      %v2804 = vpop.f32.mrb[0].mxu0
      %v2805 = vpop.f32.mrb[0].mxu0
      %v2806 = vadd.f32 0.0, %v2805
      %v2807 = vpop.f32.mrb[0].mxu0
      %2808 = vmatprep.mubr.bf16.mxu0 0
      %2809 = vmatmul.mubr.bf16.gmra.mrb[0].mxu0 %v2700
      %v2810 = vpop.f32.mrb[0].mxu0
      %v2811 = vadd.f32 0.0, %v2810
      %v2812 = vpop.f32.mrb[0].mxu0
      %v2813 = vpop.f32.mrb[0].mxu0
      %v2814 = vadd.f32 0.0, %v2813
      %v2815 = vpop.f32.mrb[0].mxu0
      %2816 = vmatprep.mubr.bf16.mxu0 0
      %2817 = vmatmul.mubr.bf16.gmra.mrb[0].mxu0 %v2703
      %v2818 = vpop.f32.mrb[0].mxu0
      %v2819 = vadd.f32 0.0, %v2818
      %v2820 = vpop.f32.mrb[0].mxu0
      %v2821 = vpop.f32.mrb[0].mxu0
      %v2822 = vadd.f32 0.0, %v2821
      %v2823 = vpop.f32.mrb[0].mxu0
      %2824 = vmatprep.mubr.bf16.mxu0 0
      %2825 = vmatmul.mubr.bf16.gmra.mrb[0].mxu0 %v2706
      %v2826 = vpop.f32.mrb[0].mxu0
      %v2827 = vadd.f32 0.0, %v2826
      %v2828 = vpop.f32.mrb[0].mxu0
      %v2829 = vpop.f32.mrb[0].mxu0
      %v2830 = vadd.f32 0.0, %v2829
      %v2831 = vpop.f32.mrb[0].mxu0
      %2832 = vmatprep.mubr.bf16.mxu0 0
      %2833 = vmatmul.mubr.bf16.gmra.mrb[0].mxu0 %v2709
      %v2834 = vpop.f32.mrb[0].mxu0
      %v2835 = vadd.f32 0.0, %v2834
      %v2836 = vpop.f32.mrb[0].mxu0
      %v2837 = vpop.f32.mrb[0].mxu0
      %v2838 = vadd.f32 0.0, %v2837
      %v2839 = vpop.f32.mrb[0].mxu0
      %2840 = vmatprep.mubr.bf16.mxu0 0
      %2841 = vmatmul.mubr.bf16.gmra.mrb[0].mxu0 %v2712
      %v2842 = vpop.f32.mrb[0].mxu0
      %v2843 = vadd.f32 0.0, %v2842
      %v2844 = vpop.f32.mrb[0].mxu0
      %v2845 = vpop.f32.mrb[0].mxu0
      %v2846 = vadd.f32 0.0, %v2845
      %v2847 = vpop.f32.mrb[0].mxu0
      %2848 = vmatprep.mubr.bf16.mxu0 0
      %2849 = vmatmul.mubr.bf16.gmra.mrb[0].mxu0 %v2715
      %v2850 = vpop.f32.mrb[0].mxu0
      %v2851 = vadd.f32 0.0, %v2850
      %v2852 = vpop.f32.mrb[0].mxu0
      %v2853 = vpop.f32.mrb[0].mxu0
      %v2854 = vadd.f32 0.0, %v2853
      %v2855 = vpop.f32.mrb[0].mxu0
      %2856 = vmatprep.mubr.bf16.mxu0 0
      %2857 = vmatmul.mubr.bf16.gmra.mrb[0].mxu0 %v2718
      %v2858 = vpop.f32.mrb[0].mxu0
      %v2859 = vadd.f32 0.0, %v2858
      %v2860 = vpop.f32.mrb[0].mxu0
      %v2861 = vpop.f32.mrb[0].mxu0
      %v2862 = vadd.f32 0.0, %v2861
      %v2863 = vpop.f32.mrb[0].mxu0
      %2864 = vmatprep.mubr.bf16.mxu0 0
      %2865 = vmatmul.mubr.bf16.gmra.mrb[0].mxu0 %v2721
      %v2866 = vpop.f32.mrb[0].mxu0
      %v2867 = vadd.f32 0.0, %v2866
      %v2868 = vpop.f32.mrb[0].mxu0
      %v2869 = vpop.f32.mrb[0].mxu0
      %v2870 = vadd.f32 0.0, %v2869
      %v2871 = vpop.f32.mrb[0].mxu0
      %2872 = vmatprep.mubr.bf16.mxu0 0
      %2873 = vmatmul.mubr.bf16.gmra.mrb[0].mxu0 %v2724
      %v2874 = vpop.f32.mrb[0].mxu0
      %v2875 = vadd.f32 0.0, %v2874
      %v2876 = vpop.f32.mrb[0].mxu0
      %v2877 = vpop.f32.mrb[0].mxu0
      %v2878 = vadd.f32 0.0, %v2877
      %v2879 = vpop.f32.mrb[0].mxu0
      %2880 = vmatprep.mubr.bf16.mxu0 0
      %2881 = vmatmul.mubr.bf16.gmra.mrb[0].mxu0 %v2727
      %v2882 = vpop.f32.mrb[0].mxu0
      %v2883 = vadd.f32 0.0, %v2882
      %v2884 = vpop.f32.mrb[0].mxu0
      %v2885 = vpop.f32.mrb[0].mxu0
      %v2886 = vadd.f32 0.0, %v2885
      %v2887 = vpop.f32.mrb[0].mxu0
      %2888 = vmatprep.mubr.bf16.mxu0 0
      %2889 = vmatmul.mubr.bf16.gmra.mrb[0].mxu0 %v2730
      %v2890 = vpop.f32.mrb[0].mxu0
      %v2891 = vadd.f32 0.0, %v2890
      %v2892 = vpop.f32.mrb[0].mxu0
      %v2893 = vpop.f32.mrb[0].mxu0
      %v2894 = vadd.f32 0.0, %v2893
      %v2895 = vpop.f32.mrb[0].mxu0
      %2896 = vmatprep.mubr.bf16.mxu0 0
      %2897 = vmatmul.mubr.bf16.gmra.mrb[0].mxu0 %v2733
      %v2898 = vpop.f32.mrb[0].mxu0
      %v2899 = vadd.f32 0.0, %v2898
      %v2900 = vpop.f32.mrb[0].mxu0
      %v2901 = vpop.f32.mrb[0].mxu0
      %v2902 = vadd.f32 0.0, %v2901
      %v2903 = vpop.f32.mrb[0].mxu0
      %2904 = vmatprep.mubr.bf16.mxu0 0
      %2905 = vmatmul.mubr.bf16.gmra.mrb[0].mxu0 %v2736
      %v2906 = vpop.f32.mrb[0].mxu0
      %v2907 = vadd.f32 0.0, %v2906
      %v2908 = vpop.f32.mrb[0].mxu0
      %v2909 = vpop.f32.mrb[0].mxu0
      %v2910 = vadd.f32 0.0, %v2909
      %v2911 = vpop.f32.mrb[0].mxu0
      %2912 = vmatprep.mubr.bf16.mxu0 0
      %2913 = vmatmul.mubr.bf16.gmra.mrb[0].mxu0 %v2739
      %v2914 = vpop.f32.mrb[0].mxu0
      %v2915 = vadd.f32 0.0, %v2914
      %v2916 = vpop.f32.mrb[0].mxu0
      %v2917 = vpop.f32.mrb[0].mxu0
      %v2918 = vadd.f32 0.0, %v2917
      %v2919 = vpop.f32.mrb[0].mxu0
      %2920 = vdwg.mxu0
      %v2921 = vadd.f32 %v2324, %v2779
      %v2922 = vadd.f32 %v2327, %v2782
      %v2923 = vadd.f32 %v2332, %v2787
      %v2924 = vadd.f32 %v2335, %v2790
      %v2925 = vadd.f32 %v2340, %v2795
      %v2926 = vadd.f32 %v2343, %v2798
      %v2927 = vadd.f32 %v2348, %v2803
      %v2928 = vadd.f32 %v2351, %v2806
      %v2929 = vadd.f32 %v2356, %v2811
      %v2930 = vadd.f32 %v2359, %v2814
      %v2931 = vadd.f32 %v2364, %v2819
      %v2932 = vadd.f32 %v2367, %v2822
      %v2933 = vadd.f32 %v2372, %v2827
      %v2934 = vadd.f32 %v2375, %v2830
      %v2935 = vadd.f32 %v2380, %v2835
      %v2936 = vadd.f32 %v2383, %v2838
      %v2937 = vadd.f32 %v2388, %v2843
      %v2938 = vadd.f32 %v2391, %v2846
      %v2939 = vadd.f32 %v2396, %v2851
      %v2940 = vadd.f32 %v2399, %v2854
      %v2941 = vadd.f32 %v2404, %v2859
      %v2942 = vadd.f32 %v2407, %v2862
      %v2943 = vadd.f32 %v2412, %v2867
      %v2944 = vadd.f32 %v2415, %v2870
      %v2945 = vadd.f32 %v2420, %v2875
      %v2946 = vadd.f32 %v2423, %v2878
      %v2947 = vadd.f32 %v2428, %v2883
      %v2948 = vadd.f32 %v2431, %v2886
      %v2949 = vadd.f32 %v2436, %v2891
      %v2950 = vadd.f32 %v2439, %v2894
      %v2951 = vadd.f32 %v2444, %v2899
      %v2952 = vadd.f32 %v2447, %v2902
      %v2953 = vadd.f32 %v2452, %v2907
      %v2954 = vadd.f32 %v2455, %v2910
      %v2955 = vadd.f32 %v2460, %v2915
      %v2956 = vadd.f32 %v2463, %v2918
      %s2957 = scalar_lea.vmem %s3, 6
      %v2958 = vld [vmem:[%s2957] sm:$0x3]
      %v2961 = vunpack.c.l.b16 %v1370
      %v2962 = vunpack.c.l.b16 %v1371
      %v2963 = vpack.c.b16 %v2962, %v2961
      %v2965 = vsel %vm1906, %v2963, 0
      %v2968 = vsel %vm1961, %v2958, 0
      %2970 = vmatprep.subr.bf16.mxu0 0
      %2971 = vmatpush1.bf16.msra.mxu0 %v2968
      %2972 = vmatprep.subr.bf16.mxu0 0
      %2973 = vmatpush1.bf16.msra.mxu0 0
      %2974 = vmatprep.subr.bf16.mxu0 0
      %2975 = vmatpush1.bf16.msra.mxu0 0
      %2976 = vmatprep.subr.bf16.mxu0 0
      %2977 = vmatpush1.bf16.msra.mxu0 0
      %2978 = vmatprep.subr.bf16.mxu0 0
      %2979 = vmatpush1.bf16.msra.mxu0 0
      %2980 = vmatprep.subr.bf16.mxu0 0
      %2981 = vmatpush1.bf16.msra.mxu0 0
      %2982 = vmatprep.subr.bf16.mxu0 0
      %2983 = vmatpush1.bf16.msra.mxu0 0
      %2984 = vmatprep.subr.bf16.mxu0 0
      %2985 = vmatpush1.bf16.msra.mxu0 0
      %2986 = vmatprep.subr.bf16.mxu0 0
      %2987 = vmatpush1.bf16.msra.mxu0 0
      %2988 = vmatprep.subr.bf16.mxu0 0
      %2989 = vmatpush1.bf16.msra.mxu0 0
      %2990 = vmatprep.subr.bf16.mxu0 0
      %2991 = vmatpush1.bf16.msra.mxu0 0
      %2992 = vmatprep.subr.bf16.mxu0 0
      %2993 = vmatpush1.bf16.msra.mxu0 0
      %2994 = vmatprep.subr.bf16.mxu0 0
      %2995 = vmatpush1.bf16.msra.mxu0 0
      %2996 = vmatprep.subr.bf16.mxu0 0
      %2997 = vmatpush1.bf16.msra.mxu0 0
      %2998 = vmatprep.subr.bf16.mxu0 0
      %2999 = vmatpush1.bf16.msra.mxu0 0
      %3000 = vmatprep.subr.bf16.mxu0 0
      %3001 = vmatpush1.bf16.msra.mxu0 0
      %3002 = vmatprep.mubr.bf16.mxu0 0
      %3003 = vmatmul.mubr.bf16.gmra.mrb[0].mxu0 %v2236
      %v3004 = vpop.f32.mrb[0].mxu0
      %v3005 = vadd.f32 0.0, %v3004
      %v3006 = vpop.f32.mrb[0].mxu0
      %v3007 = vpop.f32.mrb[0].mxu0
      %v3008 = vadd.f32 0.0, %v3007
      %v3009 = vpop.f32.mrb[0].mxu0
      %3010 = vmatprep.mubr.bf16.mxu0 0
      %3011 = vmatmul.mubr.bf16.gmra.mrb[0].mxu0 %v2239
      %v3012 = vpop.f32.mrb[0].mxu0
      %v3013 = vadd.f32 0.0, %v3012
      %v3014 = vpop.f32.mrb[0].mxu0
      %v3015 = vpop.f32.mrb[0].mxu0
      %v3016 = vadd.f32 0.0, %v3015
      %v3017 = vpop.f32.mrb[0].mxu0
      %3018 = vmatprep.mubr.bf16.mxu0 0
      %3019 = vmatmul.mubr.bf16.gmra.mrb[0].mxu0 %v2242
      %v3020 = vpop.f32.mrb[0].mxu0
      %v3021 = vadd.f32 0.0, %v3020
      %v3022 = vpop.f32.mrb[0].mxu0
      %v3023 = vpop.f32.mrb[0].mxu0
      %v3024 = vadd.f32 0.0, %v3023
      %v3025 = vpop.f32.mrb[0].mxu0
      %3026 = vmatprep.mubr.bf16.mxu0 0
      %3027 = vmatmul.mubr.bf16.gmra.mrb[0].mxu0 %v2245
      %v3028 = vpop.f32.mrb[0].mxu0
      %v3029 = vadd.f32 0.0, %v3028
      %v3030 = vpop.f32.mrb[0].mxu0
      %v3031 = vpop.f32.mrb[0].mxu0
      %v3032 = vadd.f32 0.0, %v3031
      %v3033 = vpop.f32.mrb[0].mxu0
      %3034 = vmatprep.mubr.bf16.mxu0 0
      %3035 = vmatmul.mubr.bf16.gmra.mrb[0].mxu0 %v2248
      %v3036 = vpop.f32.mrb[0].mxu0
      %v3037 = vadd.f32 0.0, %v3036
      %v3038 = vpop.f32.mrb[0].mxu0
      %v3039 = vpop.f32.mrb[0].mxu0
      %v3040 = vadd.f32 0.0, %v3039
      %v3041 = vpop.f32.mrb[0].mxu0
      %3042 = vmatprep.mubr.bf16.mxu0 0
      %3043 = vmatmul.mubr.bf16.gmra.mrb[0].mxu0 %v2251
      %v3044 = vpop.f32.mrb[0].mxu0
      %v3045 = vadd.f32 0.0, %v3044
      %v3046 = vpop.f32.mrb[0].mxu0
      %v3047 = vpop.f32.mrb[0].mxu0
      %v3048 = vadd.f32 0.0, %v3047
      %v3049 = vpop.f32.mrb[0].mxu0
      %3050 = vmatprep.mubr.bf16.mxu0 0
      %3051 = vmatmul.mubr.bf16.gmra.mrb[0].mxu0 %v2254
      %v3052 = vpop.f32.mrb[0].mxu0
      %v3053 = vadd.f32 0.0, %v3052
      %v3054 = vpop.f32.mrb[0].mxu0
      %v3055 = vpop.f32.mrb[0].mxu0
      %v3056 = vadd.f32 0.0, %v3055
      %v3057 = vpop.f32.mrb[0].mxu0
      %3058 = vmatprep.mubr.bf16.mxu0 0
      %3059 = vmatmul.mubr.bf16.gmra.mrb[0].mxu0 %v2257
      %v3060 = vpop.f32.mrb[0].mxu0
      %v3061 = vadd.f32 0.0, %v3060
      %v3062 = vpop.f32.mrb[0].mxu0
      %v3063 = vpop.f32.mrb[0].mxu0
      %v3064 = vadd.f32 0.0, %v3063
      %v3065 = vpop.f32.mrb[0].mxu0
      %3066 = vmatprep.mubr.bf16.mxu0 0
      %3067 = vmatmul.mubr.bf16.gmra.mrb[0].mxu0 %v2260
      %v3068 = vpop.f32.mrb[0].mxu0
      %v3069 = vadd.f32 0.0, %v3068
      %v3070 = vpop.f32.mrb[0].mxu0
      %v3071 = vpop.f32.mrb[0].mxu0
      %v3072 = vadd.f32 0.0, %v3071
      %v3073 = vpop.f32.mrb[0].mxu0
      %3074 = vmatprep.mubr.bf16.mxu0 0
      %3075 = vmatmul.mubr.bf16.gmra.mrb[0].mxu0 %v2263
      %v3076 = vpop.f32.mrb[0].mxu0
      %v3077 = vadd.f32 0.0, %v3076
      %v3078 = vpop.f32.mrb[0].mxu0
      %v3079 = vpop.f32.mrb[0].mxu0
      %v3080 = vadd.f32 0.0, %v3079
      %v3081 = vpop.f32.mrb[0].mxu0
      %3082 = vmatprep.mubr.bf16.mxu0 0
      %3083 = vmatmul.mubr.bf16.gmra.mrb[0].mxu0 %v2266
      %v3084 = vpop.f32.mrb[0].mxu0
      %v3085 = vadd.f32 0.0, %v3084
      %v3086 = vpop.f32.mrb[0].mxu0
      %v3087 = vpop.f32.mrb[0].mxu0
      %v3088 = vadd.f32 0.0, %v3087
      %v3089 = vpop.f32.mrb[0].mxu0
      %3090 = vmatprep.mubr.bf16.mxu0 0
      %3091 = vmatmul.mubr.bf16.gmra.mrb[0].mxu0 %v2269
      %v3092 = vpop.f32.mrb[0].mxu0
      %v3093 = vadd.f32 0.0, %v3092
      %v3094 = vpop.f32.mrb[0].mxu0
      %v3095 = vpop.f32.mrb[0].mxu0
      %v3096 = vadd.f32 0.0, %v3095
      %v3097 = vpop.f32.mrb[0].mxu0
      %3098 = vmatprep.mubr.bf16.mxu0 0
      %3099 = vmatmul.mubr.bf16.gmra.mrb[0].mxu0 %v2272
      %v3100 = vpop.f32.mrb[0].mxu0
      %v3101 = vadd.f32 0.0, %v3100
      %v3102 = vpop.f32.mrb[0].mxu0
      %v3103 = vpop.f32.mrb[0].mxu0
      %v3104 = vadd.f32 0.0, %v3103
      %v3105 = vpop.f32.mrb[0].mxu0
      %3106 = vmatprep.mubr.bf16.mxu0 0
      %3107 = vmatmul.mubr.bf16.gmra.mrb[0].mxu0 %v2275
      %v3108 = vpop.f32.mrb[0].mxu0
      %v3109 = vadd.f32 0.0, %v3108
      %v3110 = vpop.f32.mrb[0].mxu0
      %v3111 = vpop.f32.mrb[0].mxu0
      %v3112 = vadd.f32 0.0, %v3111
      %v3113 = vpop.f32.mrb[0].mxu0
      %3114 = vmatprep.mubr.bf16.mxu0 0
      %3115 = vmatmul.mubr.bf16.gmra.mrb[0].mxu0 %v2278
      %v3116 = vpop.f32.mrb[0].mxu0
      %v3117 = vadd.f32 0.0, %v3116
      %v3118 = vpop.f32.mrb[0].mxu0
      %v3119 = vpop.f32.mrb[0].mxu0
      %v3120 = vadd.f32 0.0, %v3119
      %v3121 = vpop.f32.mrb[0].mxu0
      %3122 = vmatprep.mubr.bf16.mxu0 0
      %3123 = vmatmul.mubr.bf16.gmra.mrb[0].mxu0 %v2281
      %v3124 = vpop.f32.mrb[0].mxu0
      %v3125 = vadd.f32 0.0, %v3124
      %v3126 = vpop.f32.mrb[0].mxu0
      %v3127 = vpop.f32.mrb[0].mxu0
      %v3128 = vadd.f32 0.0, %v3127
      %v3129 = vpop.f32.mrb[0].mxu0
      %3130 = vmatprep.mubr.bf16.mxu0 0
      %3131 = vmatmul.mubr.bf16.gmra.mrb[0].mxu0 %v2284
      %v3132 = vpop.f32.mrb[0].mxu0
      %v3133 = vadd.f32 0.0, %v3132
      %v3134 = vpop.f32.mrb[0].mxu0
      %v3135 = vpop.f32.mrb[0].mxu0
      %v3136 = vadd.f32 0.0, %v3135
      %v3137 = vpop.f32.mrb[0].mxu0
      %3138 = vmatprep.mubr.bf16.mxu0 0
      %3139 = vmatmul.mubr.bf16.gmra.mrb[0].mxu0 %v2965
      %v3140 = vpop.f32.mrb[0].mxu0
      %v3141 = vadd.f32 0.0, %v3140
      %v3142 = vpop.f32.mrb[0].mxu0
      %v3143 = vpop.f32.mrb[0].mxu0
      %v3144 = vadd.f32 0.0, %v3143
      %v3145 = vpop.f32.mrb[0].mxu0
      %3146 = vdwg.mxu0
      %v3147 = vadd.f32 %v2921, %v3005
      %v3148 = vadd.f32 %v2922, %v3008
      %v3149 = vadd.f32 %v2923, %v3013
      %v3150 = vadd.f32 %v2924, %v3016
      %v3151 = vadd.f32 %v2925, %v3021
      %v3152 = vadd.f32 %v2926, %v3024
      %v3153 = vadd.f32 %v2927, %v3029
      %v3154 = vadd.f32 %v2928, %v3032
      %v3155 = vadd.f32 %v2929, %v3037
      %v3156 = vadd.f32 %v2930, %v3040
      %v3157 = vadd.f32 %v2931, %v3045
      %v3158 = vadd.f32 %v2932, %v3048
      %v3159 = vadd.f32 %v2933, %v3053
      %v3160 = vadd.f32 %v2934, %v3056
      %v3161 = vadd.f32 %v2935, %v3061
      %v3162 = vadd.f32 %v2936, %v3064
      %v3163 = vadd.f32 %v2937, %v3069
      %v3164 = vadd.f32 %v2938, %v3072
      %v3165 = vadd.f32 %v2939, %v3077
      %v3166 = vadd.f32 %v2940, %v3080
      %v3167 = vadd.f32 %v2941, %v3085
      %v3168 = vadd.f32 %v2942, %v3088
      %v3169 = vadd.f32 %v2943, %v3093
      %v3170 = vadd.f32 %v2944, %v3096
      %v3171 = vadd.f32 %v2945, %v3101
      %v3172 = vadd.f32 %v2946, %v3104
      %v3173 = vadd.f32 %v2947, %v3109
      %v3174 = vadd.f32 %v2948, %v3112
      %v3175 = vadd.f32 %v2949, %v3117
      %v3176 = vadd.f32 %v2950, %v3120
      %v3177 = vadd.f32 %v2951, %v3125
      %v3178 = vadd.f32 %v2952, %v3128
      %v3179 = vadd.f32 %v2953, %v3133
      %v3180 = vadd.f32 %v2954, %v3136
      %v3181 = vadd.f32 %v2955, %v3141
      %v3182 = vadd.f32 %v2956, %v3144
      %v3184 = vshrl.u32 %v1370, 16
      %v3186 = vrot.slane %v3184, 4
      %v3187 = vshll.u32 %v1370, 16
      %v3189 = vrot.slane %v3187, 5
      %v3190 = vor.u32 %v3186, %v3189
      %v3191 = vrot.slane %v3190, 4
      %v3193 = vshll.u32 %v1371, 16
      %v3195 = vrot.slane %v3193, 5
      %v3196 = vsel %vm1417, %v3191, %v3195
      %v3197 = vshrl.u32 %v1371, 16
      %v3199 = vrot.slane %v3197, 4
      %v3200 = vor.u32 %v3199, %v3195
      %v3201 = vrot.slane %v3200, 4
      %v3203 = vshll.u32 %v1392, 16
      %v3205 = vrot.slane %v3203, 5
      %v3206 = vsel %vm1417, %v3201, %v3205
      %s3207 = scalar_lea.vmem %s3, 8
      %v3208 = vld [vmem:[%s3207] sm:$0x3]
      %v3209 = vunpack.c.l.b16 %v3196
      %v3210 = vunpack.c.l.b16 %v3206
      %v3211 = vpack.c.b16 %v3210, %v3209
      %v3213 = vsel %vm1906, %v3211, 0
      %v3216 = vsel %vm1961, %v3208, 0
      %3218 = vmatprep.subr.bf16.mxu0 0
      %3219 = vmatpush1.bf16.msra.mxu0 %v3216
      %3220 = vmatprep.subr.bf16.mxu0 0
      %3221 = vmatpush1.bf16.msra.mxu0 0
      %3222 = vmatprep.subr.bf16.mxu0 0
      %3223 = vmatpush1.bf16.msra.mxu0 0
      %3224 = vmatprep.subr.bf16.mxu0 0
      %3225 = vmatpush1.bf16.msra.mxu0 0
      %3226 = vmatprep.subr.bf16.mxu0 0
      %3227 = vmatpush1.bf16.msra.mxu0 0
      %3228 = vmatprep.subr.bf16.mxu0 0
      %3229 = vmatpush1.bf16.msra.mxu0 0
      %3230 = vmatprep.subr.bf16.mxu0 0
      %3231 = vmatpush1.bf16.msra.mxu0 0
      %3232 = vmatprep.subr.bf16.mxu0 0
      %3233 = vmatpush1.bf16.msra.mxu0 0
      %3234 = vmatprep.subr.bf16.mxu0 0
      %3235 = vmatpush1.bf16.msra.mxu0 0
      %3236 = vmatprep.subr.bf16.mxu0 0
      %3237 = vmatpush1.bf16.msra.mxu0 0
      %3238 = vmatprep.subr.bf16.mxu0 0
      %3239 = vmatpush1.bf16.msra.mxu0 0
      %3240 = vmatprep.subr.bf16.mxu0 0
      %3241 = vmatpush1.bf16.msra.mxu0 0
      %3242 = vmatprep.subr.bf16.mxu0 0
      %3243 = vmatpush1.bf16.msra.mxu0 0
      %3244 = vmatprep.subr.bf16.mxu0 0
      %3245 = vmatpush1.bf16.msra.mxu0 0
      %3246 = vmatprep.subr.bf16.mxu0 0
      %3247 = vmatpush1.bf16.msra.mxu0 0
      %3248 = vmatprep.subr.bf16.mxu0 0
      %3249 = vmatpush1.bf16.msra.mxu0 0
      %3250 = vmatprep.mubr.bf16.mxu0 0
      %3251 = vmatmul.mubr.bf16.gmra.mrb[0].mxu0 %v1911
      %v3252 = vpop.f32.mrb[0].mxu0
      %v3253 = vadd.f32 0.0, %v3252
      %v3254 = vpop.f32.mrb[0].mxu0
      %v3255 = vpop.f32.mrb[0].mxu0
      %v3256 = vadd.f32 0.0, %v3255
      %v3257 = vpop.f32.mrb[0].mxu0
      %3258 = vmatprep.mubr.bf16.mxu0 0
      %3259 = vmatmul.mubr.bf16.gmra.mrb[0].mxu0 %v1914
      %v3260 = vpop.f32.mrb[0].mxu0
      %v3261 = vadd.f32 0.0, %v3260
      %v3262 = vpop.f32.mrb[0].mxu0
      %v3263 = vpop.f32.mrb[0].mxu0
      %v3264 = vadd.f32 0.0, %v3263
      %v3265 = vpop.f32.mrb[0].mxu0
      %3266 = vmatprep.mubr.bf16.mxu0 0
      %3267 = vmatmul.mubr.bf16.gmra.mrb[0].mxu0 %v1917
      %v3268 = vpop.f32.mrb[0].mxu0
      %v3269 = vadd.f32 0.0, %v3268
      %v3270 = vpop.f32.mrb[0].mxu0
      %v3271 = vpop.f32.mrb[0].mxu0
      %v3272 = vadd.f32 0.0, %v3271
      %v3273 = vpop.f32.mrb[0].mxu0
      %3274 = vmatprep.mubr.bf16.mxu0 0
      %3275 = vmatmul.mubr.bf16.gmra.mrb[0].mxu0 %v1920
      %v3276 = vpop.f32.mrb[0].mxu0
      %v3277 = vadd.f32 0.0, %v3276
      %v3278 = vpop.f32.mrb[0].mxu0
      %v3279 = vpop.f32.mrb[0].mxu0
      %v3280 = vadd.f32 0.0, %v3279
      %v3281 = vpop.f32.mrb[0].mxu0
      %3282 = vmatprep.mubr.bf16.mxu0 0
      %3283 = vmatmul.mubr.bf16.gmra.mrb[0].mxu0 %v1923
      %v3284 = vpop.f32.mrb[0].mxu0
      %v3285 = vadd.f32 0.0, %v3284
      %v3286 = vpop.f32.mrb[0].mxu0
      %v3287 = vpop.f32.mrb[0].mxu0
      %v3288 = vadd.f32 0.0, %v3287
      %v3289 = vpop.f32.mrb[0].mxu0
      %3290 = vmatprep.mubr.bf16.mxu0 0
      %3291 = vmatmul.mubr.bf16.gmra.mrb[0].mxu0 %v1926
      %v3292 = vpop.f32.mrb[0].mxu0
      %v3293 = vadd.f32 0.0, %v3292
      %v3294 = vpop.f32.mrb[0].mxu0
      %v3295 = vpop.f32.mrb[0].mxu0
      %v3296 = vadd.f32 0.0, %v3295
      %v3297 = vpop.f32.mrb[0].mxu0
      %3298 = vmatprep.mubr.bf16.mxu0 0
      %3299 = vmatmul.mubr.bf16.gmra.mrb[0].mxu0 %v1929
      %v3300 = vpop.f32.mrb[0].mxu0
      %v3301 = vadd.f32 0.0, %v3300
      %v3302 = vpop.f32.mrb[0].mxu0
      %v3303 = vpop.f32.mrb[0].mxu0
      %v3304 = vadd.f32 0.0, %v3303
      %v3305 = vpop.f32.mrb[0].mxu0
      %3306 = vmatprep.mubr.bf16.mxu0 0
      %3307 = vmatmul.mubr.bf16.gmra.mrb[0].mxu0 %v1932
      %v3308 = vpop.f32.mrb[0].mxu0
      %v3309 = vadd.f32 0.0, %v3308
      %v3310 = vpop.f32.mrb[0].mxu0
      %v3311 = vpop.f32.mrb[0].mxu0
      %v3312 = vadd.f32 0.0, %v3311
      %v3313 = vpop.f32.mrb[0].mxu0
      %3314 = vmatprep.mubr.bf16.mxu0 0
      %3315 = vmatmul.mubr.bf16.gmra.mrb[0].mxu0 %v1935
      %v3316 = vpop.f32.mrb[0].mxu0
      %v3317 = vadd.f32 0.0, %v3316
      %v3318 = vpop.f32.mrb[0].mxu0
      %v3319 = vpop.f32.mrb[0].mxu0
      %v3320 = vadd.f32 0.0, %v3319
      %v3321 = vpop.f32.mrb[0].mxu0
      %3322 = vmatprep.mubr.bf16.mxu0 0
      %3323 = vmatmul.mubr.bf16.gmra.mrb[0].mxu0 %v1938
      %v3324 = vpop.f32.mrb[0].mxu0
      %v3325 = vadd.f32 0.0, %v3324
      %v3326 = vpop.f32.mrb[0].mxu0
      %v3327 = vpop.f32.mrb[0].mxu0
      %v3328 = vadd.f32 0.0, %v3327
      %v3329 = vpop.f32.mrb[0].mxu0
      %3330 = vmatprep.mubr.bf16.mxu0 0
      %3331 = vmatmul.mubr.bf16.gmra.mrb[0].mxu0 %v1941
      %v3332 = vpop.f32.mrb[0].mxu0
      %v3333 = vadd.f32 0.0, %v3332
      %v3334 = vpop.f32.mrb[0].mxu0
      %v3335 = vpop.f32.mrb[0].mxu0
      %v3336 = vadd.f32 0.0, %v3335
      %v3337 = vpop.f32.mrb[0].mxu0
      %3338 = vmatprep.mubr.bf16.mxu0 0
      %3339 = vmatmul.mubr.bf16.gmra.mrb[0].mxu0 %v1944
      %v3340 = vpop.f32.mrb[0].mxu0
      %v3341 = vadd.f32 0.0, %v3340
      %v3342 = vpop.f32.mrb[0].mxu0
      %v3343 = vpop.f32.mrb[0].mxu0
      %v3344 = vadd.f32 0.0, %v3343
      %v3345 = vpop.f32.mrb[0].mxu0
      %3346 = vmatprep.mubr.bf16.mxu0 0
      %3347 = vmatmul.mubr.bf16.gmra.mrb[0].mxu0 %v1947
      %v3348 = vpop.f32.mrb[0].mxu0
      %v3349 = vadd.f32 0.0, %v3348
      %v3350 = vpop.f32.mrb[0].mxu0
      %v3351 = vpop.f32.mrb[0].mxu0
      %v3352 = vadd.f32 0.0, %v3351
      %v3353 = vpop.f32.mrb[0].mxu0
      %3354 = vmatprep.mubr.bf16.mxu0 0
      %3355 = vmatmul.mubr.bf16.gmra.mrb[0].mxu0 %v1950
      %v3356 = vpop.f32.mrb[0].mxu0
      %v3357 = vadd.f32 0.0, %v3356
      %v3358 = vpop.f32.mrb[0].mxu0
      %v3359 = vpop.f32.mrb[0].mxu0
      %v3360 = vadd.f32 0.0, %v3359
      %v3361 = vpop.f32.mrb[0].mxu0
      %3362 = vmatprep.mubr.bf16.mxu0 0
      %3363 = vmatmul.mubr.bf16.gmra.mrb[0].mxu0 %v1953
      %v3364 = vpop.f32.mrb[0].mxu0
      %v3365 = vadd.f32 0.0, %v3364
      %v3366 = vpop.f32.mrb[0].mxu0
      %v3367 = vpop.f32.mrb[0].mxu0
      %v3368 = vadd.f32 0.0, %v3367
      %v3369 = vpop.f32.mrb[0].mxu0
      %3370 = vmatprep.mubr.bf16.mxu0 0
      %3371 = vmatmul.mubr.bf16.gmra.mrb[0].mxu0 %v1956
      %v3372 = vpop.f32.mrb[0].mxu0
      %v3373 = vadd.f32 0.0, %v3372
      %v3374 = vpop.f32.mrb[0].mxu0
      %v3375 = vpop.f32.mrb[0].mxu0
      %v3376 = vadd.f32 0.0, %v3375
      %v3377 = vpop.f32.mrb[0].mxu0
      %3378 = vmatprep.mubr.bf16.mxu0 0
      %3379 = vmatmul.mubr.bf16.gmra.mrb[0].mxu0 %v1959
      %v3380 = vpop.f32.mrb[0].mxu0
      %v3381 = vadd.f32 0.0, %v3380
      %v3382 = vpop.f32.mrb[0].mxu0
      %v3383 = vpop.f32.mrb[0].mxu0
      %v3384 = vadd.f32 0.0, %v3383
      %v3385 = vpop.f32.mrb[0].mxu0
      %3386 = vmatprep.mubr.bf16.mxu0 0
      %3387 = vmatmul.mubr.bf16.gmra.mrb[0].mxu0 %v3213
      %v3388 = vpop.f32.mrb[0].mxu0
      %v3389 = vadd.f32 0.0, %v3388
      %v3390 = vpop.f32.mrb[0].mxu0
      %v3391 = vpop.f32.mrb[0].mxu0
      %v3392 = vadd.f32 0.0, %v3391
      %v3393 = vpop.f32.mrb[0].mxu0
      %3394 = vdwg.mxu0
      %v3395 = vadd.f32 %v3147, %v3253
      %v3396 = vadd.f32 %v3148, %v3256
      %v3397 = vadd.f32 %v3149, %v3261
      %v3398 = vadd.f32 %v3150, %v3264
      %v3399 = vadd.f32 %v3151, %v3269
      %v3400 = vadd.f32 %v3152, %v3272
      %v3401 = vadd.f32 %v3153, %v3277
      %v3402 = vadd.f32 %v3154, %v3280
      %v3403 = vadd.f32 %v3155, %v3285
      %v3404 = vadd.f32 %v3156, %v3288
      %v3405 = vadd.f32 %v3157, %v3293
      %v3406 = vadd.f32 %v3158, %v3296
      %v3407 = vadd.f32 %v3159, %v3301
      %v3408 = vadd.f32 %v3160, %v3304
      %v3409 = vadd.f32 %v3161, %v3309
      %v3410 = vadd.f32 %v3162, %v3312
      %v3411 = vadd.f32 %v3163, %v3317
      %v3412 = vadd.f32 %v3164, %v3320
      %v3413 = vadd.f32 %v3165, %v3325
      %v3414 = vadd.f32 %v3166, %v3328
      %v3415 = vadd.f32 %v3167, %v3333
      %v3416 = vadd.f32 %v3168, %v3336
      %v3417 = vadd.f32 %v3169, %v3341
      %v3418 = vadd.f32 %v3170, %v3344
      %v3419 = vadd.f32 %v3171, %v3349
      %v3420 = vadd.f32 %v3172, %v3352
      %v3421 = vadd.f32 %v3173, %v3357
      %v3422 = vadd.f32 %v3174, %v3360
      %v3423 = vadd.f32 %v3175, %v3365
      %v3424 = vadd.f32 %v3176, %v3368
      %v3425 = vadd.f32 %v3177, %v3373
      %v3426 = vadd.f32 %v3178, %v3376
      %v3427 = vadd.f32 %v3179, %v3381
      %v3428 = vadd.f32 %v3180, %v3384
      %v3429 = vadd.f32 %v3181, %v3389
      %v3430 = vadd.f32 %v3182, %v3392
      %v3433 = vrot.slane %v1412, 5
      %v3434 = vrot.slane %v3433, 4
      %v3435 = vrot.slane %v1371, 5
      %v3436 = vsel %vm2504, %v3434, %v3435
      %v3437 = vrot.slane %v3435, 4
      %v3438 = vrot.slane %v1392, 5
      %v3439 = vsel %vm2504, %v3437, %v3438
      %s3440 = scalar_lea.vmem %s3, 10
      %v3441 = vld [vmem:[%s3440] sm:$0x3]
      %v3442 = vunpack.c.l.b16 %v3436
      %v3443 = vunpack.c.l.b16 %v3439
      %v3444 = vpack.c.b16 %v3443, %v3442
      %v3446 = vsel %vm1906, %v3444, 0
      %v3449 = vsel %vm1961, %v3441, 0
      %3451 = vmatprep.subr.bf16.mxu0 0
      %3452 = vmatpush1.bf16.msra.mxu0 %v3449
      %3453 = vmatprep.subr.bf16.mxu0 0
      %3454 = vmatpush1.bf16.msra.mxu0 0
      %3455 = vmatprep.subr.bf16.mxu0 0
      %3456 = vmatpush1.bf16.msra.mxu0 0
      %3457 = vmatprep.subr.bf16.mxu0 0
      %3458 = vmatpush1.bf16.msra.mxu0 0
      %3459 = vmatprep.subr.bf16.mxu0 0
      %3460 = vmatpush1.bf16.msra.mxu0 0
      %3461 = vmatprep.subr.bf16.mxu0 0
      %3462 = vmatpush1.bf16.msra.mxu0 0
      %3463 = vmatprep.subr.bf16.mxu0 0
      %3464 = vmatpush1.bf16.msra.mxu0 0
      %3465 = vmatprep.subr.bf16.mxu0 0
      %3466 = vmatpush1.bf16.msra.mxu0 0
      %3467 = vmatprep.subr.bf16.mxu0 0
      %3468 = vmatpush1.bf16.msra.mxu0 0
      %3469 = vmatprep.subr.bf16.mxu0 0
      %3470 = vmatpush1.bf16.msra.mxu0 0
      %3471 = vmatprep.subr.bf16.mxu0 0
      %3472 = vmatpush1.bf16.msra.mxu0 0
      %3473 = vmatprep.subr.bf16.mxu0 0
      %3474 = vmatpush1.bf16.msra.mxu0 0
      %3475 = vmatprep.subr.bf16.mxu0 0
      %3476 = vmatpush1.bf16.msra.mxu0 0
      %3477 = vmatprep.subr.bf16.mxu0 0
      %3478 = vmatpush1.bf16.msra.mxu0 0
      %3479 = vmatprep.subr.bf16.mxu0 0
      %3480 = vmatpush1.bf16.msra.mxu0 0
      %3481 = vmatprep.subr.bf16.mxu0 0
      %3482 = vmatpush1.bf16.msra.mxu0 0
      %3483 = vmatprep.mubr.bf16.mxu0 0
      %3484 = vmatmul.mubr.bf16.gmra.mrb[0].mxu0 %v2691
      %v3485 = vpop.f32.mrb[0].mxu0
      %v3486 = vadd.f32 0.0, %v3485
      %v3487 = vpop.f32.mrb[0].mxu0
      %v3488 = vpop.f32.mrb[0].mxu0
      %v3489 = vadd.f32 0.0, %v3488
      %v3490 = vpop.f32.mrb[0].mxu0
      %3491 = vmatprep.mubr.bf16.mxu0 0
      %3492 = vmatmul.mubr.bf16.gmra.mrb[0].mxu0 %v2694
      %v3493 = vpop.f32.mrb[0].mxu0
      %v3494 = vadd.f32 0.0, %v3493
      %v3495 = vpop.f32.mrb[0].mxu0
      %v3496 = vpop.f32.mrb[0].mxu0
      %v3497 = vadd.f32 0.0, %v3496
      %v3498 = vpop.f32.mrb[0].mxu0
      %3499 = vmatprep.mubr.bf16.mxu0 0
      %3500 = vmatmul.mubr.bf16.gmra.mrb[0].mxu0 %v2697
      %v3501 = vpop.f32.mrb[0].mxu0
      %v3502 = vadd.f32 0.0, %v3501
      %v3503 = vpop.f32.mrb[0].mxu0
      %v3504 = vpop.f32.mrb[0].mxu0
      %v3505 = vadd.f32 0.0, %v3504
      %v3506 = vpop.f32.mrb[0].mxu0
      %3507 = vmatprep.mubr.bf16.mxu0 0
      %3508 = vmatmul.mubr.bf16.gmra.mrb[0].mxu0 %v2700
      %v3509 = vpop.f32.mrb[0].mxu0
      %v3510 = vadd.f32 0.0, %v3509
      %v3511 = vpop.f32.mrb[0].mxu0
      %v3512 = vpop.f32.mrb[0].mxu0
      %v3513 = vadd.f32 0.0, %v3512
      %v3514 = vpop.f32.mrb[0].mxu0
      %3515 = vmatprep.mubr.bf16.mxu0 0
      %3516 = vmatmul.mubr.bf16.gmra.mrb[0].mxu0 %v2703
      %v3517 = vpop.f32.mrb[0].mxu0
      %v3518 = vadd.f32 0.0, %v3517
      %v3519 = vpop.f32.mrb[0].mxu0
      %v3520 = vpop.f32.mrb[0].mxu0
      %v3521 = vadd.f32 0.0, %v3520
      %v3522 = vpop.f32.mrb[0].mxu0
      %3523 = vmatprep.mubr.bf16.mxu0 0
      %3524 = vmatmul.mubr.bf16.gmra.mrb[0].mxu0 %v2706
      %v3525 = vpop.f32.mrb[0].mxu0
      %v3526 = vadd.f32 0.0, %v3525
      %v3527 = vpop.f32.mrb[0].mxu0
      %v3528 = vpop.f32.mrb[0].mxu0
      %v3529 = vadd.f32 0.0, %v3528
      %v3530 = vpop.f32.mrb[0].mxu0
      %3531 = vmatprep.mubr.bf16.mxu0 0
      %3532 = vmatmul.mubr.bf16.gmra.mrb[0].mxu0 %v2709
      %v3533 = vpop.f32.mrb[0].mxu0
      %v3534 = vadd.f32 0.0, %v3533
      %v3535 = vpop.f32.mrb[0].mxu0
      %v3536 = vpop.f32.mrb[0].mxu0
      %v3537 = vadd.f32 0.0, %v3536
      %v3538 = vpop.f32.mrb[0].mxu0
      %3539 = vmatprep.mubr.bf16.mxu0 0
      %3540 = vmatmul.mubr.bf16.gmra.mrb[0].mxu0 %v2712
      %v3541 = vpop.f32.mrb[0].mxu0
      %v3542 = vadd.f32 0.0, %v3541
      %v3543 = vpop.f32.mrb[0].mxu0
      %v3544 = vpop.f32.mrb[0].mxu0
      %v3545 = vadd.f32 0.0, %v3544
      %v3546 = vpop.f32.mrb[0].mxu0
      %3547 = vmatprep.mubr.bf16.mxu0 0
      %3548 = vmatmul.mubr.bf16.gmra.mrb[0].mxu0 %v2715
      %v3549 = vpop.f32.mrb[0].mxu0
      %v3550 = vadd.f32 0.0, %v3549
      %v3551 = vpop.f32.mrb[0].mxu0
      %v3552 = vpop.f32.mrb[0].mxu0
      %v3553 = vadd.f32 0.0, %v3552
      %v3554 = vpop.f32.mrb[0].mxu0
      %3555 = vmatprep.mubr.bf16.mxu0 0
      %3556 = vmatmul.mubr.bf16.gmra.mrb[0].mxu0 %v2718
      %v3557 = vpop.f32.mrb[0].mxu0
      %v3558 = vadd.f32 0.0, %v3557
      %v3559 = vpop.f32.mrb[0].mxu0
      %v3560 = vpop.f32.mrb[0].mxu0
      %v3561 = vadd.f32 0.0, %v3560
      %v3562 = vpop.f32.mrb[0].mxu0
      %3563 = vmatprep.mubr.bf16.mxu0 0
      %3564 = vmatmul.mubr.bf16.gmra.mrb[0].mxu0 %v2721
      %v3565 = vpop.f32.mrb[0].mxu0
      %v3566 = vadd.f32 0.0, %v3565
      %v3567 = vpop.f32.mrb[0].mxu0
      %v3568 = vpop.f32.mrb[0].mxu0
      %v3569 = vadd.f32 0.0, %v3568
      %v3570 = vpop.f32.mrb[0].mxu0
      %3571 = vmatprep.mubr.bf16.mxu0 0
      %3572 = vmatmul.mubr.bf16.gmra.mrb[0].mxu0 %v2724
      %v3573 = vpop.f32.mrb[0].mxu0
      %v3574 = vadd.f32 0.0, %v3573
      %v3575 = vpop.f32.mrb[0].mxu0
      %v3576 = vpop.f32.mrb[0].mxu0
      %v3577 = vadd.f32 0.0, %v3576
      %v3578 = vpop.f32.mrb[0].mxu0
      %3579 = vmatprep.mubr.bf16.mxu0 0
      %3580 = vmatmul.mubr.bf16.gmra.mrb[0].mxu0 %v2727
      %v3581 = vpop.f32.mrb[0].mxu0
      %v3582 = vadd.f32 0.0, %v3581
      %v3583 = vpop.f32.mrb[0].mxu0
      %v3584 = vpop.f32.mrb[0].mxu0
      %v3585 = vadd.f32 0.0, %v3584
      %v3586 = vpop.f32.mrb[0].mxu0
      %3587 = vmatprep.mubr.bf16.mxu0 0
      %3588 = vmatmul.mubr.bf16.gmra.mrb[0].mxu0 %v2730
      %v3589 = vpop.f32.mrb[0].mxu0
      %v3590 = vadd.f32 0.0, %v3589
      %v3591 = vpop.f32.mrb[0].mxu0
      %v3592 = vpop.f32.mrb[0].mxu0
      %v3593 = vadd.f32 0.0, %v3592
      %v3594 = vpop.f32.mrb[0].mxu0
      %3595 = vmatprep.mubr.bf16.mxu0 0
      %3596 = vmatmul.mubr.bf16.gmra.mrb[0].mxu0 %v2733
      %v3597 = vpop.f32.mrb[0].mxu0
      %v3598 = vadd.f32 0.0, %v3597
      %v3599 = vpop.f32.mrb[0].mxu0
      %v3600 = vpop.f32.mrb[0].mxu0
      %v3601 = vadd.f32 0.0, %v3600
      %v3602 = vpop.f32.mrb[0].mxu0
      %3603 = vmatprep.mubr.bf16.mxu0 0
      %3604 = vmatmul.mubr.bf16.gmra.mrb[0].mxu0 %v2736
      %v3605 = vpop.f32.mrb[0].mxu0
      %v3606 = vadd.f32 0.0, %v3605
      %v3607 = vpop.f32.mrb[0].mxu0
      %v3608 = vpop.f32.mrb[0].mxu0
      %v3609 = vadd.f32 0.0, %v3608
      %v3610 = vpop.f32.mrb[0].mxu0
      %3611 = vmatprep.mubr.bf16.mxu0 0
      %3612 = vmatmul.mubr.bf16.gmra.mrb[0].mxu0 %v2739
      %v3613 = vpop.f32.mrb[0].mxu0
      %v3614 = vadd.f32 0.0, %v3613
      %v3615 = vpop.f32.mrb[0].mxu0
      %v3616 = vpop.f32.mrb[0].mxu0
      %v3617 = vadd.f32 0.0, %v3616
      %v3618 = vpop.f32.mrb[0].mxu0
      %3619 = vmatprep.mubr.bf16.mxu0 0
      %3620 = vmatmul.mubr.bf16.gmra.mrb[0].mxu0 %v3446
      %v3621 = vpop.f32.mrb[0].mxu0
      %v3622 = vadd.f32 0.0, %v3621
      %v3623 = vpop.f32.mrb[0].mxu0
      %v3624 = vpop.f32.mrb[0].mxu0
      %v3625 = vadd.f32 0.0, %v3624
      %v3626 = vpop.f32.mrb[0].mxu0
      %3627 = vdwg.mxu0
      %v3628 = vadd.f32 %v3395, %v3486
      %v3629 = vadd.f32 %v3396, %v3489
      %v3630 = vadd.f32 %v3397, %v3494
      %v3631 = vadd.f32 %v3398, %v3497
      %v3632 = vadd.f32 %v3399, %v3502
      %v3633 = vadd.f32 %v3400, %v3505
      %v3634 = vadd.f32 %v3401, %v3510
      %v3635 = vadd.f32 %v3402, %v3513
      %v3636 = vadd.f32 %v3403, %v3518
      %v3637 = vadd.f32 %v3404, %v3521
      %v3638 = vadd.f32 %v3405, %v3526
      %v3639 = vadd.f32 %v3406, %v3529
      %v3640 = vadd.f32 %v3407, %v3534
      %v3641 = vadd.f32 %v3408, %v3537
      %v3642 = vadd.f32 %v3409, %v3542
      %v3643 = vadd.f32 %v3410, %v3545
      %v3644 = vadd.f32 %v3411, %v3550
      %v3645 = vadd.f32 %v3412, %v3553
      %v3646 = vadd.f32 %v3413, %v3558
      %v3647 = vadd.f32 %v3414, %v3561
      %v3648 = vadd.f32 %v3415, %v3566
      %v3649 = vadd.f32 %v3416, %v3569
      %v3650 = vadd.f32 %v3417, %v3574
      %v3651 = vadd.f32 %v3418, %v3577
      %v3652 = vadd.f32 %v3419, %v3582
      %v3653 = vadd.f32 %v3420, %v3585
      %v3654 = vadd.f32 %v3421, %v3590
      %v3655 = vadd.f32 %v3422, %v3593
      %v3656 = vadd.f32 %v3423, %v3598
      %v3657 = vadd.f32 %v3424, %v3601
      %v3658 = vadd.f32 %v3425, %v3606
      %v3659 = vadd.f32 %v3426, %v3609
      %v3660 = vadd.f32 %v3427, %v3614
      %v3661 = vadd.f32 %v3428, %v3617
      %v3662 = vadd.f32 %v3429, %v3622
      %v3663 = vadd.f32 %v3430, %v3625
      %s3664 = scalar_lea.vmem %s3, 12
      %v3665 = vld [vmem:[%s3664] sm:$0x3]
      %v3668 = vunpack.c.l.b16 %v1372
      %v3669 = vunpack.c.l.b16 %v1373
      %v3670 = vpack.c.b16 %v3669, %v3668
      %v3672 = vsel %vm1906, %v3670, 0
      %v3675 = vsel %vm1961, %v3665, 0
      %3677 = vmatprep.subr.bf16.mxu0 0
      %3678 = vmatpush1.bf16.msra.mxu0 %v3675
      %3679 = vmatprep.subr.bf16.mxu0 0
      %3680 = vmatpush1.bf16.msra.mxu0 0
      %3681 = vmatprep.subr.bf16.mxu0 0
      %3682 = vmatpush1.bf16.msra.mxu0 0
      %3683 = vmatprep.subr.bf16.mxu0 0
      %3684 = vmatpush1.bf16.msra.mxu0 0
      %3685 = vmatprep.subr.bf16.mxu0 0
      %3686 = vmatpush1.bf16.msra.mxu0 0
      %3687 = vmatprep.subr.bf16.mxu0 0
      %3688 = vmatpush1.bf16.msra.mxu0 0
      %3689 = vmatprep.subr.bf16.mxu0 0
      %3690 = vmatpush1.bf16.msra.mxu0 0
      %3691 = vmatprep.subr.bf16.mxu0 0
      %3692 = vmatpush1.bf16.msra.mxu0 0
      %3693 = vmatprep.subr.bf16.mxu0 0
      %3694 = vmatpush1.bf16.msra.mxu0 0
      %3695 = vmatprep.subr.bf16.mxu0 0
      %3696 = vmatpush1.bf16.msra.mxu0 0
      %3697 = vmatprep.subr.bf16.mxu0 0
      %3698 = vmatpush1.bf16.msra.mxu0 0
      %3699 = vmatprep.subr.bf16.mxu0 0
      %3700 = vmatpush1.bf16.msra.mxu0 0
      %3701 = vmatprep.subr.bf16.mxu0 0
      %3702 = vmatpush1.bf16.msra.mxu0 0
      %3703 = vmatprep.subr.bf16.mxu0 0
      %3704 = vmatpush1.bf16.msra.mxu0 0
      %3705 = vmatprep.subr.bf16.mxu0 0
      %3706 = vmatpush1.bf16.msra.mxu0 0
      %3707 = vmatprep.subr.bf16.mxu0 0
      %3708 = vmatpush1.bf16.msra.mxu0 0
      %3709 = vmatprep.mubr.bf16.mxu0 0
      %3710 = vmatmul.mubr.bf16.gmra.mrb[0].mxu0 %v2239
      %v3711 = vpop.f32.mrb[0].mxu0
      %v3712 = vadd.f32 0.0, %v3711
      %v3713 = vpop.f32.mrb[0].mxu0
      %v3714 = vpop.f32.mrb[0].mxu0
      %v3715 = vadd.f32 0.0, %v3714
      %v3716 = vpop.f32.mrb[0].mxu0
      %3717 = vmatprep.mubr.bf16.mxu0 0
      %3718 = vmatmul.mubr.bf16.gmra.mrb[0].mxu0 %v2242
      %v3719 = vpop.f32.mrb[0].mxu0
      %v3720 = vadd.f32 0.0, %v3719
      %v3721 = vpop.f32.mrb[0].mxu0
      %v3722 = vpop.f32.mrb[0].mxu0
      %v3723 = vadd.f32 0.0, %v3722
      %v3724 = vpop.f32.mrb[0].mxu0
      %3725 = vmatprep.mubr.bf16.mxu0 0
      %3726 = vmatmul.mubr.bf16.gmra.mrb[0].mxu0 %v2245
      %v3727 = vpop.f32.mrb[0].mxu0
      %v3728 = vadd.f32 0.0, %v3727
      %v3729 = vpop.f32.mrb[0].mxu0
      %v3730 = vpop.f32.mrb[0].mxu0
      %v3731 = vadd.f32 0.0, %v3730
      %v3732 = vpop.f32.mrb[0].mxu0
      %3733 = vmatprep.mubr.bf16.mxu0 0
      %3734 = vmatmul.mubr.bf16.gmra.mrb[0].mxu0 %v2248
      %v3735 = vpop.f32.mrb[0].mxu0
      %v3736 = vadd.f32 0.0, %v3735
      %v3737 = vpop.f32.mrb[0].mxu0
      %v3738 = vpop.f32.mrb[0].mxu0
      %v3739 = vadd.f32 0.0, %v3738
      %v3740 = vpop.f32.mrb[0].mxu0
      %3741 = vmatprep.mubr.bf16.mxu0 0
      %3742 = vmatmul.mubr.bf16.gmra.mrb[0].mxu0 %v2251
      %v3743 = vpop.f32.mrb[0].mxu0
      %v3744 = vadd.f32 0.0, %v3743
      %v3745 = vpop.f32.mrb[0].mxu0
      %v3746 = vpop.f32.mrb[0].mxu0
      %v3747 = vadd.f32 0.0, %v3746
      %v3748 = vpop.f32.mrb[0].mxu0
      %3749 = vmatprep.mubr.bf16.mxu0 0
      %3750 = vmatmul.mubr.bf16.gmra.mrb[0].mxu0 %v2254
      %v3751 = vpop.f32.mrb[0].mxu0
      %v3752 = vadd.f32 0.0, %v3751
      %v3753 = vpop.f32.mrb[0].mxu0
      %v3754 = vpop.f32.mrb[0].mxu0
      %v3755 = vadd.f32 0.0, %v3754
      %v3756 = vpop.f32.mrb[0].mxu0
      %3757 = vmatprep.mubr.bf16.mxu0 0
      %3758 = vmatmul.mubr.bf16.gmra.mrb[0].mxu0 %v2257
      %v3759 = vpop.f32.mrb[0].mxu0
      %v3760 = vadd.f32 0.0, %v3759
      %v3761 = vpop.f32.mrb[0].mxu0
      %v3762 = vpop.f32.mrb[0].mxu0
      %v3763 = vadd.f32 0.0, %v3762
      %v3764 = vpop.f32.mrb[0].mxu0
      %3765 = vmatprep.mubr.bf16.mxu0 0
      %3766 = vmatmul.mubr.bf16.gmra.mrb[0].mxu0 %v2260
      %v3767 = vpop.f32.mrb[0].mxu0
      %v3768 = vadd.f32 0.0, %v3767
      %v3769 = vpop.f32.mrb[0].mxu0
      %v3770 = vpop.f32.mrb[0].mxu0
      %v3771 = vadd.f32 0.0, %v3770
      %v3772 = vpop.f32.mrb[0].mxu0
      %3773 = vmatprep.mubr.bf16.mxu0 0
      %3774 = vmatmul.mubr.bf16.gmra.mrb[0].mxu0 %v2263
      %v3775 = vpop.f32.mrb[0].mxu0
      %v3776 = vadd.f32 0.0, %v3775
      %v3777 = vpop.f32.mrb[0].mxu0
      %v3778 = vpop.f32.mrb[0].mxu0
      %v3779 = vadd.f32 0.0, %v3778
      %v3780 = vpop.f32.mrb[0].mxu0
      %3781 = vmatprep.mubr.bf16.mxu0 0
      %3782 = vmatmul.mubr.bf16.gmra.mrb[0].mxu0 %v2266
      %v3783 = vpop.f32.mrb[0].mxu0
      %v3784 = vadd.f32 0.0, %v3783
      %v3785 = vpop.f32.mrb[0].mxu0
      %v3786 = vpop.f32.mrb[0].mxu0
      %v3787 = vadd.f32 0.0, %v3786
      %v3788 = vpop.f32.mrb[0].mxu0
      %3789 = vmatprep.mubr.bf16.mxu0 0
      %3790 = vmatmul.mubr.bf16.gmra.mrb[0].mxu0 %v2269
      %v3791 = vpop.f32.mrb[0].mxu0
      %v3792 = vadd.f32 0.0, %v3791
      %v3793 = vpop.f32.mrb[0].mxu0
      %v3794 = vpop.f32.mrb[0].mxu0
      %v3795 = vadd.f32 0.0, %v3794
      %v3796 = vpop.f32.mrb[0].mxu0
      %3797 = vmatprep.mubr.bf16.mxu0 0
      %3798 = vmatmul.mubr.bf16.gmra.mrb[0].mxu0 %v2272
      %v3799 = vpop.f32.mrb[0].mxu0
      %v3800 = vadd.f32 0.0, %v3799
      %v3801 = vpop.f32.mrb[0].mxu0
      %v3802 = vpop.f32.mrb[0].mxu0
      %v3803 = vadd.f32 0.0, %v3802
      %v3804 = vpop.f32.mrb[0].mxu0
      %3805 = vmatprep.mubr.bf16.mxu0 0
      %3806 = vmatmul.mubr.bf16.gmra.mrb[0].mxu0 %v2275
      %v3807 = vpop.f32.mrb[0].mxu0
      %v3808 = vadd.f32 0.0, %v3807
      %v3809 = vpop.f32.mrb[0].mxu0
      %v3810 = vpop.f32.mrb[0].mxu0
      %v3811 = vadd.f32 0.0, %v3810
      %v3812 = vpop.f32.mrb[0].mxu0
      %3813 = vmatprep.mubr.bf16.mxu0 0
      %3814 = vmatmul.mubr.bf16.gmra.mrb[0].mxu0 %v2278
      %v3815 = vpop.f32.mrb[0].mxu0
      %v3816 = vadd.f32 0.0, %v3815
      %v3817 = vpop.f32.mrb[0].mxu0
      %v3818 = vpop.f32.mrb[0].mxu0
      %v3819 = vadd.f32 0.0, %v3818
      %v3820 = vpop.f32.mrb[0].mxu0
      %3821 = vmatprep.mubr.bf16.mxu0 0
      %3822 = vmatmul.mubr.bf16.gmra.mrb[0].mxu0 %v2281
      %v3823 = vpop.f32.mrb[0].mxu0
      %v3824 = vadd.f32 0.0, %v3823
      %v3825 = vpop.f32.mrb[0].mxu0
      %v3826 = vpop.f32.mrb[0].mxu0
      %v3827 = vadd.f32 0.0, %v3826
      %v3828 = vpop.f32.mrb[0].mxu0
      %3829 = vmatprep.mubr.bf16.mxu0 0
      %3830 = vmatmul.mubr.bf16.gmra.mrb[0].mxu0 %v2284
      %v3831 = vpop.f32.mrb[0].mxu0
      %v3832 = vadd.f32 0.0, %v3831
      %v3833 = vpop.f32.mrb[0].mxu0
      %v3834 = vpop.f32.mrb[0].mxu0
      %v3835 = vadd.f32 0.0, %v3834
      %v3836 = vpop.f32.mrb[0].mxu0
      %3837 = vmatprep.mubr.bf16.mxu0 0
      %3838 = vmatmul.mubr.bf16.gmra.mrb[0].mxu0 %v2965
      %v3839 = vpop.f32.mrb[0].mxu0
      %v3840 = vadd.f32 0.0, %v3839
      %v3841 = vpop.f32.mrb[0].mxu0
      %v3842 = vpop.f32.mrb[0].mxu0
      %v3843 = vadd.f32 0.0, %v3842
      %v3844 = vpop.f32.mrb[0].mxu0
      %3845 = vmatprep.mubr.bf16.mxu0 0
      %3846 = vmatmul.mubr.bf16.gmra.mrb[0].mxu0 %v3672
      %v3847 = vpop.f32.mrb[0].mxu0
      %v3848 = vadd.f32 0.0, %v3847
      %v3849 = vpop.f32.mrb[0].mxu0
      %v3850 = vpop.f32.mrb[0].mxu0
      %v3851 = vadd.f32 0.0, %v3850
      %v3852 = vpop.f32.mrb[0].mxu0
      %3853 = vdwg.mxu0
      %v3854 = vadd.f32 %v3628, %v3712
      %v3855 = vadd.f32 %v3629, %v3715
      %v3856 = vadd.f32 %v3630, %v3720
      %v3857 = vadd.f32 %v3631, %v3723
      %v3858 = vadd.f32 %v3632, %v3728
      %v3859 = vadd.f32 %v3633, %v3731
      %v3860 = vadd.f32 %v3634, %v3736
      %v3861 = vadd.f32 %v3635, %v3739
      %v3862 = vadd.f32 %v3636, %v3744
      %v3863 = vadd.f32 %v3637, %v3747
      %v3864 = vadd.f32 %v3638, %v3752
      %v3865 = vadd.f32 %v3639, %v3755
      %v3866 = vadd.f32 %v3640, %v3760
      %v3867 = vadd.f32 %v3641, %v3763
      %v3868 = vadd.f32 %v3642, %v3768
      %v3869 = vadd.f32 %v3643, %v3771
      %v3870 = vadd.f32 %v3644, %v3776
      %v3871 = vadd.f32 %v3645, %v3779
      %v3872 = vadd.f32 %v3646, %v3784
      %v3873 = vadd.f32 %v3647, %v3787
      %v3874 = vadd.f32 %v3648, %v3792
      %v3875 = vadd.f32 %v3649, %v3795
      %v3876 = vadd.f32 %v3650, %v3800
      %v3877 = vadd.f32 %v3651, %v3803
      %v3878 = vadd.f32 %v3652, %v3808
      %v3879 = vadd.f32 %v3653, %v3811
      %v3880 = vadd.f32 %v3654, %v3816
      %v3881 = vadd.f32 %v3655, %v3819
      %v3882 = vadd.f32 %v3656, %v3824
      %v3883 = vadd.f32 %v3657, %v3827
      %v3884 = vadd.f32 %v3658, %v3832
      %v3885 = vadd.f32 %v3659, %v3835
      %v3886 = vadd.f32 %v3660, %v3840
      %v3887 = vadd.f32 %v3661, %v3843
      %v3888 = vadd.f32 %v3662, %v3848
      %v3889 = vadd.f32 %v3663, %v3851
      %v3891 = vshrl.u32 %v1372, 16
      %v3893 = vrot.slane %v3891, 4
      %v3894 = vshll.u32 %v1372, 16
      %v3896 = vrot.slane %v3894, 5
      %v3897 = vor.u32 %v3893, %v3896
      %v3898 = vrot.slane %v3897, 4
      %v3900 = vshll.u32 %v1373, 16
      %v3902 = vrot.slane %v3900, 5
      %v3903 = vsel %vm1417, %v3898, %v3902
      %v3904 = vshrl.u32 %v1373, 16
      %v3906 = vrot.slane %v3904, 4
      %v3907 = vor.u32 %v3906, %v3902
      %v3908 = vrot.slane %v3907, 4
      %v3910 = vshll.u32 %v1393, 16
      %v3912 = vrot.slane %v3910, 5
      %v3913 = vsel %vm1417, %v3908, %v3912
      %s3914 = scalar_lea.vmem %s3, 14
      %v3915 = vld [vmem:[%s3914] sm:$0x3]
      %v3916 = vunpack.c.l.b16 %v3903
      %v3917 = vunpack.c.l.b16 %v3913
      %v3918 = vpack.c.b16 %v3917, %v3916
      %v3920 = vsel %vm1906, %v3918, 0
      %v3923 = vsel %vm1961, %v3915, 0
      %3925 = vmatprep.subr.bf16.mxu0 0
      %3926 = vmatpush1.bf16.msra.mxu0 %v3923
      %3927 = vmatprep.subr.bf16.mxu0 0
      %3928 = vmatpush1.bf16.msra.mxu0 0
      %3929 = vmatprep.subr.bf16.mxu0 0
      %3930 = vmatpush1.bf16.msra.mxu0 0
      %3931 = vmatprep.subr.bf16.mxu0 0
      %3932 = vmatpush1.bf16.msra.mxu0 0
      %3933 = vmatprep.subr.bf16.mxu0 0
      %3934 = vmatpush1.bf16.msra.mxu0 0
      %3935 = vmatprep.subr.bf16.mxu0 0
      %3936 = vmatpush1.bf16.msra.mxu0 0
      %3937 = vmatprep.subr.bf16.mxu0 0
      %3938 = vmatpush1.bf16.msra.mxu0 0
      %3939 = vmatprep.subr.bf16.mxu0 0
      %3940 = vmatpush1.bf16.msra.mxu0 0
      %3941 = vmatprep.subr.bf16.mxu0 0
      %3942 = vmatpush1.bf16.msra.mxu0 0
      %3943 = vmatprep.subr.bf16.mxu0 0
      %3944 = vmatpush1.bf16.msra.mxu0 0
      %3945 = vmatprep.subr.bf16.mxu0 0
      %3946 = vmatpush1.bf16.msra.mxu0 0
      %3947 = vmatprep.subr.bf16.mxu0 0
      %3948 = vmatpush1.bf16.msra.mxu0 0
      %3949 = vmatprep.subr.bf16.mxu0 0
      %3950 = vmatpush1.bf16.msra.mxu0 0
      %3951 = vmatprep.subr.bf16.mxu0 0
      %3952 = vmatpush1.bf16.msra.mxu0 0
      %3953 = vmatprep.subr.bf16.mxu0 0
      %3954 = vmatpush1.bf16.msra.mxu0 0
      %3955 = vmatprep.subr.bf16.mxu0 0
      %3956 = vmatpush1.bf16.msra.mxu0 0
      %3957 = vmatprep.mubr.bf16.mxu0 0
      %3958 = vmatmul.mubr.bf16.gmra.mrb[0].mxu0 %v1914
      %v3959 = vpop.f32.mrb[0].mxu0
      %v3960 = vadd.f32 0.0, %v3959
      %v3961 = vpop.f32.mrb[0].mxu0
      %v3962 = vpop.f32.mrb[0].mxu0
      %v3963 = vadd.f32 0.0, %v3962
      %v3964 = vpop.f32.mrb[0].mxu0
      %3965 = vmatprep.mubr.bf16.mxu0 0
      %3966 = vmatmul.mubr.bf16.gmra.mrb[0].mxu0 %v1917
      %v3967 = vpop.f32.mrb[0].mxu0
      %v3968 = vadd.f32 0.0, %v3967
      %v3969 = vpop.f32.mrb[0].mxu0
      %v3970 = vpop.f32.mrb[0].mxu0
      %v3971 = vadd.f32 0.0, %v3970
      %v3972 = vpop.f32.mrb[0].mxu0
      %3973 = vmatprep.mubr.bf16.mxu0 0
      %3974 = vmatmul.mubr.bf16.gmra.mrb[0].mxu0 %v1920
      %v3975 = vpop.f32.mrb[0].mxu0
      %v3976 = vadd.f32 0.0, %v3975
      %v3977 = vpop.f32.mrb[0].mxu0
      %v3978 = vpop.f32.mrb[0].mxu0
      %v3979 = vadd.f32 0.0, %v3978
      %v3980 = vpop.f32.mrb[0].mxu0
      %3981 = vmatprep.mubr.bf16.mxu0 0
      %3982 = vmatmul.mubr.bf16.gmra.mrb[0].mxu0 %v1923
      %v3983 = vpop.f32.mrb[0].mxu0
      %v3984 = vadd.f32 0.0, %v3983
      %v3985 = vpop.f32.mrb[0].mxu0
      %v3986 = vpop.f32.mrb[0].mxu0
      %v3987 = vadd.f32 0.0, %v3986
      %v3988 = vpop.f32.mrb[0].mxu0
      %3989 = vmatprep.mubr.bf16.mxu0 0
      %3990 = vmatmul.mubr.bf16.gmra.mrb[0].mxu0 %v1926
      %v3991 = vpop.f32.mrb[0].mxu0
      %v3992 = vadd.f32 0.0, %v3991
      %v3993 = vpop.f32.mrb[0].mxu0
      %v3994 = vpop.f32.mrb[0].mxu0
      %v3995 = vadd.f32 0.0, %v3994
      %v3996 = vpop.f32.mrb[0].mxu0
      %3997 = vmatprep.mubr.bf16.mxu0 0
      %3998 = vmatmul.mubr.bf16.gmra.mrb[0].mxu0 %v1929
      %v3999 = vpop.f32.mrb[0].mxu0
      %v4000 = vadd.f32 0.0, %v3999
      %v4001 = vpop.f32.mrb[0].mxu0
      %v4002 = vpop.f32.mrb[0].mxu0
      %v4003 = vadd.f32 0.0, %v4002
      %v4004 = vpop.f32.mrb[0].mxu0
      %4005 = vmatprep.mubr.bf16.mxu0 0
      %4006 = vmatmul.mubr.bf16.gmra.mrb[0].mxu0 %v1932
      %v4007 = vpop.f32.mrb[0].mxu0
      %v4008 = vadd.f32 0.0, %v4007
      %v4009 = vpop.f32.mrb[0].mxu0
      %v4010 = vpop.f32.mrb[0].mxu0
      %v4011 = vadd.f32 0.0, %v4010
      %v4012 = vpop.f32.mrb[0].mxu0
      %4013 = vmatprep.mubr.bf16.mxu0 0
      %4014 = vmatmul.mubr.bf16.gmra.mrb[0].mxu0 %v1935
      %v4015 = vpop.f32.mrb[0].mxu0
      %v4016 = vadd.f32 0.0, %v4015
      %v4017 = vpop.f32.mrb[0].mxu0
      %v4018 = vpop.f32.mrb[0].mxu0
      %v4019 = vadd.f32 0.0, %v4018
      %v4020 = vpop.f32.mrb[0].mxu0
      %4021 = vmatprep.mubr.bf16.mxu0 0
      %4022 = vmatmul.mubr.bf16.gmra.mrb[0].mxu0 %v1938
      %v4023 = vpop.f32.mrb[0].mxu0
      %v4024 = vadd.f32 0.0, %v4023
      %v4025 = vpop.f32.mrb[0].mxu0
      %v4026 = vpop.f32.mrb[0].mxu0
      %v4027 = vadd.f32 0.0, %v4026
      %v4028 = vpop.f32.mrb[0].mxu0
      %4029 = vmatprep.mubr.bf16.mxu0 0
      %4030 = vmatmul.mubr.bf16.gmra.mrb[0].mxu0 %v1941
      %v4031 = vpop.f32.mrb[0].mxu0
      %v4032 = vadd.f32 0.0, %v4031
      %v4033 = vpop.f32.mrb[0].mxu0
      %v4034 = vpop.f32.mrb[0].mxu0
      %v4035 = vadd.f32 0.0, %v4034
      %v4036 = vpop.f32.mrb[0].mxu0
      %4037 = vmatprep.mubr.bf16.mxu0 0
      %4038 = vmatmul.mubr.bf16.gmra.mrb[0].mxu0 %v1944
      %v4039 = vpop.f32.mrb[0].mxu0
      %v4040 = vadd.f32 0.0, %v4039
      %v4041 = vpop.f32.mrb[0].mxu0
      %v4042 = vpop.f32.mrb[0].mxu0
      %v4043 = vadd.f32 0.0, %v4042
      %v4044 = vpop.f32.mrb[0].mxu0
      %4045 = vmatprep.mubr.bf16.mxu0 0
      %4046 = vmatmul.mubr.bf16.gmra.mrb[0].mxu0 %v1947
      %v4047 = vpop.f32.mrb[0].mxu0
      %v4048 = vadd.f32 0.0, %v4047
      %v4049 = vpop.f32.mrb[0].mxu0
      %v4050 = vpop.f32.mrb[0].mxu0
      %v4051 = vadd.f32 0.0, %v4050
      %v4052 = vpop.f32.mrb[0].mxu0
      %4053 = vmatprep.mubr.bf16.mxu0 0
      %4054 = vmatmul.mubr.bf16.gmra.mrb[0].mxu0 %v1950
      %v4055 = vpop.f32.mrb[0].mxu0
      %v4056 = vadd.f32 0.0, %v4055
      %v4057 = vpop.f32.mrb[0].mxu0
      %v4058 = vpop.f32.mrb[0].mxu0
      %v4059 = vadd.f32 0.0, %v4058
      %v4060 = vpop.f32.mrb[0].mxu0
      %4061 = vmatprep.mubr.bf16.mxu0 0
      %4062 = vmatmul.mubr.bf16.gmra.mrb[0].mxu0 %v1953
      %v4063 = vpop.f32.mrb[0].mxu0
      %v4064 = vadd.f32 0.0, %v4063
      %v4065 = vpop.f32.mrb[0].mxu0
      %v4066 = vpop.f32.mrb[0].mxu0
      %v4067 = vadd.f32 0.0, %v4066
      %v4068 = vpop.f32.mrb[0].mxu0
      %4069 = vmatprep.mubr.bf16.mxu0 0
      %4070 = vmatmul.mubr.bf16.gmra.mrb[0].mxu0 %v1956
      %v4071 = vpop.f32.mrb[0].mxu0
      %v4072 = vadd.f32 0.0, %v4071
      %v4073 = vpop.f32.mrb[0].mxu0
      %v4074 = vpop.f32.mrb[0].mxu0
      %v4075 = vadd.f32 0.0, %v4074
      %v4076 = vpop.f32.mrb[0].mxu0
      %4077 = vmatprep.mubr.bf16.mxu0 0
      %4078 = vmatmul.mubr.bf16.gmra.mrb[0].mxu0 %v1959
      %v4079 = vpop.f32.mrb[0].mxu0
      %v4080 = vadd.f32 0.0, %v4079
      %v4081 = vpop.f32.mrb[0].mxu0
      %v4082 = vpop.f32.mrb[0].mxu0
      %v4083 = vadd.f32 0.0, %v4082
      %v4084 = vpop.f32.mrb[0].mxu0
      %4085 = vmatprep.mubr.bf16.mxu0 0
      %4086 = vmatmul.mubr.bf16.gmra.mrb[0].mxu0 %v3213
      %v4087 = vpop.f32.mrb[0].mxu0
      %v4088 = vadd.f32 0.0, %v4087
      %v4089 = vpop.f32.mrb[0].mxu0
      %v4090 = vpop.f32.mrb[0].mxu0
      %v4091 = vadd.f32 0.0, %v4090
      %v4092 = vpop.f32.mrb[0].mxu0
      %4093 = vmatprep.mubr.bf16.mxu0 0
      %4094 = vmatmul.mubr.bf16.gmra.mrb[0].mxu0 %v3920
      %v4095 = vpop.f32.mrb[0].mxu0
      %v4096 = vadd.f32 0.0, %v4095
      %v4097 = vpop.f32.mrb[0].mxu0
      %v4098 = vpop.f32.mrb[0].mxu0
      %v4099 = vadd.f32 0.0, %v4098
      %v4100 = vpop.f32.mrb[0].mxu0
      %4101 = vdwg.mxu0
      %v4102 = vadd.f32 %v3854, %v3960
      %v4103 = vadd.f32 %v3855, %v3963
      %v4104 = vadd.f32 %v3856, %v3968
      %v4105 = vadd.f32 %v3857, %v3971
      %v4106 = vadd.f32 %v3858, %v3976
      %v4107 = vadd.f32 %v3859, %v3979
      %v4108 = vadd.f32 %v3860, %v3984
      %v4109 = vadd.f32 %v3861, %v3987
      %v4110 = vadd.f32 %v3862, %v3992
      %v4111 = vadd.f32 %v3863, %v3995
      %v4112 = vadd.f32 %v3864, %v4000
      %v4113 = vadd.f32 %v3865, %v4003
      %v4114 = vadd.f32 %v3866, %v4008
      %v4115 = vadd.f32 %v3867, %v4011
      %v4116 = vadd.f32 %v3868, %v4016
      %v4117 = vadd.f32 %v3869, %v4019
      %v4118 = vadd.f32 %v3870, %v4024
      %v4119 = vadd.f32 %v3871, %v4027
      %v4120 = vadd.f32 %v3872, %v4032
      %v4121 = vadd.f32 %v3873, %v4035
      %v4122 = vadd.f32 %v3874, %v4040
      %v4123 = vadd.f32 %v3875, %v4043
      %v4124 = vadd.f32 %v3876, %v4048
      %v4125 = vadd.f32 %v3877, %v4051
      %v4126 = vadd.f32 %v3878, %v4056
      %v4127 = vadd.f32 %v3879, %v4059
      %v4128 = vadd.f32 %v3880, %v4064
      %v4129 = vadd.f32 %v3881, %v4067
      %v4130 = vadd.f32 %v3882, %v4072
      %v4131 = vadd.f32 %v3883, %v4075
      %v4132 = vadd.f32 %v3884, %v4080
      %v4133 = vadd.f32 %v3885, %v4083
      %v4134 = vadd.f32 %v3886, %v4088
      %v4135 = vadd.f32 %v3887, %v4091
      %v4136 = vadd.f32 %v3888, %v4096
      %v4137 = vadd.f32 %v3889, %v4099
      %v4140 = vrot.slane %v1413, 5
      %v4141 = vrot.slane %v4140, 4
      %v4142 = vrot.slane %v1373, 5
      %v4143 = vsel %vm2504, %v4141, %v4142
      %v4144 = vrot.slane %v4142, 4
      %v4145 = vrot.slane %v1393, 5
      %v4146 = vsel %vm2504, %v4144, %v4145
      %s4147 = scalar_lea.vmem %s3, 16
      %v4148 = vld [vmem:[%s4147] sm:$0x3]
      %v4149 = vunpack.c.l.b16 %v4143
      %v4150 = vunpack.c.l.b16 %v4146
      %v4151 = vpack.c.b16 %v4150, %v4149
      %v4153 = vsel %vm1906, %v4151, 0
      %v4156 = vsel %vm1961, %v4148, 0
      %4158 = vmatprep.subr.bf16.mxu0 0
      %4159 = vmatpush1.bf16.msra.mxu0 %v4156
      %4160 = vmatprep.subr.bf16.mxu0 0
      %4161 = vmatpush1.bf16.msra.mxu0 0
      %4162 = vmatprep.subr.bf16.mxu0 0
      %4163 = vmatpush1.bf16.msra.mxu0 0
      %4164 = vmatprep.subr.bf16.mxu0 0
      %4165 = vmatpush1.bf16.msra.mxu0 0
      %4166 = vmatprep.subr.bf16.mxu0 0
      %4167 = vmatpush1.bf16.msra.mxu0 0
      %4168 = vmatprep.subr.bf16.mxu0 0
      %4169 = vmatpush1.bf16.msra.mxu0 0
      %4170 = vmatprep.subr.bf16.mxu0 0
      %4171 = vmatpush1.bf16.msra.mxu0 0
      %4172 = vmatprep.subr.bf16.mxu0 0
      %4173 = vmatpush1.bf16.msra.mxu0 0
      %4174 = vmatprep.subr.bf16.mxu0 0
      %4175 = vmatpush1.bf16.msra.mxu0 0
      %4176 = vmatprep.subr.bf16.mxu0 0
      %4177 = vmatpush1.bf16.msra.mxu0 0
      %4178 = vmatprep.subr.bf16.mxu0 0
      %4179 = vmatpush1.bf16.msra.mxu0 0
      %4180 = vmatprep.subr.bf16.mxu0 0
      %4181 = vmatpush1.bf16.msra.mxu0 0
      %4182 = vmatprep.subr.bf16.mxu0 0
      %4183 = vmatpush1.bf16.msra.mxu0 0
      %4184 = vmatprep.subr.bf16.mxu0 0
      %4185 = vmatpush1.bf16.msra.mxu0 0
      %4186 = vmatprep.subr.bf16.mxu0 0
      %4187 = vmatpush1.bf16.msra.mxu0 0
      %4188 = vmatprep.subr.bf16.mxu0 0
      %4189 = vmatpush1.bf16.msra.mxu0 0
      %4190 = vmatprep.mubr.bf16.mxu0 0
      %4191 = vmatmul.mubr.bf16.gmra.mrb[0].mxu0 %v2694
      %v4192 = vpop.f32.mrb[0].mxu0
      %v4193 = vadd.f32 0.0, %v4192
      %v4194 = vpop.f32.mrb[0].mxu0
      %v4195 = vpop.f32.mrb[0].mxu0
      %v4196 = vadd.f32 0.0, %v4195
      %v4197 = vpop.f32.mrb[0].mxu0
      %4198 = vmatprep.mubr.bf16.mxu0 0
      %4199 = vmatmul.mubr.bf16.gmra.mrb[0].mxu0 %v2697
      %v4200 = vpop.f32.mrb[0].mxu0
      %v4201 = vadd.f32 0.0, %v4200
      %v4202 = vpop.f32.mrb[0].mxu0
      %v4203 = vpop.f32.mrb[0].mxu0
      %v4204 = vadd.f32 0.0, %v4203
      %v4205 = vpop.f32.mrb[0].mxu0
      %4206 = vmatprep.mubr.bf16.mxu0 0
      %4207 = vmatmul.mubr.bf16.gmra.mrb[0].mxu0 %v2700
      %v4208 = vpop.f32.mrb[0].mxu0
      %v4209 = vadd.f32 0.0, %v4208
      %v4210 = vpop.f32.mrb[0].mxu0
      %v4211 = vpop.f32.mrb[0].mxu0
      %v4212 = vadd.f32 0.0, %v4211
      %v4213 = vpop.f32.mrb[0].mxu0
      %4214 = vmatprep.mubr.bf16.mxu0 0
      %4215 = vmatmul.mubr.bf16.gmra.mrb[0].mxu0 %v2703
      %v4216 = vpop.f32.mrb[0].mxu0
      %v4217 = vadd.f32 0.0, %v4216
      %v4218 = vpop.f32.mrb[0].mxu0
      %v4219 = vpop.f32.mrb[0].mxu0
      %v4220 = vadd.f32 0.0, %v4219
      %v4221 = vpop.f32.mrb[0].mxu0
      %4222 = vmatprep.mubr.bf16.mxu0 0
      %4223 = vmatmul.mubr.bf16.gmra.mrb[0].mxu0 %v2706
      %v4224 = vpop.f32.mrb[0].mxu0
      %v4225 = vadd.f32 0.0, %v4224
      %v4226 = vpop.f32.mrb[0].mxu0
      %v4227 = vpop.f32.mrb[0].mxu0
      %v4228 = vadd.f32 0.0, %v4227
      %v4229 = vpop.f32.mrb[0].mxu0
      %4230 = vmatprep.mubr.bf16.mxu0 0
      %4231 = vmatmul.mubr.bf16.gmra.mrb[0].mxu0 %v2709
      %v4232 = vpop.f32.mrb[0].mxu0
      %v4233 = vadd.f32 0.0, %v4232
      %v4234 = vpop.f32.mrb[0].mxu0
      %v4235 = vpop.f32.mrb[0].mxu0
      %v4236 = vadd.f32 0.0, %v4235
      %v4237 = vpop.f32.mrb[0].mxu0
      %4238 = vmatprep.mubr.bf16.mxu0 0
      %4239 = vmatmul.mubr.bf16.gmra.mrb[0].mxu0 %v2712
      %v4240 = vpop.f32.mrb[0].mxu0
      %v4241 = vadd.f32 0.0, %v4240
      %v4242 = vpop.f32.mrb[0].mxu0
      %v4243 = vpop.f32.mrb[0].mxu0
      %v4244 = vadd.f32 0.0, %v4243
      %v4245 = vpop.f32.mrb[0].mxu0
      %4246 = vmatprep.mubr.bf16.mxu0 0
      %4247 = vmatmul.mubr.bf16.gmra.mrb[0].mxu0 %v2715
      %v4248 = vpop.f32.mrb[0].mxu0
      %v4249 = vadd.f32 0.0, %v4248
      %v4250 = vpop.f32.mrb[0].mxu0
      %v4251 = vpop.f32.mrb[0].mxu0
      %v4252 = vadd.f32 0.0, %v4251
      %v4253 = vpop.f32.mrb[0].mxu0
      %4254 = vmatprep.mubr.bf16.mxu0 0
      %4255 = vmatmul.mubr.bf16.gmra.mrb[0].mxu0 %v2718
      %v4256 = vpop.f32.mrb[0].mxu0
      %v4257 = vadd.f32 0.0, %v4256
      %v4258 = vpop.f32.mrb[0].mxu0
      %v4259 = vpop.f32.mrb[0].mxu0
      %v4260 = vadd.f32 0.0, %v4259
      %v4261 = vpop.f32.mrb[0].mxu0
      %4262 = vmatprep.mubr.bf16.mxu0 0
      %4263 = vmatmul.mubr.bf16.gmra.mrb[0].mxu0 %v2721
      %v4264 = vpop.f32.mrb[0].mxu0
      %v4265 = vadd.f32 0.0, %v4264
      %v4266 = vpop.f32.mrb[0].mxu0
      %v4267 = vpop.f32.mrb[0].mxu0
      %v4268 = vadd.f32 0.0, %v4267
      %v4269 = vpop.f32.mrb[0].mxu0
      %4270 = vmatprep.mubr.bf16.mxu0 0
      %4271 = vmatmul.mubr.bf16.gmra.mrb[0].mxu0 %v2724
      %v4272 = vpop.f32.mrb[0].mxu0
      %v4273 = vadd.f32 0.0, %v4272
      %v4274 = vpop.f32.mrb[0].mxu0
      %v4275 = vpop.f32.mrb[0].mxu0
      %v4276 = vadd.f32 0.0, %v4275
      %v4277 = vpop.f32.mrb[0].mxu0
      %4278 = vmatprep.mubr.bf16.mxu0 0
      %4279 = vmatmul.mubr.bf16.gmra.mrb[0].mxu0 %v2727
      %v4280 = vpop.f32.mrb[0].mxu0
      %v4281 = vadd.f32 0.0, %v4280
      %v4282 = vpop.f32.mrb[0].mxu0
      %v4283 = vpop.f32.mrb[0].mxu0
      %v4284 = vadd.f32 0.0, %v4283
      %v4285 = vpop.f32.mrb[0].mxu0
      %4286 = vmatprep.mubr.bf16.mxu0 0
      %4287 = vmatmul.mubr.bf16.gmra.mrb[0].mxu0 %v2730
      %v4288 = vpop.f32.mrb[0].mxu0
      %v4289 = vadd.f32 0.0, %v4288
      %v4290 = vpop.f32.mrb[0].mxu0
      %v4291 = vpop.f32.mrb[0].mxu0
      %v4292 = vadd.f32 0.0, %v4291
      %v4293 = vpop.f32.mrb[0].mxu0
      %4294 = vmatprep.mubr.bf16.mxu0 0
      %4295 = vmatmul.mubr.bf16.gmra.mrb[0].mxu0 %v2733
      %v4296 = vpop.f32.mrb[0].mxu0
      %v4297 = vadd.f32 0.0, %v4296
      %v4298 = vpop.f32.mrb[0].mxu0
      %v4299 = vpop.f32.mrb[0].mxu0
      %v4300 = vadd.f32 0.0, %v4299
      %v4301 = vpop.f32.mrb[0].mxu0
      %4302 = vmatprep.mubr.bf16.mxu0 0
      %4303 = vmatmul.mubr.bf16.gmra.mrb[0].mxu0 %v2736
      %v4304 = vpop.f32.mrb[0].mxu0
      %v4305 = vadd.f32 0.0, %v4304
      %v4306 = vpop.f32.mrb[0].mxu0
      %v4307 = vpop.f32.mrb[0].mxu0
      %v4308 = vadd.f32 0.0, %v4307
      %v4309 = vpop.f32.mrb[0].mxu0
      %4310 = vmatprep.mubr.bf16.mxu0 0
      %4311 = vmatmul.mubr.bf16.gmra.mrb[0].mxu0 %v2739
      %v4312 = vpop.f32.mrb[0].mxu0
      %v4313 = vadd.f32 0.0, %v4312
      %v4314 = vpop.f32.mrb[0].mxu0
      %v4315 = vpop.f32.mrb[0].mxu0
      %v4316 = vadd.f32 0.0, %v4315
      %v4317 = vpop.f32.mrb[0].mxu0
      %4318 = vmatprep.mubr.bf16.mxu0 0
      %4319 = vmatmul.mubr.bf16.gmra.mrb[0].mxu0 %v3446
      %v4320 = vpop.f32.mrb[0].mxu0
      %v4321 = vadd.f32 0.0, %v4320
      %v4322 = vpop.f32.mrb[0].mxu0
      %v4323 = vpop.f32.mrb[0].mxu0
      %v4324 = vadd.f32 0.0, %v4323
      %v4325 = vpop.f32.mrb[0].mxu0
      %4326 = vmatprep.mubr.bf16.mxu0 0
      %4327 = vmatmul.mubr.bf16.gmra.mrb[0].mxu0 %v4153
      %v4328 = vpop.f32.mrb[0].mxu0
      %v4329 = vadd.f32 0.0, %v4328
      %v4330 = vpop.f32.mrb[0].mxu0
      %v4331 = vpop.f32.mrb[0].mxu0
      %v4332 = vadd.f32 0.0, %v4331
      %v4333 = vpop.f32.mrb[0].mxu0
      %4334 = vdwg.mxu0
      %v4335 = vadd.f32 %v4102, %v4193
      %v4336 = vadd.f32 %v4103, %v4196
      %v4337 = vadd.f32 %v4104, %v4201
      %v4338 = vadd.f32 %v4105, %v4204
      %v4339 = vadd.f32 %v4106, %v4209
      %v4340 = vadd.f32 %v4107, %v4212
      %v4341 = vadd.f32 %v4108, %v4217
      %v4342 = vadd.f32 %v4109, %v4220
      %v4343 = vadd.f32 %v4110, %v4225
      %v4344 = vadd.f32 %v4111, %v4228
      %v4345 = vadd.f32 %v4112, %v4233
      %v4346 = vadd.f32 %v4113, %v4236
      %v4347 = vadd.f32 %v4114, %v4241
      %v4348 = vadd.f32 %v4115, %v4244
      %v4349 = vadd.f32 %v4116, %v4249
      %v4350 = vadd.f32 %v4117, %v4252
      %v4351 = vadd.f32 %v4118, %v4257
      %v4352 = vadd.f32 %v4119, %v4260
      %v4353 = vadd.f32 %v4120, %v4265
      %v4354 = vadd.f32 %v4121, %v4268
      %v4355 = vadd.f32 %v4122, %v4273
      %v4356 = vadd.f32 %v4123, %v4276
      %v4357 = vadd.f32 %v4124, %v4281
      %v4358 = vadd.f32 %v4125, %v4284
      %v4359 = vadd.f32 %v4126, %v4289
      %v4360 = vadd.f32 %v4127, %v4292
      %v4361 = vadd.f32 %v4128, %v4297
      %v4362 = vadd.f32 %v4129, %v4300
      %v4363 = vadd.f32 %v4130, %v4305
      %v4364 = vadd.f32 %v4131, %v4308
      %v4365 = vadd.f32 %v4132, %v4313
      %v4366 = vadd.f32 %v4133, %v4316
      %v4367 = vadd.f32 %v4134, %v4321
      %v4368 = vadd.f32 %v4135, %v4324
      %v4369 = vadd.f32 %v4136, %v4329
      %v4370 = vadd.f32 %v4137, %v4332
      %v4371 = vld [vmem:[%s4] sm:$0x1]
      %v4373 = vlaneseq
      %v4374 = vshrl.u32 %v4373, 7
      %v4375 = vsub.s32 0, %v4374
      %v4376 = vrot.slane %v4371, %v4375
      %v4378 = vadd.f32 %v4335, %v4376
      %v4379 = vadd.f32 %v4336, %v4376
      %v4380 = vadd.f32 %v4337, %v4376
      %v4381 = vadd.f32 %v4338, %v4376
      %v4382 = vadd.f32 %v4339, %v4376
      %v4383 = vadd.f32 %v4340, %v4376
      %v4384 = vadd.f32 %v4341, %v4376
      %v4385 = vadd.f32 %v4342, %v4376
      %v4386 = vadd.f32 %v4343, %v4376
      %v4387 = vadd.f32 %v4344, %v4376
      %v4388 = vadd.f32 %v4345, %v4376
      %v4389 = vadd.f32 %v4346, %v4376
      %v4390 = vadd.f32 %v4347, %v4376
      %v4391 = vadd.f32 %v4348, %v4376
      %v4392 = vadd.f32 %v4349, %v4376
      %v4393 = vadd.f32 %v4350, %v4376
      %v4394 = vadd.f32 %v4351, %v4376
      %v4395 = vadd.f32 %v4352, %v4376
      %v4396 = vadd.f32 %v4353, %v4376
      %v4397 = vadd.f32 %v4354, %v4376
      %v4398 = vadd.f32 %v4355, %v4376
      %v4399 = vadd.f32 %v4356, %v4376
      %v4400 = vadd.f32 %v4357, %v4376
      %v4401 = vadd.f32 %v4358, %v4376
      %v4402 = vadd.f32 %v4359, %v4376
      %v4403 = vadd.f32 %v4360, %v4376
      %v4404 = vadd.f32 %v4361, %v4376
      %v4405 = vadd.f32 %v4362, %v4376
      %v4406 = vadd.f32 %v4363, %v4376
      %v4407 = vadd.f32 %v4364, %v4376
      %v4408 = vadd.f32 %v4365, %v4376
      %v4409 = vadd.f32 %v4366, %v4376
      %v4410 = vadd.f32 %v4367, %v4376
      %v4411 = vadd.f32 %v4368, %v4376
      %v4412 = vadd.f32 %v4369, %v4376
      %v4413 = vadd.f32 %v4370, %v4376
      %v4414 = vmax.f32 %v4378, 0.0
      %v4415 = vmax.f32 %v4379, 0.0
      %v4416 = vmax.f32 %v4380, 0.0
      %v4417 = vmax.f32 %v4381, 0.0
      %v4418 = vmax.f32 %v4382, 0.0
      %v4419 = vmax.f32 %v4383, 0.0
      %v4420 = vmax.f32 %v4384, 0.0
      %v4421 = vmax.f32 %v4385, 0.0
      %v4422 = vmax.f32 %v4386, 0.0
      %v4423 = vmax.f32 %v4387, 0.0
      %v4424 = vmax.f32 %v4388, 0.0
      %v4425 = vmax.f32 %v4389, 0.0
      %v4426 = vmax.f32 %v4390, 0.0
      %v4427 = vmax.f32 %v4391, 0.0
      %v4428 = vmax.f32 %v4392, 0.0
      %v4429 = vmax.f32 %v4393, 0.0
      %v4430 = vmax.f32 %v4394, 0.0
      %v4431 = vmax.f32 %v4395, 0.0
      %v4432 = vmax.f32 %v4396, 0.0
      %v4433 = vmax.f32 %v4397, 0.0
      %v4434 = vmax.f32 %v4398, 0.0
      %v4435 = vmax.f32 %v4399, 0.0
      %v4436 = vmax.f32 %v4400, 0.0
      %v4437 = vmax.f32 %v4401, 0.0
      %v4438 = vmax.f32 %v4402, 0.0
      %v4439 = vmax.f32 %v4403, 0.0
      %v4440 = vmax.f32 %v4404, 0.0
      %v4441 = vmax.f32 %v4405, 0.0
      %v4442 = vmax.f32 %v4406, 0.0
      %v4443 = vmax.f32 %v4407, 0.0
      %v4444 = vmax.f32 %v4408, 0.0
      %v4445 = vmax.f32 %v4409, 0.0
      %v4446 = vmax.f32 %v4410, 0.0
      %v4447 = vmax.f32 %v4411, 0.0
      %v4448 = vmax.f32 %v4412, 0.0
      %v4449 = vmax.f32 %v4413, 0.0
      %v4450 = vld [vmem:[#allocation3] sm:$0x1]
      %v4451 = vsel %vm460, 0, %v4450
      %4452 = vst [vmem:[#allocation3] sm:$0x1] %v4451
      %v4453 = vld [vmem:[#allocation3 + $0xc] sm:$0x1]
      %v4454 = vsel %vm460, 0, %v4453
      %4455 = vst [vmem:[#allocation3 + $0xc] sm:$0x1] %v4454
      %v4456 = vld [vmem:[#allocation3 + $0x18] sm:$0x1]
      %v4457 = vsel %vm460, 0, %v4456
      %4458 = vst [vmem:[#allocation3 + $0x18] sm:$0x1] %v4457
      %v4459 = vld [vmem:[#allocation3 + $0x24] sm:$0x1]
      %v4460 = vsel %vm460, 0, %v4459
      %4461 = vst [vmem:[#allocation3 + $0x24] sm:$0x1] %v4460
      %v4462 = vld [vmem:[#allocation3 + $0x30] sm:$0x1]
      %v4463 = vsel %vm460, 0, %v4462
      %4464 = vst [vmem:[#allocation3 + $0x30] sm:$0x1] %v4463
      %v4465 = vld [vmem:[#allocation3 + $0x3c] sm:$0x1]
      %v4466 = vsel %vm460, 0, %v4465
      %4467 = vst [vmem:[#allocation3 + $0x3c] sm:$0x1] %v4466
      %v4468 = vld [vmem:[#allocation3 + $0x48] sm:$0x1]
      %v4469 = vsel %vm460, 0, %v4468
      %4470 = vst [vmem:[#allocation3 + $0x48] sm:$0x1] %v4469
      %v4471 = vld [vmem:[#allocation3 + $0x54] sm:$0x1]
      %v4472 = vsel %vm460, 0, %v4471
      %4473 = vst [vmem:[#allocation3 + $0x54] sm:$0x1] %v4472
      %v4474 = vld [vmem:[#allocation3 + $0x60] sm:$0x1]
      %v4475 = vsel %vm460, 0, %v4474
      %4476 = vst [vmem:[#allocation3 + $0x60] sm:$0x1] %v4475
      %v4477 = vld [vmem:[#allocation3 + $0x6c] sm:$0x1]
      %v4478 = vsel %vm460, 0, %v4477
      %4479 = vst [vmem:[#allocation3 + $0x6c] sm:$0x1] %v4478
      %v4480 = vld [vmem:[#allocation3 + $0x78] sm:$0x1]
      %v4481 = vsel %vm460, 0, %v4480
      %4482 = vst [vmem:[#allocation3 + $0x78] sm:$0x1] %v4481
      %v4483 = vld [vmem:[#allocation3 + $0x84] sm:$0x1]
      %v4484 = vsel %vm460, 0, %v4483
      %4485 = vst [vmem:[#allocation3 + $0x84] sm:$0x1] %v4484
      %v4486 = vld [vmem:[#allocation3 + $0x90] sm:$0x1]
      %v4487 = vsel %vm460, 0, %v4486
      %4488 = vst [vmem:[#allocation3 + $0x90] sm:$0x1] %v4487
      %v4489 = vld [vmem:[#allocation3 + $0x9c] sm:$0x1]
      %v4490 = vsel %vm460, 0, %v4489
      %4491 = vst [vmem:[#allocation3 + $0x9c] sm:$0x1] %v4490
      %v4492 = vld [vmem:[#allocation3 + $0xa8] sm:$0x1]
      %v4493 = vsel %vm460, 0, %v4492
      %4494 = vst [vmem:[#allocation3 + $0xa8] sm:$0x1] %v4493
      %v4495 = vld [vmem:[#allocation3 + $0xb4] sm:$0x1]
      %v4496 = vsel %vm460, 0, %v4495
      %4497 = vst [vmem:[#allocation3 + $0xb4] sm:$0x1] %v4496
      %v4498 = vld [vmem:[#allocation3 + $0xc0] sm:$0x1]
      %v4499 = vsel %vm460, 0, %v4498
      %4500 = vst [vmem:[#allocation3 + $0xc0] sm:$0x1] %v4499
      %v4501 = vld [vmem:[#allocation3 + $0xcc] sm:$0x1]
      %v4502 = vsel %vm460, 0, %v4501
      %4503 = vst [vmem:[#allocation3 + $0xcc] sm:$0x1] %v4502
      %v4504 = vld [vmem:[#allocation3 + $0x8] sm:$0x1]
      %v4505 = vsel %vm522, 0, %v4504
      %4506 = vst [vmem:[#allocation3 + $0x8] sm:$0x1] %v4505
      %v4507 = vld [vmem:[#allocation3 + $0x14] sm:$0x1]
      %v4508 = vsel %vm522, 0, %v4507
      %4509 = vst [vmem:[#allocation3 + $0x14] sm:$0x1] %v4508
      %v4510 = vld [vmem:[#allocation3 + $0x20] sm:$0x1]
      %v4511 = vsel %vm522, 0, %v4510
      %4512 = vst [vmem:[#allocation3 + $0x20] sm:$0x1] %v4511
      %v4513 = vld [vmem:[#allocation3 + $0x2c] sm:$0x1]
      %v4514 = vsel %vm522, 0, %v4513
      %4515 = vst [vmem:[#allocation3 + $0x2c] sm:$0x1] %v4514
      %v4516 = vld [vmem:[#allocation3 + $0x38] sm:$0x1]
      %v4517 = vsel %vm522, 0, %v4516
      %4518 = vst [vmem:[#allocation3 + $0x38] sm:$0x1] %v4517
      %v4519 = vld [vmem:[#allocation3 + $0x44] sm:$0x1]
      %v4520 = vsel %vm522, 0, %v4519
      %4521 = vst [vmem:[#allocation3 + $0x44] sm:$0x1] %v4520
      %v4522 = vld [vmem:[#allocation3 + $0x50] sm:$0x1]
      %v4523 = vsel %vm522, 0, %v4522
      %4524 = vst [vmem:[#allocation3 + $0x50] sm:$0x1] %v4523
      %v4525 = vld [vmem:[#allocation3 + $0x5c] sm:$0x1]
      %v4526 = vsel %vm522, 0, %v4525
      %4527 = vst [vmem:[#allocation3 + $0x5c] sm:$0x1] %v4526
      %v4528 = vld [vmem:[#allocation3 + $0x68] sm:$0x1]
      %v4529 = vsel %vm522, 0, %v4528
      %4530 = vst [vmem:[#allocation3 + $0x68] sm:$0x1] %v4529
      %v4531 = vld [vmem:[#allocation3 + $0x74] sm:$0x1]
      %v4532 = vsel %vm522, 0, %v4531
      %4533 = vst [vmem:[#allocation3 + $0x74] sm:$0x1] %v4532
      %v4534 = vld [vmem:[#allocation3 + $0x80] sm:$0x1]
      %v4535 = vsel %vm522, 0, %v4534
      %4536 = vst [vmem:[#allocation3 + $0x80] sm:$0x1] %v4535
      %v4537 = vld [vmem:[#allocation3 + $0x8c] sm:$0x1]
      %v4538 = vsel %vm522, 0, %v4537
      %4539 = vst [vmem:[#allocation3 + $0x8c] sm:$0x1] %v4538
      %v4540 = vld [vmem:[#allocation3 + $0x98] sm:$0x1]
      %v4541 = vsel %vm522, 0, %v4540
      %4542 = vst [vmem:[#allocation3 + $0x98] sm:$0x1] %v4541
      %v4543 = vld [vmem:[#allocation3 + $0xa4] sm:$0x1]
      %v4544 = vsel %vm522, 0, %v4543
      %4545 = vst [vmem:[#allocation3 + $0xa4] sm:$0x1] %v4544
      %v4546 = vld [vmem:[#allocation3 + $0xb0] sm:$0x1]
      %v4547 = vsel %vm522, 0, %v4546
      %4548 = vst [vmem:[#allocation3 + $0xb0] sm:$0x1] %v4547
      %v4549 = vld [vmem:[#allocation3 + $0xbc] sm:$0x1]
      %v4550 = vsel %vm522, 0, %v4549
      %4551 = vst [vmem:[#allocation3 + $0xbc] sm:$0x1] %v4550
      %v4552 = vld [vmem:[#allocation3 + $0xc8] sm:$0x1]
      %v4553 = vsel %vm522, 0, %v4552
      %4554 = vst [vmem:[#allocation3 + $0xc8] sm:$0x1] %v4553
      %v4555 = vld [vmem:[#allocation3 + $0xd4] sm:$0x1]
      %v4556 = vsel %vm522, 0, %v4555
      %4557 = vst [vmem:[#allocation3 + $0xd4] sm:$0x1] %v4556
      %v4558 = vpack.c.bf16 %v4415, %v4414
      %v4559 = vpack.c.bf16 %v4417, %v4416
      %v4560 = vpack.c.bf16 %v4419, %v4418
      %v4561 = vpack.c.bf16 %v4421, %v4420
      %v4562 = vpack.c.bf16 %v4423, %v4422
      %v4563 = vpack.c.bf16 %v4425, %v4424
      %v4564 = vpack.c.bf16 %v4427, %v4426
      %v4565 = vpack.c.bf16 %v4429, %v4428
      %v4566 = vpack.c.bf16 %v4431, %v4430
      %v4567 = vpack.c.bf16 %v4433, %v4432
      %v4568 = vpack.c.bf16 %v4435, %v4434
      %v4569 = vpack.c.bf16 %v4437, %v4436
      %v4570 = vpack.c.bf16 %v4439, %v4438
      %v4571 = vpack.c.bf16 %v4441, %v4440
      %v4572 = vpack.c.bf16 %v4443, %v4442
      %v4573 = vpack.c.bf16 %v4445, %v4444
      %v4574 = vpack.c.bf16 %v4447, %v4446
      %v4575 = vpack.c.bf16 %v4449, %v4448
      %v4594 = vunpack.c.l.b16 %v4558
      %v4595 = vunpack.c.h.b16 %v4558
      %v4596 = vunpack.c.l.b16 %v4559
      %v4597 = vunpack.c.h.b16 %v4559
      %v4598 = vunpack.c.l.b16 %v4560
      %v4599 = vunpack.c.h.b16 %v4560
      %v4600 = vunpack.c.l.b16 %v4561
      %v4601 = vunpack.c.h.b16 %v4561
      %v4602 = vunpack.c.l.b16 %v4562
      %v4603 = vunpack.c.h.b16 %v4562
      %v4604 = vunpack.c.l.b16 %v4563
      %v4605 = vunpack.c.h.b16 %v4563
      %v4606 = vunpack.c.l.b16 %v4564
      %v4607 = vunpack.c.h.b16 %v4564
      %v4608 = vunpack.c.l.b16 %v4565
      %v4609 = vunpack.c.h.b16 %v4565
      %v4610 = vunpack.c.l.b16 %v4566
      %v4611 = vunpack.c.h.b16 %v4566
      %v4612 = vunpack.c.l.b16 %v4567
      %v4613 = vunpack.c.h.b16 %v4567
      %v4614 = vunpack.c.l.b16 %v4568
      %v4615 = vunpack.c.h.b16 %v4568
      %v4616 = vunpack.c.l.b16 %v4569
      %v4617 = vunpack.c.h.b16 %v4569
      %v4618 = vunpack.c.l.b16 %v4570
      %v4619 = vunpack.c.h.b16 %v4570
      %v4620 = vunpack.c.l.b16 %v4571
      %v4621 = vunpack.c.h.b16 %v4571
      %v4622 = vunpack.c.l.b16 %v4572
      %v4623 = vunpack.c.h.b16 %v4572
      %v4624 = vunpack.c.l.b16 %v4573
      %v4625 = vunpack.c.h.b16 %v4573
      %v4626 = vunpack.c.l.b16 %v4574
      %v4627 = vunpack.c.h.b16 %v4574
      %v4628 = vunpack.c.l.b16 %v4575
      %v4629 = vunpack.c.h.b16 %v4575
      %v4630 = vpack.c.b16 %v4594, %v4594
      %v4631 = vpack.c.b16 %v4595, %v4595
      %v4632 = vpack.c.b16 %v4596, %v4596
      %v4633 = vpack.c.b16 %v4597, %v4597
      %v4634 = vpack.c.b16 %v4598, %v4598
      %v4635 = vpack.c.b16 %v4599, %v4599
      %v4636 = vpack.c.b16 %v4600, %v4600
      %v4637 = vpack.c.b16 %v4601, %v4601
      %v4638 = vpack.c.b16 %v4602, %v4602
      %v4639 = vpack.c.b16 %v4603, %v4603
      %v4640 = vpack.c.b16 %v4604, %v4604
      %v4641 = vpack.c.b16 %v4605, %v4605
      %v4642 = vpack.c.b16 %v4606, %v4606
      %v4643 = vpack.c.b16 %v4607, %v4607
      %v4644 = vpack.c.b16 %v4608, %v4608
      %v4645 = vpack.c.b16 %v4609, %v4609
      %v4646 = vpack.c.b16 %v4610, %v4610
      %v4647 = vpack.c.b16 %v4611, %v4611
      %v4648 = vpack.c.b16 %v4612, %v4612
      %v4649 = vpack.c.b16 %v4613, %v4613
      %v4650 = vpack.c.b16 %v4614, %v4614
      %v4651 = vpack.c.b16 %v4615, %v4615
      %v4652 = vpack.c.b16 %v4616, %v4616
      %v4653 = vpack.c.b16 %v4617, %v4617
      %v4654 = vpack.c.b16 %v4618, %v4618
      %v4655 = vpack.c.b16 %v4619, %v4619
      %v4656 = vpack.c.b16 %v4620, %v4620
      %v4657 = vpack.c.b16 %v4621, %v4621
      %v4658 = vpack.c.b16 %v4622, %v4622
      %v4659 = vpack.c.b16 %v4623, %v4623
      %v4660 = vpack.c.b16 %v4624, %v4624
      %v4661 = vpack.c.b16 %v4625, %v4625
      %v4662 = vpack.c.b16 %v4626, %v4626
      %v4663 = vpack.c.b16 %v4627, %v4627
      %v4664 = vpack.c.b16 %v4628, %v4628
      %v4665 = vpack.c.b16 %v4629, %v4629
      %v4667 = vshrl.u32 %v4630, 16
      %v4669 = vrot.slane %v4667, 7
      %v4670 = vshll.u32 %v4630, 16
      %v4672 = vor.u32 %v4669, %v4670
      %v4673 = vrot.slane %v4669, 4
      %v4675 = vshrl.u32 %v4631, 16
      %v4677 = vrot.slane %v4675, 7
      %v4678 = vshll.u32 %v4631, 16
      %v4680 = vor.u32 %v4677, %v4678
      %v4681 = vsel %vm712, %v4673, %v4680
      %v4682 = vrot.slane %v4677, 4
      %v4684 = vshrl.u32 %v4632, 16
      %v4686 = vrot.slane %v4684, 7
      %v4687 = vshll.u32 %v4632, 16
      %v4689 = vor.u32 %v4686, %v4687
      %v4690 = vrot.slane %v4686, 4
      %v4692 = vshrl.u32 %v4633, 16
      %v4694 = vrot.slane %v4692, 7
      %v4695 = vshll.u32 %v4633, 16
      %v4697 = vor.u32 %v4694, %v4695
      %v4698 = vsel %vm712, %v4690, %v4697
      %v4699 = vrot.slane %v4694, 4
      %v4701 = vshrl.u32 %v4634, 16
      %v4703 = vrot.slane %v4701, 7
      %v4704 = vshll.u32 %v4634, 16
      %v4706 = vor.u32 %v4703, %v4704
      %v4707 = vrot.slane %v4703, 4
      %v4709 = vshrl.u32 %v4635, 16
      %v4711 = vrot.slane %v4709, 7
      %v4712 = vshll.u32 %v4635, 16
      %v4714 = vor.u32 %v4711, %v4712
      %v4715 = vsel %vm712, %v4707, %v4714
      %v4716 = vrot.slane %v4711, 4
      %v4718 = vshrl.u32 %v4636, 16
      %v4720 = vrot.slane %v4718, 7
      %v4721 = vshll.u32 %v4636, 16
      %v4723 = vor.u32 %v4720, %v4721
      %v4724 = vrot.slane %v4720, 4
      %v4726 = vshrl.u32 %v4637, 16
      %v4728 = vrot.slane %v4726, 7
      %v4729 = vshll.u32 %v4637, 16
      %v4731 = vor.u32 %v4728, %v4729
      %v4732 = vsel %vm712, %v4724, %v4731
      %v4733 = vrot.slane %v4728, 4
      %v4735 = vshrl.u32 %v4638, 16
      %v4737 = vrot.slane %v4735, 7
      %v4738 = vshll.u32 %v4638, 16
      %v4740 = vor.u32 %v4737, %v4738
      %v4741 = vrot.slane %v4737, 4
      %v4743 = vshrl.u32 %v4639, 16
      %v4745 = vrot.slane %v4743, 7
      %v4746 = vshll.u32 %v4639, 16
      %v4748 = vor.u32 %v4745, %v4746
      %v4749 = vsel %vm712, %v4741, %v4748
      %v4750 = vrot.slane %v4745, 4
      %v4752 = vshrl.u32 %v4640, 16
      %v4754 = vrot.slane %v4752, 7
      %v4755 = vshll.u32 %v4640, 16
      %v4757 = vor.u32 %v4754, %v4755
      %v4758 = vrot.slane %v4754, 4
      %v4760 = vshrl.u32 %v4641, 16
      %v4762 = vrot.slane %v4760, 7
      %v4763 = vshll.u32 %v4641, 16
      %v4765 = vor.u32 %v4762, %v4763
      %v4766 = vsel %vm712, %v4758, %v4765
      %v4767 = vrot.slane %v4762, 4
      %v4769 = vshrl.u32 %v4642, 16
      %v4771 = vrot.slane %v4769, 7
      %v4772 = vshll.u32 %v4642, 16
      %v4774 = vor.u32 %v4771, %v4772
      %v4775 = vrot.slane %v4771, 4
      %v4777 = vshrl.u32 %v4643, 16
      %v4779 = vrot.slane %v4777, 7
      %v4780 = vshll.u32 %v4643, 16
      %v4782 = vor.u32 %v4779, %v4780
      %v4783 = vsel %vm712, %v4775, %v4782
      %v4784 = vrot.slane %v4779, 4
      %v4786 = vshrl.u32 %v4644, 16
      %v4788 = vrot.slane %v4786, 7
      %v4789 = vshll.u32 %v4644, 16
      %v4791 = vor.u32 %v4788, %v4789
      %v4792 = vrot.slane %v4788, 4
      %v4794 = vshrl.u32 %v4645, 16
      %v4796 = vrot.slane %v4794, 7
      %v4797 = vshll.u32 %v4645, 16
      %v4799 = vor.u32 %v4796, %v4797
      %v4800 = vsel %vm712, %v4792, %v4799
      %v4801 = vrot.slane %v4796, 4
      %v4803 = vshrl.u32 %v4646, 16
      %v4805 = vrot.slane %v4803, 7
      %v4806 = vshll.u32 %v4646, 16
      %v4808 = vor.u32 %v4805, %v4806
      %v4809 = vrot.slane %v4805, 4
      %v4811 = vshrl.u32 %v4647, 16
      %v4813 = vrot.slane %v4811, 7
      %v4814 = vshll.u32 %v4647, 16
      %v4816 = vor.u32 %v4813, %v4814
      %v4817 = vsel %vm712, %v4809, %v4816
      %v4818 = vrot.slane %v4813, 4
      %v4820 = vshrl.u32 %v4648, 16
      %v4822 = vrot.slane %v4820, 7
      %v4823 = vshll.u32 %v4648, 16
      %v4825 = vor.u32 %v4822, %v4823
      %v4826 = vrot.slane %v4822, 4
      %v4828 = vshrl.u32 %v4649, 16
      %v4830 = vrot.slane %v4828, 7
      %v4831 = vshll.u32 %v4649, 16
      %v4833 = vor.u32 %v4830, %v4831
      %v4834 = vsel %vm712, %v4826, %v4833
      %v4835 = vrot.slane %v4830, 4
      %v4837 = vshrl.u32 %v4650, 16
      %v4839 = vrot.slane %v4837, 7
      %v4840 = vshll.u32 %v4650, 16
      %v4842 = vor.u32 %v4839, %v4840
      %v4843 = vrot.slane %v4839, 4
      %v4845 = vshrl.u32 %v4651, 16
      %v4847 = vrot.slane %v4845, 7
      %v4848 = vshll.u32 %v4651, 16
      %v4850 = vor.u32 %v4847, %v4848
      %v4851 = vsel %vm712, %v4843, %v4850
      %v4852 = vrot.slane %v4847, 4
      %v4854 = vshrl.u32 %v4652, 16
      %v4856 = vrot.slane %v4854, 7
      %v4857 = vshll.u32 %v4652, 16
      %v4859 = vor.u32 %v4856, %v4857
      %v4860 = vrot.slane %v4856, 4
      %v4862 = vshrl.u32 %v4653, 16
      %v4864 = vrot.slane %v4862, 7
      %v4865 = vshll.u32 %v4653, 16
      %v4867 = vor.u32 %v4864, %v4865
      %v4868 = vsel %vm712, %v4860, %v4867
      %v4869 = vrot.slane %v4864, 4
      %v4871 = vshrl.u32 %v4654, 16
      %v4873 = vrot.slane %v4871, 7
      %v4874 = vshll.u32 %v4654, 16
      %v4876 = vor.u32 %v4873, %v4874
      %v4877 = vrot.slane %v4873, 4
      %v4879 = vshrl.u32 %v4655, 16
      %v4881 = vrot.slane %v4879, 7
      %v4882 = vshll.u32 %v4655, 16
      %v4884 = vor.u32 %v4881, %v4882
      %v4885 = vsel %vm712, %v4877, %v4884
      %v4886 = vrot.slane %v4881, 4
      %v4888 = vshrl.u32 %v4656, 16
      %v4890 = vrot.slane %v4888, 7
      %v4891 = vshll.u32 %v4656, 16
      %v4893 = vor.u32 %v4890, %v4891
      %v4894 = vrot.slane %v4890, 4
      %v4896 = vshrl.u32 %v4657, 16
      %v4898 = vrot.slane %v4896, 7
      %v4899 = vshll.u32 %v4657, 16
      %v4901 = vor.u32 %v4898, %v4899
      %v4902 = vsel %vm712, %v4894, %v4901
      %v4903 = vrot.slane %v4898, 4
      %v4905 = vshrl.u32 %v4658, 16
      %v4907 = vrot.slane %v4905, 7
      %v4908 = vshll.u32 %v4658, 16
      %v4910 = vor.u32 %v4907, %v4908
      %v4911 = vrot.slane %v4907, 4
      %v4913 = vshrl.u32 %v4659, 16
      %v4915 = vrot.slane %v4913, 7
      %v4916 = vshll.u32 %v4659, 16
      %v4918 = vor.u32 %v4915, %v4916
      %v4919 = vsel %vm712, %v4911, %v4918
      %v4920 = vrot.slane %v4915, 4
      %v4922 = vshrl.u32 %v4660, 16
      %v4924 = vrot.slane %v4922, 7
      %v4925 = vshll.u32 %v4660, 16
      %v4927 = vor.u32 %v4924, %v4925
      %v4928 = vrot.slane %v4924, 4
      %v4930 = vshrl.u32 %v4661, 16
      %v4932 = vrot.slane %v4930, 7
      %v4933 = vshll.u32 %v4661, 16
      %v4935 = vor.u32 %v4932, %v4933
      %v4936 = vsel %vm712, %v4928, %v4935
      %v4937 = vrot.slane %v4932, 4
      %v4939 = vshrl.u32 %v4662, 16
      %v4941 = vrot.slane %v4939, 7
      %v4942 = vshll.u32 %v4662, 16
      %v4944 = vor.u32 %v4941, %v4942
      %v4945 = vrot.slane %v4941, 4
      %v4947 = vshrl.u32 %v4663, 16
      %v4949 = vrot.slane %v4947, 7
      %v4950 = vshll.u32 %v4663, 16
      %v4952 = vor.u32 %v4949, %v4950
      %v4953 = vsel %vm712, %v4945, %v4952
      %v4954 = vrot.slane %v4949, 4
      %v4956 = vshrl.u32 %v4664, 16
      %v4958 = vrot.slane %v4956, 7
      %v4959 = vshll.u32 %v4664, 16
      %v4961 = vor.u32 %v4958, %v4959
      %v4962 = vrot.slane %v4958, 4
      %v4964 = vshrl.u32 %v4665, 16
      %v4966 = vrot.slane %v4964, 7
      %v4967 = vshll.u32 %v4665, 16
      %v4969 = vor.u32 %v4966, %v4967
      %v4970 = vsel %vm712, %v4962, %v4969
      %v4971 = vrot.slane %v4966, 4
      %v5026 = vld [vmem:[#allocation3] sm:$0xf]
      %v5027 = vsel %vm1035, %v4672, %v5026
      %5028 = vst [vmem:[#allocation3] sm:$0xf] %v5027
      %5029 = vst.msk [vmem:[#allocation3 + $0x4] sm:$0xf] %vm1039, %v4681
      %v5030 = vld [vmem:[#allocation3 + $0x8] sm:$0x1]
      %v5031 = vsel %vm460, %v4682, %v5030
      %5032 = vst [vmem:[#allocation3 + $0x8] sm:$0x1] %v5031
      %v5033 = vld [vmem:[#allocation3 + $0xc] sm:$0xf]
      %v5034 = vsel %vm1035, %v4689, %v5033
      %5035 = vst [vmem:[#allocation3 + $0xc] sm:$0xf] %v5034
      %5036 = vst.msk [vmem:[#allocation3 + $0x10] sm:$0xf] %vm1039, %v4698
      %v5037 = vld [vmem:[#allocation3 + $0x14] sm:$0x1]
      %v5038 = vsel %vm460, %v4699, %v5037
      %5039 = vst [vmem:[#allocation3 + $0x14] sm:$0x1] %v5038
      %v5040 = vld [vmem:[#allocation3 + $0x18] sm:$0xf]
      %v5041 = vsel %vm1035, %v4706, %v5040
      %5042 = vst [vmem:[#allocation3 + $0x18] sm:$0xf] %v5041
      %5043 = vst.msk [vmem:[#allocation3 + $0x1c] sm:$0xf] %vm1039, %v4715
      %v5044 = vld [vmem:[#allocation3 + $0x20] sm:$0x1]
      %v5045 = vsel %vm460, %v4716, %v5044
      %5046 = vst [vmem:[#allocation3 + $0x20] sm:$0x1] %v5045
      %v5047 = vld [vmem:[#allocation3 + $0x24] sm:$0xf]
      %v5048 = vsel %vm1035, %v4723, %v5047
      %5049 = vst [vmem:[#allocation3 + $0x24] sm:$0xf] %v5048
      %5050 = vst.msk [vmem:[#allocation3 + $0x28] sm:$0xf] %vm1039, %v4732
      %v5051 = vld [vmem:[#allocation3 + $0x2c] sm:$0x1]
      %v5052 = vsel %vm460, %v4733, %v5051
      %5053 = vst [vmem:[#allocation3 + $0x2c] sm:$0x1] %v5052
      %v5054 = vld [vmem:[#allocation3 + $0x30] sm:$0xf]
      %v5055 = vsel %vm1035, %v4740, %v5054
      %5056 = vst [vmem:[#allocation3 + $0x30] sm:$0xf] %v5055
      %5057 = vst.msk [vmem:[#allocation3 + $0x34] sm:$0xf] %vm1039, %v4749
      %v5058 = vld [vmem:[#allocation3 + $0x38] sm:$0x1]
      %v5059 = vsel %vm460, %v4750, %v5058
      %5060 = vst [vmem:[#allocation3 + $0x38] sm:$0x1] %v5059
      %v5061 = vld [vmem:[#allocation3 + $0x3c] sm:$0xf]
      %v5062 = vsel %vm1035, %v4757, %v5061
      %5063 = vst [vmem:[#allocation3 + $0x3c] sm:$0xf] %v5062
      %5064 = vst.msk [vmem:[#allocation3 + $0x40] sm:$0xf] %vm1039, %v4766
      %v5065 = vld [vmem:[#allocation3 + $0x44] sm:$0x1]
      %v5066 = vsel %vm460, %v4767, %v5065
      %5067 = vst [vmem:[#allocation3 + $0x44] sm:$0x1] %v5066
      %v5068 = vld [vmem:[#allocation3 + $0x48] sm:$0xf]
      %v5069 = vsel %vm1035, %v4774, %v5068
      %5070 = vst [vmem:[#allocation3 + $0x48] sm:$0xf] %v5069
      %5071 = vst.msk [vmem:[#allocation3 + $0x4c] sm:$0xf] %vm1039, %v4783
      %v5072 = vld [vmem:[#allocation3 + $0x50] sm:$0x1]
      %v5073 = vsel %vm460, %v4784, %v5072
      %5074 = vst [vmem:[#allocation3 + $0x50] sm:$0x1] %v5073
      %v5075 = vld [vmem:[#allocation3 + $0x54] sm:$0xf]
      %v5076 = vsel %vm1035, %v4791, %v5075
      %5077 = vst [vmem:[#allocation3 + $0x54] sm:$0xf] %v5076
      %5078 = vst.msk [vmem:[#allocation3 + $0x58] sm:$0xf] %vm1039, %v4800
      %v5079 = vld [vmem:[#allocation3 + $0x5c] sm:$0x1]
      %v5080 = vsel %vm460, %v4801, %v5079
      %5081 = vst [vmem:[#allocation3 + $0x5c] sm:$0x1] %v5080
      %v5082 = vld [vmem:[#allocation3 + $0x60] sm:$0xf]
      %v5083 = vsel %vm1035, %v4808, %v5082
      %5084 = vst [vmem:[#allocation3 + $0x60] sm:$0xf] %v5083
      %5085 = vst.msk [vmem:[#allocation3 + $0x64] sm:$0xf] %vm1039, %v4817
      %v5086 = vld [vmem:[#allocation3 + $0x68] sm:$0x1]
      %v5087 = vsel %vm460, %v4818, %v5086
      %5088 = vst [vmem:[#allocation3 + $0x68] sm:$0x1] %v5087
      %v5089 = vld [vmem:[#allocation3 + $0x6c] sm:$0xf]
      %v5090 = vsel %vm1035, %v4825, %v5089
      %5091 = vst [vmem:[#allocation3 + $0x6c] sm:$0xf] %v5090
      %5092 = vst.msk [vmem:[#allocation3 + $0x70] sm:$0xf] %vm1039, %v4834
      %v5093 = vld [vmem:[#allocation3 + $0x74] sm:$0x1]
      %v5094 = vsel %vm460, %v4835, %v5093
      %5095 = vst [vmem:[#allocation3 + $0x74] sm:$0x1] %v5094
      %v5096 = vld [vmem:[#allocation3 + $0x78] sm:$0xf]
      %v5097 = vsel %vm1035, %v4842, %v5096
      %5098 = vst [vmem:[#allocation3 + $0x78] sm:$0xf] %v5097
      %5099 = vst.msk [vmem:[#allocation3 + $0x7c] sm:$0xf] %vm1039, %v4851
      %v5100 = vld [vmem:[#allocation3 + $0x80] sm:$0x1]
      %v5101 = vsel %vm460, %v4852, %v5100
      %5102 = vst [vmem:[#allocation3 + $0x80] sm:$0x1] %v5101
      %v5103 = vld [vmem:[#allocation3 + $0x84] sm:$0xf]
      %v5104 = vsel %vm1035, %v4859, %v5103
      %5105 = vst [vmem:[#allocation3 + $0x84] sm:$0xf] %v5104
      %5106 = vst.msk [vmem:[#allocation3 + $0x88] sm:$0xf] %vm1039, %v4868
      %v5107 = vld [vmem:[#allocation3 + $0x8c] sm:$0x1]
      %v5108 = vsel %vm460, %v4869, %v5107
      %5109 = vst [vmem:[#allocation3 + $0x8c] sm:$0x1] %v5108
      %v5110 = vld [vmem:[#allocation3 + $0x90] sm:$0xf]
      %v5111 = vsel %vm1035, %v4876, %v5110
      %5112 = vst [vmem:[#allocation3 + $0x90] sm:$0xf] %v5111
      %5113 = vst.msk [vmem:[#allocation3 + $0x94] sm:$0xf] %vm1039, %v4885
      %v5114 = vld [vmem:[#allocation3 + $0x98] sm:$0x1]
      %v5115 = vsel %vm460, %v4886, %v5114
      %5116 = vst [vmem:[#allocation3 + $0x98] sm:$0x1] %v5115
      %v5117 = vld [vmem:[#allocation3 + $0x9c] sm:$0xf]
      %v5118 = vsel %vm1035, %v4893, %v5117
      %5119 = vst [vmem:[#allocation3 + $0x9c] sm:$0xf] %v5118
      %5120 = vst.msk [vmem:[#allocation3 + $0xa0] sm:$0xf] %vm1039, %v4902
      %v5121 = vld [vmem:[#allocation3 + $0xa4] sm:$0x1]
      %v5122 = vsel %vm460, %v4903, %v5121
      %5123 = vst [vmem:[#allocation3 + $0xa4] sm:$0x1] %v5122
      %v5124 = vld [vmem:[#allocation3 + $0xa8] sm:$0xf]
      %v5125 = vsel %vm1035, %v4910, %v5124
      %5126 = vst [vmem:[#allocation3 + $0xa8] sm:$0xf] %v5125
      %5127 = vst.msk [vmem:[#allocation3 + $0xac] sm:$0xf] %vm1039, %v4919
      %v5128 = vld [vmem:[#allocation3 + $0xb0] sm:$0x1]
      %v5129 = vsel %vm460, %v4920, %v5128
      %5130 = vst [vmem:[#allocation3 + $0xb0] sm:$0x1] %v5129
      %v5131 = vld [vmem:[#allocation3 + $0xb4] sm:$0xf]
      %v5132 = vsel %vm1035, %v4927, %v5131
      %5133 = vst [vmem:[#allocation3 + $0xb4] sm:$0xf] %v5132
      %5134 = vst.msk [vmem:[#allocation3 + $0xb8] sm:$0xf] %vm1039, %v4936
      %v5135 = vld [vmem:[#allocation3 + $0xbc] sm:$0x1]
      %v5136 = vsel %vm460, %v4937, %v5135
      %5137 = vst [vmem:[#allocation3 + $0xbc] sm:$0x1] %v5136
      %v5138 = vld [vmem:[#allocation3 + $0xc0] sm:$0xf]
      %v5139 = vsel %vm1035, %v4944, %v5138
      %5140 = vst [vmem:[#allocation3 + $0xc0] sm:$0xf] %v5139
      %5141 = vst.msk [vmem:[#allocation3 + $0xc4] sm:$0xf] %vm1039, %v4953
      %v5142 = vld [vmem:[#allocation3 + $0xc8] sm:$0x1]
      %v5143 = vsel %vm460, %v4954, %v5142
      %5144 = vst [vmem:[#allocation3 + $0xc8] sm:$0x1] %v5143
      %v5145 = vld [vmem:[#allocation3 + $0xcc] sm:$0xf]
      %v5146 = vsel %vm1035, %v4961, %v5145
      %5147 = vst [vmem:[#allocation3 + $0xcc] sm:$0xf] %v5146
      %5148 = vst.msk [vmem:[#allocation3 + $0xd0] sm:$0xf] %vm1039, %v4970
      %v5149 = vld [vmem:[#allocation3 + $0xd4] sm:$0x1]
      %v5150 = vsel %vm460, %v4971, %v5149
      %5151 = vst [vmem:[#allocation3 + $0xd4] sm:$0x1] %v5150
      // Predicated region
      $region65: #{tpu_custom_call.1} parent=47 // pred_check
        %p5152 = pneg %p1223
      $region66: #{tpu_custom_call.1} parent=47 // pred_check_branch
        %5154 = sbr.rel (%p5152) target = $region68
      $region67: #{tpu_custom_call.1} parent=47 // pred_region
        %5155 = vst.msk [vmem:[#allocation3] sm:$0xf] %vm1039, 0
        %5156 = vst.msk [vmem:[#allocation3 + $0x4] sm:$0xf] %vm1039, 0
        %vm5157 = vcmask 24576
        %5158 = vst.msk [vmem:[#allocation3 + $0x8] sm:$0x1] %vm5157, 0
        %s5159 = scalar_lea.vmem [#allocation3], 204
        %5160 = vst.msk [vmem:[%s5159] sm:$0xf] %vm1039, 0
        %5161 = vst.msk [vmem:[%s5159 + $0x4] sm:$0xf] %vm1039, 0
        %5162 = vst.msk [vmem:[%s5159 + $0x8] sm:$0x1] %vm5157, 0
      $region68: #{tpu_custom_call.1} parent=47 // pred_fallthru
        _
      %v5163 = vld [vmem:[#allocation3] sm:$0xf]
      %v5164 = vld [vmem:[#allocation3 + $0x4] sm:$0xf]
      %v5165 = vld [vmem:[#allocation3 + $0xc] sm:$0xf]
      %v5166 = vld [vmem:[#allocation3 + $0x10] sm:$0xf]
      %v5167 = vld [vmem:[#allocation3 + $0x18] sm:$0xf]
      %v5168 = vld [vmem:[#allocation3 + $0x1c] sm:$0xf]
      %v5169 = vld [vmem:[#allocation3 + $0x24] sm:$0xf]
      %v5170 = vld [vmem:[#allocation3 + $0x28] sm:$0xf]
      %v5171 = vld [vmem:[#allocation3 + $0x30] sm:$0xf]
      %v5172 = vld [vmem:[#allocation3 + $0x34] sm:$0xf]
      %v5173 = vld [vmem:[#allocation3 + $0x3c] sm:$0xf]
      %v5174 = vld [vmem:[#allocation3 + $0x40] sm:$0xf]
      %v5175 = vld [vmem:[#allocation3 + $0x48] sm:$0xf]
      %v5176 = vld [vmem:[#allocation3 + $0x4c] sm:$0xf]
      %v5177 = vld [vmem:[#allocation3 + $0x54] sm:$0xf]
      %v5178 = vld [vmem:[#allocation3 + $0x58] sm:$0xf]
      %v5179 = vld [vmem:[#allocation3 + $0x60] sm:$0xf]
      %v5180 = vld [vmem:[#allocation3 + $0x64] sm:$0xf]
      %v5181 = vld [vmem:[#allocation3 + $0x6c] sm:$0xf]
      %v5182 = vld [vmem:[#allocation3 + $0x70] sm:$0xf]
      %v5183 = vld [vmem:[#allocation3 + $0x78] sm:$0xf]
      %v5184 = vld [vmem:[#allocation3 + $0x7c] sm:$0xf]
      %v5185 = vld [vmem:[#allocation3 + $0x84] sm:$0xf]
      %v5186 = vld [vmem:[#allocation3 + $0x88] sm:$0xf]
      %v5187 = vld [vmem:[#allocation3 + $0x90] sm:$0xf]
      %v5188 = vld [vmem:[#allocation3 + $0x94] sm:$0xf]
      %v5189 = vld [vmem:[#allocation3 + $0x9c] sm:$0xf]
      %v5190 = vld [vmem:[#allocation3 + $0xa0] sm:$0xf]
      %v5191 = vld [vmem:[#allocation3 + $0xa8] sm:$0xf]
      %v5192 = vld [vmem:[#allocation3 + $0xac] sm:$0xf]
      %v5193 = vld [vmem:[#allocation3 + $0xb4] sm:$0xf]
      %v5194 = vld [vmem:[#allocation3 + $0xb8] sm:$0xf]
      %v5195 = vld [vmem:[#allocation3 + $0xc0] sm:$0xf]
      %v5196 = vld [vmem:[#allocation3 + $0xc4] sm:$0xf]
      %v5197 = vld [vmem:[#allocation3 + $0xcc] sm:$0xf]
      %v5198 = vld [vmem:[#allocation3 + $0xd0] sm:$0xf]
      %v5199 = vld [vmem:[#allocation3 + $0x8] sm:$0x1]
      %v5200 = vld [vmem:[#allocation3 + $0x14] sm:$0x1]
      %v5201 = vld [vmem:[#allocation3 + $0x20] sm:$0x1]
      %v5202 = vld [vmem:[#allocation3 + $0x2c] sm:$0x1]
      %v5203 = vld [vmem:[#allocation3 + $0x38] sm:$0x1]
      %v5204 = vld [vmem:[#allocation3 + $0x44] sm:$0x1]
      %v5205 = vld [vmem:[#allocation3 + $0x50] sm:$0x1]
      %v5206 = vld [vmem:[#allocation3 + $0x5c] sm:$0x1]
      %v5207 = vld [vmem:[#allocation3 + $0x68] sm:$0x1]
      %v5208 = vld [vmem:[#allocation3 + $0x74] sm:$0x1]
      %v5209 = vld [vmem:[#allocation3 + $0x80] sm:$0x1]
      %v5210 = vld [vmem:[#allocation3 + $0x8c] sm:$0x1]
      %v5211 = vld [vmem:[#allocation3 + $0x98] sm:$0x1]
      %v5212 = vld [vmem:[#allocation3 + $0xa4] sm:$0x1]
      %v5213 = vld [vmem:[#allocation3 + $0xb0] sm:$0x1]
      %v5214 = vld [vmem:[#allocation3 + $0xbc] sm:$0x1]
      %v5215 = vld [vmem:[#allocation3 + $0xc8] sm:$0x1]
      %v5216 = vld [vmem:[#allocation3 + $0xd4] sm:$0x1]
      %v5217 = vld [vmem:[#allocation3] sm:$0xe]
      %v5218 = vld [vmem:[#allocation3 + $0xc] sm:$0xe]
      %v5219 = vld [vmem:[#allocation3 + $0x18] sm:$0xe]
      %v5220 = vld [vmem:[#allocation3 + $0x24] sm:$0xe]
      %v5221 = vld [vmem:[#allocation3 + $0x30] sm:$0xe]
      %v5222 = vld [vmem:[#allocation3 + $0x3c] sm:$0xe]
      %v5223 = vld [vmem:[#allocation3 + $0x48] sm:$0xe]
      %v5224 = vld [vmem:[#allocation3 + $0x54] sm:$0xe]
      %v5225 = vld [vmem:[#allocation3 + $0x60] sm:$0xe]
      %v5226 = vld [vmem:[#allocation3 + $0x6c] sm:$0xe]
      %v5227 = vld [vmem:[#allocation3 + $0x78] sm:$0xe]
      %v5228 = vld [vmem:[#allocation3 + $0x84] sm:$0xe]
      %v5229 = vld [vmem:[#allocation3 + $0x90] sm:$0xe]
      %v5230 = vld [vmem:[#allocation3 + $0x9c] sm:$0xe]
      %v5231 = vld [vmem:[#allocation3 + $0xa8] sm:$0xe]
      %v5232 = vld [vmem:[#allocation3 + $0xb4] sm:$0xe]
      %v5233 = vld [vmem:[#allocation3 + $0xc0] sm:$0xe]
      %v5234 = vld [vmem:[#allocation3 + $0xcc] sm:$0xe]
      %v5235 = vld [vmem:[%s5] sm:$0x3]
      %v5237 = vshrl.u32 %v5163, 16
      %v5239 = vrot.slane %v5237, 4
      %v5240 = vshll.u32 %v5163, 16
      %v5242 = vrot.slane %v5240, 5
      %v5243 = vor.u32 %v5239, %v5242
      %v5244 = vrot.slane %v5243, 4
      %v5246 = vshll.u32 %v5164, 16
      %v5248 = vrot.slane %v5246, 5
      %v5249 = vsel %vm1417, %v5244, %v5248
      %v5250 = vshrl.u32 %v5164, 16
      %v5252 = vrot.slane %v5250, 4
      %v5253 = vor.u32 %v5252, %v5248
      %v5254 = vrot.slane %v5253, 4
      %v5256 = vshll.u32 %v5199, 16
      %v5258 = vrot.slane %v5256, 5
      %v5259 = vsel %vm1417, %v5254, %v5258
      %v5261 = vshrl.u32 %v5165, 16
      %v5263 = vrot.slane %v5261, 4
      %v5264 = vshll.u32 %v5165, 16
      %v5266 = vrot.slane %v5264, 5
      %v5267 = vor.u32 %v5263, %v5266
      %v5268 = vrot.slane %v5267, 4
      %v5270 = vshll.u32 %v5166, 16
      %v5272 = vrot.slane %v5270, 5
      %v5273 = vsel %vm1417, %v5268, %v5272
      %v5274 = vshrl.u32 %v5166, 16
      %v5276 = vrot.slane %v5274, 4
      %v5277 = vor.u32 %v5276, %v5272
      %v5278 = vrot.slane %v5277, 4
      %v5280 = vshll.u32 %v5200, 16
      %v5282 = vrot.slane %v5280, 5
      %v5283 = vsel %vm1417, %v5278, %v5282
      %v5285 = vshrl.u32 %v5167, 16
      %v5287 = vrot.slane %v5285, 4
      %v5288 = vshll.u32 %v5167, 16
      %v5290 = vrot.slane %v5288, 5
      %v5291 = vor.u32 %v5287, %v5290
      %v5292 = vrot.slane %v5291, 4
      %v5294 = vshll.u32 %v5168, 16
      %v5296 = vrot.slane %v5294, 5
      %v5297 = vsel %vm1417, %v5292, %v5296
      %v5298 = vshrl.u32 %v5168, 16
      %v5300 = vrot.slane %v5298, 4
      %v5301 = vor.u32 %v5300, %v5296
      %v5302 = vrot.slane %v5301, 4
      %v5304 = vshll.u32 %v5201, 16
      %v5306 = vrot.slane %v5304, 5
      %v5307 = vsel %vm1417, %v5302, %v5306
      %v5309 = vshrl.u32 %v5169, 16
      %v5311 = vrot.slane %v5309, 4
      %v5312 = vshll.u32 %v5169, 16
      %v5314 = vrot.slane %v5312, 5
      %v5315 = vor.u32 %v5311, %v5314
      %v5316 = vrot.slane %v5315, 4
      %v5318 = vshll.u32 %v5170, 16
      %v5320 = vrot.slane %v5318, 5
      %v5321 = vsel %vm1417, %v5316, %v5320
      %v5322 = vshrl.u32 %v5170, 16
      %v5324 = vrot.slane %v5322, 4
      %v5325 = vor.u32 %v5324, %v5320
      %v5326 = vrot.slane %v5325, 4
      %v5328 = vshll.u32 %v5202, 16
      %v5330 = vrot.slane %v5328, 5
      %v5331 = vsel %vm1417, %v5326, %v5330
      %v5333 = vshrl.u32 %v5171, 16
      %v5335 = vrot.slane %v5333, 4
      %v5336 = vshll.u32 %v5171, 16
      %v5338 = vrot.slane %v5336, 5
      %v5339 = vor.u32 %v5335, %v5338
      %v5340 = vrot.slane %v5339, 4
      %v5342 = vshll.u32 %v5172, 16
      %v5344 = vrot.slane %v5342, 5
      %v5345 = vsel %vm1417, %v5340, %v5344
      %v5346 = vshrl.u32 %v5172, 16
      %v5348 = vrot.slane %v5346, 4
      %v5349 = vor.u32 %v5348, %v5344
      %v5350 = vrot.slane %v5349, 4
      %v5352 = vshll.u32 %v5203, 16
      %v5354 = vrot.slane %v5352, 5
      %v5355 = vsel %vm1417, %v5350, %v5354
      %v5357 = vshrl.u32 %v5173, 16
      %v5359 = vrot.slane %v5357, 4
      %v5360 = vshll.u32 %v5173, 16
      %v5362 = vrot.slane %v5360, 5
      %v5363 = vor.u32 %v5359, %v5362
      %v5364 = vrot.slane %v5363, 4
      %v5366 = vshll.u32 %v5174, 16
      %v5368 = vrot.slane %v5366, 5
      %v5369 = vsel %vm1417, %v5364, %v5368
      %v5370 = vshrl.u32 %v5174, 16
      %v5372 = vrot.slane %v5370, 4
      %v5373 = vor.u32 %v5372, %v5368
      %v5374 = vrot.slane %v5373, 4
      %v5376 = vshll.u32 %v5204, 16
      %v5378 = vrot.slane %v5376, 5
      %v5379 = vsel %vm1417, %v5374, %v5378
      %v5381 = vshrl.u32 %v5175, 16
      %v5383 = vrot.slane %v5381, 4
      %v5384 = vshll.u32 %v5175, 16
      %v5386 = vrot.slane %v5384, 5
      %v5387 = vor.u32 %v5383, %v5386
      %v5388 = vrot.slane %v5387, 4
      %v5390 = vshll.u32 %v5176, 16
      %v5392 = vrot.slane %v5390, 5
      %v5393 = vsel %vm1417, %v5388, %v5392
      %v5394 = vshrl.u32 %v5176, 16
      %v5396 = vrot.slane %v5394, 4
      %v5397 = vor.u32 %v5396, %v5392
      %v5398 = vrot.slane %v5397, 4
      %v5400 = vshll.u32 %v5205, 16
      %v5402 = vrot.slane %v5400, 5
      %v5403 = vsel %vm1417, %v5398, %v5402
      %v5405 = vshrl.u32 %v5177, 16
      %v5407 = vrot.slane %v5405, 4
      %v5408 = vshll.u32 %v5177, 16
      %v5410 = vrot.slane %v5408, 5
      %v5411 = vor.u32 %v5407, %v5410
      %v5412 = vrot.slane %v5411, 4
      %v5414 = vshll.u32 %v5178, 16
      %v5416 = vrot.slane %v5414, 5
      %v5417 = vsel %vm1417, %v5412, %v5416
      %v5418 = vshrl.u32 %v5178, 16
      %v5420 = vrot.slane %v5418, 4
      %v5421 = vor.u32 %v5420, %v5416
      %v5422 = vrot.slane %v5421, 4
      %v5424 = vshll.u32 %v5206, 16
      %v5426 = vrot.slane %v5424, 5
      %v5427 = vsel %vm1417, %v5422, %v5426
      %v5429 = vshrl.u32 %v5179, 16
      %v5431 = vrot.slane %v5429, 4
      %v5432 = vshll.u32 %v5179, 16
      %v5434 = vrot.slane %v5432, 5
      %v5435 = vor.u32 %v5431, %v5434
      %v5436 = vrot.slane %v5435, 4
      %v5438 = vshll.u32 %v5180, 16
      %v5440 = vrot.slane %v5438, 5
      %v5441 = vsel %vm1417, %v5436, %v5440
      %v5442 = vshrl.u32 %v5180, 16
      %v5444 = vrot.slane %v5442, 4
      %v5445 = vor.u32 %v5444, %v5440
      %v5446 = vrot.slane %v5445, 4
      %v5448 = vshll.u32 %v5207, 16
      %v5450 = vrot.slane %v5448, 5
      %v5451 = vsel %vm1417, %v5446, %v5450
      %v5453 = vshrl.u32 %v5181, 16
      %v5455 = vrot.slane %v5453, 4
      %v5456 = vshll.u32 %v5181, 16
      %v5458 = vrot.slane %v5456, 5
      %v5459 = vor.u32 %v5455, %v5458
      %v5460 = vrot.slane %v5459, 4
      %v5462 = vshll.u32 %v5182, 16
      %v5464 = vrot.slane %v5462, 5
      %v5465 = vsel %vm1417, %v5460, %v5464
      %v5466 = vshrl.u32 %v5182, 16
      %v5468 = vrot.slane %v5466, 4
      %v5469 = vor.u32 %v5468, %v5464
      %v5470 = vrot.slane %v5469, 4
      %v5472 = vshll.u32 %v5208, 16
      %v5474 = vrot.slane %v5472, 5
      %v5475 = vsel %vm1417, %v5470, %v5474
      %v5477 = vshrl.u32 %v5183, 16
      %v5479 = vrot.slane %v5477, 4
      %v5480 = vshll.u32 %v5183, 16
      %v5482 = vrot.slane %v5480, 5
      %v5483 = vor.u32 %v5479, %v5482
      %v5484 = vrot.slane %v5483, 4
      %v5486 = vshll.u32 %v5184, 16
      %v5488 = vrot.slane %v5486, 5
      %v5489 = vsel %vm1417, %v5484, %v5488
      %v5490 = vshrl.u32 %v5184, 16
      %v5492 = vrot.slane %v5490, 4
      %v5493 = vor.u32 %v5492, %v5488
      %v5494 = vrot.slane %v5493, 4
      %v5496 = vshll.u32 %v5209, 16
      %v5498 = vrot.slane %v5496, 5
      %v5499 = vsel %vm1417, %v5494, %v5498
      %v5501 = vshrl.u32 %v5185, 16
      %v5503 = vrot.slane %v5501, 4
      %v5504 = vshll.u32 %v5185, 16
      %v5506 = vrot.slane %v5504, 5
      %v5507 = vor.u32 %v5503, %v5506
      %v5508 = vrot.slane %v5507, 4
      %v5510 = vshll.u32 %v5186, 16
      %v5512 = vrot.slane %v5510, 5
      %v5513 = vsel %vm1417, %v5508, %v5512
      %v5514 = vshrl.u32 %v5186, 16
      %v5516 = vrot.slane %v5514, 4
      %v5517 = vor.u32 %v5516, %v5512
      %v5518 = vrot.slane %v5517, 4
      %v5520 = vshll.u32 %v5210, 16
      %v5522 = vrot.slane %v5520, 5
      %v5523 = vsel %vm1417, %v5518, %v5522
      %v5525 = vshrl.u32 %v5187, 16
      %v5527 = vrot.slane %v5525, 4
      %v5528 = vshll.u32 %v5187, 16
      %v5530 = vrot.slane %v5528, 5
      %v5531 = vor.u32 %v5527, %v5530
      %v5532 = vrot.slane %v5531, 4
      %v5534 = vshll.u32 %v5188, 16
      %v5536 = vrot.slane %v5534, 5
      %v5537 = vsel %vm1417, %v5532, %v5536
      %v5538 = vshrl.u32 %v5188, 16
      %v5540 = vrot.slane %v5538, 4
      %v5541 = vor.u32 %v5540, %v5536
      %v5542 = vrot.slane %v5541, 4
      %v5544 = vshll.u32 %v5211, 16
      %v5546 = vrot.slane %v5544, 5
      %v5547 = vsel %vm1417, %v5542, %v5546
      %v5549 = vshrl.u32 %v5189, 16
      %v5551 = vrot.slane %v5549, 4
      %v5552 = vshll.u32 %v5189, 16
      %v5554 = vrot.slane %v5552, 5
      %v5555 = vor.u32 %v5551, %v5554
      %v5556 = vrot.slane %v5555, 4
      %v5558 = vshll.u32 %v5190, 16
      %v5560 = vrot.slane %v5558, 5
      %v5561 = vsel %vm1417, %v5556, %v5560
      %v5562 = vshrl.u32 %v5190, 16
      %v5564 = vrot.slane %v5562, 4
      %v5565 = vor.u32 %v5564, %v5560
      %v5566 = vrot.slane %v5565, 4
      %v5568 = vshll.u32 %v5212, 16
      %v5570 = vrot.slane %v5568, 5
      %v5571 = vsel %vm1417, %v5566, %v5570
      %v5573 = vshrl.u32 %v5191, 16
      %v5575 = vrot.slane %v5573, 4
      %v5576 = vshll.u32 %v5191, 16
      %v5578 = vrot.slane %v5576, 5
      %v5579 = vor.u32 %v5575, %v5578
      %v5580 = vrot.slane %v5579, 4
      %v5582 = vshll.u32 %v5192, 16
      %v5584 = vrot.slane %v5582, 5
      %v5585 = vsel %vm1417, %v5580, %v5584
      %v5586 = vshrl.u32 %v5192, 16
      %v5588 = vrot.slane %v5586, 4
      %v5589 = vor.u32 %v5588, %v5584
      %v5590 = vrot.slane %v5589, 4
      %v5592 = vshll.u32 %v5213, 16
      %v5594 = vrot.slane %v5592, 5
      %v5595 = vsel %vm1417, %v5590, %v5594
      %v5597 = vshrl.u32 %v5193, 16
      %v5599 = vrot.slane %v5597, 4
      %v5600 = vshll.u32 %v5193, 16
      %v5602 = vrot.slane %v5600, 5
      %v5603 = vor.u32 %v5599, %v5602
      %v5604 = vrot.slane %v5603, 4
      %v5606 = vshll.u32 %v5194, 16
      %v5608 = vrot.slane %v5606, 5
      %v5609 = vsel %vm1417, %v5604, %v5608
      %v5610 = vshrl.u32 %v5194, 16
      %v5612 = vrot.slane %v5610, 4
      %v5613 = vor.u32 %v5612, %v5608
      %v5614 = vrot.slane %v5613, 4
      %v5616 = vshll.u32 %v5214, 16
      %v5618 = vrot.slane %v5616, 5
      %v5619 = vsel %vm1417, %v5614, %v5618
      %s5620 = scalar_lea.vmem %s5, 2
      %v5621 = vld [vmem:[%s5620] sm:$0x3]
      %v5622 = vunpack.c.l.b16 %v5249
      %v5623 = vunpack.c.l.b16 %v5259
      %v5624 = vunpack.c.l.b16 %v5273
      %v5625 = vunpack.c.l.b16 %v5283
      %v5626 = vunpack.c.l.b16 %v5297
      %v5627 = vunpack.c.l.b16 %v5307
      %v5628 = vunpack.c.l.b16 %v5321
      %v5629 = vunpack.c.l.b16 %v5331
      %v5630 = vunpack.c.l.b16 %v5345
      %v5631 = vunpack.c.l.b16 %v5355
      %v5632 = vunpack.c.l.b16 %v5369
      %v5633 = vunpack.c.l.b16 %v5379
      %v5634 = vunpack.c.l.b16 %v5393
      %v5635 = vunpack.c.l.b16 %v5403
      %v5636 = vunpack.c.l.b16 %v5417
      %v5637 = vunpack.c.l.b16 %v5427
      %v5638 = vunpack.c.l.b16 %v5441
      %v5639 = vunpack.c.l.b16 %v5451
      %v5640 = vunpack.c.l.b16 %v5465
      %v5641 = vunpack.c.l.b16 %v5475
      %v5642 = vunpack.c.l.b16 %v5489
      %v5643 = vunpack.c.l.b16 %v5499
      %v5644 = vunpack.c.l.b16 %v5513
      %v5645 = vunpack.c.l.b16 %v5523
      %v5646 = vunpack.c.l.b16 %v5537
      %v5647 = vunpack.c.l.b16 %v5547
      %v5648 = vunpack.c.l.b16 %v5561
      %v5649 = vunpack.c.l.b16 %v5571
      %v5650 = vunpack.c.l.b16 %v5585
      %v5651 = vunpack.c.l.b16 %v5595
      %v5652 = vunpack.c.l.b16 %v5609
      %v5653 = vunpack.c.l.b16 %v5619
      %v5654 = vpack.c.b16 %v5623, %v5622
      %v5655 = vpack.c.b16 %v5625, %v5624
      %v5656 = vpack.c.b16 %v5627, %v5626
      %v5657 = vpack.c.b16 %v5629, %v5628
      %v5658 = vpack.c.b16 %v5631, %v5630
      %v5659 = vpack.c.b16 %v5633, %v5632
      %v5660 = vpack.c.b16 %v5635, %v5634
      %v5661 = vpack.c.b16 %v5637, %v5636
      %v5662 = vpack.c.b16 %v5639, %v5638
      %v5663 = vpack.c.b16 %v5641, %v5640
      %v5664 = vpack.c.b16 %v5643, %v5642
      %v5665 = vpack.c.b16 %v5645, %v5644
      %v5666 = vpack.c.b16 %v5647, %v5646
      %v5667 = vpack.c.b16 %v5649, %v5648
      %v5668 = vpack.c.b16 %v5651, %v5650
      %v5669 = vpack.c.b16 %v5653, %v5652
      %v5671 = vsel %vm1906, %v5654, 0
      %v5674 = vsel %vm1906, %v5655, 0
      %v5677 = vsel %vm1906, %v5656, 0
      %v5680 = vsel %vm1906, %v5657, 0
      %v5683 = vsel %vm1906, %v5658, 0
      %v5686 = vsel %vm1906, %v5659, 0
      %v5689 = vsel %vm1906, %v5660, 0
      %v5692 = vsel %vm1906, %v5661, 0
      %v5695 = vsel %vm1906, %v5662, 0
      %v5698 = vsel %vm1906, %v5663, 0
      %v5701 = vsel %vm1906, %v5664, 0
      %v5704 = vsel %vm1906, %v5665, 0
      %v5707 = vsel %vm1906, %v5666, 0
      %v5710 = vsel %vm1906, %v5667, 0
      %v5713 = vsel %vm1906, %v5668, 0
      %v5716 = vsel %vm1906, %v5669, 0
      %v5719 = vsel %vm1961, %v5621, 0
      %5721 = vmatprep.subr.bf16.mxu0 0
      %5722 = vmatpush1.bf16.msra.mxu0 %v5719
      %5723 = vmatprep.subr.bf16.mxu0 0
      %5724 = vmatpush1.bf16.msra.mxu0 0
      %5725 = vmatprep.subr.bf16.mxu0 0
      %5726 = vmatpush1.bf16.msra.mxu0 0
      %5727 = vmatprep.subr.bf16.mxu0 0
      %5728 = vmatpush1.bf16.msra.mxu0 0
      %5729 = vmatprep.subr.bf16.mxu0 0
      %5730 = vmatpush1.bf16.msra.mxu0 0
      %5731 = vmatprep.subr.bf16.mxu0 0
      %5732 = vmatpush1.bf16.msra.mxu0 0
      %5733 = vmatprep.subr.bf16.mxu0 0
      %5734 = vmatpush1.bf16.msra.mxu0 0
      %5735 = vmatprep.subr.bf16.mxu0 0
      %5736 = vmatpush1.bf16.msra.mxu0 0
      %5737 = vmatprep.subr.bf16.mxu0 0
      %5738 = vmatpush1.bf16.msra.mxu0 0
      %5739 = vmatprep.subr.bf16.mxu0 0
      %5740 = vmatpush1.bf16.msra.mxu0 0
      %5741 = vmatprep.subr.bf16.mxu0 0
      %5742 = vmatpush1.bf16.msra.mxu0 0
      %5743 = vmatprep.subr.bf16.mxu0 0
      %5744 = vmatpush1.bf16.msra.mxu0 0
      %5745 = vmatprep.subr.bf16.mxu0 0
      %5746 = vmatpush1.bf16.msra.mxu0 0
      %5747 = vmatprep.subr.bf16.mxu0 0
      %5748 = vmatpush1.bf16.msra.mxu0 0
      %5749 = vmatprep.subr.bf16.mxu0 0
      %5750 = vmatpush1.bf16.msra.mxu0 0
      %5751 = vmatprep.subr.bf16.mxu0 0
      %5752 = vmatpush1.bf16.msra.mxu0 0
      %5753 = vmatprep.mubr.bf16.mxu0 0
      %5754 = vmatmul.mubr.bf16.gmra.mrb[0].mxu0 %v5671
      %v5755 = vpop.f32.mrb[0].mxu0
      %v5756 = vadd.f32 0.0, %v5755
      %v5757 = vpop.f32.mrb[0].mxu0
      %v5758 = vpop.f32.mrb[0].mxu0
      %v5759 = vadd.f32 0.0, %v5758
      %v5760 = vpop.f32.mrb[0].mxu0
      %5761 = vmatprep.mubr.bf16.mxu0 0
      %5762 = vmatmul.mubr.bf16.gmra.mrb[0].mxu0 %v5674
      %v5763 = vpop.f32.mrb[0].mxu0
      %v5764 = vadd.f32 0.0, %v5763
      %v5765 = vpop.f32.mrb[0].mxu0
      %v5766 = vpop.f32.mrb[0].mxu0
      %v5767 = vadd.f32 0.0, %v5766
      %v5768 = vpop.f32.mrb[0].mxu0
      %5769 = vmatprep.mubr.bf16.mxu0 0
      %5770 = vmatmul.mubr.bf16.gmra.mrb[0].mxu0 %v5677
      %v5771 = vpop.f32.mrb[0].mxu0
      %v5772 = vadd.f32 0.0, %v5771
      %v5773 = vpop.f32.mrb[0].mxu0
      %v5774 = vpop.f32.mrb[0].mxu0
      %v5775 = vadd.f32 0.0, %v5774
      %v5776 = vpop.f32.mrb[0].mxu0
      %5777 = vmatprep.mubr.bf16.mxu0 0
      %5778 = vmatmul.mubr.bf16.gmra.mrb[0].mxu0 %v5680
      %v5779 = vpop.f32.mrb[0].mxu0
      %v5780 = vadd.f32 0.0, %v5779
      %v5781 = vpop.f32.mrb[0].mxu0
      %v5782 = vpop.f32.mrb[0].mxu0
      %v5783 = vadd.f32 0.0, %v5782
      %v5784 = vpop.f32.mrb[0].mxu0
      %5785 = vmatprep.mubr.bf16.mxu0 0
      %5786 = vmatmul.mubr.bf16.gmra.mrb[0].mxu0 %v5683
      %v5787 = vpop.f32.mrb[0].mxu0
      %v5788 = vadd.f32 0.0, %v5787
      %v5789 = vpop.f32.mrb[0].mxu0
      %v5790 = vpop.f32.mrb[0].mxu0
      %v5791 = vadd.f32 0.0, %v5790
      %v5792 = vpop.f32.mrb[0].mxu0
      %5793 = vmatprep.mubr.bf16.mxu0 0
      %5794 = vmatmul.mubr.bf16.gmra.mrb[0].mxu0 %v5686
      %v5795 = vpop.f32.mrb[0].mxu0
      %v5796 = vadd.f32 0.0, %v5795
      %v5797 = vpop.f32.mrb[0].mxu0
      %v5798 = vpop.f32.mrb[0].mxu0
      %v5799 = vadd.f32 0.0, %v5798
      %v5800 = vpop.f32.mrb[0].mxu0
      %5801 = vmatprep.mubr.bf16.mxu0 0
      %5802 = vmatmul.mubr.bf16.gmra.mrb[0].mxu0 %v5689
      %v5803 = vpop.f32.mrb[0].mxu0
      %v5804 = vadd.f32 0.0, %v5803
      %v5805 = vpop.f32.mrb[0].mxu0
      %v5806 = vpop.f32.mrb[0].mxu0
      %v5807 = vadd.f32 0.0, %v5806
      %v5808 = vpop.f32.mrb[0].mxu0
      %5809 = vmatprep.mubr.bf16.mxu0 0
      %5810 = vmatmul.mubr.bf16.gmra.mrb[0].mxu0 %v5692
      %v5811 = vpop.f32.mrb[0].mxu0
      %v5812 = vadd.f32 0.0, %v5811
      %v5813 = vpop.f32.mrb[0].mxu0
      %v5814 = vpop.f32.mrb[0].mxu0
      %v5815 = vadd.f32 0.0, %v5814
      %v5816 = vpop.f32.mrb[0].mxu0
      %5817 = vmatprep.mubr.bf16.mxu0 0
      %5818 = vmatmul.mubr.bf16.gmra.mrb[0].mxu0 %v5695
      %v5819 = vpop.f32.mrb[0].mxu0
      %v5820 = vadd.f32 0.0, %v5819
      %v5821 = vpop.f32.mrb[0].mxu0
      %v5822 = vpop.f32.mrb[0].mxu0
      %v5823 = vadd.f32 0.0, %v5822
      %v5824 = vpop.f32.mrb[0].mxu0
      %5825 = vmatprep.mubr.bf16.mxu0 0
      %5826 = vmatmul.mubr.bf16.gmra.mrb[0].mxu0 %v5698
      %v5827 = vpop.f32.mrb[0].mxu0
      %v5828 = vadd.f32 0.0, %v5827
      %v5829 = vpop.f32.mrb[0].mxu0
      %v5830 = vpop.f32.mrb[0].mxu0
      %v5831 = vadd.f32 0.0, %v5830
      %v5832 = vpop.f32.mrb[0].mxu0
      %5833 = vmatprep.mubr.bf16.mxu0 0
      %5834 = vmatmul.mubr.bf16.gmra.mrb[0].mxu0 %v5701
      %v5835 = vpop.f32.mrb[0].mxu0
      %v5836 = vadd.f32 0.0, %v5835
      %v5837 = vpop.f32.mrb[0].mxu0
      %v5838 = vpop.f32.mrb[0].mxu0
      %v5839 = vadd.f32 0.0, %v5838
      %v5840 = vpop.f32.mrb[0].mxu0
      %5841 = vmatprep.mubr.bf16.mxu0 0
      %5842 = vmatmul.mubr.bf16.gmra.mrb[0].mxu0 %v5704
      %v5843 = vpop.f32.mrb[0].mxu0
      %v5844 = vadd.f32 0.0, %v5843
      %v5845 = vpop.f32.mrb[0].mxu0
      %v5846 = vpop.f32.mrb[0].mxu0
      %v5847 = vadd.f32 0.0, %v5846
      %v5848 = vpop.f32.mrb[0].mxu0
      %5849 = vmatprep.mubr.bf16.mxu0 0
      %5850 = vmatmul.mubr.bf16.gmra.mrb[0].mxu0 %v5707
      %v5851 = vpop.f32.mrb[0].mxu0
      %v5852 = vadd.f32 0.0, %v5851
      %v5853 = vpop.f32.mrb[0].mxu0
      %v5854 = vpop.f32.mrb[0].mxu0
      %v5855 = vadd.f32 0.0, %v5854
      %v5856 = vpop.f32.mrb[0].mxu0
      %5857 = vmatprep.mubr.bf16.mxu0 0
      %5858 = vmatmul.mubr.bf16.gmra.mrb[0].mxu0 %v5710
      %v5859 = vpop.f32.mrb[0].mxu0
      %v5860 = vadd.f32 0.0, %v5859
      %v5861 = vpop.f32.mrb[0].mxu0
      %v5862 = vpop.f32.mrb[0].mxu0
      %v5863 = vadd.f32 0.0, %v5862
      %v5864 = vpop.f32.mrb[0].mxu0
      %5865 = vmatprep.mubr.bf16.mxu0 0
      %5866 = vmatmul.mubr.bf16.gmra.mrb[0].mxu0 %v5713
      %v5867 = vpop.f32.mrb[0].mxu0
      %v5868 = vadd.f32 0.0, %v5867
      %v5869 = vpop.f32.mrb[0].mxu0
      %v5870 = vpop.f32.mrb[0].mxu0
      %v5871 = vadd.f32 0.0, %v5870
      %v5872 = vpop.f32.mrb[0].mxu0
      %5873 = vmatprep.mubr.bf16.mxu0 0
      %5874 = vmatmul.mubr.bf16.gmra.mrb[0].mxu0 %v5716
      %v5875 = vpop.f32.mrb[0].mxu0
      %v5876 = vadd.f32 0.0, %v5875
      %v5877 = vpop.f32.mrb[0].mxu0
      %v5878 = vpop.f32.mrb[0].mxu0
      %v5879 = vadd.f32 0.0, %v5878
      %v5880 = vpop.f32.mrb[0].mxu0
      %5881 = vdwg.mxu0
      %v5914 = vunpack.c.l.b16 %v5163
      %v5915 = vunpack.c.l.b16 %v5164
      %v5916 = vunpack.c.l.b16 %v5165
      %v5917 = vunpack.c.l.b16 %v5166
      %v5918 = vunpack.c.l.b16 %v5167
      %v5919 = vunpack.c.l.b16 %v5168
      %v5920 = vunpack.c.l.b16 %v5169
      %v5921 = vunpack.c.l.b16 %v5170
      %v5922 = vunpack.c.l.b16 %v5171
      %v5923 = vunpack.c.l.b16 %v5172
      %v5924 = vunpack.c.l.b16 %v5173
      %v5925 = vunpack.c.l.b16 %v5174
      %v5926 = vunpack.c.l.b16 %v5175
      %v5927 = vunpack.c.l.b16 %v5176
      %v5928 = vunpack.c.l.b16 %v5177
      %v5929 = vunpack.c.l.b16 %v5178
      %v5930 = vunpack.c.l.b16 %v5179
      %v5931 = vunpack.c.l.b16 %v5180
      %v5932 = vunpack.c.l.b16 %v5181
      %v5933 = vunpack.c.l.b16 %v5182
      %v5934 = vunpack.c.l.b16 %v5183
      %v5935 = vunpack.c.l.b16 %v5184
      %v5936 = vunpack.c.l.b16 %v5185
      %v5937 = vunpack.c.l.b16 %v5186
      %v5938 = vunpack.c.l.b16 %v5187
      %v5939 = vunpack.c.l.b16 %v5188
      %v5940 = vunpack.c.l.b16 %v5189
      %v5941 = vunpack.c.l.b16 %v5190
      %v5942 = vunpack.c.l.b16 %v5191
      %v5943 = vunpack.c.l.b16 %v5192
      %v5944 = vunpack.c.l.b16 %v5193
      %v5945 = vunpack.c.l.b16 %v5194
      %v5946 = vpack.c.b16 %v5915, %v5914
      %v5947 = vpack.c.b16 %v5917, %v5916
      %v5948 = vpack.c.b16 %v5919, %v5918
      %v5949 = vpack.c.b16 %v5921, %v5920
      %v5950 = vpack.c.b16 %v5923, %v5922
      %v5951 = vpack.c.b16 %v5925, %v5924
      %v5952 = vpack.c.b16 %v5927, %v5926
      %v5953 = vpack.c.b16 %v5929, %v5928
      %v5954 = vpack.c.b16 %v5931, %v5930
      %v5955 = vpack.c.b16 %v5933, %v5932
      %v5956 = vpack.c.b16 %v5935, %v5934
      %v5957 = vpack.c.b16 %v5937, %v5936
      %v5958 = vpack.c.b16 %v5939, %v5938
      %v5959 = vpack.c.b16 %v5941, %v5940
      %v5960 = vpack.c.b16 %v5943, %v5942
      %v5961 = vpack.c.b16 %v5945, %v5944
      %v5963 = vsel %vm1906, %v5946, 0
      %v5966 = vsel %vm1906, %v5947, 0
      %v5969 = vsel %vm1906, %v5948, 0
      %v5972 = vsel %vm1906, %v5949, 0
      %v5975 = vsel %vm1906, %v5950, 0
      %v5978 = vsel %vm1906, %v5951, 0
      %v5981 = vsel %vm1906, %v5952, 0
      %v5984 = vsel %vm1906, %v5953, 0
      %v5987 = vsel %vm1906, %v5954, 0
      %v5990 = vsel %vm1906, %v5955, 0
      %v5993 = vsel %vm1906, %v5956, 0
      %v5996 = vsel %vm1906, %v5957, 0
      %v5999 = vsel %vm1906, %v5958, 0
      %v6002 = vsel %vm1906, %v5959, 0
      %v6005 = vsel %vm1906, %v5960, 0
      %v6008 = vsel %vm1906, %v5961, 0
      %v6011 = vsel %vm1961, %v5235, 0
      %6013 = vmatprep.subr.bf16.mxu0 0
      %6014 = vmatpush1.bf16.msra.mxu0 %v6011
      %6015 = vmatprep.subr.bf16.mxu0 0
      %6016 = vmatpush1.bf16.msra.mxu0 0
      %6017 = vmatprep.subr.bf16.mxu0 0
      %6018 = vmatpush1.bf16.msra.mxu0 0
      %6019 = vmatprep.subr.bf16.mxu0 0
      %6020 = vmatpush1.bf16.msra.mxu0 0
      %6021 = vmatprep.subr.bf16.mxu0 0
      %6022 = vmatpush1.bf16.msra.mxu0 0
      %6023 = vmatprep.subr.bf16.mxu0 0
      %6024 = vmatpush1.bf16.msra.mxu0 0
      %6025 = vmatprep.subr.bf16.mxu0 0
      %6026 = vmatpush1.bf16.msra.mxu0 0
      %6027 = vmatprep.subr.bf16.mxu0 0
      %6028 = vmatpush1.bf16.msra.mxu0 0
      %6029 = vmatprep.subr.bf16.mxu0 0
      %6030 = vmatpush1.bf16.msra.mxu0 0
      %6031 = vmatprep.subr.bf16.mxu0 0
      %6032 = vmatpush1.bf16.msra.mxu0 0
      %6033 = vmatprep.subr.bf16.mxu0 0
      %6034 = vmatpush1.bf16.msra.mxu0 0
      %6035 = vmatprep.subr.bf16.mxu0 0
      %6036 = vmatpush1.bf16.msra.mxu0 0
      %6037 = vmatprep.subr.bf16.mxu0 0
      %6038 = vmatpush1.bf16.msra.mxu0 0
      %6039 = vmatprep.subr.bf16.mxu0 0
      %6040 = vmatpush1.bf16.msra.mxu0 0
      %6041 = vmatprep.subr.bf16.mxu0 0
      %6042 = vmatpush1.bf16.msra.mxu0 0
      %6043 = vmatprep.subr.bf16.mxu0 0
      %6044 = vmatpush1.bf16.msra.mxu0 0
      %6045 = vmatprep.mubr.bf16.mxu0 0
      %6046 = vmatmul.mubr.bf16.gmra.mrb[0].mxu0 %v5963
      %v6047 = vpop.f32.mrb[0].mxu0
      %v6048 = vadd.f32 %v5756, %v6047
      %v6049 = vpop.f32.mrb[0].mxu0
      %v6050 = vpop.f32.mrb[0].mxu0
      %v6051 = vadd.f32 %v5759, %v6050
      %v6052 = vpop.f32.mrb[0].mxu0
      %6053 = vmatprep.mubr.bf16.mxu0 0
      %6054 = vmatmul.mubr.bf16.gmra.mrb[0].mxu0 %v5966
      %v6055 = vpop.f32.mrb[0].mxu0
      %v6056 = vadd.f32 %v5764, %v6055
      %v6057 = vpop.f32.mrb[0].mxu0
      %v6058 = vpop.f32.mrb[0].mxu0
      %v6059 = vadd.f32 %v5767, %v6058
      %v6060 = vpop.f32.mrb[0].mxu0
      %6061 = vmatprep.mubr.bf16.mxu0 0
      %6062 = vmatmul.mubr.bf16.gmra.mrb[0].mxu0 %v5969
      %v6063 = vpop.f32.mrb[0].mxu0
      %v6064 = vadd.f32 %v5772, %v6063
      %v6065 = vpop.f32.mrb[0].mxu0
      %v6066 = vpop.f32.mrb[0].mxu0
      %v6067 = vadd.f32 %v5775, %v6066
      %v6068 = vpop.f32.mrb[0].mxu0
      %6069 = vmatprep.mubr.bf16.mxu0 0
      %6070 = vmatmul.mubr.bf16.gmra.mrb[0].mxu0 %v5972
      %v6071 = vpop.f32.mrb[0].mxu0
      %v6072 = vadd.f32 %v5780, %v6071
      %v6073 = vpop.f32.mrb[0].mxu0
      %v6074 = vpop.f32.mrb[0].mxu0
      %v6075 = vadd.f32 %v5783, %v6074
      %v6076 = vpop.f32.mrb[0].mxu0
      %6077 = vmatprep.mubr.bf16.mxu0 0
      %6078 = vmatmul.mubr.bf16.gmra.mrb[0].mxu0 %v5975
      %v6079 = vpop.f32.mrb[0].mxu0
      %v6080 = vadd.f32 %v5788, %v6079
      %v6081 = vpop.f32.mrb[0].mxu0
      %v6082 = vpop.f32.mrb[0].mxu0
      %v6083 = vadd.f32 %v5791, %v6082
      %v6084 = vpop.f32.mrb[0].mxu0
      %6085 = vmatprep.mubr.bf16.mxu0 0
      %6086 = vmatmul.mubr.bf16.gmra.mrb[0].mxu0 %v5978
      %v6087 = vpop.f32.mrb[0].mxu0
      %v6088 = vadd.f32 %v5796, %v6087
      %v6089 = vpop.f32.mrb[0].mxu0
      %v6090 = vpop.f32.mrb[0].mxu0
      %v6091 = vadd.f32 %v5799, %v6090
      %v6092 = vpop.f32.mrb[0].mxu0
      %6093 = vmatprep.mubr.bf16.mxu0 0
      %6094 = vmatmul.mubr.bf16.gmra.mrb[0].mxu0 %v5981
      %v6095 = vpop.f32.mrb[0].mxu0
      %v6096 = vadd.f32 %v5804, %v6095
      %v6097 = vpop.f32.mrb[0].mxu0
      %v6098 = vpop.f32.mrb[0].mxu0
      %v6099 = vadd.f32 %v5807, %v6098
      %v6100 = vpop.f32.mrb[0].mxu0
      %6101 = vmatprep.mubr.bf16.mxu0 0
      %6102 = vmatmul.mubr.bf16.gmra.mrb[0].mxu0 %v5984
      %v6103 = vpop.f32.mrb[0].mxu0
      %v6104 = vadd.f32 %v5812, %v6103
      %v6105 = vpop.f32.mrb[0].mxu0
      %v6106 = vpop.f32.mrb[0].mxu0
      %v6107 = vadd.f32 %v5815, %v6106
      %v6108 = vpop.f32.mrb[0].mxu0
      %6109 = vmatprep.mubr.bf16.mxu0 0
      %6110 = vmatmul.mubr.bf16.gmra.mrb[0].mxu0 %v5987
      %v6111 = vpop.f32.mrb[0].mxu0
      %v6112 = vadd.f32 %v5820, %v6111
      %v6113 = vpop.f32.mrb[0].mxu0
      %v6114 = vpop.f32.mrb[0].mxu0
      %v6115 = vadd.f32 %v5823, %v6114
      %v6116 = vpop.f32.mrb[0].mxu0
      %6117 = vmatprep.mubr.bf16.mxu0 0
      %6118 = vmatmul.mubr.bf16.gmra.mrb[0].mxu0 %v5990
      %v6119 = vpop.f32.mrb[0].mxu0
      %v6120 = vadd.f32 %v5828, %v6119
      %v6121 = vpop.f32.mrb[0].mxu0
      %v6122 = vpop.f32.mrb[0].mxu0
      %v6123 = vadd.f32 %v5831, %v6122
      %v6124 = vpop.f32.mrb[0].mxu0
      %6125 = vmatprep.mubr.bf16.mxu0 0
      %6126 = vmatmul.mubr.bf16.gmra.mrb[0].mxu0 %v5993
      %v6127 = vpop.f32.mrb[0].mxu0
      %v6128 = vadd.f32 %v5836, %v6127
      %v6129 = vpop.f32.mrb[0].mxu0
      %v6130 = vpop.f32.mrb[0].mxu0
      %v6131 = vadd.f32 %v5839, %v6130
      %v6132 = vpop.f32.mrb[0].mxu0
      %6133 = vmatprep.mubr.bf16.mxu0 0
      %6134 = vmatmul.mubr.bf16.gmra.mrb[0].mxu0 %v5996
      %v6135 = vpop.f32.mrb[0].mxu0
      %v6136 = vadd.f32 %v5844, %v6135
      %v6137 = vpop.f32.mrb[0].mxu0
      %v6138 = vpop.f32.mrb[0].mxu0
      %v6139 = vadd.f32 %v5847, %v6138
      %v6140 = vpop.f32.mrb[0].mxu0
      %6141 = vmatprep.mubr.bf16.mxu0 0
      %6142 = vmatmul.mubr.bf16.gmra.mrb[0].mxu0 %v5999
      %v6143 = vpop.f32.mrb[0].mxu0
      %v6144 = vadd.f32 %v5852, %v6143
      %v6145 = vpop.f32.mrb[0].mxu0
      %v6146 = vpop.f32.mrb[0].mxu0
      %v6147 = vadd.f32 %v5855, %v6146
      %v6148 = vpop.f32.mrb[0].mxu0
      %6149 = vmatprep.mubr.bf16.mxu0 0
      %6150 = vmatmul.mubr.bf16.gmra.mrb[0].mxu0 %v6002
      %v6151 = vpop.f32.mrb[0].mxu0
      %v6152 = vadd.f32 %v5860, %v6151
      %v6153 = vpop.f32.mrb[0].mxu0
      %v6154 = vpop.f32.mrb[0].mxu0
      %v6155 = vadd.f32 %v5863, %v6154
      %v6156 = vpop.f32.mrb[0].mxu0
      %6157 = vmatprep.mubr.bf16.mxu0 0
      %6158 = vmatmul.mubr.bf16.gmra.mrb[0].mxu0 %v6005
      %v6159 = vpop.f32.mrb[0].mxu0
      %v6160 = vadd.f32 %v5868, %v6159
      %v6161 = vpop.f32.mrb[0].mxu0
      %v6162 = vpop.f32.mrb[0].mxu0
      %v6163 = vadd.f32 %v5871, %v6162
      %v6164 = vpop.f32.mrb[0].mxu0
      %6165 = vmatprep.mubr.bf16.mxu0 0
      %6166 = vmatmul.mubr.bf16.gmra.mrb[0].mxu0 %v6008
      %v6167 = vpop.f32.mrb[0].mxu0
      %v6168 = vadd.f32 %v5876, %v6167
      %v6169 = vpop.f32.mrb[0].mxu0
      %v6170 = vpop.f32.mrb[0].mxu0
      %v6171 = vadd.f32 %v5879, %v6170
      %v6172 = vpop.f32.mrb[0].mxu0
      %6173 = vdwg.mxu0
      %v6206 = vrot.slane %v5217, 5
      %v6207 = vrot.slane %v6206, 4
      %v6208 = vrot.slane %v5164, 5
      %v6209 = vsel %vm2504, %v6207, %v6208
      %v6210 = vrot.slane %v6208, 4
      %v6211 = vrot.slane %v5199, 5
      %v6212 = vsel %vm2504, %v6210, %v6211
      %v6213 = vrot.slane %v5218, 5
      %v6214 = vrot.slane %v6213, 4
      %v6215 = vrot.slane %v5166, 5
      %v6216 = vsel %vm2504, %v6214, %v6215
      %v6217 = vrot.slane %v6215, 4
      %v6218 = vrot.slane %v5200, 5
      %v6219 = vsel %vm2504, %v6217, %v6218
      %v6220 = vrot.slane %v5219, 5
      %v6221 = vrot.slane %v6220, 4
      %v6222 = vrot.slane %v5168, 5
      %v6223 = vsel %vm2504, %v6221, %v6222
      %v6224 = vrot.slane %v6222, 4
      %v6225 = vrot.slane %v5201, 5
      %v6226 = vsel %vm2504, %v6224, %v6225
      %v6227 = vrot.slane %v5220, 5
      %v6228 = vrot.slane %v6227, 4
      %v6229 = vrot.slane %v5170, 5
      %v6230 = vsel %vm2504, %v6228, %v6229
      %v6231 = vrot.slane %v6229, 4
      %v6232 = vrot.slane %v5202, 5
      %v6233 = vsel %vm2504, %v6231, %v6232
      %v6234 = vrot.slane %v5221, 5
      %v6235 = vrot.slane %v6234, 4
      %v6236 = vrot.slane %v5172, 5
      %v6237 = vsel %vm2504, %v6235, %v6236
      %v6238 = vrot.slane %v6236, 4
      %v6239 = vrot.slane %v5203, 5
      %v6240 = vsel %vm2504, %v6238, %v6239
      %v6241 = vrot.slane %v5222, 5
      %v6242 = vrot.slane %v6241, 4
      %v6243 = vrot.slane %v5174, 5
      %v6244 = vsel %vm2504, %v6242, %v6243
      %v6245 = vrot.slane %v6243, 4
      %v6246 = vrot.slane %v5204, 5
      %v6247 = vsel %vm2504, %v6245, %v6246
      %v6248 = vrot.slane %v5223, 5
      %v6249 = vrot.slane %v6248, 4
      %v6250 = vrot.slane %v5176, 5
      %v6251 = vsel %vm2504, %v6249, %v6250
      %v6252 = vrot.slane %v6250, 4
      %v6253 = vrot.slane %v5205, 5
      %v6254 = vsel %vm2504, %v6252, %v6253
      %v6255 = vrot.slane %v5224, 5
      %v6256 = vrot.slane %v6255, 4
      %v6257 = vrot.slane %v5178, 5
      %v6258 = vsel %vm2504, %v6256, %v6257
      %v6259 = vrot.slane %v6257, 4
      %v6260 = vrot.slane %v5206, 5
      %v6261 = vsel %vm2504, %v6259, %v6260
      %v6262 = vrot.slane %v5225, 5
      %v6263 = vrot.slane %v6262, 4
      %v6264 = vrot.slane %v5180, 5
      %v6265 = vsel %vm2504, %v6263, %v6264
      %v6266 = vrot.slane %v6264, 4
      %v6267 = vrot.slane %v5207, 5
      %v6268 = vsel %vm2504, %v6266, %v6267
      %v6269 = vrot.slane %v5226, 5
      %v6270 = vrot.slane %v6269, 4
      %v6271 = vrot.slane %v5182, 5
      %v6272 = vsel %vm2504, %v6270, %v6271
      %v6273 = vrot.slane %v6271, 4
      %v6274 = vrot.slane %v5208, 5
      %v6275 = vsel %vm2504, %v6273, %v6274
      %v6276 = vrot.slane %v5227, 5
      %v6277 = vrot.slane %v6276, 4
      %v6278 = vrot.slane %v5184, 5
      %v6279 = vsel %vm2504, %v6277, %v6278
      %v6280 = vrot.slane %v6278, 4
      %v6281 = vrot.slane %v5209, 5
      %v6282 = vsel %vm2504, %v6280, %v6281
      %v6283 = vrot.slane %v5228, 5
      %v6284 = vrot.slane %v6283, 4
      %v6285 = vrot.slane %v5186, 5
      %v6286 = vsel %vm2504, %v6284, %v6285
      %v6287 = vrot.slane %v6285, 4
      %v6288 = vrot.slane %v5210, 5
      %v6289 = vsel %vm2504, %v6287, %v6288
      %v6290 = vrot.slane %v5229, 5
      %v6291 = vrot.slane %v6290, 4
      %v6292 = vrot.slane %v5188, 5
      %v6293 = vsel %vm2504, %v6291, %v6292
      %v6294 = vrot.slane %v6292, 4
      %v6295 = vrot.slane %v5211, 5
      %v6296 = vsel %vm2504, %v6294, %v6295
      %v6297 = vrot.slane %v5230, 5
      %v6298 = vrot.slane %v6297, 4
      %v6299 = vrot.slane %v5190, 5
      %v6300 = vsel %vm2504, %v6298, %v6299
      %v6301 = vrot.slane %v6299, 4
      %v6302 = vrot.slane %v5212, 5
      %v6303 = vsel %vm2504, %v6301, %v6302
      %v6304 = vrot.slane %v5231, 5
      %v6305 = vrot.slane %v6304, 4
      %v6306 = vrot.slane %v5192, 5
      %v6307 = vsel %vm2504, %v6305, %v6306
      %v6308 = vrot.slane %v6306, 4
      %v6309 = vrot.slane %v5213, 5
      %v6310 = vsel %vm2504, %v6308, %v6309
      %v6311 = vrot.slane %v5232, 5
      %v6312 = vrot.slane %v6311, 4
      %v6313 = vrot.slane %v5194, 5
      %v6314 = vsel %vm2504, %v6312, %v6313
      %v6315 = vrot.slane %v6313, 4
      %v6316 = vrot.slane %v5214, 5
      %v6317 = vsel %vm2504, %v6315, %v6316
      %s6318 = scalar_lea.vmem %s5, 4
      %v6319 = vld [vmem:[%s6318] sm:$0x3]
      %v6320 = vunpack.c.l.b16 %v6209
      %v6321 = vunpack.c.l.b16 %v6212
      %v6322 = vunpack.c.l.b16 %v6216
      %v6323 = vunpack.c.l.b16 %v6219
      %v6324 = vunpack.c.l.b16 %v6223
      %v6325 = vunpack.c.l.b16 %v6226
      %v6326 = vunpack.c.l.b16 %v6230
      %v6327 = vunpack.c.l.b16 %v6233
      %v6328 = vunpack.c.l.b16 %v6237
      %v6329 = vunpack.c.l.b16 %v6240
      %v6330 = vunpack.c.l.b16 %v6244
      %v6331 = vunpack.c.l.b16 %v6247
      %v6332 = vunpack.c.l.b16 %v6251
      %v6333 = vunpack.c.l.b16 %v6254
      %v6334 = vunpack.c.l.b16 %v6258
      %v6335 = vunpack.c.l.b16 %v6261
      %v6336 = vunpack.c.l.b16 %v6265
      %v6337 = vunpack.c.l.b16 %v6268
      %v6338 = vunpack.c.l.b16 %v6272
      %v6339 = vunpack.c.l.b16 %v6275
      %v6340 = vunpack.c.l.b16 %v6279
      %v6341 = vunpack.c.l.b16 %v6282
      %v6342 = vunpack.c.l.b16 %v6286
      %v6343 = vunpack.c.l.b16 %v6289
      %v6344 = vunpack.c.l.b16 %v6293
      %v6345 = vunpack.c.l.b16 %v6296
      %v6346 = vunpack.c.l.b16 %v6300
      %v6347 = vunpack.c.l.b16 %v6303
      %v6348 = vunpack.c.l.b16 %v6307
      %v6349 = vunpack.c.l.b16 %v6310
      %v6350 = vunpack.c.l.b16 %v6314
      %v6351 = vunpack.c.l.b16 %v6317
      %v6352 = vpack.c.b16 %v6321, %v6320
      %v6353 = vpack.c.b16 %v6323, %v6322
      %v6354 = vpack.c.b16 %v6325, %v6324
      %v6355 = vpack.c.b16 %v6327, %v6326
      %v6356 = vpack.c.b16 %v6329, %v6328
      %v6357 = vpack.c.b16 %v6331, %v6330
      %v6358 = vpack.c.b16 %v6333, %v6332
      %v6359 = vpack.c.b16 %v6335, %v6334
      %v6360 = vpack.c.b16 %v6337, %v6336
      %v6361 = vpack.c.b16 %v6339, %v6338
      %v6362 = vpack.c.b16 %v6341, %v6340
      %v6363 = vpack.c.b16 %v6343, %v6342
      %v6364 = vpack.c.b16 %v6345, %v6344
      %v6365 = vpack.c.b16 %v6347, %v6346
      %v6366 = vpack.c.b16 %v6349, %v6348
      %v6367 = vpack.c.b16 %v6351, %v6350
      %v6369 = vsel %vm1906, %v6352, 0
      %v6372 = vsel %vm1906, %v6353, 0
      %v6375 = vsel %vm1906, %v6354, 0
      %v6378 = vsel %vm1906, %v6355, 0
      %v6381 = vsel %vm1906, %v6356, 0
      %v6384 = vsel %vm1906, %v6357, 0
      %v6387 = vsel %vm1906, %v6358, 0
      %v6390 = vsel %vm1906, %v6359, 0
      %v6393 = vsel %vm1906, %v6360, 0
      %v6396 = vsel %vm1906, %v6361, 0
      %v6399 = vsel %vm1906, %v6362, 0
      %v6402 = vsel %vm1906, %v6363, 0
      %v6405 = vsel %vm1906, %v6364, 0
      %v6408 = vsel %vm1906, %v6365, 0
      %v6411 = vsel %vm1906, %v6366, 0
      %v6414 = vsel %vm1906, %v6367, 0
      %v6417 = vsel %vm1961, %v6319, 0
      %6419 = vmatprep.subr.bf16.mxu0 0
      %6420 = vmatpush1.bf16.msra.mxu0 %v6417
      %6421 = vmatprep.subr.bf16.mxu0 0
      %6422 = vmatpush1.bf16.msra.mxu0 0
      %6423 = vmatprep.subr.bf16.mxu0 0
      %6424 = vmatpush1.bf16.msra.mxu0 0
      %6425 = vmatprep.subr.bf16.mxu0 0
      %6426 = vmatpush1.bf16.msra.mxu0 0
      %6427 = vmatprep.subr.bf16.mxu0 0
      %6428 = vmatpush1.bf16.msra.mxu0 0
      %6429 = vmatprep.subr.bf16.mxu0 0
      %6430 = vmatpush1.bf16.msra.mxu0 0
      %6431 = vmatprep.subr.bf16.mxu0 0
      %6432 = vmatpush1.bf16.msra.mxu0 0
      %6433 = vmatprep.subr.bf16.mxu0 0
      %6434 = vmatpush1.bf16.msra.mxu0 0
      %6435 = vmatprep.subr.bf16.mxu0 0
      %6436 = vmatpush1.bf16.msra.mxu0 0
      %6437 = vmatprep.subr.bf16.mxu0 0
      %6438 = vmatpush1.bf16.msra.mxu0 0
      %6439 = vmatprep.subr.bf16.mxu0 0
      %6440 = vmatpush1.bf16.msra.mxu0 0
      %6441 = vmatprep.subr.bf16.mxu0 0
      %6442 = vmatpush1.bf16.msra.mxu0 0
      %6443 = vmatprep.subr.bf16.mxu0 0
      %6444 = vmatpush1.bf16.msra.mxu0 0
      %6445 = vmatprep.subr.bf16.mxu0 0
      %6446 = vmatpush1.bf16.msra.mxu0 0
      %6447 = vmatprep.subr.bf16.mxu0 0
      %6448 = vmatpush1.bf16.msra.mxu0 0
      %6449 = vmatprep.subr.bf16.mxu0 0
      %6450 = vmatpush1.bf16.msra.mxu0 0
      %6451 = vmatprep.mubr.bf16.mxu0 0
      %6452 = vmatmul.mubr.bf16.gmra.mrb[0].mxu0 %v6369
      %v6453 = vpop.f32.mrb[0].mxu0
      %v6454 = vadd.f32 0.0, %v6453
      %v6455 = vpop.f32.mrb[0].mxu0
      %v6456 = vpop.f32.mrb[0].mxu0
      %v6457 = vadd.f32 0.0, %v6456
      %v6458 = vpop.f32.mrb[0].mxu0
      %6459 = vmatprep.mubr.bf16.mxu0 0
      %6460 = vmatmul.mubr.bf16.gmra.mrb[0].mxu0 %v6372
      %v6461 = vpop.f32.mrb[0].mxu0
      %v6462 = vadd.f32 0.0, %v6461
      %v6463 = vpop.f32.mrb[0].mxu0
      %v6464 = vpop.f32.mrb[0].mxu0
      %v6465 = vadd.f32 0.0, %v6464
      %v6466 = vpop.f32.mrb[0].mxu0
      %6467 = vmatprep.mubr.bf16.mxu0 0
      %6468 = vmatmul.mubr.bf16.gmra.mrb[0].mxu0 %v6375
      %v6469 = vpop.f32.mrb[0].mxu0
      %v6470 = vadd.f32 0.0, %v6469
      %v6471 = vpop.f32.mrb[0].mxu0
      %v6472 = vpop.f32.mrb[0].mxu0
      %v6473 = vadd.f32 0.0, %v6472
      %v6474 = vpop.f32.mrb[0].mxu0
      %6475 = vmatprep.mubr.bf16.mxu0 0
      %6476 = vmatmul.mubr.bf16.gmra.mrb[0].mxu0 %v6378
      %v6477 = vpop.f32.mrb[0].mxu0
      %v6478 = vadd.f32 0.0, %v6477
      %v6479 = vpop.f32.mrb[0].mxu0
      %v6480 = vpop.f32.mrb[0].mxu0
      %v6481 = vadd.f32 0.0, %v6480
      %v6482 = vpop.f32.mrb[0].mxu0
      %6483 = vmatprep.mubr.bf16.mxu0 0
      %6484 = vmatmul.mubr.bf16.gmra.mrb[0].mxu0 %v6381
      %v6485 = vpop.f32.mrb[0].mxu0
      %v6486 = vadd.f32 0.0, %v6485
      %v6487 = vpop.f32.mrb[0].mxu0
      %v6488 = vpop.f32.mrb[0].mxu0
      %v6489 = vadd.f32 0.0, %v6488
      %v6490 = vpop.f32.mrb[0].mxu0
      %6491 = vmatprep.mubr.bf16.mxu0 0
      %6492 = vmatmul.mubr.bf16.gmra.mrb[0].mxu0 %v6384
      %v6493 = vpop.f32.mrb[0].mxu0
      %v6494 = vadd.f32 0.0, %v6493
      %v6495 = vpop.f32.mrb[0].mxu0
      %v6496 = vpop.f32.mrb[0].mxu0
      %v6497 = vadd.f32 0.0, %v6496
      %v6498 = vpop.f32.mrb[0].mxu0
      %6499 = vmatprep.mubr.bf16.mxu0 0
      %6500 = vmatmul.mubr.bf16.gmra.mrb[0].mxu0 %v6387
      %v6501 = vpop.f32.mrb[0].mxu0
      %v6502 = vadd.f32 0.0, %v6501
      %v6503 = vpop.f32.mrb[0].mxu0
      %v6504 = vpop.f32.mrb[0].mxu0
      %v6505 = vadd.f32 0.0, %v6504
      %v6506 = vpop.f32.mrb[0].mxu0
      %6507 = vmatprep.mubr.bf16.mxu0 0
      %6508 = vmatmul.mubr.bf16.gmra.mrb[0].mxu0 %v6390
      %v6509 = vpop.f32.mrb[0].mxu0
      %v6510 = vadd.f32 0.0, %v6509
      %v6511 = vpop.f32.mrb[0].mxu0
      %v6512 = vpop.f32.mrb[0].mxu0
      %v6513 = vadd.f32 0.0, %v6512
      %v6514 = vpop.f32.mrb[0].mxu0
      %6515 = vmatprep.mubr.bf16.mxu0 0
      %6516 = vmatmul.mubr.bf16.gmra.mrb[0].mxu0 %v6393
      %v6517 = vpop.f32.mrb[0].mxu0
      %v6518 = vadd.f32 0.0, %v6517
      %v6519 = vpop.f32.mrb[0].mxu0
      %v6520 = vpop.f32.mrb[0].mxu0
      %v6521 = vadd.f32 0.0, %v6520
      %v6522 = vpop.f32.mrb[0].mxu0
      %6523 = vmatprep.mubr.bf16.mxu0 0
      %6524 = vmatmul.mubr.bf16.gmra.mrb[0].mxu0 %v6396
      %v6525 = vpop.f32.mrb[0].mxu0
      %v6526 = vadd.f32 0.0, %v6525
      %v6527 = vpop.f32.mrb[0].mxu0
      %v6528 = vpop.f32.mrb[0].mxu0
      %v6529 = vadd.f32 0.0, %v6528
      %v6530 = vpop.f32.mrb[0].mxu0
      %6531 = vmatprep.mubr.bf16.mxu0 0
      %6532 = vmatmul.mubr.bf16.gmra.mrb[0].mxu0 %v6399
      %v6533 = vpop.f32.mrb[0].mxu0
      %v6534 = vadd.f32 0.0, %v6533
      %v6535 = vpop.f32.mrb[0].mxu0
      %v6536 = vpop.f32.mrb[0].mxu0
      %v6537 = vadd.f32 0.0, %v6536
      %v6538 = vpop.f32.mrb[0].mxu0
      %6539 = vmatprep.mubr.bf16.mxu0 0
      %6540 = vmatmul.mubr.bf16.gmra.mrb[0].mxu0 %v6402
      %v6541 = vpop.f32.mrb[0].mxu0
      %v6542 = vadd.f32 0.0, %v6541
      %v6543 = vpop.f32.mrb[0].mxu0
      %v6544 = vpop.f32.mrb[0].mxu0
      %v6545 = vadd.f32 0.0, %v6544
      %v6546 = vpop.f32.mrb[0].mxu0
      %6547 = vmatprep.mubr.bf16.mxu0 0
      %6548 = vmatmul.mubr.bf16.gmra.mrb[0].mxu0 %v6405
      %v6549 = vpop.f32.mrb[0].mxu0
      %v6550 = vadd.f32 0.0, %v6549
      %v6551 = vpop.f32.mrb[0].mxu0
      %v6552 = vpop.f32.mrb[0].mxu0
      %v6553 = vadd.f32 0.0, %v6552
      %v6554 = vpop.f32.mrb[0].mxu0
      %6555 = vmatprep.mubr.bf16.mxu0 0
      %6556 = vmatmul.mubr.bf16.gmra.mrb[0].mxu0 %v6408
      %v6557 = vpop.f32.mrb[0].mxu0
      %v6558 = vadd.f32 0.0, %v6557
      %v6559 = vpop.f32.mrb[0].mxu0
      %v6560 = vpop.f32.mrb[0].mxu0
      %v6561 = vadd.f32 0.0, %v6560
      %v6562 = vpop.f32.mrb[0].mxu0
      %6563 = vmatprep.mubr.bf16.mxu0 0
      %6564 = vmatmul.mubr.bf16.gmra.mrb[0].mxu0 %v6411
      %v6565 = vpop.f32.mrb[0].mxu0
      %v6566 = vadd.f32 0.0, %v6565
      %v6567 = vpop.f32.mrb[0].mxu0
      %v6568 = vpop.f32.mrb[0].mxu0
      %v6569 = vadd.f32 0.0, %v6568
      %v6570 = vpop.f32.mrb[0].mxu0
      %6571 = vmatprep.mubr.bf16.mxu0 0
      %6572 = vmatmul.mubr.bf16.gmra.mrb[0].mxu0 %v6414
      %v6573 = vpop.f32.mrb[0].mxu0
      %v6574 = vadd.f32 0.0, %v6573
      %v6575 = vpop.f32.mrb[0].mxu0
      %v6576 = vpop.f32.mrb[0].mxu0
      %v6577 = vadd.f32 0.0, %v6576
      %v6578 = vpop.f32.mrb[0].mxu0
      %6579 = vdwg.mxu0
      %v6580 = vadd.f32 %v6048, %v6454
      %v6581 = vadd.f32 %v6051, %v6457
      %v6582 = vadd.f32 %v6056, %v6462
      %v6583 = vadd.f32 %v6059, %v6465
      %v6584 = vadd.f32 %v6064, %v6470
      %v6585 = vadd.f32 %v6067, %v6473
      %v6586 = vadd.f32 %v6072, %v6478
      %v6587 = vadd.f32 %v6075, %v6481
      %v6588 = vadd.f32 %v6080, %v6486
      %v6589 = vadd.f32 %v6083, %v6489
      %v6590 = vadd.f32 %v6088, %v6494
      %v6591 = vadd.f32 %v6091, %v6497
      %v6592 = vadd.f32 %v6096, %v6502
      %v6593 = vadd.f32 %v6099, %v6505
      %v6594 = vadd.f32 %v6104, %v6510
      %v6595 = vadd.f32 %v6107, %v6513
      %v6596 = vadd.f32 %v6112, %v6518
      %v6597 = vadd.f32 %v6115, %v6521
      %v6598 = vadd.f32 %v6120, %v6526
      %v6599 = vadd.f32 %v6123, %v6529
      %v6600 = vadd.f32 %v6128, %v6534
      %v6601 = vadd.f32 %v6131, %v6537
      %v6602 = vadd.f32 %v6136, %v6542
      %v6603 = vadd.f32 %v6139, %v6545
      %v6604 = vadd.f32 %v6144, %v6550
      %v6605 = vadd.f32 %v6147, %v6553
      %v6606 = vadd.f32 %v6152, %v6558
      %v6607 = vadd.f32 %v6155, %v6561
      %v6608 = vadd.f32 %v6160, %v6566
      %v6609 = vadd.f32 %v6163, %v6569
      %v6610 = vadd.f32 %v6168, %v6574
      %v6611 = vadd.f32 %v6171, %v6577
      %s6612 = scalar_lea.vmem %s5, 6
      %v6613 = vld [vmem:[%s6612] sm:$0x3]
      %v6616 = vunpack.c.l.b16 %v5195
      %v6617 = vunpack.c.l.b16 %v5196
      %v6618 = vpack.c.b16 %v6617, %v6616
      %v6620 = vsel %vm1906, %v6618, 0
      %v6623 = vsel %vm1961, %v6613, 0
      %6625 = vmatprep.subr.bf16.mxu0 0
      %6626 = vmatpush1.bf16.msra.mxu0 %v6623
      %6627 = vmatprep.subr.bf16.mxu0 0
      %6628 = vmatpush1.bf16.msra.mxu0 0
      %6629 = vmatprep.subr.bf16.mxu0 0
      %6630 = vmatpush1.bf16.msra.mxu0 0
      %6631 = vmatprep.subr.bf16.mxu0 0
      %6632 = vmatpush1.bf16.msra.mxu0 0
      %6633 = vmatprep.subr.bf16.mxu0 0
      %6634 = vmatpush1.bf16.msra.mxu0 0
      %6635 = vmatprep.subr.bf16.mxu0 0
      %6636 = vmatpush1.bf16.msra.mxu0 0
      %6637 = vmatprep.subr.bf16.mxu0 0
      %6638 = vmatpush1.bf16.msra.mxu0 0
      %6639 = vmatprep.subr.bf16.mxu0 0
      %6640 = vmatpush1.bf16.msra.mxu0 0
      %6641 = vmatprep.subr.bf16.mxu0 0
      %6642 = vmatpush1.bf16.msra.mxu0 0
      %6643 = vmatprep.subr.bf16.mxu0 0
      %6644 = vmatpush1.bf16.msra.mxu0 0
      %6645 = vmatprep.subr.bf16.mxu0 0
      %6646 = vmatpush1.bf16.msra.mxu0 0
      %6647 = vmatprep.subr.bf16.mxu0 0
      %6648 = vmatpush1.bf16.msra.mxu0 0
      %6649 = vmatprep.subr.bf16.mxu0 0
      %6650 = vmatpush1.bf16.msra.mxu0 0
      %6651 = vmatprep.subr.bf16.mxu0 0
      %6652 = vmatpush1.bf16.msra.mxu0 0
      %6653 = vmatprep.subr.bf16.mxu0 0
      %6654 = vmatpush1.bf16.msra.mxu0 0
      %6655 = vmatprep.subr.bf16.mxu0 0
      %6656 = vmatpush1.bf16.msra.mxu0 0
      %6657 = vmatprep.mubr.bf16.mxu0 0
      %6658 = vmatmul.mubr.bf16.gmra.mrb[0].mxu0 %v5966
      %v6659 = vpop.f32.mrb[0].mxu0
      %v6660 = vadd.f32 0.0, %v6659
      %v6661 = vpop.f32.mrb[0].mxu0
      %v6662 = vpop.f32.mrb[0].mxu0
      %v6663 = vadd.f32 0.0, %v6662
      %v6664 = vpop.f32.mrb[0].mxu0
      %6665 = vmatprep.mubr.bf16.mxu0 0
      %6666 = vmatmul.mubr.bf16.gmra.mrb[0].mxu0 %v5969
      %v6667 = vpop.f32.mrb[0].mxu0
      %v6668 = vadd.f32 0.0, %v6667
      %v6669 = vpop.f32.mrb[0].mxu0
      %v6670 = vpop.f32.mrb[0].mxu0
      %v6671 = vadd.f32 0.0, %v6670
      %v6672 = vpop.f32.mrb[0].mxu0
      %6673 = vmatprep.mubr.bf16.mxu0 0
      %6674 = vmatmul.mubr.bf16.gmra.mrb[0].mxu0 %v5972
      %v6675 = vpop.f32.mrb[0].mxu0
      %v6676 = vadd.f32 0.0, %v6675
      %v6677 = vpop.f32.mrb[0].mxu0
      %v6678 = vpop.f32.mrb[0].mxu0
      %v6679 = vadd.f32 0.0, %v6678
      %v6680 = vpop.f32.mrb[0].mxu0
      %6681 = vmatprep.mubr.bf16.mxu0 0
      %6682 = vmatmul.mubr.bf16.gmra.mrb[0].mxu0 %v5975
      %v6683 = vpop.f32.mrb[0].mxu0
      %v6684 = vadd.f32 0.0, %v6683
      %v6685 = vpop.f32.mrb[0].mxu0
      %v6686 = vpop.f32.mrb[0].mxu0
      %v6687 = vadd.f32 0.0, %v6686
      %v6688 = vpop.f32.mrb[0].mxu0
      %6689 = vmatprep.mubr.bf16.mxu0 0
      %6690 = vmatmul.mubr.bf16.gmra.mrb[0].mxu0 %v5978
      %v6691 = vpop.f32.mrb[0].mxu0
      %v6692 = vadd.f32 0.0, %v6691
      %v6693 = vpop.f32.mrb[0].mxu0
      %v6694 = vpop.f32.mrb[0].mxu0
      %v6695 = vadd.f32 0.0, %v6694
      %v6696 = vpop.f32.mrb[0].mxu0
      %6697 = vmatprep.mubr.bf16.mxu0 0
      %6698 = vmatmul.mubr.bf16.gmra.mrb[0].mxu0 %v5981
      %v6699 = vpop.f32.mrb[0].mxu0
      %v6700 = vadd.f32 0.0, %v6699
      %v6701 = vpop.f32.mrb[0].mxu0
      %v6702 = vpop.f32.mrb[0].mxu0
      %v6703 = vadd.f32 0.0, %v6702
      %v6704 = vpop.f32.mrb[0].mxu0
      %6705 = vmatprep.mubr.bf16.mxu0 0
      %6706 = vmatmul.mubr.bf16.gmra.mrb[0].mxu0 %v5984
      %v6707 = vpop.f32.mrb[0].mxu0
      %v6708 = vadd.f32 0.0, %v6707
      %v6709 = vpop.f32.mrb[0].mxu0
      %v6710 = vpop.f32.mrb[0].mxu0
      %v6711 = vadd.f32 0.0, %v6710
      %v6712 = vpop.f32.mrb[0].mxu0
      %6713 = vmatprep.mubr.bf16.mxu0 0
      %6714 = vmatmul.mubr.bf16.gmra.mrb[0].mxu0 %v5987
      %v6715 = vpop.f32.mrb[0].mxu0
      %v6716 = vadd.f32 0.0, %v6715
      %v6717 = vpop.f32.mrb[0].mxu0
      %v6718 = vpop.f32.mrb[0].mxu0
      %v6719 = vadd.f32 0.0, %v6718
      %v6720 = vpop.f32.mrb[0].mxu0
      %6721 = vmatprep.mubr.bf16.mxu0 0
      %6722 = vmatmul.mubr.bf16.gmra.mrb[0].mxu0 %v5990
      %v6723 = vpop.f32.mrb[0].mxu0
      %v6724 = vadd.f32 0.0, %v6723
      %v6725 = vpop.f32.mrb[0].mxu0
      %v6726 = vpop.f32.mrb[0].mxu0
      %v6727 = vadd.f32 0.0, %v6726
      %v6728 = vpop.f32.mrb[0].mxu0
      %6729 = vmatprep.mubr.bf16.mxu0 0
      %6730 = vmatmul.mubr.bf16.gmra.mrb[0].mxu0 %v5993
      %v6731 = vpop.f32.mrb[0].mxu0
      %v6732 = vadd.f32 0.0, %v6731
      %v6733 = vpop.f32.mrb[0].mxu0
      %v6734 = vpop.f32.mrb[0].mxu0
      %v6735 = vadd.f32 0.0, %v6734
      %v6736 = vpop.f32.mrb[0].mxu0
      %6737 = vmatprep.mubr.bf16.mxu0 0
      %6738 = vmatmul.mubr.bf16.gmra.mrb[0].mxu0 %v5996
      %v6739 = vpop.f32.mrb[0].mxu0
      %v6740 = vadd.f32 0.0, %v6739
      %v6741 = vpop.f32.mrb[0].mxu0
      %v6742 = vpop.f32.mrb[0].mxu0
      %v6743 = vadd.f32 0.0, %v6742
      %v6744 = vpop.f32.mrb[0].mxu0
      %6745 = vmatprep.mubr.bf16.mxu0 0
      %6746 = vmatmul.mubr.bf16.gmra.mrb[0].mxu0 %v5999
      %v6747 = vpop.f32.mrb[0].mxu0
      %v6748 = vadd.f32 0.0, %v6747
      %v6749 = vpop.f32.mrb[0].mxu0
      %v6750 = vpop.f32.mrb[0].mxu0
      %v6751 = vadd.f32 0.0, %v6750
      %v6752 = vpop.f32.mrb[0].mxu0
      %6753 = vmatprep.mubr.bf16.mxu0 0
      %6754 = vmatmul.mubr.bf16.gmra.mrb[0].mxu0 %v6002
      %v6755 = vpop.f32.mrb[0].mxu0
      %v6756 = vadd.f32 0.0, %v6755
      %v6757 = vpop.f32.mrb[0].mxu0
      %v6758 = vpop.f32.mrb[0].mxu0
      %v6759 = vadd.f32 0.0, %v6758
      %v6760 = vpop.f32.mrb[0].mxu0
      %6761 = vmatprep.mubr.bf16.mxu0 0
      %6762 = vmatmul.mubr.bf16.gmra.mrb[0].mxu0 %v6005
      %v6763 = vpop.f32.mrb[0].mxu0
      %v6764 = vadd.f32 0.0, %v6763
      %v6765 = vpop.f32.mrb[0].mxu0
      %v6766 = vpop.f32.mrb[0].mxu0
      %v6767 = vadd.f32 0.0, %v6766
      %v6768 = vpop.f32.mrb[0].mxu0
      %6769 = vmatprep.mubr.bf16.mxu0 0
      %6770 = vmatmul.mubr.bf16.gmra.mrb[0].mxu0 %v6008
      %v6771 = vpop.f32.mrb[0].mxu0
      %v6772 = vadd.f32 0.0, %v6771
      %v6773 = vpop.f32.mrb[0].mxu0
      %v6774 = vpop.f32.mrb[0].mxu0
      %v6775 = vadd.f32 0.0, %v6774
      %v6776 = vpop.f32.mrb[0].mxu0
      %6777 = vmatprep.mubr.bf16.mxu0 0
      %6778 = vmatmul.mubr.bf16.gmra.mrb[0].mxu0 %v6620
      %v6779 = vpop.f32.mrb[0].mxu0
      %v6780 = vadd.f32 0.0, %v6779
      %v6781 = vpop.f32.mrb[0].mxu0
      %v6782 = vpop.f32.mrb[0].mxu0
      %v6783 = vadd.f32 0.0, %v6782
      %v6784 = vpop.f32.mrb[0].mxu0
      %6785 = vdwg.mxu0
      %v6786 = vadd.f32 %v6580, %v6660
      %v6787 = vadd.f32 %v6581, %v6663
      %v6788 = vadd.f32 %v6582, %v6668
      %v6789 = vadd.f32 %v6583, %v6671
      %v6790 = vadd.f32 %v6584, %v6676
      %v6791 = vadd.f32 %v6585, %v6679
      %v6792 = vadd.f32 %v6586, %v6684
      %v6793 = vadd.f32 %v6587, %v6687
      %v6794 = vadd.f32 %v6588, %v6692
      %v6795 = vadd.f32 %v6589, %v6695
      %v6796 = vadd.f32 %v6590, %v6700
      %v6797 = vadd.f32 %v6591, %v6703
      %v6798 = vadd.f32 %v6592, %v6708
      %v6799 = vadd.f32 %v6593, %v6711
      %v6800 = vadd.f32 %v6594, %v6716
      %v6801 = vadd.f32 %v6595, %v6719
      %v6802 = vadd.f32 %v6596, %v6724
      %v6803 = vadd.f32 %v6597, %v6727
      %v6804 = vadd.f32 %v6598, %v6732
      %v6805 = vadd.f32 %v6599, %v6735
      %v6806 = vadd.f32 %v6600, %v6740
      %v6807 = vadd.f32 %v6601, %v6743
      %v6808 = vadd.f32 %v6602, %v6748
      %v6809 = vadd.f32 %v6603, %v6751
      %v6810 = vadd.f32 %v6604, %v6756
      %v6811 = vadd.f32 %v6605, %v6759
      %v6812 = vadd.f32 %v6606, %v6764
      %v6813 = vadd.f32 %v6607, %v6767
      %v6814 = vadd.f32 %v6608, %v6772
      %v6815 = vadd.f32 %v6609, %v6775
      %v6816 = vadd.f32 %v6610, %v6780
      %v6817 = vadd.f32 %v6611, %v6783
      %v6819 = vshrl.u32 %v5195, 16
      %v6821 = vrot.slane %v6819, 4
      %v6822 = vshll.u32 %v5195, 16
      %v6824 = vrot.slane %v6822, 5
      %v6825 = vor.u32 %v6821, %v6824
      %v6826 = vrot.slane %v6825, 4
      %v6828 = vshll.u32 %v5196, 16
      %v6830 = vrot.slane %v6828, 5
      %v6831 = vsel %vm1417, %v6826, %v6830
      %v6832 = vshrl.u32 %v5196, 16
      %v6834 = vrot.slane %v6832, 4
      %v6835 = vor.u32 %v6834, %v6830
      %v6836 = vrot.slane %v6835, 4
      %v6838 = vshll.u32 %v5215, 16
      %v6840 = vrot.slane %v6838, 5
      %v6841 = vsel %vm1417, %v6836, %v6840
      %s6842 = scalar_lea.vmem %s5, 8
      %v6843 = vld [vmem:[%s6842] sm:$0x3]
      %v6844 = vunpack.c.l.b16 %v6831
      %v6845 = vunpack.c.l.b16 %v6841
      %v6846 = vpack.c.b16 %v6845, %v6844
      %v6848 = vsel %vm1906, %v6846, 0
      %v6851 = vsel %vm1961, %v6843, 0
      %6853 = vmatprep.subr.bf16.mxu0 0
      %6854 = vmatpush1.bf16.msra.mxu0 %v6851
      %6855 = vmatprep.subr.bf16.mxu0 0
      %6856 = vmatpush1.bf16.msra.mxu0 0
      %6857 = vmatprep.subr.bf16.mxu0 0
      %6858 = vmatpush1.bf16.msra.mxu0 0
      %6859 = vmatprep.subr.bf16.mxu0 0
      %6860 = vmatpush1.bf16.msra.mxu0 0
      %6861 = vmatprep.subr.bf16.mxu0 0
      %6862 = vmatpush1.bf16.msra.mxu0 0
      %6863 = vmatprep.subr.bf16.mxu0 0
      %6864 = vmatpush1.bf16.msra.mxu0 0
      %6865 = vmatprep.subr.bf16.mxu0 0
      %6866 = vmatpush1.bf16.msra.mxu0 0
      %6867 = vmatprep.subr.bf16.mxu0 0
      %6868 = vmatpush1.bf16.msra.mxu0 0
      %6869 = vmatprep.subr.bf16.mxu0 0
      %6870 = vmatpush1.bf16.msra.mxu0 0
      %6871 = vmatprep.subr.bf16.mxu0 0
      %6872 = vmatpush1.bf16.msra.mxu0 0
      %6873 = vmatprep.subr.bf16.mxu0 0
      %6874 = vmatpush1.bf16.msra.mxu0 0
      %6875 = vmatprep.subr.bf16.mxu0 0
      %6876 = vmatpush1.bf16.msra.mxu0 0
      %6877 = vmatprep.subr.bf16.mxu0 0
      %6878 = vmatpush1.bf16.msra.mxu0 0
      %6879 = vmatprep.subr.bf16.mxu0 0
      %6880 = vmatpush1.bf16.msra.mxu0 0
      %6881 = vmatprep.subr.bf16.mxu0 0
      %6882 = vmatpush1.bf16.msra.mxu0 0
      %6883 = vmatprep.subr.bf16.mxu0 0
      %6884 = vmatpush1.bf16.msra.mxu0 0
      %6885 = vmatprep.mubr.bf16.mxu0 0
      %6886 = vmatmul.mubr.bf16.gmra.mrb[0].mxu0 %v5674
      %v6887 = vpop.f32.mrb[0].mxu0
      %v6888 = vadd.f32 0.0, %v6887
      %v6889 = vpop.f32.mrb[0].mxu0
      %v6890 = vpop.f32.mrb[0].mxu0
      %v6891 = vadd.f32 0.0, %v6890
      %v6892 = vpop.f32.mrb[0].mxu0
      %6893 = vmatprep.mubr.bf16.mxu0 0
      %6894 = vmatmul.mubr.bf16.gmra.mrb[0].mxu0 %v5677
      %v6895 = vpop.f32.mrb[0].mxu0
      %v6896 = vadd.f32 0.0, %v6895
      %v6897 = vpop.f32.mrb[0].mxu0
      %v6898 = vpop.f32.mrb[0].mxu0
      %v6899 = vadd.f32 0.0, %v6898
      %v6900 = vpop.f32.mrb[0].mxu0
      %6901 = vmatprep.mubr.bf16.mxu0 0
      %6902 = vmatmul.mubr.bf16.gmra.mrb[0].mxu0 %v5680
      %v6903 = vpop.f32.mrb[0].mxu0
      %v6904 = vadd.f32 0.0, %v6903
      %v6905 = vpop.f32.mrb[0].mxu0
      %v6906 = vpop.f32.mrb[0].mxu0
      %v6907 = vadd.f32 0.0, %v6906
      %v6908 = vpop.f32.mrb[0].mxu0
      %6909 = vmatprep.mubr.bf16.mxu0 0
      %6910 = vmatmul.mubr.bf16.gmra.mrb[0].mxu0 %v5683
      %v6911 = vpop.f32.mrb[0].mxu0
      %v6912 = vadd.f32 0.0, %v6911
      %v6913 = vpop.f32.mrb[0].mxu0
      %v6914 = vpop.f32.mrb[0].mxu0
      %v6915 = vadd.f32 0.0, %v6914
      %v6916 = vpop.f32.mrb[0].mxu0
      %6917 = vmatprep.mubr.bf16.mxu0 0
      %6918 = vmatmul.mubr.bf16.gmra.mrb[0].mxu0 %v5686
      %v6919 = vpop.f32.mrb[0].mxu0
      %v6920 = vadd.f32 0.0, %v6919
      %v6921 = vpop.f32.mrb[0].mxu0
      %v6922 = vpop.f32.mrb[0].mxu0
      %v6923 = vadd.f32 0.0, %v6922
      %v6924 = vpop.f32.mrb[0].mxu0
      %6925 = vmatprep.mubr.bf16.mxu0 0
      %6926 = vmatmul.mubr.bf16.gmra.mrb[0].mxu0 %v5689
      %v6927 = vpop.f32.mrb[0].mxu0
      %v6928 = vadd.f32 0.0, %v6927
      %v6929 = vpop.f32.mrb[0].mxu0
      %v6930 = vpop.f32.mrb[0].mxu0
      %v6931 = vadd.f32 0.0, %v6930
      %v6932 = vpop.f32.mrb[0].mxu0
      %6933 = vmatprep.mubr.bf16.mxu0 0
      %6934 = vmatmul.mubr.bf16.gmra.mrb[0].mxu0 %v5692
      %v6935 = vpop.f32.mrb[0].mxu0
      %v6936 = vadd.f32 0.0, %v6935
      %v6937 = vpop.f32.mrb[0].mxu0
      %v6938 = vpop.f32.mrb[0].mxu0
      %v6939 = vadd.f32 0.0, %v6938
      %v6940 = vpop.f32.mrb[0].mxu0
      %6941 = vmatprep.mubr.bf16.mxu0 0
      %6942 = vmatmul.mubr.bf16.gmra.mrb[0].mxu0 %v5695
      %v6943 = vpop.f32.mrb[0].mxu0
      %v6944 = vadd.f32 0.0, %v6943
      %v6945 = vpop.f32.mrb[0].mxu0
      %v6946 = vpop.f32.mrb[0].mxu0
      %v6947 = vadd.f32 0.0, %v6946
      %v6948 = vpop.f32.mrb[0].mxu0
      %6949 = vmatprep.mubr.bf16.mxu0 0
      %6950 = vmatmul.mubr.bf16.gmra.mrb[0].mxu0 %v5698
      %v6951 = vpop.f32.mrb[0].mxu0
      %v6952 = vadd.f32 0.0, %v6951
      %v6953 = vpop.f32.mrb[0].mxu0
      %v6954 = vpop.f32.mrb[0].mxu0
      %v6955 = vadd.f32 0.0, %v6954
      %v6956 = vpop.f32.mrb[0].mxu0
      %6957 = vmatprep.mubr.bf16.mxu0 0
      %6958 = vmatmul.mubr.bf16.gmra.mrb[0].mxu0 %v5701
      %v6959 = vpop.f32.mrb[0].mxu0
      %v6960 = vadd.f32 0.0, %v6959
      %v6961 = vpop.f32.mrb[0].mxu0
      %v6962 = vpop.f32.mrb[0].mxu0
      %v6963 = vadd.f32 0.0, %v6962
      %v6964 = vpop.f32.mrb[0].mxu0
      %6965 = vmatprep.mubr.bf16.mxu0 0
      %6966 = vmatmul.mubr.bf16.gmra.mrb[0].mxu0 %v5704
      %v6967 = vpop.f32.mrb[0].mxu0
      %v6968 = vadd.f32 0.0, %v6967
      %v6969 = vpop.f32.mrb[0].mxu0
      %v6970 = vpop.f32.mrb[0].mxu0
      %v6971 = vadd.f32 0.0, %v6970
      %v6972 = vpop.f32.mrb[0].mxu0
      %6973 = vmatprep.mubr.bf16.mxu0 0
      %6974 = vmatmul.mubr.bf16.gmra.mrb[0].mxu0 %v5707
      %v6975 = vpop.f32.mrb[0].mxu0
      %v6976 = vadd.f32 0.0, %v6975
      %v6977 = vpop.f32.mrb[0].mxu0
      %v6978 = vpop.f32.mrb[0].mxu0
      %v6979 = vadd.f32 0.0, %v6978
      %v6980 = vpop.f32.mrb[0].mxu0
      %6981 = vmatprep.mubr.bf16.mxu0 0
      %6982 = vmatmul.mubr.bf16.gmra.mrb[0].mxu0 %v5710
      %v6983 = vpop.f32.mrb[0].mxu0
      %v6984 = vadd.f32 0.0, %v6983
      %v6985 = vpop.f32.mrb[0].mxu0
      %v6986 = vpop.f32.mrb[0].mxu0
      %v6987 = vadd.f32 0.0, %v6986
      %v6988 = vpop.f32.mrb[0].mxu0
      %6989 = vmatprep.mubr.bf16.mxu0 0
      %6990 = vmatmul.mubr.bf16.gmra.mrb[0].mxu0 %v5713
      %v6991 = vpop.f32.mrb[0].mxu0
      %v6992 = vadd.f32 0.0, %v6991
      %v6993 = vpop.f32.mrb[0].mxu0
      %v6994 = vpop.f32.mrb[0].mxu0
      %v6995 = vadd.f32 0.0, %v6994
      %v6996 = vpop.f32.mrb[0].mxu0
      %6997 = vmatprep.mubr.bf16.mxu0 0
      %6998 = vmatmul.mubr.bf16.gmra.mrb[0].mxu0 %v5716
      %v6999 = vpop.f32.mrb[0].mxu0
      %v7000 = vadd.f32 0.0, %v6999
      %v7001 = vpop.f32.mrb[0].mxu0
      %v7002 = vpop.f32.mrb[0].mxu0
      %v7003 = vadd.f32 0.0, %v7002
      %v7004 = vpop.f32.mrb[0].mxu0
      %7005 = vmatprep.mubr.bf16.mxu0 0
      %7006 = vmatmul.mubr.bf16.gmra.mrb[0].mxu0 %v6848
      %v7007 = vpop.f32.mrb[0].mxu0
      %v7008 = vadd.f32 0.0, %v7007
      %v7009 = vpop.f32.mrb[0].mxu0
      %v7010 = vpop.f32.mrb[0].mxu0
      %v7011 = vadd.f32 0.0, %v7010
      %v7012 = vpop.f32.mrb[0].mxu0
      %7013 = vdwg.mxu0
      %v7014 = vadd.f32 %v6786, %v6888
      %v7015 = vadd.f32 %v6787, %v6891
      %v7016 = vadd.f32 %v6788, %v6896
      %v7017 = vadd.f32 %v6789, %v6899
      %v7018 = vadd.f32 %v6790, %v6904
      %v7019 = vadd.f32 %v6791, %v6907
      %v7020 = vadd.f32 %v6792, %v6912
      %v7021 = vadd.f32 %v6793, %v6915
      %v7022 = vadd.f32 %v6794, %v6920
      %v7023 = vadd.f32 %v6795, %v6923
      %v7024 = vadd.f32 %v6796, %v6928
      %v7025 = vadd.f32 %v6797, %v6931
      %v7026 = vadd.f32 %v6798, %v6936
      %v7027 = vadd.f32 %v6799, %v6939
      %v7028 = vadd.f32 %v6800, %v6944
      %v7029 = vadd.f32 %v6801, %v6947
      %v7030 = vadd.f32 %v6802, %v6952
      %v7031 = vadd.f32 %v6803, %v6955
      %v7032 = vadd.f32 %v6804, %v6960
      %v7033 = vadd.f32 %v6805, %v6963
      %v7034 = vadd.f32 %v6806, %v6968
      %v7035 = vadd.f32 %v6807, %v6971
      %v7036 = vadd.f32 %v6808, %v6976
      %v7037 = vadd.f32 %v6809, %v6979
      %v7038 = vadd.f32 %v6810, %v6984
      %v7039 = vadd.f32 %v6811, %v6987
      %v7040 = vadd.f32 %v6812, %v6992
      %v7041 = vadd.f32 %v6813, %v6995
      %v7042 = vadd.f32 %v6814, %v7000
      %v7043 = vadd.f32 %v6815, %v7003
      %v7044 = vadd.f32 %v6816, %v7008
      %v7045 = vadd.f32 %v6817, %v7011
      %v7048 = vrot.slane %v5233, 5
      %v7049 = vrot.slane %v7048, 4
      %v7050 = vrot.slane %v5196, 5
      %v7051 = vsel %vm2504, %v7049, %v7050
      %v7052 = vrot.slane %v7050, 4
      %v7053 = vrot.slane %v5215, 5
      %v7054 = vsel %vm2504, %v7052, %v7053
      %s7055 = scalar_lea.vmem %s5, 10
      %v7056 = vld [vmem:[%s7055] sm:$0x3]
      %v7057 = vunpack.c.l.b16 %v7051
      %v7058 = vunpack.c.l.b16 %v7054
      %v7059 = vpack.c.b16 %v7058, %v7057
      %v7061 = vsel %vm1906, %v7059, 0
      %v7064 = vsel %vm1961, %v7056, 0
      %7066 = vmatprep.subr.bf16.mxu0 0
      %7067 = vmatpush1.bf16.msra.mxu0 %v7064
      %7068 = vmatprep.subr.bf16.mxu0 0
      %7069 = vmatpush1.bf16.msra.mxu0 0
      %7070 = vmatprep.subr.bf16.mxu0 0
      %7071 = vmatpush1.bf16.msra.mxu0 0
      %7072 = vmatprep.subr.bf16.mxu0 0
      %7073 = vmatpush1.bf16.msra.mxu0 0
      %7074 = vmatprep.subr.bf16.mxu0 0
      %7075 = vmatpush1.bf16.msra.mxu0 0
      %7076 = vmatprep.subr.bf16.mxu0 0
      %7077 = vmatpush1.bf16.msra.mxu0 0
      %7078 = vmatprep.subr.bf16.mxu0 0
      %7079 = vmatpush1.bf16.msra.mxu0 0
      %7080 = vmatprep.subr.bf16.mxu0 0
      %7081 = vmatpush1.bf16.msra.mxu0 0
      %7082 = vmatprep.subr.bf16.mxu0 0
      %7083 = vmatpush1.bf16.msra.mxu0 0
      %7084 = vmatprep.subr.bf16.mxu0 0
      %7085 = vmatpush1.bf16.msra.mxu0 0
      %7086 = vmatprep.subr.bf16.mxu0 0
      %7087 = vmatpush1.bf16.msra.mxu0 0
      %7088 = vmatprep.subr.bf16.mxu0 0
      %7089 = vmatpush1.bf16.msra.mxu0 0
      %7090 = vmatprep.subr.bf16.mxu0 0
      %7091 = vmatpush1.bf16.msra.mxu0 0
      %7092 = vmatprep.subr.bf16.mxu0 0
      %7093 = vmatpush1.bf16.msra.mxu0 0
      %7094 = vmatprep.subr.bf16.mxu0 0
      %7095 = vmatpush1.bf16.msra.mxu0 0
      %7096 = vmatprep.subr.bf16.mxu0 0
      %7097 = vmatpush1.bf16.msra.mxu0 0
      %7098 = vmatprep.mubr.bf16.mxu0 0
      %7099 = vmatmul.mubr.bf16.gmra.mrb[0].mxu0 %v6372
      %v7100 = vpop.f32.mrb[0].mxu0
      %v7101 = vadd.f32 0.0, %v7100
      %v7102 = vpop.f32.mrb[0].mxu0
      %v7103 = vpop.f32.mrb[0].mxu0
      %v7104 = vadd.f32 0.0, %v7103
      %v7105 = vpop.f32.mrb[0].mxu0
      %7106 = vmatprep.mubr.bf16.mxu0 0
      %7107 = vmatmul.mubr.bf16.gmra.mrb[0].mxu0 %v6375
      %v7108 = vpop.f32.mrb[0].mxu0
      %v7109 = vadd.f32 0.0, %v7108
      %v7110 = vpop.f32.mrb[0].mxu0
      %v7111 = vpop.f32.mrb[0].mxu0
      %v7112 = vadd.f32 0.0, %v7111
      %v7113 = vpop.f32.mrb[0].mxu0
      %7114 = vmatprep.mubr.bf16.mxu0 0
      %7115 = vmatmul.mubr.bf16.gmra.mrb[0].mxu0 %v6378
      %v7116 = vpop.f32.mrb[0].mxu0
      %v7117 = vadd.f32 0.0, %v7116
      %v7118 = vpop.f32.mrb[0].mxu0
      %v7119 = vpop.f32.mrb[0].mxu0
      %v7120 = vadd.f32 0.0, %v7119
      %v7121 = vpop.f32.mrb[0].mxu0
      %7122 = vmatprep.mubr.bf16.mxu0 0
      %7123 = vmatmul.mubr.bf16.gmra.mrb[0].mxu0 %v6381
      %v7124 = vpop.f32.mrb[0].mxu0
      %v7125 = vadd.f32 0.0, %v7124
      %v7126 = vpop.f32.mrb[0].mxu0
      %v7127 = vpop.f32.mrb[0].mxu0
      %v7128 = vadd.f32 0.0, %v7127
      %v7129 = vpop.f32.mrb[0].mxu0
      %7130 = vmatprep.mubr.bf16.mxu0 0
      %7131 = vmatmul.mubr.bf16.gmra.mrb[0].mxu0 %v6384
      %v7132 = vpop.f32.mrb[0].mxu0
      %v7133 = vadd.f32 0.0, %v7132
      %v7134 = vpop.f32.mrb[0].mxu0
      %v7135 = vpop.f32.mrb[0].mxu0
      %v7136 = vadd.f32 0.0, %v7135
      %v7137 = vpop.f32.mrb[0].mxu0
      %7138 = vmatprep.mubr.bf16.mxu0 0
      %7139 = vmatmul.mubr.bf16.gmra.mrb[0].mxu0 %v6387
      %v7140 = vpop.f32.mrb[0].mxu0
      %v7141 = vadd.f32 0.0, %v7140
      %v7142 = vpop.f32.mrb[0].mxu0
      %v7143 = vpop.f32.mrb[0].mxu0
      %v7144 = vadd.f32 0.0, %v7143
      %v7145 = vpop.f32.mrb[0].mxu0
      %7146 = vmatprep.mubr.bf16.mxu0 0
      %7147 = vmatmul.mubr.bf16.gmra.mrb[0].mxu0 %v6390
      %v7148 = vpop.f32.mrb[0].mxu0
      %v7149 = vadd.f32 0.0, %v7148
      %v7150 = vpop.f32.mrb[0].mxu0
      %v7151 = vpop.f32.mrb[0].mxu0
      %v7152 = vadd.f32 0.0, %v7151
      %v7153 = vpop.f32.mrb[0].mxu0
      %7154 = vmatprep.mubr.bf16.mxu0 0
      %7155 = vmatmul.mubr.bf16.gmra.mrb[0].mxu0 %v6393
      %v7156 = vpop.f32.mrb[0].mxu0
      %v7157 = vadd.f32 0.0, %v7156
      %v7158 = vpop.f32.mrb[0].mxu0
      %v7159 = vpop.f32.mrb[0].mxu0
      %v7160 = vadd.f32 0.0, %v7159
      %v7161 = vpop.f32.mrb[0].mxu0
      %7162 = vmatprep.mubr.bf16.mxu0 0
      %7163 = vmatmul.mubr.bf16.gmra.mrb[0].mxu0 %v6396
      %v7164 = vpop.f32.mrb[0].mxu0
      %v7165 = vadd.f32 0.0, %v7164
      %v7166 = vpop.f32.mrb[0].mxu0
      %v7167 = vpop.f32.mrb[0].mxu0
      %v7168 = vadd.f32 0.0, %v7167
      %v7169 = vpop.f32.mrb[0].mxu0
      %7170 = vmatprep.mubr.bf16.mxu0 0
      %7171 = vmatmul.mubr.bf16.gmra.mrb[0].mxu0 %v6399
      %v7172 = vpop.f32.mrb[0].mxu0
      %v7173 = vadd.f32 0.0, %v7172
      %v7174 = vpop.f32.mrb[0].mxu0
      %v7175 = vpop.f32.mrb[0].mxu0
      %v7176 = vadd.f32 0.0, %v7175
      %v7177 = vpop.f32.mrb[0].mxu0
      %7178 = vmatprep.mubr.bf16.mxu0 0
      %7179 = vmatmul.mubr.bf16.gmra.mrb[0].mxu0 %v6402
      %v7180 = vpop.f32.mrb[0].mxu0
      %v7181 = vadd.f32 0.0, %v7180
      %v7182 = vpop.f32.mrb[0].mxu0
      %v7183 = vpop.f32.mrb[0].mxu0
      %v7184 = vadd.f32 0.0, %v7183
      %v7185 = vpop.f32.mrb[0].mxu0
      %7186 = vmatprep.mubr.bf16.mxu0 0
      %7187 = vmatmul.mubr.bf16.gmra.mrb[0].mxu0 %v6405
      %v7188 = vpop.f32.mrb[0].mxu0
      %v7189 = vadd.f32 0.0, %v7188
      %v7190 = vpop.f32.mrb[0].mxu0
      %v7191 = vpop.f32.mrb[0].mxu0
      %v7192 = vadd.f32 0.0, %v7191
      %v7193 = vpop.f32.mrb[0].mxu0
      %7194 = vmatprep.mubr.bf16.mxu0 0
      %7195 = vmatmul.mubr.bf16.gmra.mrb[0].mxu0 %v6408
      %v7196 = vpop.f32.mrb[0].mxu0
      %v7197 = vadd.f32 0.0, %v7196
      %v7198 = vpop.f32.mrb[0].mxu0
      %v7199 = vpop.f32.mrb[0].mxu0
      %v7200 = vadd.f32 0.0, %v7199
      %v7201 = vpop.f32.mrb[0].mxu0
      %7202 = vmatprep.mubr.bf16.mxu0 0
      %7203 = vmatmul.mubr.bf16.gmra.mrb[0].mxu0 %v6411
      %v7204 = vpop.f32.mrb[0].mxu0
      %v7205 = vadd.f32 0.0, %v7204
      %v7206 = vpop.f32.mrb[0].mxu0
      %v7207 = vpop.f32.mrb[0].mxu0
      %v7208 = vadd.f32 0.0, %v7207
      %v7209 = vpop.f32.mrb[0].mxu0
      %7210 = vmatprep.mubr.bf16.mxu0 0
      %7211 = vmatmul.mubr.bf16.gmra.mrb[0].mxu0 %v6414
      %v7212 = vpop.f32.mrb[0].mxu0
      %v7213 = vadd.f32 0.0, %v7212
      %v7214 = vpop.f32.mrb[0].mxu0
      %v7215 = vpop.f32.mrb[0].mxu0
      %v7216 = vadd.f32 0.0, %v7215
      %v7217 = vpop.f32.mrb[0].mxu0
      %7218 = vmatprep.mubr.bf16.mxu0 0
      %7219 = vmatmul.mubr.bf16.gmra.mrb[0].mxu0 %v7061
      %v7220 = vpop.f32.mrb[0].mxu0
      %v7221 = vadd.f32 0.0, %v7220
      %v7222 = vpop.f32.mrb[0].mxu0
      %v7223 = vpop.f32.mrb[0].mxu0
      %v7224 = vadd.f32 0.0, %v7223
      %v7225 = vpop.f32.mrb[0].mxu0
      %7226 = vdwg.mxu0
      %v7227 = vadd.f32 %v7014, %v7101
      %v7228 = vadd.f32 %v7015, %v7104
      %v7229 = vadd.f32 %v7016, %v7109
      %v7230 = vadd.f32 %v7017, %v7112
      %v7231 = vadd.f32 %v7018, %v7117
      %v7232 = vadd.f32 %v7019, %v7120
      %v7233 = vadd.f32 %v7020, %v7125
      %v7234 = vadd.f32 %v7021, %v7128
      %v7235 = vadd.f32 %v7022, %v7133
      %v7236 = vadd.f32 %v7023, %v7136
      %v7237 = vadd.f32 %v7024, %v7141
      %v7238 = vadd.f32 %v7025, %v7144
      %v7239 = vadd.f32 %v7026, %v7149
      %v7240 = vadd.f32 %v7027, %v7152
      %v7241 = vadd.f32 %v7028, %v7157
      %v7242 = vadd.f32 %v7029, %v7160
      %v7243 = vadd.f32 %v7030, %v7165
      %v7244 = vadd.f32 %v7031, %v7168
      %v7245 = vadd.f32 %v7032, %v7173
      %v7246 = vadd.f32 %v7033, %v7176
      %v7247 = vadd.f32 %v7034, %v7181
      %v7248 = vadd.f32 %v7035, %v7184
      %v7249 = vadd.f32 %v7036, %v7189
      %v7250 = vadd.f32 %v7037, %v7192
      %v7251 = vadd.f32 %v7038, %v7197
      %v7252 = vadd.f32 %v7039, %v7200
      %v7253 = vadd.f32 %v7040, %v7205
      %v7254 = vadd.f32 %v7041, %v7208
      %v7255 = vadd.f32 %v7042, %v7213
      %v7256 = vadd.f32 %v7043, %v7216
      %v7257 = vadd.f32 %v7044, %v7221
      %v7258 = vadd.f32 %v7045, %v7224
      %s7259 = scalar_lea.vmem %s5, 12
      %v7260 = vld [vmem:[%s7259] sm:$0x3]
      %v7263 = vunpack.c.l.b16 %v5197
      %v7264 = vunpack.c.l.b16 %v5198
      %v7265 = vpack.c.b16 %v7264, %v7263
      %v7267 = vsel %vm1906, %v7265, 0
      %v7270 = vsel %vm1961, %v7260, 0
      %7272 = vmatprep.subr.bf16.mxu0 0
      %7273 = vmatpush1.bf16.msra.mxu0 %v7270
      %7274 = vmatprep.subr.bf16.mxu0 0
      %7275 = vmatpush1.bf16.msra.mxu0 0
      %7276 = vmatprep.subr.bf16.mxu0 0
      %7277 = vmatpush1.bf16.msra.mxu0 0
      %7278 = vmatprep.subr.bf16.mxu0 0
      %7279 = vmatpush1.bf16.msra.mxu0 0
      %7280 = vmatprep.subr.bf16.mxu0 0
      %7281 = vmatpush1.bf16.msra.mxu0 0
      %7282 = vmatprep.subr.bf16.mxu0 0
      %7283 = vmatpush1.bf16.msra.mxu0 0
      %7284 = vmatprep.subr.bf16.mxu0 0
      %7285 = vmatpush1.bf16.msra.mxu0 0
      %7286 = vmatprep.subr.bf16.mxu0 0
      %7287 = vmatpush1.bf16.msra.mxu0 0
      %7288 = vmatprep.subr.bf16.mxu0 0
      %7289 = vmatpush1.bf16.msra.mxu0 0
      %7290 = vmatprep.subr.bf16.mxu0 0
      %7291 = vmatpush1.bf16.msra.mxu0 0
      %7292 = vmatprep.subr.bf16.mxu0 0
      %7293 = vmatpush1.bf16.msra.mxu0 0
      %7294 = vmatprep.subr.bf16.mxu0 0
      %7295 = vmatpush1.bf16.msra.mxu0 0
      %7296 = vmatprep.subr.bf16.mxu0 0
      %7297 = vmatpush1.bf16.msra.mxu0 0
      %7298 = vmatprep.subr.bf16.mxu0 0
      %7299 = vmatpush1.bf16.msra.mxu0 0
      %7300 = vmatprep.subr.bf16.mxu0 0
      %7301 = vmatpush1.bf16.msra.mxu0 0
      %7302 = vmatprep.subr.bf16.mxu0 0
      %7303 = vmatpush1.bf16.msra.mxu0 0
      %7304 = vmatprep.mubr.bf16.mxu0 0
      %7305 = vmatmul.mubr.bf16.gmra.mrb[0].mxu0 %v5969
      %v7306 = vpop.f32.mrb[0].mxu0
      %v7307 = vadd.f32 0.0, %v7306
      %v7308 = vpop.f32.mrb[0].mxu0
      %v7309 = vpop.f32.mrb[0].mxu0
      %v7310 = vadd.f32 0.0, %v7309
      %v7311 = vpop.f32.mrb[0].mxu0
      %7312 = vmatprep.mubr.bf16.mxu0 0
      %7313 = vmatmul.mubr.bf16.gmra.mrb[0].mxu0 %v5972
      %v7314 = vpop.f32.mrb[0].mxu0
      %v7315 = vadd.f32 0.0, %v7314
      %v7316 = vpop.f32.mrb[0].mxu0
      %v7317 = vpop.f32.mrb[0].mxu0
      %v7318 = vadd.f32 0.0, %v7317
      %v7319 = vpop.f32.mrb[0].mxu0
      %7320 = vmatprep.mubr.bf16.mxu0 0
      %7321 = vmatmul.mubr.bf16.gmra.mrb[0].mxu0 %v5975
      %v7322 = vpop.f32.mrb[0].mxu0
      %v7323 = vadd.f32 0.0, %v7322
      %v7324 = vpop.f32.mrb[0].mxu0
      %v7325 = vpop.f32.mrb[0].mxu0
      %v7326 = vadd.f32 0.0, %v7325
      %v7327 = vpop.f32.mrb[0].mxu0
      %7328 = vmatprep.mubr.bf16.mxu0 0
      %7329 = vmatmul.mubr.bf16.gmra.mrb[0].mxu0 %v5978
      %v7330 = vpop.f32.mrb[0].mxu0
      %v7331 = vadd.f32 0.0, %v7330
      %v7332 = vpop.f32.mrb[0].mxu0
      %v7333 = vpop.f32.mrb[0].mxu0
      %v7334 = vadd.f32 0.0, %v7333
      %v7335 = vpop.f32.mrb[0].mxu0
      %7336 = vmatprep.mubr.bf16.mxu0 0
      %7337 = vmatmul.mubr.bf16.gmra.mrb[0].mxu0 %v5981
      %v7338 = vpop.f32.mrb[0].mxu0
      %v7339 = vadd.f32 0.0, %v7338
      %v7340 = vpop.f32.mrb[0].mxu0
      %v7341 = vpop.f32.mrb[0].mxu0
      %v7342 = vadd.f32 0.0, %v7341
      %v7343 = vpop.f32.mrb[0].mxu0
      %7344 = vmatprep.mubr.bf16.mxu0 0
      %7345 = vmatmul.mubr.bf16.gmra.mrb[0].mxu0 %v5984
      %v7346 = vpop.f32.mrb[0].mxu0
      %v7347 = vadd.f32 0.0, %v7346
      %v7348 = vpop.f32.mrb[0].mxu0
      %v7349 = vpop.f32.mrb[0].mxu0
      %v7350 = vadd.f32 0.0, %v7349
      %v7351 = vpop.f32.mrb[0].mxu0
      %7352 = vmatprep.mubr.bf16.mxu0 0
      %7353 = vmatmul.mubr.bf16.gmra.mrb[0].mxu0 %v5987
      %v7354 = vpop.f32.mrb[0].mxu0
      %v7355 = vadd.f32 0.0, %v7354
      %v7356 = vpop.f32.mrb[0].mxu0
      %v7357 = vpop.f32.mrb[0].mxu0
      %v7358 = vadd.f32 0.0, %v7357
      %v7359 = vpop.f32.mrb[0].mxu0
      %7360 = vmatprep.mubr.bf16.mxu0 0
      %7361 = vmatmul.mubr.bf16.gmra.mrb[0].mxu0 %v5990
      %v7362 = vpop.f32.mrb[0].mxu0
      %v7363 = vadd.f32 0.0, %v7362
      %v7364 = vpop.f32.mrb[0].mxu0
      %v7365 = vpop.f32.mrb[0].mxu0
      %v7366 = vadd.f32 0.0, %v7365
      %v7367 = vpop.f32.mrb[0].mxu0
      %7368 = vmatprep.mubr.bf16.mxu0 0
      %7369 = vmatmul.mubr.bf16.gmra.mrb[0].mxu0 %v5993
      %v7370 = vpop.f32.mrb[0].mxu0
      %v7371 = vadd.f32 0.0, %v7370
      %v7372 = vpop.f32.mrb[0].mxu0
      %v7373 = vpop.f32.mrb[0].mxu0
      %v7374 = vadd.f32 0.0, %v7373
      %v7375 = vpop.f32.mrb[0].mxu0
      %7376 = vmatprep.mubr.bf16.mxu0 0
      %7377 = vmatmul.mubr.bf16.gmra.mrb[0].mxu0 %v5996
      %v7378 = vpop.f32.mrb[0].mxu0
      %v7379 = vadd.f32 0.0, %v7378
      %v7380 = vpop.f32.mrb[0].mxu0
      %v7381 = vpop.f32.mrb[0].mxu0
      %v7382 = vadd.f32 0.0, %v7381
      %v7383 = vpop.f32.mrb[0].mxu0
      %7384 = vmatprep.mubr.bf16.mxu0 0
      %7385 = vmatmul.mubr.bf16.gmra.mrb[0].mxu0 %v5999
      %v7386 = vpop.f32.mrb[0].mxu0
      %v7387 = vadd.f32 0.0, %v7386
      %v7388 = vpop.f32.mrb[0].mxu0
      %v7389 = vpop.f32.mrb[0].mxu0
      %v7390 = vadd.f32 0.0, %v7389
      %v7391 = vpop.f32.mrb[0].mxu0
      %7392 = vmatprep.mubr.bf16.mxu0 0
      %7393 = vmatmul.mubr.bf16.gmra.mrb[0].mxu0 %v6002
      %v7394 = vpop.f32.mrb[0].mxu0
      %v7395 = vadd.f32 0.0, %v7394
      %v7396 = vpop.f32.mrb[0].mxu0
      %v7397 = vpop.f32.mrb[0].mxu0
      %v7398 = vadd.f32 0.0, %v7397
      %v7399 = vpop.f32.mrb[0].mxu0
      %7400 = vmatprep.mubr.bf16.mxu0 0
      %7401 = vmatmul.mubr.bf16.gmra.mrb[0].mxu0 %v6005
      %v7402 = vpop.f32.mrb[0].mxu0
      %v7403 = vadd.f32 0.0, %v7402
      %v7404 = vpop.f32.mrb[0].mxu0
      %v7405 = vpop.f32.mrb[0].mxu0
      %v7406 = vadd.f32 0.0, %v7405
      %v7407 = vpop.f32.mrb[0].mxu0
      %7408 = vmatprep.mubr.bf16.mxu0 0
      %7409 = vmatmul.mubr.bf16.gmra.mrb[0].mxu0 %v6008
      %v7410 = vpop.f32.mrb[0].mxu0
      %v7411 = vadd.f32 0.0, %v7410
      %v7412 = vpop.f32.mrb[0].mxu0
      %v7413 = vpop.f32.mrb[0].mxu0
      %v7414 = vadd.f32 0.0, %v7413
      %v7415 = vpop.f32.mrb[0].mxu0
      %7416 = vmatprep.mubr.bf16.mxu0 0
      %7417 = vmatmul.mubr.bf16.gmra.mrb[0].mxu0 %v6620
      %v7418 = vpop.f32.mrb[0].mxu0
      %v7419 = vadd.f32 0.0, %v7418
      %v7420 = vpop.f32.mrb[0].mxu0
      %v7421 = vpop.f32.mrb[0].mxu0
      %v7422 = vadd.f32 0.0, %v7421
      %v7423 = vpop.f32.mrb[0].mxu0
      %7424 = vmatprep.mubr.bf16.mxu0 0
      %7425 = vmatmul.mubr.bf16.gmra.mrb[0].mxu0 %v7267
      %v7426 = vpop.f32.mrb[0].mxu0
      %v7427 = vadd.f32 0.0, %v7426
      %v7428 = vpop.f32.mrb[0].mxu0
      %v7429 = vpop.f32.mrb[0].mxu0
      %v7430 = vadd.f32 0.0, %v7429
      %v7431 = vpop.f32.mrb[0].mxu0
      %7432 = vdwg.mxu0
      %v7433 = vadd.f32 %v7227, %v7307
      %v7434 = vadd.f32 %v7228, %v7310
      %v7435 = vadd.f32 %v7229, %v7315
      %v7436 = vadd.f32 %v7230, %v7318
      %v7437 = vadd.f32 %v7231, %v7323
      %v7438 = vadd.f32 %v7232, %v7326
      %v7439 = vadd.f32 %v7233, %v7331
      %v7440 = vadd.f32 %v7234, %v7334
      %v7441 = vadd.f32 %v7235, %v7339
      %v7442 = vadd.f32 %v7236, %v7342
      %v7443 = vadd.f32 %v7237, %v7347
      %v7444 = vadd.f32 %v7238, %v7350
      %v7445 = vadd.f32 %v7239, %v7355
      %v7446 = vadd.f32 %v7240, %v7358
      %v7447 = vadd.f32 %v7241, %v7363
      %v7448 = vadd.f32 %v7242, %v7366
      %v7449 = vadd.f32 %v7243, %v7371
      %v7450 = vadd.f32 %v7244, %v7374
      %v7451 = vadd.f32 %v7245, %v7379
      %v7452 = vadd.f32 %v7246, %v7382
      %v7453 = vadd.f32 %v7247, %v7387
      %v7454 = vadd.f32 %v7248, %v7390
      %v7455 = vadd.f32 %v7249, %v7395
      %v7456 = vadd.f32 %v7250, %v7398
      %v7457 = vadd.f32 %v7251, %v7403
      %v7458 = vadd.f32 %v7252, %v7406
      %v7459 = vadd.f32 %v7253, %v7411
      %v7460 = vadd.f32 %v7254, %v7414
      %v7461 = vadd.f32 %v7255, %v7419
      %v7462 = vadd.f32 %v7256, %v7422
      %v7463 = vadd.f32 %v7257, %v7427
      %v7464 = vadd.f32 %v7258, %v7430
      %v7466 = vshrl.u32 %v5197, 16
      %v7468 = vrot.slane %v7466, 4
      %v7469 = vshll.u32 %v5197, 16
      %v7471 = vrot.slane %v7469, 5
      %v7472 = vor.u32 %v7468, %v7471
      %v7473 = vrot.slane %v7472, 4
      %v7475 = vshll.u32 %v5198, 16
      %v7477 = vrot.slane %v7475, 5
      %v7478 = vsel %vm1417, %v7473, %v7477
      %v7479 = vshrl.u32 %v5198, 16
      %v7481 = vrot.slane %v7479, 4
      %v7482 = vor.u32 %v7481, %v7477
      %v7483 = vrot.slane %v7482, 4
      %v7485 = vshll.u32 %v5216, 16
      %v7487 = vrot.slane %v7485, 5
      %v7488 = vsel %vm1417, %v7483, %v7487
      %s7489 = scalar_lea.vmem %s5, 14
      %v7490 = vld [vmem:[%s7489] sm:$0x3]
      %v7491 = vunpack.c.l.b16 %v7478
      %v7492 = vunpack.c.l.b16 %v7488
      %v7493 = vpack.c.b16 %v7492, %v7491
      %v7495 = vsel %vm1906, %v7493, 0
      %v7498 = vsel %vm1961, %v7490, 0
      %7500 = vmatprep.subr.bf16.mxu0 0
      %7501 = vmatpush1.bf16.msra.mxu0 %v7498
      %7502 = vmatprep.subr.bf16.mxu0 0
      %7503 = vmatpush1.bf16.msra.mxu0 0
      %7504 = vmatprep.subr.bf16.mxu0 0
      %7505 = vmatpush1.bf16.msra.mxu0 0
      %7506 = vmatprep.subr.bf16.mxu0 0
      %7507 = vmatpush1.bf16.msra.mxu0 0
      %7508 = vmatprep.subr.bf16.mxu0 0
      %7509 = vmatpush1.bf16.msra.mxu0 0
      %7510 = vmatprep.subr.bf16.mxu0 0
      %7511 = vmatpush1.bf16.msra.mxu0 0
      %7512 = vmatprep.subr.bf16.mxu0 0
      %7513 = vmatpush1.bf16.msra.mxu0 0
      %7514 = vmatprep.subr.bf16.mxu0 0
      %7515 = vmatpush1.bf16.msra.mxu0 0
      %7516 = vmatprep.subr.bf16.mxu0 0
      %7517 = vmatpush1.bf16.msra.mxu0 0
      %7518 = vmatprep.subr.bf16.mxu0 0
      %7519 = vmatpush1.bf16.msra.mxu0 0
      %7520 = vmatprep.subr.bf16.mxu0 0
      %7521 = vmatpush1.bf16.msra.mxu0 0
      %7522 = vmatprep.subr.bf16.mxu0 0
      %7523 = vmatpush1.bf16.msra.mxu0 0
      %7524 = vmatprep.subr.bf16.mxu0 0
      %7525 = vmatpush1.bf16.msra.mxu0 0
      %7526 = vmatprep.subr.bf16.mxu0 0
      %7527 = vmatpush1.bf16.msra.mxu0 0
      %7528 = vmatprep.subr.bf16.mxu0 0
      %7529 = vmatpush1.bf16.msra.mxu0 0
      %7530 = vmatprep.subr.bf16.mxu0 0
      %7531 = vmatpush1.bf16.msra.mxu0 0
      %7532 = vmatprep.mubr.bf16.mxu0 0
      %7533 = vmatmul.mubr.bf16.gmra.mrb[0].mxu0 %v5677
      %v7534 = vpop.f32.mrb[0].mxu0
      %v7535 = vadd.f32 0.0, %v7534
      %v7536 = vpop.f32.mrb[0].mxu0
      %v7537 = vpop.f32.mrb[0].mxu0
      %v7538 = vadd.f32 0.0, %v7537
      %v7539 = vpop.f32.mrb[0].mxu0
      %7540 = vmatprep.mubr.bf16.mxu0 0
      %7541 = vmatmul.mubr.bf16.gmra.mrb[0].mxu0 %v5680
      %v7542 = vpop.f32.mrb[0].mxu0
      %v7543 = vadd.f32 0.0, %v7542
      %v7544 = vpop.f32.mrb[0].mxu0
      %v7545 = vpop.f32.mrb[0].mxu0
      %v7546 = vadd.f32 0.0, %v7545
      %v7547 = vpop.f32.mrb[0].mxu0
      %7548 = vmatprep.mubr.bf16.mxu0 0
      %7549 = vmatmul.mubr.bf16.gmra.mrb[0].mxu0 %v5683
      %v7550 = vpop.f32.mrb[0].mxu0
      %v7551 = vadd.f32 0.0, %v7550
      %v7552 = vpop.f32.mrb[0].mxu0
      %v7553 = vpop.f32.mrb[0].mxu0
      %v7554 = vadd.f32 0.0, %v7553
      %v7555 = vpop.f32.mrb[0].mxu0
      %7556 = vmatprep.mubr.bf16.mxu0 0
      %7557 = vmatmul.mubr.bf16.gmra.mrb[0].mxu0 %v5686
      %v7558 = vpop.f32.mrb[0].mxu0
      %v7559 = vadd.f32 0.0, %v7558
      %v7560 = vpop.f32.mrb[0].mxu0
      %v7561 = vpop.f32.mrb[0].mxu0
      %v7562 = vadd.f32 0.0, %v7561
      %v7563 = vpop.f32.mrb[0].mxu0
      %7564 = vmatprep.mubr.bf16.mxu0 0
      %7565 = vmatmul.mubr.bf16.gmra.mrb[0].mxu0 %v5689
      %v7566 = vpop.f32.mrb[0].mxu0
      %v7567 = vadd.f32 0.0, %v7566
      %v7568 = vpop.f32.mrb[0].mxu0
      %v7569 = vpop.f32.mrb[0].mxu0
      %v7570 = vadd.f32 0.0, %v7569
      %v7571 = vpop.f32.mrb[0].mxu0
      %7572 = vmatprep.mubr.bf16.mxu0 0
      %7573 = vmatmul.mubr.bf16.gmra.mrb[0].mxu0 %v5692
      %v7574 = vpop.f32.mrb[0].mxu0
      %v7575 = vadd.f32 0.0, %v7574
      %v7576 = vpop.f32.mrb[0].mxu0
      %v7577 = vpop.f32.mrb[0].mxu0
      %v7578 = vadd.f32 0.0, %v7577
      %v7579 = vpop.f32.mrb[0].mxu0
      %7580 = vmatprep.mubr.bf16.mxu0 0
      %7581 = vmatmul.mubr.bf16.gmra.mrb[0].mxu0 %v5695
      %v7582 = vpop.f32.mrb[0].mxu0
      %v7583 = vadd.f32 0.0, %v7582
      %v7584 = vpop.f32.mrb[0].mxu0
      %v7585 = vpop.f32.mrb[0].mxu0
      %v7586 = vadd.f32 0.0, %v7585
      %v7587 = vpop.f32.mrb[0].mxu0
      %7588 = vmatprep.mubr.bf16.mxu0 0
      %7589 = vmatmul.mubr.bf16.gmra.mrb[0].mxu0 %v5698
      %v7590 = vpop.f32.mrb[0].mxu0
      %v7591 = vadd.f32 0.0, %v7590
      %v7592 = vpop.f32.mrb[0].mxu0
      %v7593 = vpop.f32.mrb[0].mxu0
      %v7594 = vadd.f32 0.0, %v7593
      %v7595 = vpop.f32.mrb[0].mxu0
      %7596 = vmatprep.mubr.bf16.mxu0 0
      %7597 = vmatmul.mubr.bf16.gmra.mrb[0].mxu0 %v5701
      %v7598 = vpop.f32.mrb[0].mxu0
      %v7599 = vadd.f32 0.0, %v7598
      %v7600 = vpop.f32.mrb[0].mxu0
      %v7601 = vpop.f32.mrb[0].mxu0
      %v7602 = vadd.f32 0.0, %v7601
      %v7603 = vpop.f32.mrb[0].mxu0
      %7604 = vmatprep.mubr.bf16.mxu0 0
      %7605 = vmatmul.mubr.bf16.gmra.mrb[0].mxu0 %v5704
      %v7606 = vpop.f32.mrb[0].mxu0
      %v7607 = vadd.f32 0.0, %v7606
      %v7608 = vpop.f32.mrb[0].mxu0
      %v7609 = vpop.f32.mrb[0].mxu0
      %v7610 = vadd.f32 0.0, %v7609
      %v7611 = vpop.f32.mrb[0].mxu0
      %7612 = vmatprep.mubr.bf16.mxu0 0
      %7613 = vmatmul.mubr.bf16.gmra.mrb[0].mxu0 %v5707
      %v7614 = vpop.f32.mrb[0].mxu0
      %v7615 = vadd.f32 0.0, %v7614
      %v7616 = vpop.f32.mrb[0].mxu0
      %v7617 = vpop.f32.mrb[0].mxu0
      %v7618 = vadd.f32 0.0, %v7617
      %v7619 = vpop.f32.mrb[0].mxu0
      %7620 = vmatprep.mubr.bf16.mxu0 0
      %7621 = vmatmul.mubr.bf16.gmra.mrb[0].mxu0 %v5710
      %v7622 = vpop.f32.mrb[0].mxu0
      %v7623 = vadd.f32 0.0, %v7622
      %v7624 = vpop.f32.mrb[0].mxu0
      %v7625 = vpop.f32.mrb[0].mxu0
      %v7626 = vadd.f32 0.0, %v7625
      %v7627 = vpop.f32.mrb[0].mxu0
      %7628 = vmatprep.mubr.bf16.mxu0 0
      %7629 = vmatmul.mubr.bf16.gmra.mrb[0].mxu0 %v5713
      %v7630 = vpop.f32.mrb[0].mxu0
      %v7631 = vadd.f32 0.0, %v7630
      %v7632 = vpop.f32.mrb[0].mxu0
      %v7633 = vpop.f32.mrb[0].mxu0
      %v7634 = vadd.f32 0.0, %v7633
      %v7635 = vpop.f32.mrb[0].mxu0
      %7636 = vmatprep.mubr.bf16.mxu0 0
      %7637 = vmatmul.mubr.bf16.gmra.mrb[0].mxu0 %v5716
      %v7638 = vpop.f32.mrb[0].mxu0
      %v7639 = vadd.f32 0.0, %v7638
      %v7640 = vpop.f32.mrb[0].mxu0
      %v7641 = vpop.f32.mrb[0].mxu0
      %v7642 = vadd.f32 0.0, %v7641
      %v7643 = vpop.f32.mrb[0].mxu0
      %7644 = vmatprep.mubr.bf16.mxu0 0
      %7645 = vmatmul.mubr.bf16.gmra.mrb[0].mxu0 %v6848
      %v7646 = vpop.f32.mrb[0].mxu0
      %v7647 = vadd.f32 0.0, %v7646
      %v7648 = vpop.f32.mrb[0].mxu0
      %v7649 = vpop.f32.mrb[0].mxu0
      %v7650 = vadd.f32 0.0, %v7649
      %v7651 = vpop.f32.mrb[0].mxu0
      %7652 = vmatprep.mubr.bf16.mxu0 0
      %7653 = vmatmul.mubr.bf16.gmra.mrb[0].mxu0 %v7495
      %v7654 = vpop.f32.mrb[0].mxu0
      %v7655 = vadd.f32 0.0, %v7654
      %v7656 = vpop.f32.mrb[0].mxu0
      %v7657 = vpop.f32.mrb[0].mxu0
      %v7658 = vadd.f32 0.0, %v7657
      %v7659 = vpop.f32.mrb[0].mxu0
      %7660 = vdwg.mxu0
      %v7661 = vadd.f32 %v7433, %v7535
      %v7662 = vadd.f32 %v7434, %v7538
      %v7663 = vadd.f32 %v7435, %v7543
      %v7664 = vadd.f32 %v7436, %v7546
      %v7665 = vadd.f32 %v7437, %v7551
      %v7666 = vadd.f32 %v7438, %v7554
      %v7667 = vadd.f32 %v7439, %v7559
      %v7668 = vadd.f32 %v7440, %v7562
      %v7669 = vadd.f32 %v7441, %v7567
      %v7670 = vadd.f32 %v7442, %v7570
      %v7671 = vadd.f32 %v7443, %v7575
      %v7672 = vadd.f32 %v7444, %v7578
      %v7673 = vadd.f32 %v7445, %v7583
      %v7674 = vadd.f32 %v7446, %v7586
      %v7675 = vadd.f32 %v7447, %v7591
      %v7676 = vadd.f32 %v7448, %v7594
      %v7677 = vadd.f32 %v7449, %v7599
      %v7678 = vadd.f32 %v7450, %v7602
      %v7679 = vadd.f32 %v7451, %v7607
      %v7680 = vadd.f32 %v7452, %v7610
      %v7681 = vadd.f32 %v7453, %v7615
      %v7682 = vadd.f32 %v7454, %v7618
      %v7683 = vadd.f32 %v7455, %v7623
      %v7684 = vadd.f32 %v7456, %v7626
      %v7685 = vadd.f32 %v7457, %v7631
      %v7686 = vadd.f32 %v7458, %v7634
      %v7687 = vadd.f32 %v7459, %v7639
      %v7688 = vadd.f32 %v7460, %v7642
      %v7689 = vadd.f32 %v7461, %v7647
      %v7690 = vadd.f32 %v7462, %v7650
      %v7691 = vadd.f32 %v7463, %v7655
      %v7692 = vadd.f32 %v7464, %v7658
      %v7695 = vrot.slane %v5234, 5
      %v7696 = vrot.slane %v7695, 4
      %v7697 = vrot.slane %v5198, 5
      %v7698 = vsel %vm2504, %v7696, %v7697
      %v7699 = vrot.slane %v7697, 4
      %v7700 = vrot.slane %v5216, 5
      %v7701 = vsel %vm2504, %v7699, %v7700
      %s7702 = scalar_lea.vmem %s5, 16
      %v7703 = vld [vmem:[%s7702] sm:$0x3]
      %v7704 = vunpack.c.l.b16 %v7698
      %v7705 = vunpack.c.l.b16 %v7701
      %v7706 = vpack.c.b16 %v7705, %v7704
      %v7708 = vsel %vm1906, %v7706, 0
      %v7711 = vsel %vm1961, %v7703, 0
      %7713 = vmatprep.subr.bf16.mxu0 0
      %7714 = vmatpush1.bf16.msra.mxu0 %v7711
      %7715 = vmatprep.subr.bf16.mxu0 0
      %7716 = vmatpush1.bf16.msra.mxu0 0
      %7717 = vmatprep.subr.bf16.mxu0 0
      %7718 = vmatpush1.bf16.msra.mxu0 0
      %7719 = vmatprep.subr.bf16.mxu0 0
      %7720 = vmatpush1.bf16.msra.mxu0 0
      %7721 = vmatprep.subr.bf16.mxu0 0
      %7722 = vmatpush1.bf16.msra.mxu0 0
      %7723 = vmatprep.subr.bf16.mxu0 0
      %7724 = vmatpush1.bf16.msra.mxu0 0
      %7725 = vmatprep.subr.bf16.mxu0 0
      %7726 = vmatpush1.bf16.msra.mxu0 0
      %7727 = vmatprep.subr.bf16.mxu0 0
      %7728 = vmatpush1.bf16.msra.mxu0 0
      %7729 = vmatprep.subr.bf16.mxu0 0
      %7730 = vmatpush1.bf16.msra.mxu0 0
      %7731 = vmatprep.subr.bf16.mxu0 0
      %7732 = vmatpush1.bf16.msra.mxu0 0
      %7733 = vmatprep.subr.bf16.mxu0 0
      %7734 = vmatpush1.bf16.msra.mxu0 0
      %7735 = vmatprep.subr.bf16.mxu0 0
      %7736 = vmatpush1.bf16.msra.mxu0 0
      %7737 = vmatprep.subr.bf16.mxu0 0
      %7738 = vmatpush1.bf16.msra.mxu0 0
      %7739 = vmatprep.subr.bf16.mxu0 0
      %7740 = vmatpush1.bf16.msra.mxu0 0
      %7741 = vmatprep.subr.bf16.mxu0 0
      %7742 = vmatpush1.bf16.msra.mxu0 0
      %7743 = vmatprep.subr.bf16.mxu0 0
      %7744 = vmatpush1.bf16.msra.mxu0 0
      %7745 = vmatprep.mubr.bf16.mxu0 0
      %7746 = vmatmul.mubr.bf16.gmra.mrb[0].mxu0 %v6375
      %v7747 = vpop.f32.mrb[0].mxu0
      %v7748 = vadd.f32 0.0, %v7747
      %v7749 = vpop.f32.mrb[0].mxu0
      %v7750 = vpop.f32.mrb[0].mxu0
      %v7751 = vadd.f32 0.0, %v7750
      %v7752 = vpop.f32.mrb[0].mxu0
      %7753 = vmatprep.mubr.bf16.mxu0 0
      %7754 = vmatmul.mubr.bf16.gmra.mrb[0].mxu0 %v6378
      %v7755 = vpop.f32.mrb[0].mxu0
      %v7756 = vadd.f32 0.0, %v7755
      %v7757 = vpop.f32.mrb[0].mxu0
      %v7758 = vpop.f32.mrb[0].mxu0
      %v7759 = vadd.f32 0.0, %v7758
      %v7760 = vpop.f32.mrb[0].mxu0
      %7761 = vmatprep.mubr.bf16.mxu0 0
      %7762 = vmatmul.mubr.bf16.gmra.mrb[0].mxu0 %v6381
      %v7763 = vpop.f32.mrb[0].mxu0
      %v7764 = vadd.f32 0.0, %v7763
      %v7765 = vpop.f32.mrb[0].mxu0
      %v7766 = vpop.f32.mrb[0].mxu0
      %v7767 = vadd.f32 0.0, %v7766
      %v7768 = vpop.f32.mrb[0].mxu0
      %7769 = vmatprep.mubr.bf16.mxu0 0
      %7770 = vmatmul.mubr.bf16.gmra.mrb[0].mxu0 %v6384
      %v7771 = vpop.f32.mrb[0].mxu0
      %v7772 = vadd.f32 0.0, %v7771
      %v7773 = vpop.f32.mrb[0].mxu0
      %v7774 = vpop.f32.mrb[0].mxu0
      %v7775 = vadd.f32 0.0, %v7774
      %v7776 = vpop.f32.mrb[0].mxu0
      %7777 = vmatprep.mubr.bf16.mxu0 0
      %7778 = vmatmul.mubr.bf16.gmra.mrb[0].mxu0 %v6387
      %v7779 = vpop.f32.mrb[0].mxu0
      %v7780 = vadd.f32 0.0, %v7779
      %v7781 = vpop.f32.mrb[0].mxu0
      %v7782 = vpop.f32.mrb[0].mxu0
      %v7783 = vadd.f32 0.0, %v7782
      %v7784 = vpop.f32.mrb[0].mxu0
      %7785 = vmatprep.mubr.bf16.mxu0 0
      %7786 = vmatmul.mubr.bf16.gmra.mrb[0].mxu0 %v6390
      %v7787 = vpop.f32.mrb[0].mxu0
      %v7788 = vadd.f32 0.0, %v7787
      %v7789 = vpop.f32.mrb[0].mxu0
      %v7790 = vpop.f32.mrb[0].mxu0
      %v7791 = vadd.f32 0.0, %v7790
      %v7792 = vpop.f32.mrb[0].mxu0
      %7793 = vmatprep.mubr.bf16.mxu0 0
      %7794 = vmatmul.mubr.bf16.gmra.mrb[0].mxu0 %v6393
      %v7795 = vpop.f32.mrb[0].mxu0
      %v7796 = vadd.f32 0.0, %v7795
      %v7797 = vpop.f32.mrb[0].mxu0
      %v7798 = vpop.f32.mrb[0].mxu0
      %v7799 = vadd.f32 0.0, %v7798
      %v7800 = vpop.f32.mrb[0].mxu0
      %7801 = vmatprep.mubr.bf16.mxu0 0
      %7802 = vmatmul.mubr.bf16.gmra.mrb[0].mxu0 %v6396
      %v7803 = vpop.f32.mrb[0].mxu0
      %v7804 = vadd.f32 0.0, %v7803
      %v7805 = vpop.f32.mrb[0].mxu0
      %v7806 = vpop.f32.mrb[0].mxu0
      %v7807 = vadd.f32 0.0, %v7806
      %v7808 = vpop.f32.mrb[0].mxu0
      %7809 = vmatprep.mubr.bf16.mxu0 0
      %7810 = vmatmul.mubr.bf16.gmra.mrb[0].mxu0 %v6399
      %v7811 = vpop.f32.mrb[0].mxu0
      %v7812 = vadd.f32 0.0, %v7811
      %v7813 = vpop.f32.mrb[0].mxu0
      %v7814 = vpop.f32.mrb[0].mxu0
      %v7815 = vadd.f32 0.0, %v7814
      %v7816 = vpop.f32.mrb[0].mxu0
      %7817 = vmatprep.mubr.bf16.mxu0 0
      %7818 = vmatmul.mubr.bf16.gmra.mrb[0].mxu0 %v6402
      %v7819 = vpop.f32.mrb[0].mxu0
      %v7820 = vadd.f32 0.0, %v7819
      %v7821 = vpop.f32.mrb[0].mxu0
      %v7822 = vpop.f32.mrb[0].mxu0
      %v7823 = vadd.f32 0.0, %v7822
      %v7824 = vpop.f32.mrb[0].mxu0
      %7825 = vmatprep.mubr.bf16.mxu0 0
      %7826 = vmatmul.mubr.bf16.gmra.mrb[0].mxu0 %v6405
      %v7827 = vpop.f32.mrb[0].mxu0
      %v7828 = vadd.f32 0.0, %v7827
      %v7829 = vpop.f32.mrb[0].mxu0
      %v7830 = vpop.f32.mrb[0].mxu0
      %v7831 = vadd.f32 0.0, %v7830
      %v7832 = vpop.f32.mrb[0].mxu0
      %7833 = vmatprep.mubr.bf16.mxu0 0
      %7834 = vmatmul.mubr.bf16.gmra.mrb[0].mxu0 %v6408
      %v7835 = vpop.f32.mrb[0].mxu0
      %v7836 = vadd.f32 0.0, %v7835
      %v7837 = vpop.f32.mrb[0].mxu0
      %v7838 = vpop.f32.mrb[0].mxu0
      %v7839 = vadd.f32 0.0, %v7838
      %v7840 = vpop.f32.mrb[0].mxu0
      %7841 = vmatprep.mubr.bf16.mxu0 0
      %7842 = vmatmul.mubr.bf16.gmra.mrb[0].mxu0 %v6411
      %v7843 = vpop.f32.mrb[0].mxu0
      %v7844 = vadd.f32 0.0, %v7843
      %v7845 = vpop.f32.mrb[0].mxu0
      %v7846 = vpop.f32.mrb[0].mxu0
      %v7847 = vadd.f32 0.0, %v7846
      %v7848 = vpop.f32.mrb[0].mxu0
      %7849 = vmatprep.mubr.bf16.mxu0 0
      %7850 = vmatmul.mubr.bf16.gmra.mrb[0].mxu0 %v6414
      %v7851 = vpop.f32.mrb[0].mxu0
      %v7852 = vadd.f32 0.0, %v7851
      %v7853 = vpop.f32.mrb[0].mxu0
      %v7854 = vpop.f32.mrb[0].mxu0
      %v7855 = vadd.f32 0.0, %v7854
      %v7856 = vpop.f32.mrb[0].mxu0
      %7857 = vmatprep.mubr.bf16.mxu0 0
      %7858 = vmatmul.mubr.bf16.gmra.mrb[0].mxu0 %v7061
      %v7859 = vpop.f32.mrb[0].mxu0
      %v7860 = vadd.f32 0.0, %v7859
      %v7861 = vpop.f32.mrb[0].mxu0
      %v7862 = vpop.f32.mrb[0].mxu0
      %v7863 = vadd.f32 0.0, %v7862
      %v7864 = vpop.f32.mrb[0].mxu0
      %7865 = vmatprep.mubr.bf16.mxu0 0
      %7866 = vmatmul.mubr.bf16.gmra.mrb[0].mxu0 %v7708
      %v7867 = vpop.f32.mrb[0].mxu0
      %v7868 = vadd.f32 0.0, %v7867
      %v7869 = vpop.f32.mrb[0].mxu0
      %v7870 = vpop.f32.mrb[0].mxu0
      %v7871 = vadd.f32 0.0, %v7870
      %v7872 = vpop.f32.mrb[0].mxu0
      %7873 = vdwg.mxu0
      %v7874 = vadd.f32 %v7661, %v7748
      %v7875 = vadd.f32 %v7662, %v7751
      %v7876 = vadd.f32 %v7663, %v7756
      %v7877 = vadd.f32 %v7664, %v7759
      %v7878 = vadd.f32 %v7665, %v7764
      %v7879 = vadd.f32 %v7666, %v7767
      %v7880 = vadd.f32 %v7667, %v7772
      %v7881 = vadd.f32 %v7668, %v7775
      %v7882 = vadd.f32 %v7669, %v7780
      %v7883 = vadd.f32 %v7670, %v7783
      %v7884 = vadd.f32 %v7671, %v7788
      %v7885 = vadd.f32 %v7672, %v7791
      %v7886 = vadd.f32 %v7673, %v7796
      %v7887 = vadd.f32 %v7674, %v7799
      %v7888 = vadd.f32 %v7675, %v7804
      %v7889 = vadd.f32 %v7676, %v7807
      %v7890 = vadd.f32 %v7677, %v7812
      %v7891 = vadd.f32 %v7678, %v7815
      %v7892 = vadd.f32 %v7679, %v7820
      %v7893 = vadd.f32 %v7680, %v7823
      %v7894 = vadd.f32 %v7681, %v7828
      %v7895 = vadd.f32 %v7682, %v7831
      %v7896 = vadd.f32 %v7683, %v7836
      %v7897 = vadd.f32 %v7684, %v7839
      %v7898 = vadd.f32 %v7685, %v7844
      %v7899 = vadd.f32 %v7686, %v7847
      %v7900 = vadd.f32 %v7687, %v7852
      %v7901 = vadd.f32 %v7688, %v7855
      %v7902 = vadd.f32 %v7689, %v7860
      %v7903 = vadd.f32 %v7690, %v7863
      %v7904 = vadd.f32 %v7691, %v7868
      %v7905 = vadd.f32 %v7692, %v7871
      %v7906 = vld [vmem:[%s6] sm:$0x1]
      %v7908 = vlaneseq
      %v7909 = vshrl.u32 %v7908, 7
      %v7910 = vsub.s32 0, %v7909
      %v7911 = vrot.slane %v7906, %v7910
      %v7913 = vadd.f32 %v7874, %v7911
      %v7914 = vadd.f32 %v7875, %v7911
      %v7915 = vadd.f32 %v7876, %v7911
      %v7916 = vadd.f32 %v7877, %v7911
      %v7917 = vadd.f32 %v7878, %v7911
      %v7918 = vadd.f32 %v7879, %v7911
      %v7919 = vadd.f32 %v7880, %v7911
      %v7920 = vadd.f32 %v7881, %v7911
      %v7921 = vadd.f32 %v7882, %v7911
      %v7922 = vadd.f32 %v7883, %v7911
      %v7923 = vadd.f32 %v7884, %v7911
      %v7924 = vadd.f32 %v7885, %v7911
      %v7925 = vadd.f32 %v7886, %v7911
      %v7926 = vadd.f32 %v7887, %v7911
      %v7927 = vadd.f32 %v7888, %v7911
      %v7928 = vadd.f32 %v7889, %v7911
      %v7929 = vadd.f32 %v7890, %v7911
      %v7930 = vadd.f32 %v7891, %v7911
      %v7931 = vadd.f32 %v7892, %v7911
      %v7932 = vadd.f32 %v7893, %v7911
      %v7933 = vadd.f32 %v7894, %v7911
      %v7934 = vadd.f32 %v7895, %v7911
      %v7935 = vadd.f32 %v7896, %v7911
      %v7936 = vadd.f32 %v7897, %v7911
      %v7937 = vadd.f32 %v7898, %v7911
      %v7938 = vadd.f32 %v7899, %v7911
      %v7939 = vadd.f32 %v7900, %v7911
      %v7940 = vadd.f32 %v7901, %v7911
      %v7941 = vadd.f32 %v7902, %v7911
      %v7942 = vadd.f32 %v7903, %v7911
      %v7943 = vadd.f32 %v7904, %v7911
      %v7944 = vadd.f32 %v7905, %v7911
      %v7945 = vld [vmem:[%s406] sm:$0xff]
      %v7946 = vld [vmem:[%s406 + $0x8] sm:$0xff]
      %v7947 = vld [vmem:[%s406 + $0x10] sm:$0xff]
      %v7948 = vld [vmem:[%s406 + $0x18] sm:$0xff]
      %v7949 = vld [vmem:[%s406 + $0x20] sm:$0xff]
      %v7950 = vld [vmem:[%s406 + $0x28] sm:$0xff]
      %v7951 = vld [vmem:[%s406 + $0x30] sm:$0xff]
      %v7952 = vld [vmem:[%s406 + $0x38] sm:$0xff]
      %v7953 = vld [vmem:[%s406 + $0x40] sm:$0xff]
      %v7954 = vld [vmem:[%s406 + $0x48] sm:$0xff]
      %v7955 = vld [vmem:[%s406 + $0x50] sm:$0xff]
      %v7956 = vld [vmem:[%s406 + $0x58] sm:$0xff]
      %v7957 = vld [vmem:[%s406 + $0x60] sm:$0xff]
      %v7958 = vld [vmem:[%s406 + $0x68] sm:$0xff]
      %v7959 = vld [vmem:[%s406 + $0x70] sm:$0xff]
      %v7960 = vld [vmem:[%s406 + $0x78] sm:$0xff]
      %v7961 = vld [vmem:[%s406 + $0x80] sm:$0xff]
      %v7962 = vld [vmem:[%s406 + $0x88] sm:$0xff]
      %v7963 = vld [vmem:[%s406 + $0x90] sm:$0xff]
      %v7964 = vld [vmem:[%s406 + $0x98] sm:$0xff]
      %v7965 = vld [vmem:[%s406 + $0xa0] sm:$0xff]
      %v7966 = vld [vmem:[%s406 + $0xa8] sm:$0xff]
      %v7967 = vld [vmem:[%s406 + $0xb0] sm:$0xff]
      %v7968 = vld [vmem:[%s406 + $0xb8] sm:$0xff]
      %v7969 = vld [vmem:[%s406 + $0xc0] sm:$0xff]
      %v7970 = vld [vmem:[%s406 + $0xc8] sm:$0xff]
      %v7971 = vld [vmem:[%s406 + $0xd0] sm:$0xff]
      %v7972 = vld [vmem:[%s406 + $0xd8] sm:$0xff]
      %v7973 = vld [vmem:[%s406 + $0xe0] sm:$0xff]
      %v7974 = vld [vmem:[%s406 + $0xe8] sm:$0xff]
      %v7975 = vld [vmem:[%s406 + $0xf0] sm:$0xff]
      %v7976 = vld [vmem:[%s406 + $0xf8] sm:$0xff]
      %v7977 = vadd.f32 %v7913, %v7945
      %v7978 = vadd.f32 %v7914, %v7946
      %v7979 = vadd.f32 %v7915, %v7947
      %v7980 = vadd.f32 %v7916, %v7948
      %v7981 = vadd.f32 %v7917, %v7949
      %v7982 = vadd.f32 %v7918, %v7950
      %v7983 = vadd.f32 %v7919, %v7951
      %v7984 = vadd.f32 %v7920, %v7952
      %v7985 = vadd.f32 %v7921, %v7953
      %v7986 = vadd.f32 %v7922, %v7954
      %v7987 = vadd.f32 %v7923, %v7955
      %v7988 = vadd.f32 %v7924, %v7956
      %v7989 = vadd.f32 %v7925, %v7957
      %v7990 = vadd.f32 %v7926, %v7958
      %v7991 = vadd.f32 %v7927, %v7959
      %v7992 = vadd.f32 %v7928, %v7960
      %v7993 = vadd.f32 %v7929, %v7961
      %v7994 = vadd.f32 %v7930, %v7962
      %v7995 = vadd.f32 %v7931, %v7963
      %v7996 = vadd.f32 %v7932, %v7964
      %v7997 = vadd.f32 %v7933, %v7965
      %v7998 = vadd.f32 %v7934, %v7966
      %v7999 = vadd.f32 %v7935, %v7967
      %v8000 = vadd.f32 %v7936, %v7968
      %v8001 = vadd.f32 %v7937, %v7969
      %v8002 = vadd.f32 %v7938, %v7970
      %v8003 = vadd.f32 %v7939, %v7971
      %v8004 = vadd.f32 %v7940, %v7972
      %v8005 = vadd.f32 %v7941, %v7973
      %v8006 = vadd.f32 %v7942, %v7974
      %v8007 = vadd.f32 %v7943, %v7975
      %v8008 = vadd.f32 %v7944, %v7976
      %8009 = vst.msk [vmem:[%s455] sm:$0xff] %vm1906, %v7977
      %8010 = vst.msk [vmem:[%s455 + $0x8] sm:$0xff] %vm1906, %v7978
      %8011 = vst.msk [vmem:[%s455 + $0x10] sm:$0xff] %vm1906, %v7979
      %8012 = vst.msk [vmem:[%s455 + $0x18] sm:$0xff] %vm1906, %v7980
      %8013 = vst.msk [vmem:[%s455 + $0x20] sm:$0xff] %vm1906, %v7981
      %8014 = vst.msk [vmem:[%s455 + $0x28] sm:$0xff] %vm1906, %v7982
      %8015 = vst.msk [vmem:[%s455 + $0x30] sm:$0xff] %vm1906, %v7983
      %8016 = vst.msk [vmem:[%s455 + $0x38] sm:$0xff] %vm1906, %v7984
      %8017 = vst.msk [vmem:[%s455 + $0x40] sm:$0xff] %vm1906, %v7985
      %8018 = vst.msk [vmem:[%s455 + $0x48] sm:$0xff] %vm1906, %v7986
      %8019 = vst.msk [vmem:[%s455 + $0x50] sm:$0xff] %vm1906, %v7987
      %8020 = vst.msk [vmem:[%s455 + $0x58] sm:$0xff] %vm1906, %v7988
      %8021 = vst.msk [vmem:[%s455 + $0x60] sm:$0xff] %vm1906, %v7989
      %8022 = vst.msk [vmem:[%s455 + $0x68] sm:$0xff] %vm1906, %v7990
      %8023 = vst.msk [vmem:[%s455 + $0x70] sm:$0xff] %vm1906, %v7991
      %8024 = vst.msk [vmem:[%s455 + $0x78] sm:$0xff] %vm1906, %v7992
      %8025 = vst.msk [vmem:[%s455 + $0x80] sm:$0xff] %vm1906, %v7993
      %8026 = vst.msk [vmem:[%s455 + $0x88] sm:$0xff] %vm1906, %v7994
      %8027 = vst.msk [vmem:[%s455 + $0x90] sm:$0xff] %vm1906, %v7995
      %8028 = vst.msk [vmem:[%s455 + $0x98] sm:$0xff] %vm1906, %v7996
      %8029 = vst.msk [vmem:[%s455 + $0xa0] sm:$0xff] %vm1906, %v7997
      %8030 = vst.msk [vmem:[%s455 + $0xa8] sm:$0xff] %vm1906, %v7998
      %8031 = vst.msk [vmem:[%s455 + $0xb0] sm:$0xff] %vm1906, %v7999
      %8032 = vst.msk [vmem:[%s455 + $0xb8] sm:$0xff] %vm1906, %v8000
      %8033 = vst.msk [vmem:[%s455 + $0xc0] sm:$0xff] %vm1906, %v8001
      %8034 = vst.msk [vmem:[%s455 + $0xc8] sm:$0xff] %vm1906, %v8002
      %8035 = vst.msk [vmem:[%s455 + $0xd0] sm:$0xff] %vm1906, %v8003
      %8036 = vst.msk [vmem:[%s455 + $0xd8] sm:$0xff] %vm1906, %v8004
      %8037 = vst.msk [vmem:[%s455 + $0xe0] sm:$0xff] %vm1906, %v8005
      %8038 = vst.msk [vmem:[%s455 + $0xe8] sm:$0xff] %vm1906, %v8006
      %8039 = vst.msk [vmem:[%s455 + $0xf0] sm:$0xff] %vm1906, %v8007
      %8040 = vst.msk [vmem:[%s455 + $0xf8] sm:$0xff] %vm1906, %v8008
      %s8041 = smul.u32 16, %s23
      %p8042 = scmp.lt.s32.totalorder %s22, 1
      %s8043 = scalar_select %p8042, %s22, 1
      %p8044 = scmp.lt.s32.totalorder %s8041, 15
      %s8045 = scalar_select %p8044, %s8041, 15
      %s8046 = smul.addr %s8045, 2
      %s8047 = smul.addr %s8043, 32
      %s8048 = sadd.s32 %s8046, %s8047
      %s8049 = smul.addr %s8048, 8
      %s8050 = scalar_lea.vmem %s7, %s8049
      // Predicated region
      $region69: #{tpu_custom_call.1} parent=47 // pred_check
        %p8051 = pneg %p234
      $region70: #{tpu_custom_call.1} parent=47 // pred_check_branch
        %8053 = sbr.rel (%p8051) target = $region72
      $region71: #{tpu_custom_call.1} parent=47 // pred_region
        %s8054 = smul.u32 16, %s23
      $region72: #{tpu_custom_call.1} parent=47 // pred_fallthru
        _
    $region48: #{tpu_custom_call.1} parent=5 // pred_fallthru
      _
    %p8055 = scmp.le.s32.totalorder 2, %s13
    // Predicated region
    $region73: #{tpu_custom_call.1} parent=5 // pred_check
      %p8056 = pneg %p8055
    $region74: #{tpu_custom_call.1} parent=5 // pred_check_branch
      %8058 = sbr.rel (%p8056) target = $region76
    $region75: #{tpu_custom_call.1} parent=5 // pred_region
      %s8059 = ssub.s32 %s13, 2
      // Predicated region
      $region77: #{tpu_custom_call.1} parent=75 // pred_check
        %p8060 = pneg %p240
      $region78: #{tpu_custom_call.1} parent=75 // pred_check_branch
        %8062 = sbr.rel (%p8060) target = $region80
      $region79: #{tpu_custom_call.1} parent=75 // pred_region
        %s8063 = smul.u32 16, %s25
        %p8064 = scmp.lt.s32.totalorder %s24, 1
        %s8065 = scalar_select %p8064, %s24, 1
        %p8066 = scmp.lt.s32.totalorder %s8063, 15
        %s8067 = scalar_select %p8066, %s8063, 15
        %s8068 = smul.addr %s8067, 2
        %s8069 = smul.addr %s8065, 32
        %s8070 = sadd.s32 %s8068, %s8069
        %s8071 = smul.addr %s8070, 8
        %s8072 = scalar_lea.vmem %s7, %s8071
      $region80: #{tpu_custom_call.1} parent=75 // pred_fallthru
        _
    $region76: #{tpu_custom_call.1} parent=5 // pred_fallthru
      _
  $region6: #{tpu_custom_call.1} parent=0 // loop_footer
    %s17 = sadd.s32 1, %s13
  $region7: #{tpu_custom_call.1} parent=0 // loop_footer_branch
    %12 = sbr.rel target = $region3
  $region8: #{tpu_custom_call.1} parent=0 // loop_exit
    _

</llo_original>
